<compile_context>
chip_gen: v7x
topology: tpu7x:2x2x1
jax: 0.10.0
libtpu: 0.0.40
codegen_flags: <defaults>
</compile_context>

<pallas_src>
import functools

import jax
import jax.numpy as jnp
from jax.experimental import pallas as pl
from jax.experimental.pallas import tpu as pltpu


# ---------------------------------------------------------------------------
# Geometry fixed by the PyTorch module (92x92x3 input, Linear(64*8*8, fc)).
# ---------------------------------------------------------------------------
H_IN = 92                  # input spatial size
S2D = 8                    # space-to-depth factor = conv1 stride (4) x parity (2)
GRID1 = 12                 # 96 / 8   (input spatially zero-padded 92 -> 96)
PITCH = GRID1              # row pitch of every flattened activation
ROWS_IN = GRID1 * GRID1    # 144 flattened s2d rows
ROWS_IN_PAD = 160          # >= 145 rows read by conv1 taps (16-aligned for bf16)
C_IN = S2D * S2D * 3       # 192 s2d channels
OH1, C1 = 11, 32           # conv1 output per parity group (11x11x32)
OH2, C2 = 10, 64           # conv2 output (10x10x64)
OH3, C3 = 8, 64            # conv3 output (8x8x64)
C1M = 4 * C1               # 128: 4 parity groups merged along output lanes
R1 = OH1 * PITCH           # 132 wide rows of conv1 output
R2 = OH2 * PITCH           # 120
R3 = OH3 * PITCH           # 96
S1_ROWS = 144              # >= 133 rows read by conv2 taps
S2_ROWS = 128              # >= 122 rows read by conv3 taps
FEAT = OH3 * OH3 * C3      # 4096 compact features fed to FC1
QPAD = 128                 # lane-dense padded Q output width

PARITIES = ((0, 0), (0, 1), (1, 0), (1, 1))


def _round_up(a, b):
    return -(-a // b) * b


# ---------------------------------------------------------------------------
# Kernel 1: fused conv1+conv2+conv3 for a batch tile (grid over batch tiles).
# ---------------------------------------------------------------------------
def _conv_stack_kernel(x_ref, w1_ref, b1_ref, w2_ref, b2_ref, w3_ref, b3_ref,
                       feat_ref, s1_ref, s2_ref):
    f32 = jnp.float32
    bf16 = jnp.bfloat16
    nb = x_ref.shape[0]                      # static batch tile

    # NOTE: scratch tail rows (s1 rows >= 132, s2 rows >= 120) are never
    # initialized: they only ever feed pitch-padding garbage rows/columns of
    # downstream layers, which the wrapper slices off before FC1.
    for b in range(nb):
        # conv1: 8x8 s4 conv == 4 taps of (132,192)x(192,128) bf16 matmuls on
        # the space-to-depth(8) input; the four output-parity groups are merged
        # along the 128 output lanes.
        acc1 = jnp.zeros((R1, C1M), f32)
        for t, (ra, rb) in enumerate(PARITIES):
            start = ra * PITCH + rb
            acc1 = acc1 + jnp.dot(x_ref[b, start:start + R1, :], w1_ref[t],
                                  preferred_element_type=f32)
        s1_ref[0:R1, :] = jnp.maximum(acc1 + b1_ref[...], 0.0).astype(bf16)

        # conv2: 4x4 s2 conv == 4 taps of (120,128)x(128,64); the contraction
        # over the 4 conv1 parity groups is merged into K=128.
        acc2 = jnp.zeros((R2, C2), f32)
        for t, (ah, bh) in enumerate(PARITIES):
            start = ah * PITCH + bh
            acc2 = acc2 + jnp.dot(s1_ref[start:start + R2, :], w2_ref[t],
                                  preferred_element_type=f32)
        s2_ref[0:R2, :] = jnp.maximum(acc2 + b2_ref[...], 0.0).astype(bf16)

        # conv3: plain 3x3 s1 conv == 9 taps of (96,64)x(64,64).
        acc3 = jnp.zeros((R3, C3), f32)
        for a in range(3):
            for c in range(3):
                start = a * PITCH + c
                acc3 = acc3 + jnp.dot(s2_ref[start:start + R3, :],
                                      w3_ref[a * 3 + c],
                                      preferred_element_type=f32)
        feat_ref[b, :, :] = jnp.maximum(acc3 + b3_ref[...], 0.0).astype(bf16)


def conv_stack_pallas(x, w1m, b1m, w2m, b2, w3m, b3, *, batch_tile):
    n = x.shape[0]
    assert n % batch_tile == 0
    return pl.pallas_call(
        _conv_stack_kernel,
        out_shape=jax.ShapeDtypeStruct((n, R3, C3), jnp.bfloat16),
        grid_spec=pltpu.PrefetchScalarGridSpec(
            num_scalar_prefetch=0,
            grid=(n // batch_tile,),
            in_specs=[
                pl.BlockSpec((batch_tile, ROWS_IN_PAD, C_IN),
                             lambda i: (i, 0, 0)),
                pl.BlockSpec((4, C_IN, C1M), lambda i: (0, 0, 0)),
                pl.BlockSpec((1, C1M), lambda i: (0, 0)),
                pl.BlockSpec((4, C1M, C2), lambda i: (0, 0, 0)),
                pl.BlockSpec((1, C2), lambda i: (0, 0)),
                pl.BlockSpec((9, C2, C3), lambda i: (0, 0, 0)),
                pl.BlockSpec((1, C3), lambda i: (0, 0)),
            ],
            out_specs=pl.BlockSpec((batch_tile, R3, C3), lambda i: (i, 0, 0)),
            scratch_shapes=[
                pltpu.VMEM((S1_ROWS, C1M), jnp.bfloat16),
                pltpu.VMEM((S2_ROWS, C2), jnp.bfloat16),
            ],
        ),
        compiler_params=pltpu.CompilerParams(
            dimension_semantics=("parallel",)),
    )(x, w1m, b1m, w2m, b2, w3m, b3)


# ---------------------------------------------------------------------------
# Kernel 2: dueling head, gridded over batch tiles.  The dueling combine is
# pre-folded into wh2/bh2, so the kernel is just two matmuls + ReLU.
# ---------------------------------------------------------------------------
def _dueling_head_kernel(feat_ref, wh1_ref, bh1_ref, wh2_ref, bh2_ref, q_ref):
    h = jnp.dot(feat_ref[...], wh1_ref[...], preferred_element_type=jnp.float32)
    h = jnp.maximum(h + bh1_ref[...], 0.0).astype(jnp.bfloat16)
    q_ref[...] = jnp.dot(h, wh2_ref[...],
                         preferred_element_type=jnp.float32) + bh2_ref[...]


def dueling_head_pallas(feat, wh1, bh1, wh2, bh2, *, batch_tile):
    n, k = feat.shape
    fc2 = wh1.shape[1]
    assert n % batch_tile == 0
    return pl.pallas_call(
        _dueling_head_kernel,
        out_shape=jax.ShapeDtypeStruct((n, QPAD), jnp.float32),
        grid_spec=pltpu.PrefetchScalarGridSpec(
            num_scalar_prefetch=0,
            grid=(n // batch_tile,),
            in_specs=[
                pl.BlockSpec((batch_tile, k), lambda i: (i, 0)),
                pl.BlockSpec((k, fc2), lambda i: (0, 0)),
                pl.BlockSpec((1, fc2), lambda i: (0, 0)),
                pl.BlockSpec((fc2, QPAD), lambda i: (0, 0)),
                pl.BlockSpec((1, QPAD), lambda i: (0, 0)),
            ],
            out_specs=pl.BlockSpec((batch_tile, QPAD), lambda i: (i, 0)),
        ),
        compiler_params=pltpu.CompilerParams(
            dimension_semantics=("parallel",)),
    )(feat, wh1, bh1, wh2, bh2)


# ---------------------------------------------------------------------------
# Forward wrapper (only cheap, duplication-free layout ops outside kernels).
# ---------------------------------------------------------------------------
def dueling_dqn_forward(state, kp, *, num_actions):
    n = state.shape[0]
    conv_bt = min(8, n)
    n_conv = _round_up(n, conv_bt)

    x = state.astype(jnp.float32)
    x = jnp.pad(x, ((0, n_conv - n), (0, 96 - H_IN), (0, 96 - H_IN), (0, 0)))
    # duplication-free space-to-depth(8): (N,96,96,3) -> (N,12,12,192),
    # channel index = (di*8 + dj)*3 + c.
    x = x.reshape(n_conv, GRID1, S2D, GRID1, S2D, 3).transpose(0, 1, 3, 2, 4, 5)
    x = x.reshape(n_conv, ROWS_IN, C_IN)
    x = jnp.pad(x, ((0, 0), (0, ROWS_IN_PAD - ROWS_IN), (0, 0)))
    x = x.astype(jnp.bfloat16)            # pixel values <= 255 are exact in bf16

    feat = conv_stack_pallas(x, kp['w1m'], kp['b1m'], kp['w2m'], kp['b2'],
                             kp['w3m'], kp['b3'], batch_tile=conv_bt)
    # drop the pitch-12 padding columns -> compact (n, 8, 8, 64) = 4096 features
    feat = feat.reshape(n_conv, OH3, PITCH, C3)[:, :, :OH3, :]
    feat = feat.reshape(n_conv, FEAT)

    head_bt = min(256, n_conv)
    n_head = _round_up(n_conv, head_bt)
    if n_head != n_conv:
        feat = jnp.pad(feat, ((0, n_head - n_conv), (0, 0)))

    q_pad = dueling_head_pallas(feat, kp['wh1'], kp['bh1'],
                                kp['wh2'], kp['bh2'], batch_tile=head_bt)
    return q_pad[:n, :num_actions]


# ---------------------------------------------------------------------------
# One-time weight preparation (trace/init time, zero runtime cost).
# ---------------------------------------------------------------------------
def prepare_params(p, num_actions, fc_dim):
    f32 = jnp.float32
    bf16 = jnp.bfloat16
    assert num_actions <= QPAD

    # torch conv weights (Cout,Cin,kh,kw) -> spatially swapped (kw,kh,Cin,Cout),
    # which absorbs torch's transpose(1,3); the 1/255 preprocess is folded into
    # conv1's weights.
    w1s = jnp.transpose(p['w1'], (3, 2, 1, 0)).astype(f32) / 255.0   # (8,8,3,32)
    w2s = jnp.transpose(p['w2'], (3, 2, 1, 0)).astype(f32)           # (4,4,32,64)
    w3s = jnp.transpose(p['w3'], (3, 2, 1, 0)).astype(f32)           # (3,3,64,64)

    # conv1 regrouped into (output parity pr,pc) x (tap ra,rb) blocks over the
    # space-to-depth(8) channel axis k = (di*8+dj)*3 + c.
    def w1_block(pr, pc, ra, rb):
        di = jnp.arange(8)
        dj = jnp.arange(8)
        a_idx = ra * 8 + di - 4 * pr
        b_idx = rb * 8 + dj - 4 * pc
        va = (a_idx >= 0) & (a_idx < 8)
        vb = (b_idx >= 0) & (b_idx < 8)
        blk = w1s[jnp.clip(a_idx, 0, 7)][:, jnp.clip(b_idx, 0, 7)]   # (8,8,3,32)
        mask = (va[:, None] & vb[None, :]).astype(f32)[:, :, None, None]
        return (blk * mask).reshape(C_IN, C1)

    w1g = jnp.stack([jnp.stack([w1_block(pr, pc, ra, rb)
                                for (ra, rb) in PARITIES])
                     for (pr, pc) in PARITIES])                 # (grp,tap,192,32)
    # merge the 4 output-parity groups into 128 output lanes: (tap,192,128)
    w1m = jnp.transpose(w1g, (1, 2, 0, 3)).reshape(4, C_IN, C1M)
    b1m = jnp.tile(p['b1'].astype(f32), 4).reshape(1, C1M)

    # conv2 regrouped into (input parity al,bl) x (tap ah,bh) blocks, then the
    # contraction over parity groups merged into K=128: (tap,128,64)
    w2g = jnp.stack([jnp.stack([w2s[2 * ah + al, 2 * bh + bl]
                                for (ah, bh) in PARITIES])
                     for (al, bl) in PARITIES])                 # (grp,tap,32,64)
    w2m = jnp.transpose(w2g, (1, 0, 2, 3)).reshape(4, C1M, C2)

    w3m = w3s.reshape(9, C2, C3)                                # (9,64,64)

    # FC1 over the compact (ii, jj, c) feature order; rows permuted from
    # torch's NCHW flatten (c, jj, ii) -- the spatial swap of transpose(1,3) is
    # already absorbed into the conv kernels.  [advantage | value] concatenated.
    ii, jj, cc = jnp.meshgrid(jnp.arange(OH3), jnp.arange(OH3), jnp.arange(C3),
                              indexing='ij')
    perm = (cc * (OH3 * OH3) + jj * OH3 + ii).reshape(-1)       # (4096,)
    wh1 = jnp.concatenate([p['wa1'][perm], p['wv1'][perm]], axis=1)  # (4096,2fc)
    bh1 = jnp.concatenate([p['ba1'], p['bv1']]).reshape(1, 2 * fc_dim)

    # FC2 with the dueling combine folded in:
    #   q[:, a] = h_a @ (wa2[:,a] - mean_a wa2) + (ba2[a] - mean ba2)
    #           + h_v @ wv2 + bv2
    wa2c = p['wa2'] - jnp.mean(p['wa2'], axis=1, keepdims=True)
    wh2 = jnp.zeros((2 * fc_dim, QPAD), f32)
    wh2 = wh2.at[:fc_dim, :num_actions].set(wa2c)
    wh2 = wh2.at[fc_dim:, :num_actions].set(
        jnp.broadcast_to(p['wv2'], (fc_dim, num_actions)))
    bh2 = jnp.zeros((QPAD,), f32)
    bh2 = bh2.at[:num_actions].set(p['ba2'] - jnp.mean(p['ba2']) + p['bv2'][0])
    bh2 = bh2.reshape(1, QPAD)

    return {
        'w1m': w1m.astype(bf16), 'b1m': b1m.astype(f32),
        'w2m': w2m.astype(bf16), 'b2': p['b2'].reshape(1, C2).astype(f32),
        'w3m': w3m.astype(bf16), 'b3': p['b3'].reshape(1, C3).astype(f32),
        'wh1': wh1.astype(bf16), 'bh1': bh1.astype(f32),
        'wh2': wh2.astype(bf16), 'bh2': bh2.astype(f32),
    }


# ---------------------------------------------------------------------------
# Deterministic PyTorch-layout params + pure-JAX reference (for validation).
# ---------------------------------------------------------------------------
def init_params(key, num_actions, fc_dim):
    def u(k, shape, fan_in):
        return jax.random.uniform(k, shape, jnp.float32, -1.0, 1.0) / jnp.sqrt(
            jnp.float32(fan_in))

    ks = jax.random.split(key, 14)
    feat = 64 * 8 * 8
    return {
        'w1': u(ks[0], (32, 3, 8, 8), 3 * 8 * 8),   'b1': u(ks[1], (32,), 3 * 8 * 8),
        'w2': u(ks[2], (64, 32, 4, 4), 32 * 4 * 4), 'b2': u(ks[3], (64,), 32 * 4 * 4),
        'w3': u(ks[4], (64, 64, 3, 3), 64 * 3 * 3), 'b3': u(ks[5], (64,), 64 * 3 * 3),
        'wa1': u(ks[6], (feat, fc_dim), feat),      'ba1': u(ks[7], (fc_dim,), feat),
        'wa2': u(ks[8], (fc_dim, num_actions), fc_dim),
        'ba2': u(ks[9], (num_actions,), fc_dim),
        'wv1': u(ks[10], (feat, fc_dim), feat),     'bv1': u(ks[11], (fc_dim,), feat),
        'wv2': u(ks[12], (fc_dim, 1), fc_dim),      'bv2': u(ks[13], (1,), fc_dim),
    }


def reference_forward(state, p):
    hi = jax.lax.Precision.HIGHEST
    x = jnp.transpose(state / 255.0, (0, 3, 2, 1))          # torch transpose(1,3)

    def conv(x, w, b, s):
        y = jax.lax.conv_general_dilated(
            x, w, (s, s), 'VALID',
            dimension_numbers=('NCHW', 'OIHW', 'NCHW'), precision=hi)
        return jax.nn.relu(y + b[None, :, None, None])

    x = conv(x, p['w1'], p['b1'], 4)
    x = conv(x, p['w2'], p['b2'], 2)
    x = conv(x, p['w3'], p['b3'], 1)
    feat = x.reshape(x.shape[0], -1)
    adv = jnp.dot(jax.nn.relu(jnp.dot(feat, p['wa1'], precision=hi) + p['ba1']),
                  p['wa2'], precision=hi) + p['ba2']
    val = jnp.dot(jax.nn.relu(jnp.dot(feat, p['wv1'], precision=hi) + p['bv1']),
                  p['wv2'], precision=hi) + p['bv2']
    return val + (adv - jnp.mean(adv, axis=1, keepdims=True))


if __name__ == "__main__":
    key = jax.random.PRNGKey(0)
    k_params, k_x = jax.random.split(key)

    num_actions = 4
    fc_dim = 128          # small demo value (module default is 512)
    batch = 2

    params = init_params(k_params, num_actions, fc_dim)
    kparams = prepare_params(params, num_actions, fc_dim)

    # 92x92 spatial is implied by Linear(64*8*8, .) after the conv stack.
    state = jax.random.uniform(k_x, (batch, 92, 92, 3), jnp.float32, 0.0, 255.0)

    fwd = jax.jit(functools.partial(dueling_dqn_forward, num_actions=num_actions))
    q = fwd(state, kparams)
    jax.block_until_ready(q)

    assert q.shape == (batch, num_actions), q.shape
    assert q.dtype == jnp.float32
    assert bool(jnp.all(jnp.isfinite(q)))

    # validate against a pure-JAX f32 reference (loose tol: bf16 MXU operands)
    q_ref = jax.jit(reference_forward)(state, params)
    jax.block_until_ready(q_ref)
    err = float(jnp.max(jnp.abs(q - q_ref)))
    scale = float(jnp.max(jnp.abs(q_ref))) + 1e-3
    assert err <= 0.05 * scale + 0.02, (err, scale)

    print("KERNEL_OK")
</pallas_src>

<mosaic_0001>
module attributes {stable_mosaic.version = 11 : i64} {
  func.func @_conv_stack_kernel(%arg0: i32, %arg1: memref<2x160x192xbf16, #tpu.memory_space<vmem>>, %arg2: memref<4x192x128xbf16, #tpu.memory_space<vmem>>, %arg3: memref<1x128xf32, #tpu.memory_space<vmem>>, %arg4: memref<4x128x64xbf16, #tpu.memory_space<vmem>>, %arg5: memref<1x64xf32, #tpu.memory_space<vmem>>, %arg6: memref<9x64x64xbf16, #tpu.memory_space<vmem>>, %arg7: memref<1x64xf32, #tpu.memory_space<vmem>>, %arg8: memref<2x96x64xbf16, #tpu.memory_space<vmem>>, %arg9: memref<144x128xbf16, #tpu.memory_space<vmem>>, %arg10: memref<128x64xbf16, #tpu.memory_space<vmem>>) attributes {dimension_semantics = [#tpu.dimension_semantics<parallel>], iteration_bounds = array<i64: 1>, scalar_prefetch = 0 : i64, scratch_operands = 2 : i64, tpu.core_type = #tpu.core_type<tc>, window_params = [{transform_indices = @transform_0, window_bounds = array<i64: 2, 160, 192>}, {pipeline_mode = #tpu.pipeline_mode<synchronous>, transform_indices = @transform_1, window_bounds = array<i64: 4, 192, 128>}, {pipeline_mode = #tpu.pipeline_mode<synchronous>, transform_indices = @transform_2, window_bounds = array<i64: 1, 128>}, {pipeline_mode = #tpu.pipeline_mode<synchronous>, transform_indices = @transform_3, window_bounds = array<i64: 4, 128, 64>}, {pipeline_mode = #tpu.pipeline_mode<synchronous>, transform_indices = @transform_4, window_bounds = array<i64: 1, 64>}, {pipeline_mode = #tpu.pipeline_mode<synchronous>, transform_indices = @transform_5, window_bounds = array<i64: 9, 64, 64>}, {pipeline_mode = #tpu.pipeline_mode<synchronous>, transform_indices = @transform_6, window_bounds = array<i64: 1, 64>}, {transform_indices = @transform_7, window_bounds = array<i64: 2, 96, 64>}]} {
    %cst = arith.constant 0.000000e+00 : f32
    %0 = vector.broadcast %cst : f32 to vector<132x128xf32>
    %c0 = arith.constant 0 : index
    %c0_0 = arith.constant 0 : index
    %c0_1 = arith.constant 0 : index
    %1 = vector.load %arg1[%c0, %c0_0, %c0_1] : memref<2x160x192xbf16, #tpu.memory_space<vmem>>, vector<1x132x192xbf16>
    %2 = vector.shape_cast %1 : vector<1x132x192xbf16> to vector<132x192xbf16>
    %c0_2 = arith.constant 0 : index
    %c0_3 = arith.constant 0 : index
    %c0_4 = arith.constant 0 : index
    %3 = vector.load %arg2[%c0_2, %c0_3, %c0_4] : memref<4x192x128xbf16, #tpu.memory_space<vmem>>, vector<1x192x128xbf16>
    %4 = vector.shape_cast %3 : vector<1x192x128xbf16> to vector<192x128xbf16>
    %cst_5 = arith.constant dense<0.000000e+00> : vector<132x128xf32>
    %5 = tpu.matmul %2, %4, %cst_5 {dimension_numbers = #tpu.dot_dimension_numbers<[1], [0], [0], [1], [0, 0, 1, 1], [], []>} : vector<132x192xbf16>, vector<192x128xbf16>, vector<132x128xf32> -> vector<132x128xf32>
    %6 = arith.addf %0, %5 : vector<132x128xf32>
    %c0_6 = arith.constant 0 : index
    %c1 = arith.constant 1 : index
    %c0_7 = arith.constant 0 : index
    %7 = vector.load %arg1[%c0_6, %c1, %c0_7] : memref<2x160x192xbf16, #tpu.memory_space<vmem>>, vector<1x132x192xbf16>
    %8 = vector.shape_cast %7 : vector<1x132x192xbf16> to vector<132x192xbf16>
    %c1_8 = arith.constant 1 : index
    %c0_9 = arith.constant 0 : index
    %c0_10 = arith.constant 0 : index
    %9 = vector.load %arg2[%c1_8, %c0_9, %c0_10] : memref<4x192x128xbf16, #tpu.memory_space<vmem>>, vector<1x192x128xbf16>
    %10 = vector.shape_cast %9 : vector<1x192x128xbf16> to vector<192x128xbf16>
    %cst_11 = arith.constant dense<0.000000e+00> : vector<132x128xf32>
    %11 = tpu.matmul %8, %10, %cst_11 {dimension_numbers = #tpu.dot_dimension_numbers<[1], [0], [0], [1], [0, 0, 1, 1], [], []>} : vector<132x192xbf16>, vector<192x128xbf16>, vector<132x128xf32> -> vector<132x128xf32>
    %12 = arith.addf %6, %11 : vector<132x128xf32>
    %c0_12 = arith.constant 0 : index
    %c12 = arith.constant 12 : index
    %c0_13 = arith.constant 0 : index
    %13 = vector.load %arg1[%c0_12, %c12, %c0_13] : memref<2x160x192xbf16, #tpu.memory_space<vmem>>, vector<1x132x192xbf16>
    %14 = vector.shape_cast %13 : vector<1x132x192xbf16> to vector<132x192xbf16>
    %c2 = arith.constant 2 : index
    %c0_14 = arith.constant 0 : index
    %c0_15 = arith.constant 0 : index
    %15 = vector.load %arg2[%c2, %c0_14, %c0_15] : memref<4x192x128xbf16, #tpu.memory_space<vmem>>, vector<1x192x128xbf16>
    %16 = vector.shape_cast %15 : vector<1x192x128xbf16> to vector<192x128xbf16>
    %cst_16 = arith.constant dense<0.000000e+00> : vector<132x128xf32>
    %17 = tpu.matmul %14, %16, %cst_16 {dimension_numbers = #tpu.dot_dimension_numbers<[1], [0], [0], [1], [0, 0, 1, 1], [], []>} : vector<132x192xbf16>, vector<192x128xbf16>, vector<132x128xf32> -> vector<132x128xf32>
    %18 = arith.addf %12, %17 : vector<132x128xf32>
    %c0_17 = arith.constant 0 : index
    %c13 = arith.constant 13 : index
    %c0_18 = arith.constant 0 : index
    %19 = vector.load %arg1[%c0_17, %c13, %c0_18] : memref<2x160x192xbf16, #tpu.memory_space<vmem>>, vector<1x132x192xbf16>
    %20 = vector.shape_cast %19 : vector<1x132x192xbf16> to vector<132x192xbf16>
    %c3 = arith.constant 3 : index
    %c0_19 = arith.constant 0 : index
    %c0_20 = arith.constant 0 : index
    %21 = vector.load %arg2[%c3, %c0_19, %c0_20] : memref<4x192x128xbf16, #tpu.memory_space<vmem>>, vector<1x192x128xbf16>
    %22 = vector.shape_cast %21 : vector<1x192x128xbf16> to vector<192x128xbf16>
    %cst_21 = arith.constant dense<0.000000e+00> : vector<132x128xf32>
    %23 = tpu.matmul %20, %22, %cst_21 {dimension_numbers = #tpu.dot_dimension_numbers<[1], [0], [0], [1], [0, 0, 1, 1], [], []>} : vector<132x192xbf16>, vector<192x128xbf16>, vector<132x128xf32> -> vector<132x128xf32>
    %24 = arith.addf %18, %23 : vector<132x128xf32>
    %c0_22 = arith.constant 0 : index
    %c0_23 = arith.constant 0 : index
    %25 = vector.load %arg3[%c0_22, %c0_23] : memref<1x128xf32, #tpu.memory_space<vmem>>, vector<1x128xf32>
    %26 = vector.broadcast %25 : vector<1x128xf32> to vector<132x128xf32>
    %27 = arith.addf %24, %26 : vector<132x128xf32>
    %cst_24 = arith.constant 0.000000e+00 : f32
    %28 = vector.broadcast %cst_24 : f32 to vector<132x128xf32>
    %29 = arith.maximumf %27, %28 : vector<132x128xf32>
    %30 = arith.truncf %29 : vector<132x128xf32> to vector<132x128xbf16>
    %c0_25 = arith.constant 0 : index
    %c0_26 = arith.constant 0 : index
    %31 = vector.load %arg9[%c0_25, %c0_26] : memref<144x128xbf16, #tpu.memory_space<vmem>>, vector<132x128xbf16>
    tpu.vector_store %arg9[%c0_25, %c0_26], %30 {strides = array<i32>} : memref<144x128xbf16, #tpu.memory_space<vmem>>, vector<132x128xbf16>,
    %cst_27 = arith.constant 0.000000e+00 : f32
    %32 = vector.broadcast %cst_27 : f32 to vector<120x64xf32>
    %c0_28 = arith.constant 0 : index
    %c0_29 = arith.constant 0 : index
    %33 = vector.load %arg9[%c0_28, %c0_29] : memref<144x128xbf16, #tpu.memory_space<vmem>>, vector<120x128xbf16>
    %c0_30 = arith.constant 0 : index
    %c0_31 = arith.constant 0 : index
    %c0_32 = arith.constant 0 : index
    %34 = vector.load %arg4[%c0_30, %c0_31, %c0_32] : memref<4x128x64xbf16, #tpu.memory_space<vmem>>, vector<1x128x64xbf16>
    %35 = vector.shape_cast %34 : vector<1x128x64xbf16> to vector<128x64xbf16>
    %cst_33 = arith.constant dense<0.000000e+00> : vector<120x64xf32>
    %36 = tpu.matmul %33, %35, %cst_33 {dimension_numbers = #tpu.dot_dimension_numbers<[1], [0], [0], [1], [0, 0, 1, 1], [], []>} : vector<120x128xbf16>, vector<128x64xbf16>, vector<120x64xf32> -> vector<120x64xf32>
    %37 = arith.addf %32, %36 : vector<120x64xf32>
    %c1_34 = arith.constant 1 : index
    %c0_35 = arith.constant 0 : index
    %38 = vector.load %arg9[%c1_34, %c0_35] : memref<144x128xbf16, #tpu.memory_space<vmem>>, vector<120x128xbf16>
    %c1_36 = arith.constant 1 : index
    %c0_37 = arith.constant 0 : index
    %c0_38 = arith.constant 0 : index
    %39 = vector.load %arg4[%c1_36, %c0_37, %c0_38] : memref<4x128x64xbf16, #tpu.memory_space<vmem>>, vector<1x128x64xbf16>
    %40 = vector.shape_cast %39 : vector<1x128x64xbf16> to vector<128x64xbf16>
    %cst_39 = arith.constant dense<0.000000e+00> : vector<120x64xf32>
    %41 = tpu.matmul %38, %40, %cst_39 {dimension_numbers = #tpu.dot_dimension_numbers<[1], [0], [0], [1], [0, 0, 1, 1], [], []>} : vector<120x128xbf16>, vector<128x64xbf16>, vector<120x64xf32> -> vector<120x64xf32>
    %42 = arith.addf %37, %41 : vector<120x64xf32>
    %c12_40 = arith.constant 12 : index
    %c0_41 = arith.constant 0 : index
    %43 = vector.load %arg9[%c12_40, %c0_41] : memref<144x128xbf16, #tpu.memory_space<vmem>>, vector<120x128xbf16>
    %c2_42 = arith.constant 2 : index
    %c0_43 = arith.constant 0 : index
    %c0_44 = arith.constant 0 : index
    %44 = vector.load %arg4[%c2_42, %c0_43, %c0_44] : memref<4x128x64xbf16, #tpu.memory_space<vmem>>, vector<1x128x64xbf16>
    %45 = vector.shape_cast %44 : vector<1x128x64xbf16> to vector<128x64xbf16>
    %cst_45 = arith.constant dense<0.000000e+00> : vector<120x64xf32>
    %46 = tpu.matmul %43, %45, %cst_45 {dimension_numbers = #tpu.dot_dimension_numbers<[1], [0], [0], [1], [0, 0, 1, 1], [], []>} : vector<120x128xbf16>, vector<128x64xbf16>, vector<120x64xf32> -> vector<120x64xf32>
    %47 = arith.addf %42, %46 : vector<120x64xf32>
    %c13_46 = arith.constant 13 : index
    %c0_47 = arith.constant 0 : index
    %48 = vector.load %arg9[%c13_46, %c0_47] : memref<144x128xbf16, #tpu.memory_space<vmem>>, vector<120x128xbf16>
    %c3_48 = arith.constant 3 : index
    %c0_49 = arith.constant 0 : index
    %c0_50 = arith.constant 0 : index
    %49 = vector.load %arg4[%c3_48, %c0_49, %c0_50] : memref<4x128x64xbf16, #tpu.memory_space<vmem>>, vector<1x128x64xbf16>
    %50 = vector.shape_cast %49 : vector<1x128x64xbf16> to vector<128x64xbf16>
    %cst_51 = arith.constant dense<0.000000e+00> : vector<120x64xf32>
    %51 = tpu.matmul %48, %50, %cst_51 {dimension_numbers = #tpu.dot_dimension_numbers<[1], [0], [0], [1], [0, 0, 1, 1], [], []>} : vector<120x128xbf16>, vector<128x64xbf16>, vector<120x64xf32> -> vector<120x64xf32>
    %52 = arith.addf %47, %51 : vector<120x64xf32>
    %c0_52 = arith.constant 0 : index
    %c0_53 = arith.constant 0 : index
    %53 = vector.load %arg5[%c0_52, %c0_53] : memref<1x64xf32, #tpu.memory_space<vmem>>, vector<1x64xf32>
    %54 = vector.broadcast %53 : vector<1x64xf32> to vector<120x64xf32>
    %55 = arith.addf %52, %54 : vector<120x64xf32>
    %cst_54 = arith.constant 0.000000e+00 : f32
    %56 = vector.broadcast %cst_54 : f32 to vector<120x64xf32>
    %57 = arith.maximumf %55, %56 : vector<120x64xf32>
    %58 = arith.truncf %57 : vector<120x64xf32> to vector<120x64xbf16>
    %c0_55 = arith.constant 0 : index
    %c0_56 = arith.constant 0 : index
    %59 = vector.load %arg10[%c0_55, %c0_56] : memref<128x64xbf16, #tpu.memory_space<vmem>>, vector<120x64xbf16>
    tpu.vector_store %arg10[%c0_55, %c0_56], %58 {strides = array<i32>} : memref<128x64xbf16, #tpu.memory_space<vmem>>, vector<120x64xbf16>,
    %cst_57 = arith.constant 0.000000e+00 : f32
    %60 = vector.broadcast %cst_57 : f32 to vector<96x64xf32>
    %c0_58 = arith.constant 0 : index
    %c0_59 = arith.constant 0 : index
    %61 = vector.load %arg10[%c0_58, %c0_59] : memref<128x64xbf16, #tpu.memory_space<vmem>>, vector<96x64xbf16>
    %c0_60 = arith.constant 0 : index
    %c0_61 = arith.constant 0 : index
    %c0_62 = arith.constant 0 : index
    %62 = vector.load %arg6[%c0_60, %c0_61, %c0_62] : memref<9x64x64xbf16, #tpu.memory_space<vmem>>, vector<1x64x64xbf16>
    %63 = vector.shape_cast %62 : vector<1x64x64xbf16> to vector<64x64xbf16>
    %cst_63 = arith.constant dense<0.000000e+00> : vector<96x64xf32>
    %64 = tpu.matmul %61, %63, %cst_63 {dimension_numbers = #tpu.dot_dimension_numbers<[1], [0], [0], [1], [0, 0, 1, 1], [], []>} : vector<96x64xbf16>, vector<64x64xbf16>, vector<96x64xf32> -> vector<96x64xf32>
    %65 = arith.addf %60, %64 : vector<96x64xf32>
    %c1_64 = arith.constant 1 : index
    %c0_65 = arith.constant 0 : index
    %66 = vector.load %arg10[%c1_64, %c0_65] : memref<128x64xbf16, #tpu.memory_space<vmem>>, vector<96x64xbf16>
    %c1_66 = arith.constant 1 : index
    %c0_67 = arith.constant 0 : index
    %c0_68 = arith.constant 0 : index
    %67 = vector.load %arg6[%c1_66, %c0_67, %c0_68] : memref<9x64x64xbf16, #tpu.memory_space<vmem>>, vector<1x64x64xbf16>
    %68 = vector.shape_cast %67 : vector<1x64x64xbf16> to vector<64x64xbf16>
    %cst_69 = arith.constant dense<0.000000e+00> : vector<96x64xf32>
    %69 = tpu.matmul %66, %68, %cst_69 {dimension_numbers = #tpu.dot_dimension_numbers<[1], [0], [0], [1], [0, 0, 1, 1], [], []>} : vector<96x64xbf16>, vector<64x64xbf16>, vector<96x64xf32> -> vector<96x64xf32>
    %70 = arith.addf %65, %69 : vector<96x64xf32>
    %c2_70 = arith.constant 2 : index
    %c0_71 = arith.constant 0 : index
    %71 = vector.load %arg10[%c2_70, %c0_71] : memref<128x64xbf16, #tpu.memory_space<vmem>>, vector<96x64xbf16>
    %c2_72 = arith.constant 2 : index
    %c0_73 = arith.constant 0 : index
    %c0_74 = arith.constant 0 : index
    %72 = vector.load %arg6[%c2_72, %c0_73, %c0_74] : memref<9x64x64xbf16, #tpu.memory_space<vmem>>, vector<1x64x64xbf16>
    %73 = vector.shape_cast %72 : vector<1x64x64xbf16> to vector<64x64xbf16>
    %cst_75 = arith.constant dense<0.000000e+00> : vector<96x64xf32>
    %74 = tpu.matmul %71, %73, %cst_75 {dimension_numbers = #tpu.dot_dimension_numbers<[1], [0], [0], [1], [0, 0, 1, 1], [], []>} : vector<96x64xbf16>, vector<64x64xbf16>, vector<96x64xf32> -> vector<96x64xf32>
    %75 = arith.addf %70, %74 : vector<96x64xf32>
    %c12_76 = arith.constant 12 : index
    %c0_77 = arith.constant 0 : index
    %76 = vector.load %arg10[%c12_76, %c0_77] : memref<128x64xbf16, #tpu.memory_space<vmem>>, vector<96x64xbf16>
    %c3_78 = arith.constant 3 : index
    %c0_79 = arith.constant 0 : index
    %c0_80 = arith.constant 0 : index
    %77 = vector.load %arg6[%c3_78, %c0_79, %c0_80] : memref<9x64x64xbf16, #tpu.memory_space<vmem>>, vector<1x64x64xbf16>
    %78 = vector.shape_cast %77 : vector<1x64x64xbf16> to vector<64x64xbf16>
    %cst_81 = arith.constant dense<0.000000e+00> : vector<96x64xf32>
    %79 = tpu.matmul %76, %78, %cst_81 {dimension_numbers = #tpu.dot_dimension_numbers<[1], [0], [0], [1], [0, 0, 1, 1], [], []>} : vector<96x64xbf16>, vector<64x64xbf16>, vector<96x64xf32> -> vector<96x64xf32>
    %80 = arith.addf %75, %79 : vector<96x64xf32>
    %c13_82 = arith.constant 13 : index
    %c0_83 = arith.constant 0 : index
    %81 = vector.load %arg10[%c13_82, %c0_83] : memref<128x64xbf16, #tpu.memory_space<vmem>>, vector<96x64xbf16>
    %c4 = arith.constant 4 : index
    %c0_84 = arith.constant 0 : index
    %c0_85 = arith.constant 0 : index
    %82 = vector.load %arg6[%c4, %c0_84, %c0_85] : memref<9x64x64xbf16, #tpu.memory_space<vmem>>, vector<1x64x64xbf16>
    %83 = vector.shape_cast %82 : vector<1x64x64xbf16> to vector<64x64xbf16>
    %cst_86 = arith.constant dense<0.000000e+00> : vector<96x64xf32>
    %84 = tpu.matmul %81, %83, %cst_86 {dimension_numbers = #tpu.dot_dimension_numbers<[1], [0], [0], [1], [0, 0, 1, 1], [], []>} : vector<96x64xbf16>, vector<64x64xbf16>, vector<96x64xf32> -> vector<96x64xf32>
    %85 = arith.addf %80, %84 : vector<96x64xf32>
    %c14 = arith.constant 14 : index
    %c0_87 = arith.constant 0 : index
    %86 = vector.load %arg10[%c14, %c0_87] : memref<128x64xbf16, #tpu.memory_space<vmem>>, vector<96x64xbf16>
    %c5 = arith.constant 5 : index
    %c0_88 = arith.constant 0 : index
    %c0_89 = arith.constant 0 : index
    %87 = vector.load %arg6[%c5, %c0_88, %c0_89] : memref<9x64x64xbf16, #tpu.memory_space<vmem>>, vector<1x64x64xbf16>
    %88 = vector.shape_cast %87 : vector<1x64x64xbf16> to vector<64x64xbf16>
    %cst_90 = arith.constant dense<0.000000e+00> : vector<96x64xf32>
    %89 = tpu.matmul %86, %88, %cst_90 {dimension_numbers = #tpu.dot_dimension_numbers<[1], [0], [0], [1], [0, 0, 1, 1], [], []>} : vector<96x64xbf16>, vector<64x64xbf16>, vector<96x64xf32> -> vector<96x64xf32>
    %90 = arith.addf %85, %89 : vector<96x64xf32>
    %c24 = arith.constant 24 : index
    %c0_91 = arith.constant 0 : index
    %91 = vector.load %arg10[%c24, %c0_91] : memref<128x64xbf16, #tpu.memory_space<vmem>>, vector<96x64xbf16>
    %c6 = arith.constant 6 : index
    %c0_92 = arith.constant 0 : index
    %c0_93 = arith.constant 0 : index
    %92 = vector.load %arg6[%c6, %c0_92, %c0_93] : memref<9x64x64xbf16, #tpu.memory_space<vmem>>, vector<1x64x64xbf16>
    %93 = vector.shape_cast %92 : vector<1x64x64xbf16> to vector<64x64xbf16>
    %cst_94 = arith.constant dense<0.000000e+00> : vector<96x64xf32>
    %94 = tpu.matmul %91, %93, %cst_94 {dimension_numbers = #tpu.dot_dimension_numbers<[1], [0], [0], [1], [0, 0, 1, 1], [], []>} : vector<96x64xbf16>, vector<64x64xbf16>, vector<96x64xf32> -> vector<96x64xf32>
    %95 = arith.addf %90, %94 : vector<96x64xf32>
    %c25 = arith.constant 25 : index
    %c0_95 = arith.constant 0 : index
    %96 = vector.load %arg10[%c25, %c0_95] : memref<128x64xbf16, #tpu.memory_space<vmem>>, vector<96x64xbf16>
    %c7 = arith.constant 7 : index
    %c0_96 = arith.constant 0 : index
    %c0_97 = arith.constant 0 : index
    %97 = vector.load %arg6[%c7, %c0_96, %c0_97] : memref<9x64x64xbf16, #tpu.memory_space<vmem>>, vector<1x64x64xbf16>
    %98 = vector.shape_cast %97 : vector<1x64x64xbf16> to vector<64x64xbf16>
    %cst_98 = arith.constant dense<0.000000e+00> : vector<96x64xf32>
    %99 = tpu.matmul %96, %98, %cst_98 {dimension_numbers = #tpu.dot_dimension_numbers<[1], [0], [0], [1], [0, 0, 1, 1], [], []>} : vector<96x64xbf16>, vector<64x64xbf16>, vector<96x64xf32> -> vector<96x64xf32>
    %100 = arith.addf %95, %99 : vector<96x64xf32>
    %c26 = arith.constant 26 : index
    %c0_99 = arith.constant 0 : index
    %101 = vector.load %arg10[%c26, %c0_99] : memref<128x64xbf16, #tpu.memory_space<vmem>>, vector<96x64xbf16>
    %c8 = arith.constant 8 : index
    %c0_100 = arith.constant 0 : index
    %c0_101 = arith.constant 0 : index
    %102 = vector.load %arg6[%c8, %c0_100, %c0_101] : memref<9x64x64xbf16, #tpu.memory_space<vmem>>, vector<1x64x64xbf16>
    %103 = vector.shape_cast %102 : vector<1x64x64xbf16> to vector<64x64xbf16>
    %cst_102 = arith.constant dense<0.000000e+00> : vector<96x64xf32>
    %104 = tpu.matmul %101, %103, %cst_102 {dimension_numbers = #tpu.dot_dimension_numbers<[1], [0], [0], [1], [0, 0, 1, 1], [], []>} : vector<96x64xbf16>, vector<64x64xbf16>, vector<96x64xf32> -> vector<96x64xf32>
    %105 = arith.addf %100, %104 : vector<96x64xf32>
    %c0_103 = arith.constant 0 : index
    %c0_104 = arith.constant 0 : index
    %106 = vector.load %arg7[%c0_103, %c0_104] : memref<1x64xf32, #tpu.memory_space<vmem>>, vector<1x64xf32>
    %107 = vector.broadcast %106 : vector<1x64xf32> to vector<96x64xf32>
    %108 = arith.addf %105, %107 : vector<96x64xf32>
    %cst_105 = arith.constant 0.000000e+00 : f32
    %109 = vector.broadcast %cst_105 : f32 to vector<96x64xf32>
    %110 = arith.maximumf %108, %109 : vector<96x64xf32>
    %111 = arith.truncf %110 : vector<96x64xf32> to vector<96x64xbf16>
    %c0_106 = arith.constant 0 : index
    %c0_107 = arith.constant 0 : index
    %c0_108 = arith.constant 0 : index
    %112 = vector.load %arg8[%c0_106, %c0_107, %c0_108] : memref<2x96x64xbf16, #tpu.memory_space<vmem>>, vector<1x96x64xbf16>
    %113 = vector.shape_cast %112 : vector<1x96x64xbf16> to vector<96x64xbf16>
    %114 = vector.shape_cast %111 : vector<96x64xbf16> to vector<1x96x64xbf16>
    tpu.vector_store %arg8[%c0_106, %c0_107, %c0_108], %114 {strides = array<i32>} : memref<2x96x64xbf16, #tpu.memory_space<vmem>>, vector<1x96x64xbf16>,
    %cst_109 = arith.constant 0.000000e+00 : f32
    %115 = vector.broadcast %cst_109 : f32 to vector<132x128xf32>
    %c1_110 = arith.constant 1 : index
    %c0_111 = arith.constant 0 : index
    %c0_112 = arith.constant 0 : index
    %116 = vector.load %arg1[%c1_110, %c0_111, %c0_112] : memref<2x160x192xbf16, #tpu.memory_space<vmem>>, vector<1x132x192xbf16>
    %117 = vector.shape_cast %116 : vector<1x132x192xbf16> to vector<132x192xbf16>
    %c0_113 = arith.constant 0 : index
    %c0_114 = arith.constant 0 : index
    %c0_115 = arith.constant 0 : index
    %118 = vector.load %arg2[%c0_113, %c0_114, %c0_115] : memref<4x192x128xbf16, #tpu.memory_space<vmem>>, vector<1x192x128xbf16>
    %119 = vector.shape_cast %118 : vector<1x192x128xbf16> to vector<192x128xbf16>
    %cst_116 = arith.constant dense<0.000000e+00> : vector<132x128xf32>
    %120 = tpu.matmul %117, %119, %cst_116 {dimension_numbers = #tpu.dot_dimension_numbers<[1], [0], [0], [1], [0, 0, 1, 1], [], []>} : vector<132x192xbf16>, vector<192x128xbf16>, vector<132x128xf32> -> vector<132x128xf32>
    %121 = arith.addf %115, %120 : vector<132x128xf32>
    %c1_117 = arith.constant 1 : index
    %c1_118 = arith.constant 1 : index
    %c0_119 = arith.constant 0 : index
    %122 = vector.load %arg1[%c1_117, %c1_118, %c0_119] : memref<2x160x192xbf16, #tpu.memory_space<vmem>>, vector<1x132x192xbf16>
    %123 = vector.shape_cast %122 : vector<1x132x192xbf16> to vector<132x192xbf16>
    %c1_120 = arith.constant 1 : index
    %c0_121 = arith.constant 0 : index
    %c0_122 = arith.constant 0 : index
    %124 = vector.load %arg2[%c1_120, %c0_121, %c0_122] : memref<4x192x128xbf16, #tpu.memory_space<vmem>>, vector<1x192x128xbf16>
    %125 = vector.shape_cast %124 : vector<1x192x128xbf16> to vector<192x128xbf16>
    %cst_123 = arith.constant dense<0.000000e+00> : vector<132x128xf32>
    %126 = tpu.matmul %123, %125, %cst_123 {dimension_numbers = #tpu.dot_dimension_numbers<[1], [0], [0], [1], [0, 0, 1, 1], [], []>} : vector<132x192xbf16>, vector<192x128xbf16>, vector<132x128xf32> -> vector<132x128xf32>
    %127 = arith.addf %121, %126 : vector<132x128xf32>
    %c1_124 = arith.constant 1 : index
    %c12_125 = arith.constant 12 : index
    %c0_126 = arith.constant 0 : index
    %128 = vector.load %arg1[%c1_124, %c12_125, %c0_126] : memref<2x160x192xbf16, #tpu.memory_space<vmem>>, vector<1x132x192xbf16>
    %129 = vector.shape_cast %128 : vector<1x132x192xbf16> to vector<132x192xbf16>
    %c2_127 = arith.constant 2 : index
    %c0_128 = arith.constant 0 : index
    %c0_129 = arith.constant 0 : index
    %130 = vector.load %arg2[%c2_127, %c0_128, %c0_129] : memref<4x192x128xbf16, #tpu.memory_space<vmem>>, vector<1x192x128xbf16>
    %131 = vector.shape_cast %130 : vector<1x192x128xbf16> to vector<192x128xbf16>
    %cst_130 = arith.constant dense<0.000000e+00> : vector<132x128xf32>
    %132 = tpu.matmul %129, %131, %cst_130 {dimension_numbers = #tpu.dot_dimension_numbers<[1], [0], [0], [1], [0, 0, 1, 1], [], []>} : vector<132x192xbf16>, vector<192x128xbf16>, vector<132x128xf32> -> vector<132x128xf32>
    %133 = arith.addf %127, %132 : vector<132x128xf32>
    %c1_131 = arith.constant 1 : index
    %c13_132 = arith.constant 13 : index
    %c0_133 = arith.constant 0 : index
    %134 = vector.load %arg1[%c1_131, %c13_132, %c0_133] : memref<2x160x192xbf16, #tpu.memory_space<vmem>>, vector<1x132x192xbf16>
    %135 = vector.shape_cast %134 : vector<1x132x192xbf16> to vector<132x192xbf16>
    %c3_134 = arith.constant 3 : index
    %c0_135 = arith.constant 0 : index
    %c0_136 = arith.constant 0 : index
    %136 = vector.load %arg2[%c3_134, %c0_135, %c0_136] : memref<4x192x128xbf16, #tpu.memory_space<vmem>>, vector<1x192x128xbf16>
    %137 = vector.shape_cast %136 : vector<1x192x128xbf16> to vector<192x128xbf16>
    %cst_137 = arith.constant dense<0.000000e+00> : vector<132x128xf32>
    %138 = tpu.matmul %135, %137, %cst_137 {dimension_numbers = #tpu.dot_dimension_numbers<[1], [0], [0], [1], [0, 0, 1, 1], [], []>} : vector<132x192xbf16>, vector<192x128xbf16>, vector<132x128xf32> -> vector<132x128xf32>
    %139 = arith.addf %133, %138 : vector<132x128xf32>
    %c0_138 = arith.constant 0 : index
    %c0_139 = arith.constant 0 : index
    %140 = vector.load %arg3[%c0_138, %c0_139] : memref<1x128xf32, #tpu.memory_space<vmem>>, vector<1x128xf32>
    %141 = vector.broadcast %140 : vector<1x128xf32> to vector<132x128xf32>
    %142 = arith.addf %139, %141 : vector<132x128xf32>
    %cst_140 = arith.constant 0.000000e+00 : f32
    %143 = vector.broadcast %cst_140 : f32 to vector<132x128xf32>
    %144 = arith.maximumf %142, %143 : vector<132x128xf32>
    %145 = arith.truncf %144 : vector<132x128xf32> to vector<132x128xbf16>
    %c0_141 = arith.constant 0 : index
    %c0_142 = arith.constant 0 : index
    %146 = vector.load %arg9[%c0_141, %c0_142] : memref<144x128xbf16, #tpu.memory_space<vmem>>, vector<132x128xbf16>
    tpu.vector_store %arg9[%c0_141, %c0_142], %145 {strides = array<i32>} : memref<144x128xbf16, #tpu.memory_space<vmem>>, vector<132x128xbf16>,
    %cst_143 = arith.constant 0.000000e+00 : f32
    %147 = vector.broadcast %cst_143 : f32 to vector<120x64xf32>
    %c0_144 = arith.constant 0 : index
    %c0_145 = arith.constant 0 : index
    %148 = vector.load %arg9[%c0_144, %c0_145] : memref<144x128xbf16, #tpu.memory_space<vmem>>, vector<120x128xbf16>
    %c0_146 = arith.constant 0 : index
    %c0_147 = arith.constant 0 : index
    %c0_148 = arith.constant 0 : index
    %149 = vector.load %arg4[%c0_146, %c0_147, %c0_148] : memref<4x128x64xbf16, #tpu.memory_space<vmem>>, vector<1x128x64xbf16>
    %150 = vector.shape_cast %149 : vector<1x128x64xbf16> to vector<128x64xbf16>
    %cst_149 = arith.constant dense<0.000000e+00> : vector<120x64xf32>
    %151 = tpu.matmul %148, %150, %cst_149 {dimension_numbers = #tpu.dot_dimension_numbers<[1], [0], [0], [1], [0, 0, 1, 1], [], []>} : vector<120x128xbf16>, vector<128x64xbf16>, vector<120x64xf32> -> vector<120x64xf32>
    %152 = arith.addf %147, %151 : vector<120x64xf32>
    %c1_150 = arith.constant 1 : index
    %c0_151 = arith.constant 0 : index
    %153 = vector.load %arg9[%c1_150, %c0_151] : memref<144x128xbf16, #tpu.memory_space<vmem>>, vector<120x128xbf16>
    %c1_152 = arith.constant 1 : index
    %c0_153 = arith.constant 0 : index
    %c0_154 = arith.constant 0 : index
    %154 = vector.load %arg4[%c1_152, %c0_153, %c0_154] : memref<4x128x64xbf16, #tpu.memory_space<vmem>>, vector<1x128x64xbf16>
    %155 = vector.shape_cast %154 : vector<1x128x64xbf16> to vector<128x64xbf16>
    %cst_155 = arith.constant dense<0.000000e+00> : vector<120x64xf32>
    %156 = tpu.matmul %153, %155, %cst_155 {dimension_numbers = #tpu.dot_dimension_numbers<[1], [0], [0], [1], [0, 0, 1, 1], [], []>} : vector<120x128xbf16>, vector<128x64xbf16>, vector<120x64xf32> -> vector<120x64xf32>
    %157 = arith.addf %152, %156 : vector<120x64xf32>
    %c12_156 = arith.constant 12 : index
    %c0_157 = arith.constant 0 : index
    %158 = vector.load %arg9[%c12_156, %c0_157] : memref<144x128xbf16, #tpu.memory_space<vmem>>, vector<120x128xbf16>
    %c2_158 = arith.constant 2 : index
    %c0_159 = arith.constant 0 : index
    %c0_160 = arith.constant 0 : index
    %159 = vector.load %arg4[%c2_158, %c0_159, %c0_160] : memref<4x128x64xbf16, #tpu.memory_space<vmem>>, vector<1x128x64xbf16>
    %160 = vector.shape_cast %159 : vector<1x128x64xbf16> to vector<128x64xbf16>
    %cst_161 = arith.constant dense<0.000000e+00> : vector<120x64xf32>
    %161 = tpu.matmul %158, %160, %cst_161 {dimension_numbers = #tpu.dot_dimension_numbers<[1], [0], [0], [1], [0, 0, 1, 1], [], []>} : vector<120x128xbf16>, vector<128x64xbf16>, vector<120x64xf32> -> vector<120x64xf32>
    %162 = arith.addf %157, %161 : vector<120x64xf32>
    %c13_162 = arith.constant 13 : index
    %c0_163 = arith.constant 0 : index
    %163 = vector.load %arg9[%c13_162, %c0_163] : memref<144x128xbf16, #tpu.memory_space<vmem>>, vector<120x128xbf16>
    %c3_164 = arith.constant 3 : index
    %c0_165 = arith.constant 0 : index
    %c0_166 = arith.constant 0 : index
    %164 = vector.load %arg4[%c3_164, %c0_165, %c0_166] : memref<4x128x64xbf16, #tpu.memory_space<vmem>>, vector<1x128x64xbf16>
    %165 = vector.shape_cast %164 : vector<1x128x64xbf16> to vector<128x64xbf16>
    %cst_167 = arith.constant dense<0.000000e+00> : vector<120x64xf32>
    %166 = tpu.matmul %163, %165, %cst_167 {dimension_numbers = #tpu.dot_dimension_numbers<[1], [0], [0], [1], [0, 0, 1, 1], [], []>} : vector<120x128xbf16>, vector<128x64xbf16>, vector<120x64xf32> -> vector<120x64xf32>
    %167 = arith.addf %162, %166 : vector<120x64xf32>
    %c0_168 = arith.constant 0 : index
    %c0_169 = arith.constant 0 : index
    %168 = vector.load %arg5[%c0_168, %c0_169] : memref<1x64xf32, #tpu.memory_space<vmem>>, vector<1x64xf32>
    %169 = vector.broadcast %168 : vector<1x64xf32> to vector<120x64xf32>
    %170 = arith.addf %167, %169 : vector<120x64xf32>
    %cst_170 = arith.constant 0.000000e+00 : f32
    %171 = vector.broadcast %cst_170 : f32 to vector<120x64xf32>
    %172 = arith.maximumf %170, %171 : vector<120x64xf32>
    %173 = arith.truncf %172 : vector<120x64xf32> to vector<120x64xbf16>
    %c0_171 = arith.constant 0 : index
    %c0_172 = arith.constant 0 : index
    %174 = vector.load %arg10[%c0_171, %c0_172] : memref<128x64xbf16, #tpu.memory_space<vmem>>, vector<120x64xbf16>
    tpu.vector_store %arg10[%c0_171, %c0_172], %173 {strides = array<i32>} : memref<128x64xbf16, #tpu.memory_space<vmem>>, vector<120x64xbf16>,
    %cst_173 = arith.constant 0.000000e+00 : f32
    %175 = vector.broadcast %cst_173 : f32 to vector<96x64xf32>
    %c0_174 = arith.constant 0 : index
    %c0_175 = arith.constant 0 : index
    %176 = vector.load %arg10[%c0_174, %c0_175] : memref<128x64xbf16, #tpu.memory_space<vmem>>, vector<96x64xbf16>
    %c0_176 = arith.constant 0 : index
    %c0_177 = arith.constant 0 : index
    %c0_178 = arith.constant 0 : index
    %177 = vector.load %arg6[%c0_176, %c0_177, %c0_178] : memref<9x64x64xbf16, #tpu.memory_space<vmem>>, vector<1x64x64xbf16>
    %178 = vector.shape_cast %177 : vector<1x64x64xbf16> to vector<64x64xbf16>
    %cst_179 = arith.constant dense<0.000000e+00> : vector<96x64xf32>
    %179 = tpu.matmul %176, %178, %cst_179 {dimension_numbers = #tpu.dot_dimension_numbers<[1], [0], [0], [1], [0, 0, 1, 1], [], []>} : vector<96x64xbf16>, vector<64x64xbf16>, vector<96x64xf32> -> vector<96x64xf32>
    %180 = arith.addf %175, %179 : vector<96x64xf32>
    %c1_180 = arith.constant 1 : index
    %c0_181 = arith.constant 0 : index
    %181 = vector.load %arg10[%c1_180, %c0_181] : memref<128x64xbf16, #tpu.memory_space<vmem>>, vector<96x64xbf16>
    %c1_182 = arith.constant 1 : index
    %c0_183 = arith.constant 0 : index
    %c0_184 = arith.constant 0 : index
    %182 = vector.load %arg6[%c1_182, %c0_183, %c0_184] : memref<9x64x64xbf16, #tpu.memory_space<vmem>>, vector<1x64x64xbf16>
    %183 = vector.shape_cast %182 : vector<1x64x64xbf16> to vector<64x64xbf16>
    %cst_185 = arith.constant dense<0.000000e+00> : vector<96x64xf32>
    %184 = tpu.matmul %181, %183, %cst_185 {dimension_numbers = #tpu.dot_dimension_numbers<[1], [0], [0], [1], [0, 0, 1, 1], [], []>} : vector<96x64xbf16>, vector<64x64xbf16>, vector<96x64xf32> -> vector<96x64xf32>
    %185 = arith.addf %180, %184 : vector<96x64xf32>
    %c2_186 = arith.constant 2 : index
    %c0_187 = arith.constant 0 : index
    %186 = vector.load %arg10[%c2_186, %c0_187] : memref<128x64xbf16, #tpu.memory_space<vmem>>, vector<96x64xbf16>
    %c2_188 = arith.constant 2 : index
    %c0_189 = arith.constant 0 : index
    %c0_190 = arith.constant 0 : index
    %187 = vector.load %arg6[%c2_188, %c0_189, %c0_190] : memref<9x64x64xbf16, #tpu.memory_space<vmem>>, vector<1x64x64xbf16>
    %188 = vector.shape_cast %187 : vector<1x64x64xbf16> to vector<64x64xbf16>
    %cst_191 = arith.constant dense<0.000000e+00> : vector<96x64xf32>
    %189 = tpu.matmul %186, %188, %cst_191 {dimension_numbers = #tpu.dot_dimension_numbers<[1], [0], [0], [1], [0, 0, 1, 1], [], []>} : vector<96x64xbf16>, vector<64x64xbf16>, vector<96x64xf32> -> vector<96x64xf32>
    %190 = arith.addf %185, %189 : vector<96x64xf32>
    %c12_192 = arith.constant 12 : index
    %c0_193 = arith.constant 0 : index
    %191 = vector.load %arg10[%c12_192, %c0_193] : memref<128x64xbf16, #tpu.memory_space<vmem>>, vector<96x64xbf16>
    %c3_194 = arith.constant 3 : index
    %c0_195 = arith.constant 0 : index
    %c0_196 = arith.constant 0 : index
    %192 = vector.load %arg6[%c3_194, %c0_195, %c0_196] : memref<9x64x64xbf16, #tpu.memory_space<vmem>>, vector<1x64x64xbf16>
    %193 = vector.shape_cast %192 : vector<1x64x64xbf16> to vector<64x64xbf16>
    %cst_197 = arith.constant dense<0.000000e+00> : vector<96x64xf32>
    %194 = tpu.matmul %191, %193, %cst_197 {dimension_numbers = #tpu.dot_dimension_numbers<[1], [0], [0], [1], [0, 0, 1, 1], [], []>} : vector<96x64xbf16>, vector<64x64xbf16>, vector<96x64xf32> -> vector<96x64xf32>
    %195 = arith.addf %190, %194 : vector<96x64xf32>
    %c13_198 = arith.constant 13 : index
    %c0_199 = arith.constant 0 : index
    %196 = vector.load %arg10[%c13_198, %c0_199] : memref<128x64xbf16, #tpu.memory_space<vmem>>, vector<96x64xbf16>
    %c4_200 = arith.constant 4 : index
    %c0_201 = arith.constant 0 : index
    %c0_202 = arith.constant 0 : index
    %197 = vector.load %arg6[%c4_200, %c0_201, %c0_202] : memref<9x64x64xbf16, #tpu.memory_space<vmem>>, vector<1x64x64xbf16>
    %198 = vector.shape_cast %197 : vector<1x64x64xbf16> to vector<64x64xbf16>
    %cst_203 = arith.constant dense<0.000000e+00> : vector<96x64xf32>
    %199 = tpu.matmul %196, %198, %cst_203 {dimension_numbers = #tpu.dot_dimension_numbers<[1], [0], [0], [1], [0, 0, 1, 1], [], []>} : vector<96x64xbf16>, vector<64x64xbf16>, vector<96x64xf32> -> vector<96x64xf32>
    %200 = arith.addf %195, %199 : vector<96x64xf32>
    %c14_204 = arith.constant 14 : index
    %c0_205 = arith.constant 0 : index
    %201 = vector.load %arg10[%c14_204, %c0_205] : memref<128x64xbf16, #tpu.memory_space<vmem>>, vector<96x64xbf16>
    %c5_206 = arith.constant 5 : index
    %c0_207 = arith.constant 0 : index
    %c0_208 = arith.constant 0 : index
    %202 = vector.load %arg6[%c5_206, %c0_207, %c0_208] : memref<9x64x64xbf16, #tpu.memory_space<vmem>>, vector<1x64x64xbf16>
    %203 = vector.shape_cast %202 : vector<1x64x64xbf16> to vector<64x64xbf16>
    %cst_209 = arith.constant dense<0.000000e+00> : vector<96x64xf32>
    %204 = tpu.matmul %201, %203, %cst_209 {dimension_numbers = #tpu.dot_dimension_numbers<[1], [0], [0], [1], [0, 0, 1, 1], [], []>} : vector<96x64xbf16>, vector<64x64xbf16>, vector<96x64xf32> -> vector<96x64xf32>
    %205 = arith.addf %200, %204 : vector<96x64xf32>
    %c24_210 = arith.constant 24 : index
    %c0_211 = arith.constant 0 : index
    %206 = vector.load %arg10[%c24_210, %c0_211] : memref<128x64xbf16, #tpu.memory_space<vmem>>, vector<96x64xbf16>
    %c6_212 = arith.constant 6 : index
    %c0_213 = arith.constant 0 : index
    %c0_214 = arith.constant 0 : index
    %207 = vector.load %arg6[%c6_212, %c0_213, %c0_214] : memref<9x64x64xbf16, #tpu.memory_space<vmem>>, vector<1x64x64xbf16>
    %208 = vector.shape_cast %207 : vector<1x64x64xbf16> to vector<64x64xbf16>
    %cst_215 = arith.constant dense<0.000000e+00> : vector<96x64xf32>
    %209 = tpu.matmul %206, %208, %cst_215 {dimension_numbers = #tpu.dot_dimension_numbers<[1], [0], [0], [1], [0, 0, 1, 1], [], []>} : vector<96x64xbf16>, vector<64x64xbf16>, vector<96x64xf32> -> vector<96x64xf32>
    %210 = arith.addf %205, %209 : vector<96x64xf32>
    %c25_216 = arith.constant 25 : index
    %c0_217 = arith.constant 0 : index
    %211 = vector.load %arg10[%c25_216, %c0_217] : memref<128x64xbf16, #tpu.memory_space<vmem>>, vector<96x64xbf16>
    %c7_218 = arith.constant 7 : index
    %c0_219 = arith.constant 0 : index
    %c0_220 = arith.constant 0 : index
    %212 = vector.load %arg6[%c7_218, %c0_219, %c0_220] : memref<9x64x64xbf16, #tpu.memory_space<vmem>>, vector<1x64x64xbf16>
    %213 = vector.shape_cast %212 : vector<1x64x64xbf16> to vector<64x64xbf16>
    %cst_221 = arith.constant dense<0.000000e+00> : vector<96x64xf32>
    %214 = tpu.matmul %211, %213, %cst_221 {dimension_numbers = #tpu.dot_dimension_numbers<[1], [0], [0], [1], [0, 0, 1, 1], [], []>} : vector<96x64xbf16>, vector<64x64xbf16>, vector<96x64xf32> -> vector<96x64xf32>
    %215 = arith.addf %210, %214 : vector<96x64xf32>
    %c26_222 = arith.constant 26 : index
    %c0_223 = arith.constant 0 : index
    %216 = vector.load %arg10[%c26_222, %c0_223] : memref<128x64xbf16, #tpu.memory_space<vmem>>, vector<96x64xbf16>
    %c8_224 = arith.constant 8 : index
    %c0_225 = arith.constant 0 : index
    %c0_226 = arith.constant 0 : index
    %217 = vector.load %arg6[%c8_224, %c0_225, %c0_226] : memref<9x64x64xbf16, #tpu.memory_space<vmem>>, vector<1x64x64xbf16>
    %218 = vector.shape_cast %217 : vector<1x64x64xbf16> to vector<64x64xbf16>
    %cst_227 = arith.constant dense<0.000000e+00> : vector<96x64xf32>
    %219 = tpu.matmul %216, %218, %cst_227 {dimension_numbers = #tpu.dot_dimension_numbers<[1], [0], [0], [1], [0, 0, 1, 1], [], []>} : vector<96x64xbf16>, vector<64x64xbf16>, vector<96x64xf32> -> vector<96x64xf32>
    %220 = arith.addf %215, %219 : vector<96x64xf32>
    %c0_228 = arith.constant 0 : index
    %c0_229 = arith.constant 0 : index
    %221 = vector.load %arg7[%c0_228, %c0_229] : memref<1x64xf32, #tpu.memory_space<vmem>>, vector<1x64xf32>
    %222 = vector.broadcast %221 : vector<1x64xf32> to vector<96x64xf32>
    %223 = arith.addf %220, %222 : vector<96x64xf32>
    %cst_230 = arith.constant 0.000000e+00 : f32
    %224 = vector.broadcast %cst_230 : f32 to vector<96x64xf32>
    %225 = arith.maximumf %223, %224 : vector<96x64xf32>
    %226 = arith.truncf %225 : vector<96x64xf32> to vector<96x64xbf16>
    %c1_231 = arith.constant 1 : index
    %c0_232 = arith.constant 0 : index
    %c0_233 = arith.constant 0 : index
    %227 = vector.load %arg8[%c1_231, %c0_232, %c0_233] : memref<2x96x64xbf16, #tpu.memory_space<vmem>>, vector<1x96x64xbf16>
    %228 = vector.shape_cast %227 : vector<1x96x64xbf16> to vector<96x64xbf16>
    %229 = vector.shape_cast %226 : vector<96x64xbf16> to vector<1x96x64xbf16>
    tpu.vector_store %arg8[%c1_231, %c0_232, %c0_233], %229 {strides = array<i32>} : memref<2x96x64xbf16, #tpu.memory_space<vmem>>, vector<1x96x64xbf16>,
    return
  }
  func.func @transform_0(%arg0: i32) -> (i32, i32, i32) {
    %c0_i32 = arith.constant 0 : i32
    %c0_i32_0 = arith.constant 0 : i32
    %c0_i32_1 = arith.constant 0 : i32
    return %arg0, %c0_i32, %c0_i32_0 : i32, i32, i32
  }
  func.func @transform_1(%arg0: i32) -> (i32, i32, i32) {
    %c0_i32 = arith.constant 0 : i32
    %c0_i32_0 = arith.constant 0 : i32
    %c0_i32_1 = arith.constant 0 : i32
    %c0_i32_2 = arith.constant 0 : i32
    return %c0_i32, %c0_i32_0, %c0_i32_1 : i32, i32, i32
  }
  func.func @transform_2(%arg0: i32) -> (i32, i32) {
    %c0_i32 = arith.constant 0 : i32
    %c0_i32_0 = arith.constant 0 : i32
    %c0_i32_1 = arith.constant 0 : i32
    return %c0_i32, %c0_i32_0 : i32, i32
  }
  func.func @transform_3(%arg0: i32) -> (i32, i32, i32) {
    %c0_i32 = arith.constant 0 : i32
    %c0_i32_0 = arith.constant 0 : i32
    %c0_i32_1 = arith.constant 0 : i32
    %c0_i32_2 = arith.constant 0 : i32
    return %c0_i32, %c0_i32_0, %c0_i32_1 : i32, i32, i32
  }
  func.func @transform_4(%arg0: i32) -> (i32, i32) {
    %c0_i32 = arith.constant 0 : i32
    %c0_i32_0 = arith.constant 0 : i32
    %c0_i32_1 = arith.constant 0 : i32
    return %c0_i32, %c0_i32_0 : i32, i32
  }
  func.func @transform_5(%arg0: i32) -> (i32, i32, i32) {
    %c0_i32 = arith.constant 0 : i32
    %c0_i32_0 = arith.constant 0 : i32
    %c0_i32_1 = arith.constant 0 : i32
    %c0_i32_2 = arith.constant 0 : i32
    return %c0_i32, %c0_i32_0, %c0_i32_1 : i32, i32, i32
  }
  func.func @transform_6(%arg0: i32) -> (i32, i32) {
    %c0_i32 = arith.constant 0 : i32
    %c0_i32_0 = arith.constant 0 : i32
    %c0_i32_1 = arith.constant 0 : i32
    return %c0_i32, %c0_i32_0 : i32, i32
  }
  func.func @transform_7(%arg0: i32) -> (i32, i32, i32) {
    %c0_i32 = arith.constant 0 : i32
    %c0_i32_0 = arith.constant 0 : i32
    %c0_i32_1 = arith.constant 0 : i32
    return %arg0, %c0_i32, %c0_i32_0 : i32, i32, i32
  }
}

module attributes {stable_mosaic.version = 11 : i64} {
  func.func @_dueling_head_kernel(%arg0: i32, %arg1: memref<2x4096xbf16, #tpu.memory_space<vmem>>, %arg2: memref<4096x256xbf16, #tpu.memory_space<vmem>>, %arg3: memref<1x256xf32, #tpu.memory_space<vmem>>, %arg4: memref<256x128xbf16, #tpu.memory_space<vmem>>, %arg5: memref<1x128xf32, #tpu.memory_space<vmem>>, %arg6: memref<2x128xf32, #tpu.memory_space<vmem>>) attributes {dimension_semantics = [#tpu.dimension_semantics<parallel>], iteration_bounds = array<i64: 1>, scalar_prefetch = 0 : i64, scratch_operands = 0 : i64, tpu.core_type = #tpu.core_type<tc>, window_params = [{transform_indices = @transform_0, window_bounds = array<i64: 2, 4096>}, {pipeline_mode = #tpu.pipeline_mode<synchronous>, transform_indices = @transform_1, window_bounds = array<i64: 4096, 256>}, {pipeline_mode = #tpu.pipeline_mode<synchronous>, transform_indices = @transform_2, window_bounds = array<i64: 1, 256>}, {pipeline_mode = #tpu.pipeline_mode<synchronous>, transform_indices = @transform_3, window_bounds = array<i64: 256, 128>}, {pipeline_mode = #tpu.pipeline_mode<synchronous>, transform_indices = @transform_4, window_bounds = array<i64: 1, 128>}, {transform_indices = @transform_5, window_bounds = array<i64: 2, 128>}]} {
    %c0 = arith.constant 0 : index
    %c0_0 = arith.constant 0 : index
    %0 = vector.load %arg1[%c0, %c0_0] : memref<2x4096xbf16, #tpu.memory_space<vmem>>, vector<2x4096xbf16>
    %c0_1 = arith.constant 0 : index
    %c0_2 = arith.constant 0 : index
    %1 = vector.load %arg2[%c0_1, %c0_2] : memref<4096x256xbf16, #tpu.memory_space<vmem>>, vector<4096x256xbf16>
    %cst = arith.constant dense<0.000000e+00> : vector<2x256xf32>
    %2 = tpu.matmul %0, %1, %cst {dimension_numbers = #tpu.dot_dimension_numbers<[1], [0], [0], [1], [0, 0, 1, 1], [], []>} : vector<2x4096xbf16>, vector<4096x256xbf16>, vector<2x256xf32> -> vector<2x256xf32>
    %c0_3 = arith.constant 0 : index
    %c0_4 = arith.constant 0 : index
    %3 = vector.load %arg3[%c0_3, %c0_4] : memref<1x256xf32, #tpu.memory_space<vmem>>, vector<1x256xf32>
    %4 = vector.broadcast %3 : vector<1x256xf32> to vector<2x256xf32>
    %5 = arith.addf %2, %4 : vector<2x256xf32>
    %cst_5 = arith.constant 0.000000e+00 : f32
    %6 = vector.broadcast %cst_5 : f32 to vector<2x256xf32>
    %7 = arith.maximumf %5, %6 : vector<2x256xf32>
    %8 = arith.truncf %7 : vector<2x256xf32> to vector<2x256xbf16>
    %c0_6 = arith.constant 0 : index
    %c0_7 = arith.constant 0 : index
    %9 = vector.load %arg4[%c0_6, %c0_7] : memref<256x128xbf16, #tpu.memory_space<vmem>>, vector<256x128xbf16>
    %cst_8 = arith.constant dense<0.000000e+00> : vector<2x128xf32>
    %10 = tpu.matmul %8, %9, %cst_8 {dimension_numbers = #tpu.dot_dimension_numbers<[1], [0], [0], [1], [0, 0, 1, 1], [], []>} : vector<2x256xbf16>, vector<256x128xbf16>, vector<2x128xf32> -> vector<2x128xf32>
    %c0_9 = arith.constant 0 : index
    %c0_10 = arith.constant 0 : index
    %11 = vector.load %arg5[%c0_9, %c0_10] : memref<1x128xf32, #tpu.memory_space<vmem>>, vector<1x128xf32>
    %12 = vector.broadcast %11 : vector<1x128xf32> to vector<2x128xf32>
    %13 = arith.addf %10, %12 : vector<2x128xf32>
    %c0_11 = arith.constant 0 : index
    %c0_12 = arith.constant 0 : index
    %14 = vector.load %arg6[%c0_11, %c0_12] : memref<2x128xf32, #tpu.memory_space<vmem>>, vector<2x128xf32>
    tpu.vector_store %arg6[%c0_11, %c0_12], %13 {strides = array<i32>} : memref<2x128xf32, #tpu.memory_space<vmem>>, vector<2x128xf32>,
    return
  }
  func.func @transform_0(%arg0: i32) -> (i32, i32) {
    %c0_i32 = arith.constant 0 : i32
    %c0_i32_0 = arith.constant 0 : i32
    return %arg0, %c0_i32 : i32, i32
  }
  func.func @transform_1(%arg0: i32) -> (i32, i32) {
    %c0_i32 = arith.constant 0 : i32
    %c0_i32_0 = arith.constant 0 : i32
    %c0_i32_1 = arith.constant 0 : i32
    return %c0_i32, %c0_i32_0 : i32, i32
  }
  func.func @transform_2(%arg0: i32) -> (i32, i32) {
    %c0_i32 = arith.constant 0 : i32
    %c0_i32_0 = arith.constant 0 : i32
    %c0_i32_1 = arith.constant 0 : i32
    return %c0_i32, %c0_i32_0 : i32, i32
  }
  func.func @transform_3(%arg0: i32) -> (i32, i32) {
    %c0_i32 = arith.constant 0 : i32
    %c0_i32_0 = arith.constant 0 : i32
    %c0_i32_1 = arith.constant 0 : i32
    return %c0_i32, %c0_i32_0 : i32, i32
  }
  func.func @transform_4(%arg0: i32) -> (i32, i32) {
    %c0_i32 = arith.constant 0 : i32
    %c0_i32_0 = arith.constant 0 : i32
    %c0_i32_1 = arith.constant 0 : i32
    return %c0_i32, %c0_i32_0 : i32, i32
  }
  func.func @transform_5(%arg0: i32) -> (i32, i32) {
    %c0_i32 = arith.constant 0 : i32
    %c0_i32_0 = arith.constant 0 : i32
    return %arg0, %c0_i32 : i32, i32
  }
}

</mosaic_0001>

<llo_original>
// kernel: dueling_dqn_forward.2
$region0: #{dueling_dqn_forward.2}
  #allocation0 [shape = 'u32[]', space=smem, size = 0x4, offset = 0x4, fixed_abs, tag = 'smem constant byte address 0x4 - core index']
  #allocation1 [shape = 'u32[144,128]{1,0:T(1,128)}', space=vmem, size = 0x12000, scoped, tag = 'internal scratch']
  #allocation2 [shape = 'bf16[144,128]{1,0:T(16,128)(2,1)}', space=vmem, size = 0x9000, scoped, tag = 'scratch operand']
  #allocation3 [shape = 'bf16[128,64]{1,0:T(16,128)(2,1)}', space=vmem, size = 0x8000, scoped, tag = 'scratch operand']
  %s0 = inlined_call_operand.vmem [shape: bf16[2,160,192], index: 0, kind: input, shape index: {}]
  %s1 = inlined_call_operand.vmem [shape: bf16[4,192,128], index: 1, kind: input, shape index: {}]
  %s2 = inlined_call_operand.vmem [shape: f32[1,128], index: 2, kind: input, shape index: {}]
  %s3 = inlined_call_operand.vmem [shape: bf16[4,128,64], index: 3, kind: input, shape index: {}]
  %s4 = inlined_call_operand.vmem [shape: f32[1,64], index: 4, kind: input, shape index: {}]
  %s5 = inlined_call_operand.vmem [shape: bf16[9,64,64], index: 5, kind: input, shape index: {}]
  %s6 = inlined_call_operand.vmem [shape: f32[1,64], index: 6, kind: input, shape index: {}]
  %s7 = inlined_call_operand.vmem [shape: bf16[2,96,64], index: 7, kind: output, shape index: {}]
  %s8 = sld [smem:[#allocation0]]
  $region38: #{dueling_dqn_forward.2} parent=0
    _
  %s10 = ssub.s32 1, %s8
  %s11 = scalar_select 0, %s10, %s8
  // Predicated region
  $region2: #{dueling_dqn_forward.2} parent=0 // pred_check
    _
  $region3: #{dueling_dqn_forward.2} parent=0 // pred_check_branch
    %13 = sbr.rel (0) target = $region5
  $region4: #{dueling_dqn_forward.2} parent=0 // pred_region
    _
  $region5: #{dueling_dqn_forward.2} parent=0 // pred_fallthru
    _
  // Predicated region
  $region6: #{dueling_dqn_forward.2} parent=0 // pred_check
    _
  $region7: #{dueling_dqn_forward.2} parent=0 // pred_check_branch
    %15 = sbr.rel (0) target = $region9
  $region8: #{dueling_dqn_forward.2} parent=0 // pred_region
    _
  $region9: #{dueling_dqn_forward.2} parent=0 // pred_fallthru
    _
  // Predicated region
  $region10: #{dueling_dqn_forward.2} parent=0 // pred_check
    _
  $region11: #{dueling_dqn_forward.2} parent=0 // pred_check_branch
    %17 = sbr.rel (0) target = $region13
  $region12: #{dueling_dqn_forward.2} parent=0 // pred_region
    _
  $region13: #{dueling_dqn_forward.2} parent=0 // pred_fallthru
    _
  // Predicated region
  $region14: #{dueling_dqn_forward.2} parent=0 // pred_check
    _
  $region15: #{dueling_dqn_forward.2} parent=0 // pred_check_branch
    %19 = sbr.rel (0) target = $region17
  $region16: #{dueling_dqn_forward.2} parent=0 // pred_region
    _
  $region17: #{dueling_dqn_forward.2} parent=0 // pred_fallthru
    _
  // Predicated region
  $region18: #{dueling_dqn_forward.2} parent=0 // pred_check
    _
  $region19: #{dueling_dqn_forward.2} parent=0 // pred_check_branch
    %21 = sbr.rel (0) target = $region21
  $region20: #{dueling_dqn_forward.2} parent=0 // pred_region
    _
  $region21: #{dueling_dqn_forward.2} parent=0 // pred_fallthru
    _
  // Predicated region
  $region22: #{dueling_dqn_forward.2} parent=0 // pred_check
    _
  $region23: #{dueling_dqn_forward.2} parent=0 // pred_check_branch
    %23 = sbr.rel (0) target = $region25
  $region24: #{dueling_dqn_forward.2} parent=0 // pred_region
    _
  $region25: #{dueling_dqn_forward.2} parent=0 // pred_fallthru
    _
  // Predicated region
  $region26: #{dueling_dqn_forward.2} parent=0 // pred_check
    _
  $region27: #{dueling_dqn_forward.2} parent=0 // pred_check_branch
    %25 = sbr.rel (0) target = $region29
  $region28: #{dueling_dqn_forward.2} parent=0 // pred_region
    _
  $region29: #{dueling_dqn_forward.2} parent=0 // pred_fallthru
    _
  %v27 = vld [vmem:[%s0] sm:$0xff]
  %v28 = vld [vmem:[%s0 + $0x8] sm:$0xff]
  %v29 = vld [vmem:[%s0 + $0x10] sm:$0xff]
  %v30 = vld [vmem:[%s0 + $0x18] sm:$0xff]
  %v31 = vld [vmem:[%s0 + $0x20] sm:$0xff]
  %v32 = vld [vmem:[%s0 + $0x28] sm:$0xff]
  %v33 = vld [vmem:[%s0 + $0x30] sm:$0xff]
  %v34 = vld [vmem:[%s0 + $0x38] sm:$0xff]
  %v35 = vld [vmem:[%s0 + $0x40] sm:$0xff]
  %v36 = vld [vmem:[%s0 + $0x48] sm:$0xff]
  %v37 = vld [vmem:[%s0 + $0x50] sm:$0xff]
  %v38 = vld [vmem:[%s0 + $0x58] sm:$0xff]
  %v39 = vld [vmem:[%s0 + $0x60] sm:$0xff]
  %v40 = vld [vmem:[%s0 + $0x68] sm:$0xff]
  %v41 = vld [vmem:[%s0 + $0x70] sm:$0xff]
  %v42 = vld [vmem:[%s0 + $0x78] sm:$0xff]
  %v43 = vld [vmem:[%s0 + $0x80] sm:$0x33]
  %v44 = vld [vmem:[%s1] sm:$0xf]
  %v45 = vld [vmem:[%s1 + $0x4] sm:$0xf]
  %v46 = vld [vmem:[%s1 + $0x8] sm:$0xf]
  %v47 = vld [vmem:[%s1 + $0xc] sm:$0xf]
  %v48 = vld [vmem:[%s1 + $0x10] sm:$0xf]
  %v49 = vld [vmem:[%s1 + $0x14] sm:$0xf]
  %v50 = vld [vmem:[%s1 + $0x18] sm:$0xf]
  %v51 = vld [vmem:[%s1 + $0x1c] sm:$0xf]
  %v52 = vld [vmem:[%s1 + $0x20] sm:$0xf]
  %v53 = vld [vmem:[%s1 + $0x24] sm:$0xf]
  %v54 = vld [vmem:[%s1 + $0x28] sm:$0xf]
  %v55 = vld [vmem:[%s1 + $0x2c] sm:$0xf]
  %v56 = vld [vmem:[%s1 + $0x30] sm:$0xf]
  %v57 = vld [vmem:[%s1 + $0x34] sm:$0xf]
  %v58 = vld [vmem:[%s1 + $0x38] sm:$0xf]
  %v59 = vld [vmem:[%s1 + $0x3c] sm:$0xf]
  %v60 = vld [vmem:[%s1 + $0x40] sm:$0xf]
  %v61 = vld [vmem:[%s1 + $0x44] sm:$0xf]
  %v62 = vld [vmem:[%s1 + $0x48] sm:$0xf]
  %v63 = vld [vmem:[%s1 + $0x4c] sm:$0xf]
  %v64 = vld [vmem:[%s1 + $0x50] sm:$0xf]
  %v65 = vld [vmem:[%s1 + $0x54] sm:$0xf]
  %v66 = vld [vmem:[%s1 + $0x58] sm:$0xf]
  %v67 = vld [vmem:[%s1 + $0x5c] sm:$0xf]
  %v68 = vld [vmem:[%s0 + $0x80] sm:$0x77]
  %s69 = scalar_lea.vmem %s1, 96
  %v70 = vld [vmem:[%s69] sm:$0xf]
  %v71 = vld [vmem:[%s69 + $0x4] sm:$0xf]
  %v72 = vld [vmem:[%s69 + $0x8] sm:$0xf]
  %v73 = vld [vmem:[%s69 + $0xc] sm:$0xf]
  %v74 = vld [vmem:[%s69 + $0x10] sm:$0xf]
  %v75 = vld [vmem:[%s69 + $0x14] sm:$0xf]
  %v76 = vld [vmem:[%s69 + $0x18] sm:$0xf]
  %v77 = vld [vmem:[%s69 + $0x1c] sm:$0xf]
  %v78 = vld [vmem:[%s69 + $0x20] sm:$0xf]
  %v79 = vld [vmem:[%s69 + $0x24] sm:$0xf]
  %v80 = vld [vmem:[%s69 + $0x28] sm:$0xf]
  %v81 = vld [vmem:[%s69 + $0x2c] sm:$0xf]
  %v82 = vld [vmem:[%s69 + $0x30] sm:$0xf]
  %v83 = vld [vmem:[%s69 + $0x34] sm:$0xf]
  %v84 = vld [vmem:[%s69 + $0x38] sm:$0xf]
  %v85 = vld [vmem:[%s69 + $0x3c] sm:$0xf]
  %v86 = vld [vmem:[%s69 + $0x40] sm:$0xf]
  %v87 = vld [vmem:[%s69 + $0x44] sm:$0xf]
  %v88 = vld [vmem:[%s69 + $0x48] sm:$0xf]
  %v89 = vld [vmem:[%s69 + $0x4c] sm:$0xf]
  %v90 = vld [vmem:[%s69 + $0x50] sm:$0xf]
  %v91 = vld [vmem:[%s69 + $0x54] sm:$0xf]
  %v92 = vld [vmem:[%s69 + $0x58] sm:$0xf]
  %v93 = vld [vmem:[%s69 + $0x5c] sm:$0xf]
  %v111 = vunpack.c.l.b16 %v27
  %v112 = vunpack.c.h.b16 %v27
  %v113 = vunpack.c.l.b16 %v28
  %v114 = vunpack.c.h.b16 %v28
  %v115 = vunpack.c.l.b16 %v29
  %v116 = vunpack.c.h.b16 %v29
  %v117 = vunpack.c.l.b16 %v30
  %v118 = vunpack.c.h.b16 %v30
  %v119 = vunpack.c.l.b16 %v31
  %v120 = vunpack.c.h.b16 %v31
  %v121 = vunpack.c.l.b16 %v32
  %v122 = vunpack.c.h.b16 %v32
  %v123 = vunpack.c.l.b16 %v33
  %v124 = vunpack.c.h.b16 %v33
  %v125 = vunpack.c.l.b16 %v34
  %v126 = vunpack.c.h.b16 %v34
  %v127 = vunpack.c.l.b16 %v35
  %v128 = vunpack.c.h.b16 %v35
  %v129 = vunpack.c.l.b16 %v36
  %v130 = vunpack.c.h.b16 %v36
  %v131 = vunpack.c.l.b16 %v37
  %v132 = vunpack.c.h.b16 %v37
  %v133 = vunpack.c.l.b16 %v38
  %v134 = vunpack.c.h.b16 %v38
  %v135 = vunpack.c.l.b16 %v39
  %v136 = vunpack.c.h.b16 %v39
  %v137 = vunpack.c.l.b16 %v40
  %v138 = vunpack.c.h.b16 %v40
  %v139 = vunpack.c.l.b16 %v41
  %v140 = vunpack.c.h.b16 %v41
  %v141 = vunpack.c.l.b16 %v42
  %v142 = vunpack.c.h.b16 %v42
  %v143 = vunpack.c.l.b16 %v68
  %v144 = vunpack.c.h.b16 %v68
  %v145 = vpack.c.b16 %v113, %v111
  %v146 = vpack.c.b16 %v114, %v112
  %v147 = vpack.c.b16 %v117, %v115
  %v148 = vpack.c.b16 %v118, %v116
  %v149 = vpack.c.b16 %v121, %v119
  %v150 = vpack.c.b16 %v122, %v120
  %v151 = vpack.c.b16 %v125, %v123
  %v152 = vpack.c.b16 %v126, %v124
  %v153 = vpack.c.b16 %v129, %v127
  %v154 = vpack.c.b16 %v130, %v128
  %v155 = vpack.c.b16 %v133, %v131
  %v156 = vpack.c.b16 %v134, %v132
  %v157 = vpack.c.b16 %v137, %v135
  %v158 = vpack.c.b16 %v138, %v136
  %v159 = vpack.c.b16 %v141, %v139
  %v160 = vpack.c.b16 %v142, %v140
  %v161 = vpack.c.b16 %v143, %v143
  %v162 = vpack.c.b16 %v144, %v144
  %vm163 = vsmask.f32 7424
  %v165 = vshrl.u32 %v145, 16
  %v167 = vshll.u32 %v145, 16
  %v169 = vrot.slane %v167, 1
  %v170 = vor.u32 %v165, %v169
  %v172 = vshll.u32 %v147, 16
  %v174 = vrot.slane %v172, 1
  %v175 = vsel %vm163, %v170, %v174
  %v177 = vshrl.u32 %v146, 16
  %v179 = vshll.u32 %v146, 16
  %v181 = vrot.slane %v179, 1
  %v182 = vor.u32 %v177, %v181
  %v184 = vshll.u32 %v148, 16
  %v186 = vrot.slane %v184, 1
  %v187 = vsel %vm163, %v182, %v186
  %v188 = vshrl.u32 %v147, 16
  %v190 = vor.u32 %v188, %v174
  %v192 = vshll.u32 %v149, 16
  %v194 = vrot.slane %v192, 1
  %v195 = vsel %vm163, %v190, %v194
  %v196 = vshrl.u32 %v148, 16
  %v198 = vor.u32 %v196, %v186
  %v200 = vshll.u32 %v150, 16
  %v202 = vrot.slane %v200, 1
  %v203 = vsel %vm163, %v198, %v202
  %v204 = vshrl.u32 %v149, 16
  %v206 = vor.u32 %v204, %v194
  %v208 = vshll.u32 %v151, 16
  %v210 = vrot.slane %v208, 1
  %v211 = vsel %vm163, %v206, %v210
  %v212 = vshrl.u32 %v150, 16
  %v214 = vor.u32 %v212, %v202
  %v216 = vshll.u32 %v152, 16
  %v218 = vrot.slane %v216, 1
  %v219 = vsel %vm163, %v214, %v218
  %v220 = vshrl.u32 %v151, 16
  %v222 = vor.u32 %v220, %v210
  %v224 = vshll.u32 %v153, 16
  %v226 = vrot.slane %v224, 1
  %v227 = vsel %vm163, %v222, %v226
  %v228 = vshrl.u32 %v152, 16
  %v230 = vor.u32 %v228, %v218
  %v232 = vshll.u32 %v154, 16
  %v234 = vrot.slane %v232, 1
  %v235 = vsel %vm163, %v230, %v234
  %v236 = vshrl.u32 %v153, 16
  %v238 = vor.u32 %v236, %v226
  %v240 = vshll.u32 %v155, 16
  %v242 = vrot.slane %v240, 1
  %v243 = vsel %vm163, %v238, %v242
  %v244 = vshrl.u32 %v154, 16
  %v246 = vor.u32 %v244, %v234
  %v248 = vshll.u32 %v156, 16
  %v250 = vrot.slane %v248, 1
  %v251 = vsel %vm163, %v246, %v250
  %v252 = vshrl.u32 %v155, 16
  %v254 = vor.u32 %v252, %v242
  %v256 = vshll.u32 %v157, 16
  %v258 = vrot.slane %v256, 1
  %v259 = vsel %vm163, %v254, %v258
  %v260 = vshrl.u32 %v156, 16
  %v262 = vor.u32 %v260, %v250
  %v264 = vshll.u32 %v158, 16
  %v266 = vrot.slane %v264, 1
  %v267 = vsel %vm163, %v262, %v266
  %v268 = vshrl.u32 %v157, 16
  %v270 = vor.u32 %v268, %v258
  %v272 = vshll.u32 %v159, 16
  %v274 = vrot.slane %v272, 1
  %v275 = vsel %vm163, %v270, %v274
  %v276 = vshrl.u32 %v158, 16
  %v278 = vor.u32 %v276, %v266
  %v280 = vshll.u32 %v160, 16
  %v282 = vrot.slane %v280, 1
  %v283 = vsel %vm163, %v278, %v282
  %v284 = vshrl.u32 %v159, 16
  %v286 = vor.u32 %v284, %v274
  %v288 = vshll.u32 %v161, 16
  %v290 = vrot.slane %v288, 1
  %v291 = vsel %vm163, %v286, %v290
  %v292 = vshrl.u32 %v160, 16
  %v294 = vor.u32 %v292, %v282
  %v296 = vshll.u32 %v162, 16
  %v298 = vrot.slane %v296, 1
  %v299 = vsel %vm163, %v294, %v298
  %v300 = vshrl.u32 %v161, 16
  %v302 = vor.u32 %v300, %v290
  %v303 = vshrl.u32 %v162, 16
  %v305 = vor.u32 %v303, %v298
  %v339 = vunpack.c.l.b16 %v70
  %v340 = vunpack.c.l.b16 %v71
  %v341 = vunpack.c.l.b16 %v72
  %v342 = vunpack.c.l.b16 %v73
  %v343 = vunpack.c.l.b16 %v74
  %v344 = vunpack.c.l.b16 %v75
  %v345 = vunpack.c.l.b16 %v76
  %v346 = vunpack.c.l.b16 %v77
  %v347 = vunpack.c.l.b16 %v78
  %v348 = vunpack.c.l.b16 %v79
  %v349 = vunpack.c.l.b16 %v80
  %v350 = vunpack.c.l.b16 %v81
  %v351 = vunpack.c.l.b16 %v82
  %v352 = vunpack.c.l.b16 %v83
  %v353 = vunpack.c.l.b16 %v84
  %v354 = vunpack.c.l.b16 %v85
  %v355 = vunpack.c.l.b16 %v86
  %v356 = vunpack.c.l.b16 %v87
  %v357 = vunpack.c.l.b16 %v88
  %v358 = vunpack.c.l.b16 %v89
  %v359 = vunpack.c.l.b16 %v90
  %v360 = vunpack.c.l.b16 %v91
  %v361 = vunpack.c.l.b16 %v92
  %v362 = vunpack.c.l.b16 %v93
  %v363 = vpack.c.b16 %v340, %v339
  %v364 = vpack.c.b16 %v342, %v341
  %v365 = vpack.c.b16 %v344, %v343
  %v366 = vpack.c.b16 %v346, %v345
  %v367 = vpack.c.b16 %v348, %v347
  %v368 = vpack.c.b16 %v350, %v349
  %v369 = vpack.c.b16 %v352, %v351
  %v370 = vpack.c.b16 %v354, %v353
  %v371 = vpack.c.b16 %v356, %v355
  %v372 = vpack.c.b16 %v358, %v357
  %v373 = vpack.c.b16 %v360, %v359
  %v374 = vpack.c.b16 %v362, %v361
  %vm387 = vcmask 523264
  %v389 = vsel %vm387, %v187, 0
  %v392 = vsel %vm387, %v203, 0
  %v395 = vsel %vm387, %v219, 0
  %v398 = vsel %vm387, %v235, 0
  %v401 = vsel %vm387, %v251, 0
  %v404 = vsel %vm387, %v267, 0
  %v407 = vsel %vm387, %v283, 0
  %v410 = vsel %vm387, %v299, 0
  %v413 = vsel %vm387, %v305, 0
  %415 = vmatprep.subr.bf16.mxu0 0
  %416 = vmatpush1.bf16.msra.mxu0 %v363
  %417 = vmatprep.subr.bf16.mxu0 0
  %418 = vmatpush1.bf16.msra.mxu0 %v364
  %419 = vmatprep.subr.bf16.mxu0 0
  %420 = vmatpush1.bf16.msra.mxu0 %v365
  %421 = vmatprep.subr.bf16.mxu0 0
  %422 = vmatpush1.bf16.msra.mxu0 %v366
  %423 = vmatprep.subr.bf16.mxu0 0
  %424 = vmatpush1.bf16.msra.mxu0 %v367
  %425 = vmatprep.subr.bf16.mxu0 0
  %426 = vmatpush1.bf16.msra.mxu0 %v368
  %427 = vmatprep.subr.bf16.mxu0 0
  %428 = vmatpush1.bf16.msra.mxu0 %v369
  %429 = vmatprep.subr.bf16.mxu0 0
  %430 = vmatpush1.bf16.msra.mxu0 %v370
  %431 = vmatprep.subr.bf16.mxu0 0
  %432 = vmatpush1.bf16.msra.mxu0 %v371
  %433 = vmatprep.subr.bf16.mxu0 0
  %434 = vmatpush1.bf16.msra.mxu0 %v372
  %435 = vmatprep.subr.bf16.mxu0 0
  %436 = vmatpush1.bf16.msra.mxu0 %v373
  %437 = vmatprep.subr.bf16.mxu0 0
  %438 = vmatpush1.bf16.msra.mxu0 %v374
  %439 = vmatprep.subr.bf16.mxu0 0
  %440 = vmatpush1.bf16.msra.mxu0 0
  %441 = vmatprep.subr.bf16.mxu0 0
  %442 = vmatpush1.bf16.msra.mxu0 0
  %443 = vmatprep.subr.bf16.mxu0 0
  %444 = vmatpush1.bf16.msra.mxu0 0
  %445 = vmatprep.subr.bf16.mxu0 0
  %446 = vmatpush1.bf16.msra.mxu0 0
  %447 = vmatprep.mubr.bf16.mxu0 %v389
  %448 = vmatmul.mubr.bf16.gmra.mrb[0].mxu0 %v175
  %v449 = vpop.f32.mrb[0].mxu0
  %v450 = vadd.f32 0.0, %v449
  %v451 = vpop.f32.mrb[0].mxu0
  %v452 = vpop.f32.mrb[0].mxu0
  %v453 = vadd.f32 0.0, %v452
  %v454 = vpop.f32.mrb[0].mxu0
  %455 = vmatprep.mubr.bf16.mxu0 %v392
  %456 = vmatmul.mubr.bf16.gmra.mrb[0].mxu0 %v195
  %v457 = vpop.f32.mrb[0].mxu0
  %v458 = vadd.f32 0.0, %v457
  %v459 = vpop.f32.mrb[0].mxu0
  %v460 = vpop.f32.mrb[0].mxu0
  %v461 = vadd.f32 0.0, %v460
  %v462 = vpop.f32.mrb[0].mxu0
  %463 = vmatprep.mubr.bf16.mxu0 %v395
  %464 = vmatmul.mubr.bf16.gmra.mrb[0].mxu0 %v211
  %v465 = vpop.f32.mrb[0].mxu0
  %v466 = vadd.f32 0.0, %v465
  %v467 = vpop.f32.mrb[0].mxu0
  %v468 = vpop.f32.mrb[0].mxu0
  %v469 = vadd.f32 0.0, %v468
  %v470 = vpop.f32.mrb[0].mxu0
  %471 = vmatprep.mubr.bf16.mxu0 %v398
  %472 = vmatmul.mubr.bf16.gmra.mrb[0].mxu0 %v227
  %v473 = vpop.f32.mrb[0].mxu0
  %v474 = vadd.f32 0.0, %v473
  %v475 = vpop.f32.mrb[0].mxu0
  %v476 = vpop.f32.mrb[0].mxu0
  %v477 = vadd.f32 0.0, %v476
  %v478 = vpop.f32.mrb[0].mxu0
  %479 = vmatprep.mubr.bf16.mxu0 %v401
  %480 = vmatmul.mubr.bf16.gmra.mrb[0].mxu0 %v243
  %v481 = vpop.f32.mrb[0].mxu0
  %v482 = vadd.f32 0.0, %v481
  %v483 = vpop.f32.mrb[0].mxu0
  %v484 = vpop.f32.mrb[0].mxu0
  %v485 = vadd.f32 0.0, %v484
  %v486 = vpop.f32.mrb[0].mxu0
  %487 = vmatprep.mubr.bf16.mxu0 %v404
  %488 = vmatmul.mubr.bf16.gmra.mrb[0].mxu0 %v259
  %v489 = vpop.f32.mrb[0].mxu0
  %v490 = vadd.f32 0.0, %v489
  %v491 = vpop.f32.mrb[0].mxu0
  %v492 = vpop.f32.mrb[0].mxu0
  %v493 = vadd.f32 0.0, %v492
  %v494 = vpop.f32.mrb[0].mxu0
  %495 = vmatprep.mubr.bf16.mxu0 %v407
  %496 = vmatmul.mubr.bf16.gmra.mrb[0].mxu0 %v275
  %v497 = vpop.f32.mrb[0].mxu0
  %v498 = vadd.f32 0.0, %v497
  %v499 = vpop.f32.mrb[0].mxu0
  %v500 = vpop.f32.mrb[0].mxu0
  %v501 = vadd.f32 0.0, %v500
  %v502 = vpop.f32.mrb[0].mxu0
  %503 = vmatprep.mubr.bf16.mxu0 %v410
  %504 = vmatmul.mubr.bf16.gmra.mrb[0].mxu0 %v291
  %v505 = vpop.f32.mrb[0].mxu0
  %v506 = vadd.f32 0.0, %v505
  %v507 = vpop.f32.mrb[0].mxu0
  %v508 = vpop.f32.mrb[0].mxu0
  %v509 = vadd.f32 0.0, %v508
  %v510 = vpop.f32.mrb[0].mxu0
  %511 = vmatprep.mubr.bf16.mxu0 %v413
  %512 = vmatmul.mubr.bf16.gmra.mrb[0].mxu0 %v302
  %v513 = vpop.f32.mrb[0].mxu0
  %v514 = vadd.f32 0.0, %v513
  %v515 = vpop.f32.mrb[0].mxu0
  %v516 = vpop.f32.mrb[0].mxu0
  %v517 = vpop.f32.mrb[0].mxu0
  %518 = vdwg.mxu0
  %v520 = vunpack.c.l.b16 %v43
  %v521 = vunpack.c.h.b16 %v43
  %v522 = vpack.c.b16 %v520, %v520
  %v523 = vpack.c.b16 %v521, %v521
  %v557 = vunpack.c.l.b16 %v44
  %v558 = vunpack.c.l.b16 %v45
  %v559 = vunpack.c.l.b16 %v46
  %v560 = vunpack.c.l.b16 %v47
  %v561 = vunpack.c.l.b16 %v48
  %v562 = vunpack.c.l.b16 %v49
  %v563 = vunpack.c.l.b16 %v50
  %v564 = vunpack.c.l.b16 %v51
  %v565 = vunpack.c.l.b16 %v52
  %v566 = vunpack.c.l.b16 %v53
  %v567 = vunpack.c.l.b16 %v54
  %v568 = vunpack.c.l.b16 %v55
  %v569 = vunpack.c.l.b16 %v56
  %v570 = vunpack.c.l.b16 %v57
  %v571 = vunpack.c.l.b16 %v58
  %v572 = vunpack.c.l.b16 %v59
  %v573 = vunpack.c.l.b16 %v60
  %v574 = vunpack.c.l.b16 %v61
  %v575 = vunpack.c.l.b16 %v62
  %v576 = vunpack.c.l.b16 %v63
  %v577 = vunpack.c.l.b16 %v64
  %v578 = vunpack.c.l.b16 %v65
  %v579 = vunpack.c.l.b16 %v66
  %v580 = vunpack.c.l.b16 %v67
  %v581 = vpack.c.b16 %v558, %v557
  %v582 = vpack.c.b16 %v560, %v559
  %v583 = vpack.c.b16 %v562, %v561
  %v584 = vpack.c.b16 %v564, %v563
  %v585 = vpack.c.b16 %v566, %v565
  %v586 = vpack.c.b16 %v568, %v567
  %v587 = vpack.c.b16 %v570, %v569
  %v588 = vpack.c.b16 %v572, %v571
  %v589 = vpack.c.b16 %v574, %v573
  %v590 = vpack.c.b16 %v576, %v575
  %v591 = vpack.c.b16 %v578, %v577
  %v592 = vpack.c.b16 %v580, %v579
  %v605 = vsel %vm387, %v146, 0
  %v607 = vsel %vm387, %v148, 0
  %v609 = vsel %vm387, %v150, 0
  %v611 = vsel %vm387, %v152, 0
  %v613 = vsel %vm387, %v154, 0
  %v615 = vsel %vm387, %v156, 0
  %v617 = vsel %vm387, %v158, 0
  %v619 = vsel %vm387, %v160, 0
  %v622 = vsel %vm387, %v523, 0
  %624 = vmatprep.subr.bf16.mxu0 0
  %625 = vmatpush1.bf16.msra.mxu0 %v581
  %626 = vmatprep.subr.bf16.mxu0 0
  %627 = vmatpush1.bf16.msra.mxu0 %v582
  %628 = vmatprep.subr.bf16.mxu0 0
  %629 = vmatpush1.bf16.msra.mxu0 %v583
  %630 = vmatprep.subr.bf16.mxu0 0
  %631 = vmatpush1.bf16.msra.mxu0 %v584
  %632 = vmatprep.subr.bf16.mxu0 0
  %633 = vmatpush1.bf16.msra.mxu0 %v585
  %634 = vmatprep.subr.bf16.mxu0 0
  %635 = vmatpush1.bf16.msra.mxu0 %v586
  %636 = vmatprep.subr.bf16.mxu0 0
  %637 = vmatpush1.bf16.msra.mxu0 %v587
  %638 = vmatprep.subr.bf16.mxu0 0
  %639 = vmatpush1.bf16.msra.mxu0 %v588
  %640 = vmatprep.subr.bf16.mxu0 0
  %641 = vmatpush1.bf16.msra.mxu0 %v589
  %642 = vmatprep.subr.bf16.mxu0 0
  %643 = vmatpush1.bf16.msra.mxu0 %v590
  %644 = vmatprep.subr.bf16.mxu0 0
  %645 = vmatpush1.bf16.msra.mxu0 %v591
  %646 = vmatprep.subr.bf16.mxu0 0
  %647 = vmatpush1.bf16.msra.mxu0 %v592
  %648 = vmatprep.subr.bf16.mxu0 0
  %649 = vmatpush1.bf16.msra.mxu0 0
  %650 = vmatprep.subr.bf16.mxu0 0
  %651 = vmatpush1.bf16.msra.mxu0 0
  %652 = vmatprep.subr.bf16.mxu0 0
  %653 = vmatpush1.bf16.msra.mxu0 0
  %654 = vmatprep.subr.bf16.mxu0 0
  %655 = vmatpush1.bf16.msra.mxu0 0
  %656 = vmatprep.mubr.bf16.mxu0 %v605
  %657 = vmatmul.mubr.bf16.gmra.mrb[0].mxu0 %v145
  %v658 = vpop.f32.mrb[0].mxu0
  %v659 = vadd.f32 %v450, %v658
  %v660 = vpop.f32.mrb[0].mxu0
  %v661 = vpop.f32.mrb[0].mxu0
  %v662 = vadd.f32 %v453, %v661
  %v663 = vpop.f32.mrb[0].mxu0
  %664 = vmatprep.mubr.bf16.mxu0 %v607
  %665 = vmatmul.mubr.bf16.gmra.mrb[0].mxu0 %v147
  %v666 = vpop.f32.mrb[0].mxu0
  %v667 = vadd.f32 %v458, %v666
  %v668 = vpop.f32.mrb[0].mxu0
  %v669 = vpop.f32.mrb[0].mxu0
  %v670 = vadd.f32 %v461, %v669
  %v671 = vpop.f32.mrb[0].mxu0
  %672 = vmatprep.mubr.bf16.mxu0 %v609
  %673 = vmatmul.mubr.bf16.gmra.mrb[0].mxu0 %v149
  %v674 = vpop.f32.mrb[0].mxu0
  %v675 = vadd.f32 %v466, %v674
  %v676 = vpop.f32.mrb[0].mxu0
  %v677 = vpop.f32.mrb[0].mxu0
  %v678 = vadd.f32 %v469, %v677
  %v679 = vpop.f32.mrb[0].mxu0
  %680 = vmatprep.mubr.bf16.mxu0 %v611
  %681 = vmatmul.mubr.bf16.gmra.mrb[0].mxu0 %v151
  %v682 = vpop.f32.mrb[0].mxu0
  %v683 = vadd.f32 %v474, %v682
  %v684 = vpop.f32.mrb[0].mxu0
  %v685 = vpop.f32.mrb[0].mxu0
  %v686 = vadd.f32 %v477, %v685
  %v687 = vpop.f32.mrb[0].mxu0
  %688 = vmatprep.mubr.bf16.mxu0 %v613
  %689 = vmatmul.mubr.bf16.gmra.mrb[0].mxu0 %v153
  %v690 = vpop.f32.mrb[0].mxu0
  %v691 = vadd.f32 %v482, %v690
  %v692 = vpop.f32.mrb[0].mxu0
  %v693 = vpop.f32.mrb[0].mxu0
  %v694 = vadd.f32 %v485, %v693
  %v695 = vpop.f32.mrb[0].mxu0
  %696 = vmatprep.mubr.bf16.mxu0 %v615
  %697 = vmatmul.mubr.bf16.gmra.mrb[0].mxu0 %v155
  %v698 = vpop.f32.mrb[0].mxu0
  %v699 = vadd.f32 %v490, %v698
  %v700 = vpop.f32.mrb[0].mxu0
  %v701 = vpop.f32.mrb[0].mxu0
  %v702 = vadd.f32 %v493, %v701
  %v703 = vpop.f32.mrb[0].mxu0
  %704 = vmatprep.mubr.bf16.mxu0 %v617
  %705 = vmatmul.mubr.bf16.gmra.mrb[0].mxu0 %v157
  %v706 = vpop.f32.mrb[0].mxu0
  %v707 = vadd.f32 %v498, %v706
  %v708 = vpop.f32.mrb[0].mxu0
  %v709 = vpop.f32.mrb[0].mxu0
  %v710 = vadd.f32 %v501, %v709
  %v711 = vpop.f32.mrb[0].mxu0
  %712 = vmatprep.mubr.bf16.mxu0 %v619
  %713 = vmatmul.mubr.bf16.gmra.mrb[0].mxu0 %v159
  %v714 = vpop.f32.mrb[0].mxu0
  %v715 = vadd.f32 %v506, %v714
  %v716 = vpop.f32.mrb[0].mxu0
  %v717 = vpop.f32.mrb[0].mxu0
  %v718 = vadd.f32 %v509, %v717
  %v719 = vpop.f32.mrb[0].mxu0
  %720 = vmatprep.mubr.bf16.mxu0 %v622
  %721 = vmatmul.mubr.bf16.gmra.mrb[0].mxu0 %v522
  %v722 = vpop.f32.mrb[0].mxu0
  %v723 = vadd.f32 %v514, %v722
  %v724 = vpop.f32.mrb[0].mxu0
  %v725 = vpop.f32.mrb[0].mxu0
  %v726 = vpop.f32.mrb[0].mxu0
  %727 = vdwg.mxu0
  %v728 = vld [vmem:[%s0 + $0x8] sm:$0xcc]
  %v729 = vld [vmem:[%s0 + $0x10] sm:$0xff]
  %v730 = vld [vmem:[%s0 + $0x18] sm:$0xff]
  %v731 = vld [vmem:[%s0 + $0x20] sm:$0xff]
  %v732 = vld [vmem:[%s0 + $0x28] sm:$0xff]
  %v733 = vld [vmem:[%s0 + $0x30] sm:$0xff]
  %v734 = vld [vmem:[%s0 + $0x38] sm:$0xff]
  %v735 = vld [vmem:[%s0 + $0x40] sm:$0xff]
  %v736 = vld [vmem:[%s0 + $0x48] sm:$0xff]
  %v737 = vld [vmem:[%s0 + $0x50] sm:$0xff]
  %v738 = vld [vmem:[%s0 + $0x58] sm:$0xff]
  %v739 = vld [vmem:[%s0 + $0x60] sm:$0xff]
  %v740 = vld [vmem:[%s0 + $0x68] sm:$0xff]
  %v741 = vld [vmem:[%s0 + $0x70] sm:$0xff]
  %v742 = vld [vmem:[%s0 + $0x78] sm:$0xff]
  %v743 = vld [vmem:[%s0 + $0x80] sm:$0xff]
  %v744 = vld [vmem:[%s0 + $0x88] sm:$0xff]
  %s745 = scalar_lea.vmem %s1, 192
  %v746 = vld [vmem:[%s745] sm:$0xf]
  %v747 = vld [vmem:[%s745 + $0x4] sm:$0xf]
  %v748 = vld [vmem:[%s745 + $0x8] sm:$0xf]
  %v749 = vld [vmem:[%s745 + $0xc] sm:$0xf]
  %v750 = vld [vmem:[%s745 + $0x10] sm:$0xf]
  %v751 = vld [vmem:[%s745 + $0x14] sm:$0xf]
  %v752 = vld [vmem:[%s745 + $0x18] sm:$0xf]
  %v753 = vld [vmem:[%s745 + $0x1c] sm:$0xf]
  %v754 = vld [vmem:[%s745 + $0x20] sm:$0xf]
  %v755 = vld [vmem:[%s745 + $0x24] sm:$0xf]
  %v756 = vld [vmem:[%s745 + $0x28] sm:$0xf]
  %v757 = vld [vmem:[%s745 + $0x2c] sm:$0xf]
  %v758 = vld [vmem:[%s745 + $0x30] sm:$0xf]
  %v759 = vld [vmem:[%s745 + $0x34] sm:$0xf]
  %v760 = vld [vmem:[%s745 + $0x38] sm:$0xf]
  %v761 = vld [vmem:[%s745 + $0x3c] sm:$0xf]
  %v762 = vld [vmem:[%s745 + $0x40] sm:$0xf]
  %v763 = vld [vmem:[%s745 + $0x44] sm:$0xf]
  %v764 = vld [vmem:[%s745 + $0x48] sm:$0xf]
  %v765 = vld [vmem:[%s745 + $0x4c] sm:$0xf]
  %v766 = vld [vmem:[%s745 + $0x50] sm:$0xf]
  %v767 = vld [vmem:[%s745 + $0x54] sm:$0xf]
  %v768 = vld [vmem:[%s745 + $0x58] sm:$0xf]
  %v769 = vld [vmem:[%s745 + $0x5c] sm:$0xf]
  %v787 = vunpack.c.l.b16 %v728
  %v788 = vunpack.c.h.b16 %v728
  %v789 = vunpack.c.l.b16 %v729
  %v790 = vunpack.c.h.b16 %v729
  %v791 = vunpack.c.l.b16 %v730
  %v792 = vunpack.c.h.b16 %v730
  %v793 = vunpack.c.l.b16 %v731
  %v794 = vunpack.c.h.b16 %v731
  %v795 = vunpack.c.l.b16 %v732
  %v796 = vunpack.c.h.b16 %v732
  %v797 = vunpack.c.l.b16 %v733
  %v798 = vunpack.c.h.b16 %v733
  %v799 = vunpack.c.l.b16 %v734
  %v800 = vunpack.c.h.b16 %v734
  %v801 = vunpack.c.l.b16 %v735
  %v802 = vunpack.c.h.b16 %v735
  %v803 = vunpack.c.l.b16 %v736
  %v804 = vunpack.c.h.b16 %v736
  %v805 = vunpack.c.l.b16 %v737
  %v806 = vunpack.c.h.b16 %v737
  %v807 = vunpack.c.l.b16 %v738
  %v808 = vunpack.c.h.b16 %v738
  %v809 = vunpack.c.l.b16 %v739
  %v810 = vunpack.c.h.b16 %v739
  %v811 = vunpack.c.l.b16 %v740
  %v812 = vunpack.c.h.b16 %v740
  %v813 = vunpack.c.l.b16 %v741
  %v814 = vunpack.c.h.b16 %v741
  %v815 = vunpack.c.l.b16 %v742
  %v816 = vunpack.c.h.b16 %v742
  %v817 = vunpack.c.l.b16 %v743
  %v818 = vunpack.c.h.b16 %v743
  %v819 = vunpack.c.l.b16 %v744
  %v820 = vunpack.c.h.b16 %v744
  %v821 = vpack.c.b16 %v789, %v787
  %v822 = vpack.c.b16 %v790, %v788
  %v823 = vpack.c.b16 %v793, %v791
  %v824 = vpack.c.b16 %v794, %v792
  %v825 = vpack.c.b16 %v797, %v795
  %v826 = vpack.c.b16 %v798, %v796
  %v827 = vpack.c.b16 %v801, %v799
  %v828 = vpack.c.b16 %v802, %v800
  %v829 = vpack.c.b16 %v805, %v803
  %v830 = vpack.c.b16 %v806, %v804
  %v831 = vpack.c.b16 %v809, %v807
  %v832 = vpack.c.b16 %v810, %v808
  %v833 = vpack.c.b16 %v813, %v811
  %v834 = vpack.c.b16 %v814, %v812
  %v835 = vpack.c.b16 %v817, %v815
  %v836 = vpack.c.b16 %v818, %v816
  %v837 = vpack.c.b16 %v819, %v819
  %v838 = vpack.c.b16 %v820, %v820
  %vm839 = vcmask 1045504
  %v840 = vrot.slane %v821, 2
  %v841 = vrot.slane %v823, 2
  %v842 = vsel %vm839, %v840, %v841
  %v843 = vrot.slane %v822, 2
  %v844 = vrot.slane %v824, 2
  %v845 = vsel %vm839, %v843, %v844
  %v846 = vrot.slane %v825, 2
  %v847 = vsel %vm839, %v841, %v846
  %v848 = vrot.slane %v826, 2
  %v849 = vsel %vm839, %v844, %v848
  %v850 = vrot.slane %v827, 2
  %v851 = vsel %vm839, %v846, %v850
  %v852 = vrot.slane %v828, 2
  %v853 = vsel %vm839, %v848, %v852
  %v854 = vrot.slane %v829, 2
  %v855 = vsel %vm839, %v850, %v854
  %v856 = vrot.slane %v830, 2
  %v857 = vsel %vm839, %v852, %v856
  %v858 = vrot.slane %v831, 2
  %v859 = vsel %vm839, %v854, %v858
  %v860 = vrot.slane %v832, 2
  %v861 = vsel %vm839, %v856, %v860
  %v862 = vrot.slane %v833, 2
  %v863 = vsel %vm839, %v858, %v862
  %v864 = vrot.slane %v834, 2
  %v865 = vsel %vm839, %v860, %v864
  %v866 = vrot.slane %v835, 2
  %v867 = vsel %vm839, %v862, %v866
  %v868 = vrot.slane %v836, 2
  %v869 = vsel %vm839, %v864, %v868
  %v870 = vrot.slane %v837, 2
  %v871 = vsel %vm839, %v866, %v870
  %v872 = vrot.slane %v838, 2
  %v873 = vsel %vm839, %v868, %v872
  %v907 = vunpack.c.l.b16 %v746
  %v908 = vunpack.c.l.b16 %v747
  %v909 = vunpack.c.l.b16 %v748
  %v910 = vunpack.c.l.b16 %v749
  %v911 = vunpack.c.l.b16 %v750
  %v912 = vunpack.c.l.b16 %v751
  %v913 = vunpack.c.l.b16 %v752
  %v914 = vunpack.c.l.b16 %v753
  %v915 = vunpack.c.l.b16 %v754
  %v916 = vunpack.c.l.b16 %v755
  %v917 = vunpack.c.l.b16 %v756
  %v918 = vunpack.c.l.b16 %v757
  %v919 = vunpack.c.l.b16 %v758
  %v920 = vunpack.c.l.b16 %v759
  %v921 = vunpack.c.l.b16 %v760
  %v922 = vunpack.c.l.b16 %v761
  %v923 = vunpack.c.l.b16 %v762
  %v924 = vunpack.c.l.b16 %v763
  %v925 = vunpack.c.l.b16 %v764
  %v926 = vunpack.c.l.b16 %v765
  %v927 = vunpack.c.l.b16 %v766
  %v928 = vunpack.c.l.b16 %v767
  %v929 = vunpack.c.l.b16 %v768
  %v930 = vunpack.c.l.b16 %v769
  %v931 = vpack.c.b16 %v908, %v907
  %v932 = vpack.c.b16 %v910, %v909
  %v933 = vpack.c.b16 %v912, %v911
  %v934 = vpack.c.b16 %v914, %v913
  %v935 = vpack.c.b16 %v916, %v915
  %v936 = vpack.c.b16 %v918, %v917
  %v937 = vpack.c.b16 %v920, %v919
  %v938 = vpack.c.b16 %v922, %v921
  %v939 = vpack.c.b16 %v924, %v923
  %v940 = vpack.c.b16 %v926, %v925
  %v941 = vpack.c.b16 %v928, %v927
  %v942 = vpack.c.b16 %v930, %v929
  %v956 = vsel %vm387, %v845, 0
  %v959 = vsel %vm387, %v849, 0
  %v962 = vsel %vm387, %v853, 0
  %v965 = vsel %vm387, %v857, 0
  %v968 = vsel %vm387, %v861, 0
  %v971 = vsel %vm387, %v865, 0
  %v974 = vsel %vm387, %v869, 0
  %v977 = vsel %vm387, %v873, 0
  %v980 = vsel %vm387, %v872, 0
  %982 = vmatprep.subr.bf16.mxu0 0
  %983 = vmatpush1.bf16.msra.mxu0 %v931
  %984 = vmatprep.subr.bf16.mxu0 0
  %985 = vmatpush1.bf16.msra.mxu0 %v932
  %986 = vmatprep.subr.bf16.mxu0 0
  %987 = vmatpush1.bf16.msra.mxu0 %v933
  %988 = vmatprep.subr.bf16.mxu0 0
  %989 = vmatpush1.bf16.msra.mxu0 %v934
  %990 = vmatprep.subr.bf16.mxu0 0
  %991 = vmatpush1.bf16.msra.mxu0 %v935
  %992 = vmatprep.subr.bf16.mxu0 0
  %993 = vmatpush1.bf16.msra.mxu0 %v936
  %994 = vmatprep.subr.bf16.mxu0 0
  %995 = vmatpush1.bf16.msra.mxu0 %v937
  %996 = vmatprep.subr.bf16.mxu0 0
  %997 = vmatpush1.bf16.msra.mxu0 %v938
  %998 = vmatprep.subr.bf16.mxu0 0
  %999 = vmatpush1.bf16.msra.mxu0 %v939
  %1000 = vmatprep.subr.bf16.mxu0 0
  %1001 = vmatpush1.bf16.msra.mxu0 %v940
  %1002 = vmatprep.subr.bf16.mxu0 0
  %1003 = vmatpush1.bf16.msra.mxu0 %v941
  %1004 = vmatprep.subr.bf16.mxu0 0
  %1005 = vmatpush1.bf16.msra.mxu0 %v942
  %1006 = vmatprep.subr.bf16.mxu0 0
  %1007 = vmatpush1.bf16.msra.mxu0 0
  %1008 = vmatprep.subr.bf16.mxu0 0
  %1009 = vmatpush1.bf16.msra.mxu0 0
  %1010 = vmatprep.subr.bf16.mxu0 0
  %1011 = vmatpush1.bf16.msra.mxu0 0
  %1012 = vmatprep.subr.bf16.mxu0 0
  %1013 = vmatpush1.bf16.msra.mxu0 0
  %1014 = vmatprep.mubr.bf16.mxu0 %v956
  %1015 = vmatmul.mubr.bf16.gmra.mrb[0].mxu0 %v842
  %v1016 = vpop.f32.mrb[0].mxu0
  %v1017 = vadd.f32 0.0, %v1016
  %v1018 = vpop.f32.mrb[0].mxu0
  %v1019 = vpop.f32.mrb[0].mxu0
  %v1020 = vadd.f32 0.0, %v1019
  %v1021 = vpop.f32.mrb[0].mxu0
  %1022 = vmatprep.mubr.bf16.mxu0 %v959
  %1023 = vmatmul.mubr.bf16.gmra.mrb[0].mxu0 %v847
  %v1024 = vpop.f32.mrb[0].mxu0
  %v1025 = vadd.f32 0.0, %v1024
  %v1026 = vpop.f32.mrb[0].mxu0
  %v1027 = vpop.f32.mrb[0].mxu0
  %v1028 = vadd.f32 0.0, %v1027
  %v1029 = vpop.f32.mrb[0].mxu0
  %1030 = vmatprep.mubr.bf16.mxu0 %v962
  %1031 = vmatmul.mubr.bf16.gmra.mrb[0].mxu0 %v851
  %v1032 = vpop.f32.mrb[0].mxu0
  %v1033 = vadd.f32 0.0, %v1032
  %v1034 = vpop.f32.mrb[0].mxu0
  %v1035 = vpop.f32.mrb[0].mxu0
  %v1036 = vadd.f32 0.0, %v1035
  %v1037 = vpop.f32.mrb[0].mxu0
  %1038 = vmatprep.mubr.bf16.mxu0 %v965
  %1039 = vmatmul.mubr.bf16.gmra.mrb[0].mxu0 %v855
  %v1040 = vpop.f32.mrb[0].mxu0
  %v1041 = vadd.f32 0.0, %v1040
  %v1042 = vpop.f32.mrb[0].mxu0
  %v1043 = vpop.f32.mrb[0].mxu0
  %v1044 = vadd.f32 0.0, %v1043
  %v1045 = vpop.f32.mrb[0].mxu0
  %1046 = vmatprep.mubr.bf16.mxu0 %v968
  %1047 = vmatmul.mubr.bf16.gmra.mrb[0].mxu0 %v859
  %v1048 = vpop.f32.mrb[0].mxu0
  %v1049 = vadd.f32 0.0, %v1048
  %v1050 = vpop.f32.mrb[0].mxu0
  %v1051 = vpop.f32.mrb[0].mxu0
  %v1052 = vadd.f32 0.0, %v1051
  %v1053 = vpop.f32.mrb[0].mxu0
  %1054 = vmatprep.mubr.bf16.mxu0 %v971
  %1055 = vmatmul.mubr.bf16.gmra.mrb[0].mxu0 %v863
  %v1056 = vpop.f32.mrb[0].mxu0
  %v1057 = vadd.f32 0.0, %v1056
  %v1058 = vpop.f32.mrb[0].mxu0
  %v1059 = vpop.f32.mrb[0].mxu0
  %v1060 = vadd.f32 0.0, %v1059
  %v1061 = vpop.f32.mrb[0].mxu0
  %1062 = vmatprep.mubr.bf16.mxu0 %v974
  %1063 = vmatmul.mubr.bf16.gmra.mrb[0].mxu0 %v867
  %v1064 = vpop.f32.mrb[0].mxu0
  %v1065 = vadd.f32 0.0, %v1064
  %v1066 = vpop.f32.mrb[0].mxu0
  %v1067 = vpop.f32.mrb[0].mxu0
  %v1068 = vadd.f32 0.0, %v1067
  %v1069 = vpop.f32.mrb[0].mxu0
  %1070 = vmatprep.mubr.bf16.mxu0 %v977
  %1071 = vmatmul.mubr.bf16.gmra.mrb[0].mxu0 %v871
  %v1072 = vpop.f32.mrb[0].mxu0
  %v1073 = vadd.f32 0.0, %v1072
  %v1074 = vpop.f32.mrb[0].mxu0
  %v1075 = vpop.f32.mrb[0].mxu0
  %v1076 = vadd.f32 0.0, %v1075
  %v1077 = vpop.f32.mrb[0].mxu0
  %1078 = vmatprep.mubr.bf16.mxu0 %v980
  %1079 = vmatmul.mubr.bf16.gmra.mrb[0].mxu0 %v870
  %v1080 = vpop.f32.mrb[0].mxu0
  %v1081 = vadd.f32 0.0, %v1080
  %v1082 = vpop.f32.mrb[0].mxu0
  %v1083 = vpop.f32.mrb[0].mxu0
  %v1084 = vpop.f32.mrb[0].mxu0
  %1085 = vdwg.mxu0
  %v1086 = vadd.f32 %v659, %v1017
  %v1087 = vadd.f32 %v662, %v1020
  %v1088 = vadd.f32 %v667, %v1025
  %v1089 = vadd.f32 %v670, %v1028
  %v1090 = vadd.f32 %v675, %v1033
  %v1091 = vadd.f32 %v678, %v1036
  %v1092 = vadd.f32 %v683, %v1041
  %v1093 = vadd.f32 %v686, %v1044
  %v1094 = vadd.f32 %v691, %v1049
  %v1095 = vadd.f32 %v694, %v1052
  %v1096 = vadd.f32 %v699, %v1057
  %v1097 = vadd.f32 %v702, %v1060
  %v1098 = vadd.f32 %v707, %v1065
  %v1099 = vadd.f32 %v710, %v1068
  %v1100 = vadd.f32 %v715, %v1073
  %v1101 = vadd.f32 %v718, %v1076
  %v1102 = vadd.f32 %v723, %v1081
  %v1103 = vld [vmem:[%s0 + $0x8] sm:$0xcc]
  %v1104 = vld [vmem:[%s0 + $0x10] sm:$0xff]
  %v1105 = vld [vmem:[%s0 + $0x18] sm:$0xff]
  %v1106 = vld [vmem:[%s0 + $0x20] sm:$0xff]
  %v1107 = vld [vmem:[%s0 + $0x28] sm:$0xff]
  %v1108 = vld [vmem:[%s0 + $0x30] sm:$0xff]
  %v1109 = vld [vmem:[%s0 + $0x38] sm:$0xff]
  %v1110 = vld [vmem:[%s0 + $0x40] sm:$0xff]
  %v1111 = vld [vmem:[%s0 + $0x48] sm:$0xff]
  %v1112 = vld [vmem:[%s0 + $0x50] sm:$0xff]
  %v1113 = vld [vmem:[%s0 + $0x58] sm:$0xff]
  %v1114 = vld [vmem:[%s0 + $0x60] sm:$0xff]
  %v1115 = vld [vmem:[%s0 + $0x68] sm:$0xff]
  %v1116 = vld [vmem:[%s0 + $0x70] sm:$0xff]
  %v1117 = vld [vmem:[%s0 + $0x78] sm:$0xff]
  %v1118 = vld [vmem:[%s0 + $0x80] sm:$0xff]
  %v1119 = vld [vmem:[%s0 + $0x88] sm:$0xff]
  %v1120 = vld [vmem:[%s0 + $0x90] sm:$0x11]
  %s1121 = scalar_lea.vmem %s1, 288
  %v1122 = vld [vmem:[%s1121] sm:$0xf]
  %v1123 = vld [vmem:[%s1121 + $0x4] sm:$0xf]
  %v1124 = vld [vmem:[%s1121 + $0x8] sm:$0xf]
  %v1125 = vld [vmem:[%s1121 + $0xc] sm:$0xf]
  %v1126 = vld [vmem:[%s1121 + $0x10] sm:$0xf]
  %v1127 = vld [vmem:[%s1121 + $0x14] sm:$0xf]
  %v1128 = vld [vmem:[%s1121 + $0x18] sm:$0xf]
  %v1129 = vld [vmem:[%s1121 + $0x1c] sm:$0xf]
  %v1130 = vld [vmem:[%s1121 + $0x20] sm:$0xf]
  %v1131 = vld [vmem:[%s1121 + $0x24] sm:$0xf]
  %v1132 = vld [vmem:[%s1121 + $0x28] sm:$0xf]
  %v1133 = vld [vmem:[%s1121 + $0x2c] sm:$0xf]
  %v1134 = vld [vmem:[%s1121 + $0x30] sm:$0xf]
  %v1135 = vld [vmem:[%s1121 + $0x34] sm:$0xf]
  %v1136 = vld [vmem:[%s1121 + $0x38] sm:$0xf]
  %v1137 = vld [vmem:[%s1121 + $0x3c] sm:$0xf]
  %v1138 = vld [vmem:[%s1121 + $0x40] sm:$0xf]
  %v1139 = vld [vmem:[%s1121 + $0x44] sm:$0xf]
  %v1140 = vld [vmem:[%s1121 + $0x48] sm:$0xf]
  %v1141 = vld [vmem:[%s1121 + $0x4c] sm:$0xf]
  %v1142 = vld [vmem:[%s1121 + $0x50] sm:$0xf]
  %v1143 = vld [vmem:[%s1121 + $0x54] sm:$0xf]
  %v1144 = vld [vmem:[%s1121 + $0x58] sm:$0xf]
  %v1145 = vld [vmem:[%s1121 + $0x5c] sm:$0xf]
  %v1164 = vunpack.c.l.b16 %v1103
  %v1165 = vunpack.c.h.b16 %v1103
  %v1166 = vunpack.c.l.b16 %v1104
  %v1167 = vunpack.c.h.b16 %v1104
  %v1168 = vunpack.c.l.b16 %v1105
  %v1169 = vunpack.c.h.b16 %v1105
  %v1170 = vunpack.c.l.b16 %v1106
  %v1171 = vunpack.c.h.b16 %v1106
  %v1172 = vunpack.c.l.b16 %v1107
  %v1173 = vunpack.c.h.b16 %v1107
  %v1174 = vunpack.c.l.b16 %v1108
  %v1175 = vunpack.c.h.b16 %v1108
  %v1176 = vunpack.c.l.b16 %v1109
  %v1177 = vunpack.c.h.b16 %v1109
  %v1178 = vunpack.c.l.b16 %v1110
  %v1179 = vunpack.c.h.b16 %v1110
  %v1180 = vunpack.c.l.b16 %v1111
  %v1181 = vunpack.c.h.b16 %v1111
  %v1182 = vunpack.c.l.b16 %v1112
  %v1183 = vunpack.c.h.b16 %v1112
  %v1184 = vunpack.c.l.b16 %v1113
  %v1185 = vunpack.c.h.b16 %v1113
  %v1186 = vunpack.c.l.b16 %v1114
  %v1187 = vunpack.c.h.b16 %v1114
  %v1188 = vunpack.c.l.b16 %v1115
  %v1189 = vunpack.c.h.b16 %v1115
  %v1190 = vunpack.c.l.b16 %v1116
  %v1191 = vunpack.c.h.b16 %v1116
  %v1192 = vunpack.c.l.b16 %v1117
  %v1193 = vunpack.c.h.b16 %v1117
  %v1194 = vunpack.c.l.b16 %v1118
  %v1195 = vunpack.c.h.b16 %v1118
  %v1196 = vunpack.c.l.b16 %v1119
  %v1197 = vunpack.c.h.b16 %v1119
  %v1198 = vunpack.c.l.b16 %v1120
  %v1199 = vunpack.c.h.b16 %v1120
  %v1200 = vpack.c.b16 %v1166, %v1164
  %v1201 = vpack.c.b16 %v1167, %v1165
  %v1202 = vpack.c.b16 %v1170, %v1168
  %v1203 = vpack.c.b16 %v1171, %v1169
  %v1204 = vpack.c.b16 %v1174, %v1172
  %v1205 = vpack.c.b16 %v1175, %v1173
  %v1206 = vpack.c.b16 %v1178, %v1176
  %v1207 = vpack.c.b16 %v1179, %v1177
  %v1208 = vpack.c.b16 %v1182, %v1180
  %v1209 = vpack.c.b16 %v1183, %v1181
  %v1210 = vpack.c.b16 %v1186, %v1184
  %v1211 = vpack.c.b16 %v1187, %v1185
  %v1212 = vpack.c.b16 %v1190, %v1188
  %v1213 = vpack.c.b16 %v1191, %v1189
  %v1214 = vpack.c.b16 %v1194, %v1192
  %v1215 = vpack.c.b16 %v1195, %v1193
  %v1216 = vpack.c.b16 %v1198, %v1196
  %v1217 = vpack.c.b16 %v1199, %v1197
  %vm1218 = vsmask.f32 5376
  %v1220 = vshrl.u32 %v1200, 16
  %v1222 = vrot.slane %v1220, 2
  %v1223 = vshll.u32 %v1200, 16
  %v1225 = vrot.slane %v1223, 3
  %v1226 = vor.u32 %v1222, %v1225
  %v1228 = vshrl.u32 %v1202, 16
  %v1230 = vrot.slane %v1228, 2
  %v1231 = vshll.u32 %v1202, 16
  %v1233 = vrot.slane %v1231, 3
  %v1234 = vor.u32 %v1230, %v1233
  %v1235 = vsel %vm1218, %v1226, %v1234
  %v1237 = vshrl.u32 %v1201, 16
  %v1239 = vrot.slane %v1237, 2
  %v1240 = vshll.u32 %v1201, 16
  %v1242 = vrot.slane %v1240, 3
  %v1243 = vor.u32 %v1239, %v1242
  %v1245 = vshrl.u32 %v1203, 16
  %v1247 = vrot.slane %v1245, 2
  %v1248 = vshll.u32 %v1203, 16
  %v1250 = vrot.slane %v1248, 3
  %v1251 = vor.u32 %v1247, %v1250
  %v1252 = vsel %vm1218, %v1243, %v1251
  %v1254 = vshrl.u32 %v1204, 16
  %v1256 = vrot.slane %v1254, 2
  %v1257 = vshll.u32 %v1204, 16
  %v1259 = vrot.slane %v1257, 3
  %v1260 = vor.u32 %v1256, %v1259
  %v1261 = vsel %vm1218, %v1234, %v1260
  %v1263 = vshrl.u32 %v1205, 16
  %v1265 = vrot.slane %v1263, 2
  %v1266 = vshll.u32 %v1205, 16
  %v1268 = vrot.slane %v1266, 3
  %v1269 = vor.u32 %v1265, %v1268
  %v1270 = vsel %vm1218, %v1251, %v1269
  %v1272 = vshrl.u32 %v1206, 16
  %v1274 = vrot.slane %v1272, 2
  %v1275 = vshll.u32 %v1206, 16
  %v1277 = vrot.slane %v1275, 3
  %v1278 = vor.u32 %v1274, %v1277
  %v1279 = vsel %vm1218, %v1260, %v1278
  %v1281 = vshrl.u32 %v1207, 16
  %v1283 = vrot.slane %v1281, 2
  %v1284 = vshll.u32 %v1207, 16
  %v1286 = vrot.slane %v1284, 3
  %v1287 = vor.u32 %v1283, %v1286
  %v1288 = vsel %vm1218, %v1269, %v1287
  %v1290 = vshrl.u32 %v1208, 16
  %v1292 = vrot.slane %v1290, 2
  %v1293 = vshll.u32 %v1208, 16
  %v1295 = vrot.slane %v1293, 3
  %v1296 = vor.u32 %v1292, %v1295
  %v1297 = vsel %vm1218, %v1278, %v1296
  %v1299 = vshrl.u32 %v1209, 16
  %v1301 = vrot.slane %v1299, 2
  %v1302 = vshll.u32 %v1209, 16
  %v1304 = vrot.slane %v1302, 3
  %v1305 = vor.u32 %v1301, %v1304
  %v1306 = vsel %vm1218, %v1287, %v1305
  %v1308 = vshrl.u32 %v1210, 16
  %v1310 = vrot.slane %v1308, 2
  %v1311 = vshll.u32 %v1210, 16
  %v1313 = vrot.slane %v1311, 3
  %v1314 = vor.u32 %v1310, %v1313
  %v1315 = vsel %vm1218, %v1296, %v1314
  %v1317 = vshrl.u32 %v1211, 16
  %v1319 = vrot.slane %v1317, 2
  %v1320 = vshll.u32 %v1211, 16
  %v1322 = vrot.slane %v1320, 3
  %v1323 = vor.u32 %v1319, %v1322
  %v1324 = vsel %vm1218, %v1305, %v1323
  %v1326 = vshrl.u32 %v1212, 16
  %v1328 = vrot.slane %v1326, 2
  %v1329 = vshll.u32 %v1212, 16
  %v1331 = vrot.slane %v1329, 3
  %v1332 = vor.u32 %v1328, %v1331
  %v1333 = vsel %vm1218, %v1314, %v1332
  %v1335 = vshrl.u32 %v1213, 16
  %v1337 = vrot.slane %v1335, 2
  %v1338 = vshll.u32 %v1213, 16
  %v1340 = vrot.slane %v1338, 3
  %v1341 = vor.u32 %v1337, %v1340
  %v1342 = vsel %vm1218, %v1323, %v1341
  %v1344 = vshrl.u32 %v1214, 16
  %v1346 = vrot.slane %v1344, 2
  %v1347 = vshll.u32 %v1214, 16
  %v1349 = vrot.slane %v1347, 3
  %v1350 = vor.u32 %v1346, %v1349
  %v1351 = vsel %vm1218, %v1332, %v1350
  %v1353 = vshrl.u32 %v1215, 16
  %v1355 = vrot.slane %v1353, 2
  %v1356 = vshll.u32 %v1215, 16
  %v1358 = vrot.slane %v1356, 3
  %v1359 = vor.u32 %v1355, %v1358
  %v1360 = vsel %vm1218, %v1341, %v1359
  %v1362 = vshrl.u32 %v1216, 16
  %v1364 = vrot.slane %v1362, 2
  %v1365 = vshll.u32 %v1216, 16
  %v1367 = vrot.slane %v1365, 3
  %v1368 = vor.u32 %v1364, %v1367
  %v1369 = vsel %vm1218, %v1350, %v1368
  %v1371 = vshrl.u32 %v1217, 16
  %v1373 = vrot.slane %v1371, 2
  %v1374 = vshll.u32 %v1217, 16
  %v1376 = vrot.slane %v1374, 3
  %v1377 = vor.u32 %v1373, %v1376
  %v1378 = vsel %vm1218, %v1359, %v1377
  %v1412 = vunpack.c.l.b16 %v1122
  %v1413 = vunpack.c.l.b16 %v1123
  %v1414 = vunpack.c.l.b16 %v1124
  %v1415 = vunpack.c.l.b16 %v1125
  %v1416 = vunpack.c.l.b16 %v1126
  %v1417 = vunpack.c.l.b16 %v1127
  %v1418 = vunpack.c.l.b16 %v1128
  %v1419 = vunpack.c.l.b16 %v1129
  %v1420 = vunpack.c.l.b16 %v1130
  %v1421 = vunpack.c.l.b16 %v1131
  %v1422 = vunpack.c.l.b16 %v1132
  %v1423 = vunpack.c.l.b16 %v1133
  %v1424 = vunpack.c.l.b16 %v1134
  %v1425 = vunpack.c.l.b16 %v1135
  %v1426 = vunpack.c.l.b16 %v1136
  %v1427 = vunpack.c.l.b16 %v1137
  %v1428 = vunpack.c.l.b16 %v1138
  %v1429 = vunpack.c.l.b16 %v1139
  %v1430 = vunpack.c.l.b16 %v1140
  %v1431 = vunpack.c.l.b16 %v1141
  %v1432 = vunpack.c.l.b16 %v1142
  %v1433 = vunpack.c.l.b16 %v1143
  %v1434 = vunpack.c.l.b16 %v1144
  %v1435 = vunpack.c.l.b16 %v1145
  %v1436 = vpack.c.b16 %v1413, %v1412
  %v1437 = vpack.c.b16 %v1415, %v1414
  %v1438 = vpack.c.b16 %v1417, %v1416
  %v1439 = vpack.c.b16 %v1419, %v1418
  %v1440 = vpack.c.b16 %v1421, %v1420
  %v1441 = vpack.c.b16 %v1423, %v1422
  %v1442 = vpack.c.b16 %v1425, %v1424
  %v1443 = vpack.c.b16 %v1427, %v1426
  %v1444 = vpack.c.b16 %v1429, %v1428
  %v1445 = vpack.c.b16 %v1431, %v1430
  %v1446 = vpack.c.b16 %v1433, %v1432
  %v1447 = vpack.c.b16 %v1435, %v1434
  %v1461 = vsel %vm387, %v1252, 0
  %v1464 = vsel %vm387, %v1270, 0
  %v1467 = vsel %vm387, %v1288, 0
  %v1470 = vsel %vm387, %v1306, 0
  %v1473 = vsel %vm387, %v1324, 0
  %v1476 = vsel %vm387, %v1342, 0
  %v1479 = vsel %vm387, %v1360, 0
  %v1482 = vsel %vm387, %v1378, 0
  %v1485 = vsel %vm387, %v1377, 0
  %1487 = vmatprep.subr.bf16.mxu0 0
  %1488 = vmatpush1.bf16.msra.mxu0 %v1436
  %1489 = vmatprep.subr.bf16.mxu0 0
  %1490 = vmatpush1.bf16.msra.mxu0 %v1437
  %1491 = vmatprep.subr.bf16.mxu0 0
  %1492 = vmatpush1.bf16.msra.mxu0 %v1438
  %1493 = vmatprep.subr.bf16.mxu0 0
  %1494 = vmatpush1.bf16.msra.mxu0 %v1439
  %1495 = vmatprep.subr.bf16.mxu0 0
  %1496 = vmatpush1.bf16.msra.mxu0 %v1440
  %1497 = vmatprep.subr.bf16.mxu0 0
  %1498 = vmatpush1.bf16.msra.mxu0 %v1441
  %1499 = vmatprep.subr.bf16.mxu0 0
  %1500 = vmatpush1.bf16.msra.mxu0 %v1442
  %1501 = vmatprep.subr.bf16.mxu0 0
  %1502 = vmatpush1.bf16.msra.mxu0 %v1443
  %1503 = vmatprep.subr.bf16.mxu0 0
  %1504 = vmatpush1.bf16.msra.mxu0 %v1444
  %1505 = vmatprep.subr.bf16.mxu0 0
  %1506 = vmatpush1.bf16.msra.mxu0 %v1445
  %1507 = vmatprep.subr.bf16.mxu0 0
  %1508 = vmatpush1.bf16.msra.mxu0 %v1446
  %1509 = vmatprep.subr.bf16.mxu0 0
  %1510 = vmatpush1.bf16.msra.mxu0 %v1447
  %1511 = vmatprep.subr.bf16.mxu0 0
  %1512 = vmatpush1.bf16.msra.mxu0 0
  %1513 = vmatprep.subr.bf16.mxu0 0
  %1514 = vmatpush1.bf16.msra.mxu0 0
  %1515 = vmatprep.subr.bf16.mxu0 0
  %1516 = vmatpush1.bf16.msra.mxu0 0
  %1517 = vmatprep.subr.bf16.mxu0 0
  %1518 = vmatpush1.bf16.msra.mxu0 0
  %1519 = vmatprep.mubr.bf16.mxu0 %v1461
  %1520 = vmatmul.mubr.bf16.gmra.mrb[0].mxu0 %v1235
  %v1521 = vpop.f32.mrb[0].mxu0
  %v1522 = vadd.f32 0.0, %v1521
  %v1523 = vpop.f32.mrb[0].mxu0
  %v1524 = vpop.f32.mrb[0].mxu0
  %v1525 = vadd.f32 0.0, %v1524
  %v1526 = vpop.f32.mrb[0].mxu0
  %1527 = vmatprep.mubr.bf16.mxu0 %v1464
  %1528 = vmatmul.mubr.bf16.gmra.mrb[0].mxu0 %v1261
  %v1529 = vpop.f32.mrb[0].mxu0
  %v1530 = vadd.f32 0.0, %v1529
  %v1531 = vpop.f32.mrb[0].mxu0
  %v1532 = vpop.f32.mrb[0].mxu0
  %v1533 = vadd.f32 0.0, %v1532
  %v1534 = vpop.f32.mrb[0].mxu0
  %1535 = vmatprep.mubr.bf16.mxu0 %v1467
  %1536 = vmatmul.mubr.bf16.gmra.mrb[0].mxu0 %v1279
  %v1537 = vpop.f32.mrb[0].mxu0
  %v1538 = vadd.f32 0.0, %v1537
  %v1539 = vpop.f32.mrb[0].mxu0
  %v1540 = vpop.f32.mrb[0].mxu0
  %v1541 = vadd.f32 0.0, %v1540
  %v1542 = vpop.f32.mrb[0].mxu0
  %1543 = vmatprep.mubr.bf16.mxu0 %v1470
  %1544 = vmatmul.mubr.bf16.gmra.mrb[0].mxu0 %v1297
  %v1545 = vpop.f32.mrb[0].mxu0
  %v1546 = vadd.f32 0.0, %v1545
  %v1547 = vpop.f32.mrb[0].mxu0
  %v1548 = vpop.f32.mrb[0].mxu0
  %v1549 = vadd.f32 0.0, %v1548
  %v1550 = vpop.f32.mrb[0].mxu0
  %1551 = vmatprep.mubr.bf16.mxu0 %v1473
  %1552 = vmatmul.mubr.bf16.gmra.mrb[0].mxu0 %v1315
  %v1553 = vpop.f32.mrb[0].mxu0
  %v1554 = vadd.f32 0.0, %v1553
  %v1555 = vpop.f32.mrb[0].mxu0
  %v1556 = vpop.f32.mrb[0].mxu0
  %v1557 = vadd.f32 0.0, %v1556
  %v1558 = vpop.f32.mrb[0].mxu0
  %1559 = vmatprep.mubr.bf16.mxu0 %v1476
  %1560 = vmatmul.mubr.bf16.gmra.mrb[0].mxu0 %v1333
  %v1561 = vpop.f32.mrb[0].mxu0
  %v1562 = vadd.f32 0.0, %v1561
  %v1563 = vpop.f32.mrb[0].mxu0
  %v1564 = vpop.f32.mrb[0].mxu0
  %v1565 = vadd.f32 0.0, %v1564
  %v1566 = vpop.f32.mrb[0].mxu0
  %1567 = vmatprep.mubr.bf16.mxu0 %v1479
  %1568 = vmatmul.mubr.bf16.gmra.mrb[0].mxu0 %v1351
  %v1569 = vpop.f32.mrb[0].mxu0
  %v1570 = vadd.f32 0.0, %v1569
  %v1571 = vpop.f32.mrb[0].mxu0
  %v1572 = vpop.f32.mrb[0].mxu0
  %v1573 = vadd.f32 0.0, %v1572
  %v1574 = vpop.f32.mrb[0].mxu0
  %1575 = vmatprep.mubr.bf16.mxu0 %v1482
  %1576 = vmatmul.mubr.bf16.gmra.mrb[0].mxu0 %v1369
  %v1577 = vpop.f32.mrb[0].mxu0
  %v1578 = vadd.f32 0.0, %v1577
  %v1579 = vpop.f32.mrb[0].mxu0
  %v1580 = vpop.f32.mrb[0].mxu0
  %v1581 = vadd.f32 0.0, %v1580
  %v1582 = vpop.f32.mrb[0].mxu0
  %1583 = vmatprep.mubr.bf16.mxu0 %v1485
  %1584 = vmatmul.mubr.bf16.gmra.mrb[0].mxu0 %v1368
  %v1585 = vpop.f32.mrb[0].mxu0
  %v1586 = vadd.f32 0.0, %v1585
  %v1587 = vpop.f32.mrb[0].mxu0
  %v1588 = vpop.f32.mrb[0].mxu0
  %v1589 = vpop.f32.mrb[0].mxu0
  %1590 = vdwg.mxu0
  %v1591 = vadd.f32 %v1086, %v1522
  %v1592 = vadd.f32 %v1087, %v1525
  %v1593 = vadd.f32 %v1088, %v1530
  %v1594 = vadd.f32 %v1089, %v1533
  %v1595 = vadd.f32 %v1090, %v1538
  %v1596 = vadd.f32 %v1091, %v1541
  %v1597 = vadd.f32 %v1092, %v1546
  %v1598 = vadd.f32 %v1093, %v1549
  %v1599 = vadd.f32 %v1094, %v1554
  %v1600 = vadd.f32 %v1095, %v1557
  %v1601 = vadd.f32 %v1096, %v1562
  %v1602 = vadd.f32 %v1097, %v1565
  %v1603 = vadd.f32 %v1098, %v1570
  %v1604 = vadd.f32 %v1099, %v1573
  %v1605 = vadd.f32 %v1100, %v1578
  %v1606 = vadd.f32 %v1101, %v1581
  %v1607 = vadd.f32 %v1102, %v1586
  %v1608 = vld [vmem:[%s2] sm:$0x1]
  %v1610 = vlaneseq
  %v1611 = vshrl.u32 %v1610, 7
  %v1612 = vsub.s32 0, %v1611
  %v1613 = vrot.slane %v1608, %v1612
  %v1615 = vadd.f32 %v1591, %v1613
  %v1616 = vadd.f32 %v1592, %v1613
  %v1617 = vadd.f32 %v1593, %v1613
  %v1618 = vadd.f32 %v1594, %v1613
  %v1619 = vadd.f32 %v1595, %v1613
  %v1620 = vadd.f32 %v1596, %v1613
  %v1621 = vadd.f32 %v1597, %v1613
  %v1622 = vadd.f32 %v1598, %v1613
  %v1623 = vadd.f32 %v1599, %v1613
  %v1624 = vadd.f32 %v1600, %v1613
  %v1625 = vadd.f32 %v1601, %v1613
  %v1626 = vadd.f32 %v1602, %v1613
  %v1627 = vadd.f32 %v1603, %v1613
  %v1628 = vadd.f32 %v1604, %v1613
  %v1629 = vadd.f32 %v1605, %v1613
  %v1630 = vadd.f32 %v1606, %v1613
  %v1631 = vadd.f32 %v1607, %v1613
  %v1632 = vmax.f32 %v1615, 0.0
  %v1633 = vmax.f32 %v1616, 0.0
  %v1634 = vmax.f32 %v1617, 0.0
  %v1635 = vmax.f32 %v1618, 0.0
  %v1636 = vmax.f32 %v1619, 0.0
  %v1637 = vmax.f32 %v1620, 0.0
  %v1638 = vmax.f32 %v1621, 0.0
  %v1639 = vmax.f32 %v1622, 0.0
  %v1640 = vmax.f32 %v1623, 0.0
  %v1641 = vmax.f32 %v1624, 0.0
  %v1642 = vmax.f32 %v1625, 0.0
  %v1643 = vmax.f32 %v1626, 0.0
  %v1644 = vmax.f32 %v1627, 0.0
  %v1645 = vmax.f32 %v1628, 0.0
  %v1646 = vmax.f32 %v1629, 0.0
  %v1647 = vmax.f32 %v1630, 0.0
  %v1648 = vmax.f32 %v1631, 0.0
  %v1649 = vpack.c.bf16 %v1633, %v1632
  %v1650 = vpack.c.bf16 %v1635, %v1634
  %v1651 = vpack.c.bf16 %v1637, %v1636
  %v1652 = vpack.c.bf16 %v1639, %v1638
  %v1653 = vpack.c.bf16 %v1641, %v1640
  %v1654 = vpack.c.bf16 %v1643, %v1642
  %v1655 = vpack.c.bf16 %v1645, %v1644
  %v1656 = vpack.c.bf16 %v1647, %v1646
  %v1657 = vpack.c.bf16 %v1648, %v1648
  %1658 = vst [vmem:[#allocation2] sm:$0xff] %v1649
  %1659 = vst [vmem:[#allocation2 + $0x8] sm:$0xff] %v1650
  %1660 = vst [vmem:[#allocation2 + $0x10] sm:$0xff] %v1651
  %1661 = vst [vmem:[#allocation2 + $0x18] sm:$0xff] %v1652
  %1662 = vst [vmem:[#allocation2 + $0x20] sm:$0xff] %v1653
  %1663 = vst [vmem:[#allocation2 + $0x28] sm:$0xff] %v1654
  %1664 = vst [vmem:[#allocation2 + $0x30] sm:$0xff] %v1655
  %1665 = vst [vmem:[#allocation2 + $0x38] sm:$0xff] %v1656
  %1666 = vst [vmem:[#allocation2 + $0x40] sm:$0x3] %v1657
  %v1667 = vld [vmem:[#allocation2] sm:$0xff]
  %v1668 = vld [vmem:[#allocation2 + $0x8] sm:$0xff]
  %v1669 = vld [vmem:[#allocation2 + $0x10] sm:$0xff]
  %v1670 = vld [vmem:[#allocation2 + $0x18] sm:$0xff]
  %v1671 = vld [vmem:[#allocation2 + $0x20] sm:$0xff]
  %v1672 = vld [vmem:[#allocation2 + $0x28] sm:$0xff]
  %v1673 = vld [vmem:[#allocation2 + $0x30] sm:$0xff]
  %v1674 = vld [vmem:[#allocation2 + $0x38] sm:$0xf]
  %v1675 = vld [vmem:[%s3] sm:$0xf]
  %v1676 = vld [vmem:[%s3 + $0x4] sm:$0xf]
  %v1677 = vld [vmem:[%s3 + $0x8] sm:$0xf]
  %v1678 = vld [vmem:[%s3 + $0xc] sm:$0xf]
  %v1679 = vld [vmem:[%s3 + $0x10] sm:$0xf]
  %v1680 = vld [vmem:[%s3 + $0x14] sm:$0xf]
  %v1681 = vld [vmem:[%s3 + $0x18] sm:$0xf]
  %v1682 = vld [vmem:[%s3 + $0x1c] sm:$0xf]
  %v1683 = vld [vmem:[%s3 + $0x20] sm:$0xf]
  %v1684 = vld [vmem:[%s3 + $0x24] sm:$0xf]
  %v1685 = vld [vmem:[%s3 + $0x28] sm:$0xf]
  %v1686 = vld [vmem:[%s3 + $0x2c] sm:$0xf]
  %v1687 = vld [vmem:[%s3 + $0x30] sm:$0xf]
  %v1688 = vld [vmem:[%s3 + $0x34] sm:$0xf]
  %v1689 = vld [vmem:[%s3 + $0x38] sm:$0xf]
  %v1690 = vld [vmem:[%s3 + $0x3c] sm:$0xf]
  %v1691 = vld [vmem:[#allocation2 + $0x38] sm:$0x1f]
  %s1692 = scalar_lea.vmem %s3, 64
  %v1693 = vld [vmem:[%s1692] sm:$0xf]
  %v1694 = vld [vmem:[%s1692 + $0x4] sm:$0xf]
  %v1695 = vld [vmem:[%s1692 + $0x8] sm:$0xf]
  %v1696 = vld [vmem:[%s1692 + $0xc] sm:$0xf]
  %v1697 = vld [vmem:[%s1692 + $0x10] sm:$0xf]
  %v1698 = vld [vmem:[%s1692 + $0x14] sm:$0xf]
  %v1699 = vld [vmem:[%s1692 + $0x18] sm:$0xf]
  %v1700 = vld [vmem:[%s1692 + $0x1c] sm:$0xf]
  %v1701 = vld [vmem:[%s1692 + $0x20] sm:$0xf]
  %v1702 = vld [vmem:[%s1692 + $0x24] sm:$0xf]
  %v1703 = vld [vmem:[%s1692 + $0x28] sm:$0xf]
  %v1704 = vld [vmem:[%s1692 + $0x2c] sm:$0xf]
  %v1705 = vld [vmem:[%s1692 + $0x30] sm:$0xf]
  %v1706 = vld [vmem:[%s1692 + $0x34] sm:$0xf]
  %v1707 = vld [vmem:[%s1692 + $0x38] sm:$0xf]
  %v1708 = vld [vmem:[%s1692 + $0x3c] sm:$0xf]
  %v1710 = vshrl.u32 %v1667, 16
  %v1712 = vshll.u32 %v1667, 16
  %v1714 = vrot.slane %v1712, 1
  %v1715 = vor.u32 %v1710, %v1714
  %v1717 = vshll.u32 %v1668, 16
  %v1719 = vrot.slane %v1717, 1
  %v1720 = vsel %vm163, %v1715, %v1719
  %v1721 = vshrl.u32 %v1668, 16
  %v1723 = vor.u32 %v1721, %v1719
  %v1725 = vshll.u32 %v1669, 16
  %v1727 = vrot.slane %v1725, 1
  %v1728 = vsel %vm163, %v1723, %v1727
  %v1729 = vshrl.u32 %v1669, 16
  %v1731 = vor.u32 %v1729, %v1727
  %v1733 = vshll.u32 %v1670, 16
  %v1735 = vrot.slane %v1733, 1
  %v1736 = vsel %vm163, %v1731, %v1735
  %v1737 = vshrl.u32 %v1670, 16
  %v1739 = vor.u32 %v1737, %v1735
  %v1741 = vshll.u32 %v1671, 16
  %v1743 = vrot.slane %v1741, 1
  %v1744 = vsel %vm163, %v1739, %v1743
  %v1745 = vshrl.u32 %v1671, 16
  %v1747 = vor.u32 %v1745, %v1743
  %v1749 = vshll.u32 %v1672, 16
  %v1751 = vrot.slane %v1749, 1
  %v1752 = vsel %vm163, %v1747, %v1751
  %v1753 = vshrl.u32 %v1672, 16
  %v1755 = vor.u32 %v1753, %v1751
  %v1757 = vshll.u32 %v1673, 16
  %v1759 = vrot.slane %v1757, 1
  %v1760 = vsel %vm163, %v1755, %v1759
  %v1761 = vshrl.u32 %v1673, 16
  %v1763 = vor.u32 %v1761, %v1759
  %v1765 = vshll.u32 %v1691, 16
  %v1767 = vrot.slane %v1765, 1
  %v1768 = vsel %vm163, %v1763, %v1767
  %v1769 = vshrl.u32 %v1691, 16
  %v1771 = vor.u32 %v1769, %v1767
  %v1796 = vunpack.c.l.b16 %v1693
  %v1797 = vunpack.c.l.b16 %v1694
  %v1798 = vunpack.c.l.b16 %v1695
  %v1799 = vunpack.c.l.b16 %v1696
  %v1800 = vunpack.c.l.b16 %v1697
  %v1801 = vunpack.c.l.b16 %v1698
  %v1802 = vunpack.c.l.b16 %v1699
  %v1803 = vunpack.c.l.b16 %v1700
  %v1804 = vunpack.c.l.b16 %v1701
  %v1805 = vunpack.c.l.b16 %v1702
  %v1806 = vunpack.c.l.b16 %v1703
  %v1807 = vunpack.c.l.b16 %v1704
  %v1808 = vunpack.c.l.b16 %v1705
  %v1809 = vunpack.c.l.b16 %v1706
  %v1810 = vunpack.c.l.b16 %v1707
  %v1811 = vunpack.c.l.b16 %v1708
  %v1812 = vpack.c.b16 %v1797, %v1796
  %v1813 = vpack.c.b16 %v1799, %v1798
  %v1814 = vpack.c.b16 %v1801, %v1800
  %v1815 = vpack.c.b16 %v1803, %v1802
  %v1816 = vpack.c.b16 %v1805, %v1804
  %v1817 = vpack.c.b16 %v1807, %v1806
  %v1818 = vpack.c.b16 %v1809, %v1808
  %v1819 = vpack.c.b16 %v1811, %v1810
  %1828 = vmatprep.subr.bf16.mxu0 0
  %1829 = vmatpush1.bf16.msra.mxu0 %v1812
  %1830 = vmatprep.subr.bf16.mxu0 0
  %1831 = vmatpush1.bf16.msra.mxu0 %v1813
  %1832 = vmatprep.subr.bf16.mxu0 0
  %1833 = vmatpush1.bf16.msra.mxu0 %v1814
  %1834 = vmatprep.subr.bf16.mxu0 0
  %1835 = vmatpush1.bf16.msra.mxu0 %v1815
  %1836 = vmatprep.subr.bf16.mxu0 0
  %1837 = vmatpush1.bf16.msra.mxu0 %v1816
  %1838 = vmatprep.subr.bf16.mxu0 0
  %1839 = vmatpush1.bf16.msra.mxu0 %v1817
  %1840 = vmatprep.subr.bf16.mxu0 0
  %1841 = vmatpush1.bf16.msra.mxu0 %v1818
  %1842 = vmatprep.subr.bf16.mxu0 0
  %1843 = vmatpush1.bf16.msra.mxu0 %v1819
  %1844 = vmatprep.subr.bf16.mxu0 0
  %1845 = vmatpush1.bf16.msra.mxu0 0
  %1846 = vmatprep.subr.bf16.mxu0 0
  %1847 = vmatpush1.bf16.msra.mxu0 0
  %1848 = vmatprep.subr.bf16.mxu0 0
  %1849 = vmatpush1.bf16.msra.mxu0 0
  %1850 = vmatprep.subr.bf16.mxu0 0
  %1851 = vmatpush1.bf16.msra.mxu0 0
  %1852 = vmatprep.subr.bf16.mxu0 0
  %1853 = vmatpush1.bf16.msra.mxu0 0
  %1854 = vmatprep.subr.bf16.mxu0 0
  %1855 = vmatpush1.bf16.msra.mxu0 0
  %1856 = vmatprep.subr.bf16.mxu0 0
  %1857 = vmatpush1.bf16.msra.mxu0 0
  %1858 = vmatprep.subr.bf16.mxu0 0
  %1859 = vmatpush1.bf16.msra.mxu0 0
  %1860 = vmatprep.mubr.bf16.mxu0 0
  %1861 = vmatmul.mubr.bf16.gmra.mrb[0].mxu0 %v1720
  %v1862 = vpop.f32.mrb[0].mxu0
  %v1863 = vadd.f32 0.0, %v1862
  %v1864 = vpop.f32.mrb[0].mxu0
  %v1865 = vpop.f32.mrb[0].mxu0
  %v1866 = vadd.f32 0.0, %v1865
  %v1867 = vpop.f32.mrb[0].mxu0
  %1868 = vmatprep.mubr.bf16.mxu0 0
  %1869 = vmatmul.mubr.bf16.gmra.mrb[0].mxu0 %v1728
  %v1870 = vpop.f32.mrb[0].mxu0
  %v1871 = vadd.f32 0.0, %v1870
  %v1872 = vpop.f32.mrb[0].mxu0
  %v1873 = vpop.f32.mrb[0].mxu0
  %v1874 = vadd.f32 0.0, %v1873
  %v1875 = vpop.f32.mrb[0].mxu0
  %1876 = vmatprep.mubr.bf16.mxu0 0
  %1877 = vmatmul.mubr.bf16.gmra.mrb[0].mxu0 %v1736
  %v1878 = vpop.f32.mrb[0].mxu0
  %v1879 = vadd.f32 0.0, %v1878
  %v1880 = vpop.f32.mrb[0].mxu0
  %v1881 = vpop.f32.mrb[0].mxu0
  %v1882 = vadd.f32 0.0, %v1881
  %v1883 = vpop.f32.mrb[0].mxu0
  %1884 = vmatprep.mubr.bf16.mxu0 0
  %1885 = vmatmul.mubr.bf16.gmra.mrb[0].mxu0 %v1744
  %v1886 = vpop.f32.mrb[0].mxu0
  %v1887 = vadd.f32 0.0, %v1886
  %v1888 = vpop.f32.mrb[0].mxu0
  %v1889 = vpop.f32.mrb[0].mxu0
  %v1890 = vadd.f32 0.0, %v1889
  %v1891 = vpop.f32.mrb[0].mxu0
  %1892 = vmatprep.mubr.bf16.mxu0 0
  %1893 = vmatmul.mubr.bf16.gmra.mrb[0].mxu0 %v1752
  %v1894 = vpop.f32.mrb[0].mxu0
  %v1895 = vadd.f32 0.0, %v1894
  %v1896 = vpop.f32.mrb[0].mxu0
  %v1897 = vpop.f32.mrb[0].mxu0
  %v1898 = vadd.f32 0.0, %v1897
  %v1899 = vpop.f32.mrb[0].mxu0
  %1900 = vmatprep.mubr.bf16.mxu0 0
  %1901 = vmatmul.mubr.bf16.gmra.mrb[0].mxu0 %v1760
  %v1902 = vpop.f32.mrb[0].mxu0
  %v1903 = vadd.f32 0.0, %v1902
  %v1904 = vpop.f32.mrb[0].mxu0
  %v1905 = vpop.f32.mrb[0].mxu0
  %v1906 = vadd.f32 0.0, %v1905
  %v1907 = vpop.f32.mrb[0].mxu0
  %1908 = vmatprep.mubr.bf16.mxu0 0
  %1909 = vmatmul.mubr.bf16.gmra.mrb[0].mxu0 %v1768
  %v1910 = vpop.f32.mrb[0].mxu0
  %v1911 = vadd.f32 0.0, %v1910
  %v1912 = vpop.f32.mrb[0].mxu0
  %v1913 = vpop.f32.mrb[0].mxu0
  %v1914 = vadd.f32 0.0, %v1913
  %v1915 = vpop.f32.mrb[0].mxu0
  %1916 = vmatprep.mubr.bf16.mxu0 0
  %1917 = vmatmul.mubr.bf16.gmra.mrb[0].mxu0 %v1771
  %v1918 = vpop.f32.mrb[0].mxu0
  %v1919 = vadd.f32 0.0, %v1918
  %v1920 = vpop.f32.mrb[0].mxu0
  %v1921 = vpop.f32.mrb[0].mxu0
  %v1922 = vpop.f32.mrb[0].mxu0
  %1923 = vdwg.mxu0
  %v1940 = vunpack.c.l.b16 %v1675
  %v1941 = vunpack.c.l.b16 %v1676
  %v1942 = vunpack.c.l.b16 %v1677
  %v1943 = vunpack.c.l.b16 %v1678
  %v1944 = vunpack.c.l.b16 %v1679
  %v1945 = vunpack.c.l.b16 %v1680
  %v1946 = vunpack.c.l.b16 %v1681
  %v1947 = vunpack.c.l.b16 %v1682
  %v1948 = vunpack.c.l.b16 %v1683
  %v1949 = vunpack.c.l.b16 %v1684
  %v1950 = vunpack.c.l.b16 %v1685
  %v1951 = vunpack.c.l.b16 %v1686
  %v1952 = vunpack.c.l.b16 %v1687
  %v1953 = vunpack.c.l.b16 %v1688
  %v1954 = vunpack.c.l.b16 %v1689
  %v1955 = vunpack.c.l.b16 %v1690
  %v1956 = vpack.c.b16 %v1941, %v1940
  %v1957 = vpack.c.b16 %v1943, %v1942
  %v1958 = vpack.c.b16 %v1945, %v1944
  %v1959 = vpack.c.b16 %v1947, %v1946
  %v1960 = vpack.c.b16 %v1949, %v1948
  %v1961 = vpack.c.b16 %v1951, %v1950
  %v1962 = vpack.c.b16 %v1953, %v1952
  %v1963 = vpack.c.b16 %v1955, %v1954
  %1972 = vmatprep.subr.bf16.mxu0 0
  %1973 = vmatpush1.bf16.msra.mxu0 %v1956
  %1974 = vmatprep.subr.bf16.mxu0 0
  %1975 = vmatpush1.bf16.msra.mxu0 %v1957
  %1976 = vmatprep.subr.bf16.mxu0 0
  %1977 = vmatpush1.bf16.msra.mxu0 %v1958
  %1978 = vmatprep.subr.bf16.mxu0 0
  %1979 = vmatpush1.bf16.msra.mxu0 %v1959
  %1980 = vmatprep.subr.bf16.mxu0 0
  %1981 = vmatpush1.bf16.msra.mxu0 %v1960
  %1982 = vmatprep.subr.bf16.mxu0 0
  %1983 = vmatpush1.bf16.msra.mxu0 %v1961
  %1984 = vmatprep.subr.bf16.mxu0 0
  %1985 = vmatpush1.bf16.msra.mxu0 %v1962
  %1986 = vmatprep.subr.bf16.mxu0 0
  %1987 = vmatpush1.bf16.msra.mxu0 %v1963
  %1988 = vmatprep.subr.bf16.mxu0 0
  %1989 = vmatpush1.bf16.msra.mxu0 0
  %1990 = vmatprep.subr.bf16.mxu0 0
  %1991 = vmatpush1.bf16.msra.mxu0 0
  %1992 = vmatprep.subr.bf16.mxu0 0
  %1993 = vmatpush1.bf16.msra.mxu0 0
  %1994 = vmatprep.subr.bf16.mxu0 0
  %1995 = vmatpush1.bf16.msra.mxu0 0
  %1996 = vmatprep.subr.bf16.mxu0 0
  %1997 = vmatpush1.bf16.msra.mxu0 0
  %1998 = vmatprep.subr.bf16.mxu0 0
  %1999 = vmatpush1.bf16.msra.mxu0 0
  %2000 = vmatprep.subr.bf16.mxu0 0
  %2001 = vmatpush1.bf16.msra.mxu0 0
  %2002 = vmatprep.subr.bf16.mxu0 0
  %2003 = vmatpush1.bf16.msra.mxu0 0
  %2004 = vmatprep.mubr.bf16.mxu0 0
  %2005 = vmatmul.mubr.bf16.gmra.mrb[0].mxu0 %v1667
  %v2006 = vpop.f32.mrb[0].mxu0
  %v2007 = vadd.f32 %v1863, %v2006
  %v2008 = vpop.f32.mrb[0].mxu0
  %v2009 = vpop.f32.mrb[0].mxu0
  %v2010 = vadd.f32 %v1866, %v2009
  %v2011 = vpop.f32.mrb[0].mxu0
  %2012 = vmatprep.mubr.bf16.mxu0 0
  %2013 = vmatmul.mubr.bf16.gmra.mrb[0].mxu0 %v1668
  %v2014 = vpop.f32.mrb[0].mxu0
  %v2015 = vadd.f32 %v1871, %v2014
  %v2016 = vpop.f32.mrb[0].mxu0
  %v2017 = vpop.f32.mrb[0].mxu0
  %v2018 = vadd.f32 %v1874, %v2017
  %v2019 = vpop.f32.mrb[0].mxu0
  %2020 = vmatprep.mubr.bf16.mxu0 0
  %2021 = vmatmul.mubr.bf16.gmra.mrb[0].mxu0 %v1669
  %v2022 = vpop.f32.mrb[0].mxu0
  %v2023 = vadd.f32 %v1879, %v2022
  %v2024 = vpop.f32.mrb[0].mxu0
  %v2025 = vpop.f32.mrb[0].mxu0
  %v2026 = vadd.f32 %v1882, %v2025
  %v2027 = vpop.f32.mrb[0].mxu0
  %2028 = vmatprep.mubr.bf16.mxu0 0
  %2029 = vmatmul.mubr.bf16.gmra.mrb[0].mxu0 %v1670
  %v2030 = vpop.f32.mrb[0].mxu0
  %v2031 = vadd.f32 %v1887, %v2030
  %v2032 = vpop.f32.mrb[0].mxu0
  %v2033 = vpop.f32.mrb[0].mxu0
  %v2034 = vadd.f32 %v1890, %v2033
  %v2035 = vpop.f32.mrb[0].mxu0
  %2036 = vmatprep.mubr.bf16.mxu0 0
  %2037 = vmatmul.mubr.bf16.gmra.mrb[0].mxu0 %v1671
  %v2038 = vpop.f32.mrb[0].mxu0
  %v2039 = vadd.f32 %v1895, %v2038
  %v2040 = vpop.f32.mrb[0].mxu0
  %v2041 = vpop.f32.mrb[0].mxu0
  %v2042 = vadd.f32 %v1898, %v2041
  %v2043 = vpop.f32.mrb[0].mxu0
  %2044 = vmatprep.mubr.bf16.mxu0 0
  %2045 = vmatmul.mubr.bf16.gmra.mrb[0].mxu0 %v1672
  %v2046 = vpop.f32.mrb[0].mxu0
  %v2047 = vadd.f32 %v1903, %v2046
  %v2048 = vpop.f32.mrb[0].mxu0
  %v2049 = vpop.f32.mrb[0].mxu0
  %v2050 = vadd.f32 %v1906, %v2049
  %v2051 = vpop.f32.mrb[0].mxu0
  %2052 = vmatprep.mubr.bf16.mxu0 0
  %2053 = vmatmul.mubr.bf16.gmra.mrb[0].mxu0 %v1673
  %v2054 = vpop.f32.mrb[0].mxu0
  %v2055 = vadd.f32 %v1911, %v2054
  %v2056 = vpop.f32.mrb[0].mxu0
  %v2057 = vpop.f32.mrb[0].mxu0
  %v2058 = vadd.f32 %v1914, %v2057
  %v2059 = vpop.f32.mrb[0].mxu0
  %2060 = vmatprep.mubr.bf16.mxu0 0
  %2061 = vmatmul.mubr.bf16.gmra.mrb[0].mxu0 %v1674
  %v2062 = vpop.f32.mrb[0].mxu0
  %v2063 = vadd.f32 %v1919, %v2062
  %v2064 = vpop.f32.mrb[0].mxu0
  %v2065 = vpop.f32.mrb[0].mxu0
  %v2066 = vpop.f32.mrb[0].mxu0
  %2067 = vdwg.mxu0
  %v2068 = vld [vmem:[#allocation2] sm:$0xc0]
  %v2069 = vld [vmem:[#allocation2 + $0x8] sm:$0xff]
  %v2070 = vld [vmem:[#allocation2 + $0x10] sm:$0xff]
  %v2071 = vld [vmem:[#allocation2 + $0x18] sm:$0xff]
  %v2072 = vld [vmem:[#allocation2 + $0x20] sm:$0xff]
  %v2073 = vld [vmem:[#allocation2 + $0x28] sm:$0xff]
  %v2074 = vld [vmem:[#allocation2 + $0x30] sm:$0xff]
  %v2075 = vld [vmem:[#allocation2 + $0x38] sm:$0xff]
  %v2076 = vld [vmem:[#allocation2 + $0x40] sm:$0x3]
  %s2077 = scalar_lea.vmem %s3, 128
  %v2078 = vld [vmem:[%s2077] sm:$0xf]
  %v2079 = vld [vmem:[%s2077 + $0x4] sm:$0xf]
  %v2080 = vld [vmem:[%s2077 + $0x8] sm:$0xf]
  %v2081 = vld [vmem:[%s2077 + $0xc] sm:$0xf]
  %v2082 = vld [vmem:[%s2077 + $0x10] sm:$0xf]
  %v2083 = vld [vmem:[%s2077 + $0x14] sm:$0xf]
  %v2084 = vld [vmem:[%s2077 + $0x18] sm:$0xf]
  %v2085 = vld [vmem:[%s2077 + $0x1c] sm:$0xf]
  %v2086 = vld [vmem:[%s2077 + $0x20] sm:$0xf]
  %v2087 = vld [vmem:[%s2077 + $0x24] sm:$0xf]
  %v2088 = vld [vmem:[%s2077 + $0x28] sm:$0xf]
  %v2089 = vld [vmem:[%s2077 + $0x2c] sm:$0xf]
  %v2090 = vld [vmem:[%s2077 + $0x30] sm:$0xf]
  %v2091 = vld [vmem:[%s2077 + $0x34] sm:$0xf]
  %v2092 = vld [vmem:[%s2077 + $0x38] sm:$0xf]
  %v2093 = vld [vmem:[%s2077 + $0x3c] sm:$0xf]
  %vm2103 = vcmask 1041408
  %v2104 = vrot.slane %v2068, 6
  %v2105 = vrot.slane %v2069, 6
  %v2106 = vsel %vm2103, %v2104, %v2105
  %v2107 = vrot.slane %v2070, 6
  %v2108 = vsel %vm2103, %v2105, %v2107
  %v2109 = vrot.slane %v2071, 6
  %v2110 = vsel %vm2103, %v2107, %v2109
  %v2111 = vrot.slane %v2072, 6
  %v2112 = vsel %vm2103, %v2109, %v2111
  %v2113 = vrot.slane %v2073, 6
  %v2114 = vsel %vm2103, %v2111, %v2113
  %v2115 = vrot.slane %v2074, 6
  %v2116 = vsel %vm2103, %v2113, %v2115
  %v2117 = vrot.slane %v2075, 6
  %v2118 = vsel %vm2103, %v2115, %v2117
  %v2119 = vrot.slane %v2076, 6
  %v2120 = vsel %vm2103, %v2117, %v2119
  %v2145 = vunpack.c.l.b16 %v2078
  %v2146 = vunpack.c.l.b16 %v2079
  %v2147 = vunpack.c.l.b16 %v2080
  %v2148 = vunpack.c.l.b16 %v2081
  %v2149 = vunpack.c.l.b16 %v2082
  %v2150 = vunpack.c.l.b16 %v2083
  %v2151 = vunpack.c.l.b16 %v2084
  %v2152 = vunpack.c.l.b16 %v2085
  %v2153 = vunpack.c.l.b16 %v2086
  %v2154 = vunpack.c.l.b16 %v2087
  %v2155 = vunpack.c.l.b16 %v2088
  %v2156 = vunpack.c.l.b16 %v2089
  %v2157 = vunpack.c.l.b16 %v2090
  %v2158 = vunpack.c.l.b16 %v2091
  %v2159 = vunpack.c.l.b16 %v2092
  %v2160 = vunpack.c.l.b16 %v2093
  %v2161 = vpack.c.b16 %v2146, %v2145
  %v2162 = vpack.c.b16 %v2148, %v2147
  %v2163 = vpack.c.b16 %v2150, %v2149
  %v2164 = vpack.c.b16 %v2152, %v2151
  %v2165 = vpack.c.b16 %v2154, %v2153
  %v2166 = vpack.c.b16 %v2156, %v2155
  %v2167 = vpack.c.b16 %v2158, %v2157
  %v2168 = vpack.c.b16 %v2160, %v2159
  %2177 = vmatprep.subr.bf16.mxu0 0
  %2178 = vmatpush1.bf16.msra.mxu0 %v2161
  %2179 = vmatprep.subr.bf16.mxu0 0
  %2180 = vmatpush1.bf16.msra.mxu0 %v2162
  %2181 = vmatprep.subr.bf16.mxu0 0
  %2182 = vmatpush1.bf16.msra.mxu0 %v2163
  %2183 = vmatprep.subr.bf16.mxu0 0
  %2184 = vmatpush1.bf16.msra.mxu0 %v2164
  %2185 = vmatprep.subr.bf16.mxu0 0
  %2186 = vmatpush1.bf16.msra.mxu0 %v2165
  %2187 = vmatprep.subr.bf16.mxu0 0
  %2188 = vmatpush1.bf16.msra.mxu0 %v2166
  %2189 = vmatprep.subr.bf16.mxu0 0
  %2190 = vmatpush1.bf16.msra.mxu0 %v2167
  %2191 = vmatprep.subr.bf16.mxu0 0
  %2192 = vmatpush1.bf16.msra.mxu0 %v2168
  %2193 = vmatprep.subr.bf16.mxu0 0
  %2194 = vmatpush1.bf16.msra.mxu0 0
  %2195 = vmatprep.subr.bf16.mxu0 0
  %2196 = vmatpush1.bf16.msra.mxu0 0
  %2197 = vmatprep.subr.bf16.mxu0 0
  %2198 = vmatpush1.bf16.msra.mxu0 0
  %2199 = vmatprep.subr.bf16.mxu0 0
  %2200 = vmatpush1.bf16.msra.mxu0 0
  %2201 = vmatprep.subr.bf16.mxu0 0
  %2202 = vmatpush1.bf16.msra.mxu0 0
  %2203 = vmatprep.subr.bf16.mxu0 0
  %2204 = vmatpush1.bf16.msra.mxu0 0
  %2205 = vmatprep.subr.bf16.mxu0 0
  %2206 = vmatpush1.bf16.msra.mxu0 0
  %2207 = vmatprep.subr.bf16.mxu0 0
  %2208 = vmatpush1.bf16.msra.mxu0 0
  %2209 = vmatprep.mubr.bf16.mxu0 0
  %2210 = vmatmul.mubr.bf16.gmra.mrb[0].mxu0 %v2106
  %v2211 = vpop.f32.mrb[0].mxu0
  %v2212 = vadd.f32 0.0, %v2211
  %v2213 = vpop.f32.mrb[0].mxu0
  %v2214 = vpop.f32.mrb[0].mxu0
  %v2215 = vadd.f32 0.0, %v2214
  %v2216 = vpop.f32.mrb[0].mxu0
  %2217 = vmatprep.mubr.bf16.mxu0 0
  %2218 = vmatmul.mubr.bf16.gmra.mrb[0].mxu0 %v2108
  %v2219 = vpop.f32.mrb[0].mxu0
  %v2220 = vadd.f32 0.0, %v2219
  %v2221 = vpop.f32.mrb[0].mxu0
  %v2222 = vpop.f32.mrb[0].mxu0
  %v2223 = vadd.f32 0.0, %v2222
  %v2224 = vpop.f32.mrb[0].mxu0
  %2225 = vmatprep.mubr.bf16.mxu0 0
  %2226 = vmatmul.mubr.bf16.gmra.mrb[0].mxu0 %v2110
  %v2227 = vpop.f32.mrb[0].mxu0
  %v2228 = vadd.f32 0.0, %v2227
  %v2229 = vpop.f32.mrb[0].mxu0
  %v2230 = vpop.f32.mrb[0].mxu0
  %v2231 = vadd.f32 0.0, %v2230
  %v2232 = vpop.f32.mrb[0].mxu0
  %2233 = vmatprep.mubr.bf16.mxu0 0
  %2234 = vmatmul.mubr.bf16.gmra.mrb[0].mxu0 %v2112
  %v2235 = vpop.f32.mrb[0].mxu0
  %v2236 = vadd.f32 0.0, %v2235
  %v2237 = vpop.f32.mrb[0].mxu0
  %v2238 = vpop.f32.mrb[0].mxu0
  %v2239 = vadd.f32 0.0, %v2238
  %v2240 = vpop.f32.mrb[0].mxu0
  %2241 = vmatprep.mubr.bf16.mxu0 0
  %2242 = vmatmul.mubr.bf16.gmra.mrb[0].mxu0 %v2114
  %v2243 = vpop.f32.mrb[0].mxu0
  %v2244 = vadd.f32 0.0, %v2243
  %v2245 = vpop.f32.mrb[0].mxu0
  %v2246 = vpop.f32.mrb[0].mxu0
  %v2247 = vadd.f32 0.0, %v2246
  %v2248 = vpop.f32.mrb[0].mxu0
  %2249 = vmatprep.mubr.bf16.mxu0 0
  %2250 = vmatmul.mubr.bf16.gmra.mrb[0].mxu0 %v2116
  %v2251 = vpop.f32.mrb[0].mxu0
  %v2252 = vadd.f32 0.0, %v2251
  %v2253 = vpop.f32.mrb[0].mxu0
  %v2254 = vpop.f32.mrb[0].mxu0
  %v2255 = vadd.f32 0.0, %v2254
  %v2256 = vpop.f32.mrb[0].mxu0
  %2257 = vmatprep.mubr.bf16.mxu0 0
  %2258 = vmatmul.mubr.bf16.gmra.mrb[0].mxu0 %v2118
  %v2259 = vpop.f32.mrb[0].mxu0
  %v2260 = vadd.f32 0.0, %v2259
  %v2261 = vpop.f32.mrb[0].mxu0
  %v2262 = vpop.f32.mrb[0].mxu0
  %v2263 = vadd.f32 0.0, %v2262
  %v2264 = vpop.f32.mrb[0].mxu0
  %2265 = vmatprep.mubr.bf16.mxu0 0
  %2266 = vmatmul.mubr.bf16.gmra.mrb[0].mxu0 %v2120
  %v2267 = vpop.f32.mrb[0].mxu0
  %v2268 = vadd.f32 0.0, %v2267
  %v2269 = vpop.f32.mrb[0].mxu0
  %v2270 = vpop.f32.mrb[0].mxu0
  %v2271 = vpop.f32.mrb[0].mxu0
  %2272 = vdwg.mxu0
  %v2273 = vadd.f32 %v2007, %v2212
  %v2274 = vadd.f32 %v2010, %v2215
  %v2275 = vadd.f32 %v2015, %v2220
  %v2276 = vadd.f32 %v2018, %v2223
  %v2277 = vadd.f32 %v2023, %v2228
  %v2278 = vadd.f32 %v2026, %v2231
  %v2279 = vadd.f32 %v2031, %v2236
  %v2280 = vadd.f32 %v2034, %v2239
  %v2281 = vadd.f32 %v2039, %v2244
  %v2282 = vadd.f32 %v2042, %v2247
  %v2283 = vadd.f32 %v2047, %v2252
  %v2284 = vadd.f32 %v2050, %v2255
  %v2285 = vadd.f32 %v2055, %v2260
  %v2286 = vadd.f32 %v2058, %v2263
  %v2287 = vadd.f32 %v2063, %v2268
  %v2288 = vld [vmem:[#allocation2 + $0x40] sm:$0x7]
  %s2289 = scalar_lea.vmem %s3, 192
  %v2290 = vld [vmem:[%s2289] sm:$0xf]
  %v2291 = vld [vmem:[%s2289 + $0x4] sm:$0xf]
  %v2292 = vld [vmem:[%s2289 + $0x8] sm:$0xf]
  %v2293 = vld [vmem:[%s2289 + $0xc] sm:$0xf]
  %v2294 = vld [vmem:[%s2289 + $0x10] sm:$0xf]
  %v2295 = vld [vmem:[%s2289 + $0x14] sm:$0xf]
  %v2296 = vld [vmem:[%s2289 + $0x18] sm:$0xf]
  %v2297 = vld [vmem:[%s2289 + $0x1c] sm:$0xf]
  %v2298 = vld [vmem:[%s2289 + $0x20] sm:$0xf]
  %v2299 = vld [vmem:[%s2289 + $0x24] sm:$0xf]
  %v2300 = vld [vmem:[%s2289 + $0x28] sm:$0xf]
  %v2301 = vld [vmem:[%s2289 + $0x2c] sm:$0xf]
  %v2302 = vld [vmem:[%s2289 + $0x30] sm:$0xf]
  %v2303 = vld [vmem:[%s2289 + $0x34] sm:$0xf]
  %v2304 = vld [vmem:[%s2289 + $0x38] sm:$0xf]
  %v2305 = vld [vmem:[%s2289 + $0x3c] sm:$0xf]
  %vm2306 = vsmask.f32 1280
  %v2308 = vshrl.u32 %v2068, 16
  %v2310 = vrot.slane %v2308, 6
  %v2311 = vshll.u32 %v2068, 16
  %v2313 = vrot.slane %v2311, 7
  %v2314 = vor.u32 %v2310, %v2313
  %v2316 = vshrl.u32 %v2069, 16
  %v2318 = vrot.slane %v2316, 6
  %v2319 = vshll.u32 %v2069, 16
  %v2321 = vrot.slane %v2319, 7
  %v2322 = vor.u32 %v2318, %v2321
  %v2323 = vsel %vm2306, %v2314, %v2322
  %v2325 = vshrl.u32 %v2070, 16
  %v2327 = vrot.slane %v2325, 6
  %v2328 = vshll.u32 %v2070, 16
  %v2330 = vrot.slane %v2328, 7
  %v2331 = vor.u32 %v2327, %v2330
  %v2332 = vsel %vm2306, %v2322, %v2331
  %v2334 = vshrl.u32 %v2071, 16
  %v2336 = vrot.slane %v2334, 6
  %v2337 = vshll.u32 %v2071, 16
  %v2339 = vrot.slane %v2337, 7
  %v2340 = vor.u32 %v2336, %v2339
  %v2341 = vsel %vm2306, %v2331, %v2340
  %v2343 = vshrl.u32 %v2072, 16
  %v2345 = vrot.slane %v2343, 6
  %v2346 = vshll.u32 %v2072, 16
  %v2348 = vrot.slane %v2346, 7
  %v2349 = vor.u32 %v2345, %v2348
  %v2350 = vsel %vm2306, %v2340, %v2349
  %v2352 = vshrl.u32 %v2073, 16
  %v2354 = vrot.slane %v2352, 6
  %v2355 = vshll.u32 %v2073, 16
  %v2357 = vrot.slane %v2355, 7
  %v2358 = vor.u32 %v2354, %v2357
  %v2359 = vsel %vm2306, %v2349, %v2358
  %v2361 = vshrl.u32 %v2074, 16
  %v2363 = vrot.slane %v2361, 6
  %v2364 = vshll.u32 %v2074, 16
  %v2366 = vrot.slane %v2364, 7
  %v2367 = vor.u32 %v2363, %v2366
  %v2368 = vsel %vm2306, %v2358, %v2367
  %v2370 = vshrl.u32 %v2075, 16
  %v2372 = vrot.slane %v2370, 6
  %v2373 = vshll.u32 %v2075, 16
  %v2375 = vrot.slane %v2373, 7
  %v2376 = vor.u32 %v2372, %v2375
  %v2377 = vsel %vm2306, %v2367, %v2376
  %v2379 = vshrl.u32 %v2288, 16
  %v2381 = vrot.slane %v2379, 6
  %v2382 = vshll.u32 %v2288, 16
  %v2384 = vrot.slane %v2382, 7
  %v2385 = vor.u32 %v2381, %v2384
  %v2386 = vsel %vm2306, %v2376, %v2385
  %v2411 = vunpack.c.l.b16 %v2290
  %v2412 = vunpack.c.l.b16 %v2291
  %v2413 = vunpack.c.l.b16 %v2292
  %v2414 = vunpack.c.l.b16 %v2293
  %v2415 = vunpack.c.l.b16 %v2294
  %v2416 = vunpack.c.l.b16 %v2295
  %v2417 = vunpack.c.l.b16 %v2296
  %v2418 = vunpack.c.l.b16 %v2297
  %v2419 = vunpack.c.l.b16 %v2298
  %v2420 = vunpack.c.l.b16 %v2299
  %v2421 = vunpack.c.l.b16 %v2300
  %v2422 = vunpack.c.l.b16 %v2301
  %v2423 = vunpack.c.l.b16 %v2302
  %v2424 = vunpack.c.l.b16 %v2303
  %v2425 = vunpack.c.l.b16 %v2304
  %v2426 = vunpack.c.l.b16 %v2305
  %v2427 = vpack.c.b16 %v2412, %v2411
  %v2428 = vpack.c.b16 %v2414, %v2413
  %v2429 = vpack.c.b16 %v2416, %v2415
  %v2430 = vpack.c.b16 %v2418, %v2417
  %v2431 = vpack.c.b16 %v2420, %v2419
  %v2432 = vpack.c.b16 %v2422, %v2421
  %v2433 = vpack.c.b16 %v2424, %v2423
  %v2434 = vpack.c.b16 %v2426, %v2425
  %2443 = vmatprep.subr.bf16.mxu0 0
  %2444 = vmatpush1.bf16.msra.mxu0 %v2427
  %2445 = vmatprep.subr.bf16.mxu0 0
  %2446 = vmatpush1.bf16.msra.mxu0 %v2428
  %2447 = vmatprep.subr.bf16.mxu0 0
  %2448 = vmatpush1.bf16.msra.mxu0 %v2429
  %2449 = vmatprep.subr.bf16.mxu0 0
  %2450 = vmatpush1.bf16.msra.mxu0 %v2430
  %2451 = vmatprep.subr.bf16.mxu0 0
  %2452 = vmatpush1.bf16.msra.mxu0 %v2431
  %2453 = vmatprep.subr.bf16.mxu0 0
  %2454 = vmatpush1.bf16.msra.mxu0 %v2432
  %2455 = vmatprep.subr.bf16.mxu0 0
  %2456 = vmatpush1.bf16.msra.mxu0 %v2433
  %2457 = vmatprep.subr.bf16.mxu0 0
  %2458 = vmatpush1.bf16.msra.mxu0 %v2434
  %2459 = vmatprep.subr.bf16.mxu0 0
  %2460 = vmatpush1.bf16.msra.mxu0 0
  %2461 = vmatprep.subr.bf16.mxu0 0
  %2462 = vmatpush1.bf16.msra.mxu0 0
  %2463 = vmatprep.subr.bf16.mxu0 0
  %2464 = vmatpush1.bf16.msra.mxu0 0
  %2465 = vmatprep.subr.bf16.mxu0 0
  %2466 = vmatpush1.bf16.msra.mxu0 0
  %2467 = vmatprep.subr.bf16.mxu0 0
  %2468 = vmatpush1.bf16.msra.mxu0 0
  %2469 = vmatprep.subr.bf16.mxu0 0
  %2470 = vmatpush1.bf16.msra.mxu0 0
  %2471 = vmatprep.subr.bf16.mxu0 0
  %2472 = vmatpush1.bf16.msra.mxu0 0
  %2473 = vmatprep.subr.bf16.mxu0 0
  %2474 = vmatpush1.bf16.msra.mxu0 0
  %2475 = vmatprep.mubr.bf16.mxu0 0
  %2476 = vmatmul.mubr.bf16.gmra.mrb[0].mxu0 %v2323
  %v2477 = vpop.f32.mrb[0].mxu0
  %v2478 = vadd.f32 0.0, %v2477
  %v2479 = vpop.f32.mrb[0].mxu0
  %v2480 = vpop.f32.mrb[0].mxu0
  %v2481 = vadd.f32 0.0, %v2480
  %v2482 = vpop.f32.mrb[0].mxu0
  %2483 = vmatprep.mubr.bf16.mxu0 0
  %2484 = vmatmul.mubr.bf16.gmra.mrb[0].mxu0 %v2332
  %v2485 = vpop.f32.mrb[0].mxu0
  %v2486 = vadd.f32 0.0, %v2485
  %v2487 = vpop.f32.mrb[0].mxu0
  %v2488 = vpop.f32.mrb[0].mxu0
  %v2489 = vadd.f32 0.0, %v2488
  %v2490 = vpop.f32.mrb[0].mxu0
  %2491 = vmatprep.mubr.bf16.mxu0 0
  %2492 = vmatmul.mubr.bf16.gmra.mrb[0].mxu0 %v2341
  %v2493 = vpop.f32.mrb[0].mxu0
  %v2494 = vadd.f32 0.0, %v2493
  %v2495 = vpop.f32.mrb[0].mxu0
  %v2496 = vpop.f32.mrb[0].mxu0
  %v2497 = vadd.f32 0.0, %v2496
  %v2498 = vpop.f32.mrb[0].mxu0
  %2499 = vmatprep.mubr.bf16.mxu0 0
  %2500 = vmatmul.mubr.bf16.gmra.mrb[0].mxu0 %v2350
  %v2501 = vpop.f32.mrb[0].mxu0
  %v2502 = vadd.f32 0.0, %v2501
  %v2503 = vpop.f32.mrb[0].mxu0
  %v2504 = vpop.f32.mrb[0].mxu0
  %v2505 = vadd.f32 0.0, %v2504
  %v2506 = vpop.f32.mrb[0].mxu0
  %2507 = vmatprep.mubr.bf16.mxu0 0
  %2508 = vmatmul.mubr.bf16.gmra.mrb[0].mxu0 %v2359
  %v2509 = vpop.f32.mrb[0].mxu0
  %v2510 = vadd.f32 0.0, %v2509
  %v2511 = vpop.f32.mrb[0].mxu0
  %v2512 = vpop.f32.mrb[0].mxu0
  %v2513 = vadd.f32 0.0, %v2512
  %v2514 = vpop.f32.mrb[0].mxu0
  %2515 = vmatprep.mubr.bf16.mxu0 0
  %2516 = vmatmul.mubr.bf16.gmra.mrb[0].mxu0 %v2368
  %v2517 = vpop.f32.mrb[0].mxu0
  %v2518 = vadd.f32 0.0, %v2517
  %v2519 = vpop.f32.mrb[0].mxu0
  %v2520 = vpop.f32.mrb[0].mxu0
  %v2521 = vadd.f32 0.0, %v2520
  %v2522 = vpop.f32.mrb[0].mxu0
  %2523 = vmatprep.mubr.bf16.mxu0 0
  %2524 = vmatmul.mubr.bf16.gmra.mrb[0].mxu0 %v2377
  %v2525 = vpop.f32.mrb[0].mxu0
  %v2526 = vadd.f32 0.0, %v2525
  %v2527 = vpop.f32.mrb[0].mxu0
  %v2528 = vpop.f32.mrb[0].mxu0
  %v2529 = vadd.f32 0.0, %v2528
  %v2530 = vpop.f32.mrb[0].mxu0
  %2531 = vmatprep.mubr.bf16.mxu0 0
  %2532 = vmatmul.mubr.bf16.gmra.mrb[0].mxu0 %v2386
  %v2533 = vpop.f32.mrb[0].mxu0
  %v2534 = vadd.f32 0.0, %v2533
  %v2535 = vpop.f32.mrb[0].mxu0
  %v2536 = vpop.f32.mrb[0].mxu0
  %v2537 = vpop.f32.mrb[0].mxu0
  %2538 = vdwg.mxu0
  %v2539 = vadd.f32 %v2273, %v2478
  %v2540 = vadd.f32 %v2274, %v2481
  %v2541 = vadd.f32 %v2275, %v2486
  %v2542 = vadd.f32 %v2276, %v2489
  %v2543 = vadd.f32 %v2277, %v2494
  %v2544 = vadd.f32 %v2278, %v2497
  %v2545 = vadd.f32 %v2279, %v2502
  %v2546 = vadd.f32 %v2280, %v2505
  %v2547 = vadd.f32 %v2281, %v2510
  %v2548 = vadd.f32 %v2282, %v2513
  %v2549 = vadd.f32 %v2283, %v2518
  %v2550 = vadd.f32 %v2284, %v2521
  %v2551 = vadd.f32 %v2285, %v2526
  %v2552 = vadd.f32 %v2286, %v2529
  %v2553 = vadd.f32 %v2287, %v2534
  %v2554 = vld [vmem:[%s4] sm:$0x1]
  %v2556 = vlaneseq
  %v2557 = vshrl.u32 %v2556, 7
  %v2558 = vsub.s32 0, %v2557
  %v2559 = vrot.slane %v2554, %v2558
  %v2561 = vadd.f32 %v2539, %v2559
  %v2562 = vadd.f32 %v2540, %v2559
  %v2563 = vadd.f32 %v2541, %v2559
  %v2564 = vadd.f32 %v2542, %v2559
  %v2565 = vadd.f32 %v2543, %v2559
  %v2566 = vadd.f32 %v2544, %v2559
  %v2567 = vadd.f32 %v2545, %v2559
  %v2568 = vadd.f32 %v2546, %v2559
  %v2569 = vadd.f32 %v2547, %v2559
  %v2570 = vadd.f32 %v2548, %v2559
  %v2571 = vadd.f32 %v2549, %v2559
  %v2572 = vadd.f32 %v2550, %v2559
  %v2573 = vadd.f32 %v2551, %v2559
  %v2574 = vadd.f32 %v2552, %v2559
  %v2575 = vadd.f32 %v2553, %v2559
  %v2576 = vmax.f32 %v2561, 0.0
  %v2577 = vmax.f32 %v2562, 0.0
  %v2578 = vmax.f32 %v2563, 0.0
  %v2579 = vmax.f32 %v2564, 0.0
  %v2580 = vmax.f32 %v2565, 0.0
  %v2581 = vmax.f32 %v2566, 0.0
  %v2582 = vmax.f32 %v2567, 0.0
  %v2583 = vmax.f32 %v2568, 0.0
  %v2584 = vmax.f32 %v2569, 0.0
  %v2585 = vmax.f32 %v2570, 0.0
  %v2586 = vmax.f32 %v2571, 0.0
  %v2587 = vmax.f32 %v2572, 0.0
  %v2588 = vmax.f32 %v2573, 0.0
  %v2589 = vmax.f32 %v2574, 0.0
  %v2590 = vmax.f32 %v2575, 0.0
  %v2591 = vpack.c.bf16 %v2577, %v2576
  %v2592 = vpack.c.bf16 %v2579, %v2578
  %v2593 = vpack.c.bf16 %v2581, %v2580
  %v2594 = vpack.c.bf16 %v2583, %v2582
  %v2595 = vpack.c.bf16 %v2585, %v2584
  %v2596 = vpack.c.bf16 %v2587, %v2586
  %v2597 = vpack.c.bf16 %v2589, %v2588
  %v2598 = vpack.c.bf16 %v2590, %v2590
  %2599 = vst.msk [vmem:[#allocation3] sm:$0xff] %vm387, %v2591
  %2600 = vst.msk [vmem:[#allocation3 + $0x8] sm:$0xff] %vm387, %v2592
  %2601 = vst.msk [vmem:[#allocation3 + $0x10] sm:$0xff] %vm387, %v2593
  %2602 = vst.msk [vmem:[#allocation3 + $0x18] sm:$0xff] %vm387, %v2594
  %2603 = vst.msk [vmem:[#allocation3 + $0x20] sm:$0xff] %vm387, %v2595
  %2604 = vst.msk [vmem:[#allocation3 + $0x28] sm:$0xff] %vm387, %v2596
  %2605 = vst.msk [vmem:[#allocation3 + $0x30] sm:$0xff] %vm387, %v2597
  %vm2606 = vcmask 519168
  %2607 = vst.msk [vmem:[#allocation3 + $0x38] sm:$0xf] %vm2606, %v2598
  %v2608 = vld [vmem:[#allocation3] sm:$0xff]
  %v2609 = vld [vmem:[#allocation3 + $0x8] sm:$0xff]
  %v2610 = vld [vmem:[#allocation3 + $0x10] sm:$0xff]
  %v2611 = vld [vmem:[#allocation3 + $0x18] sm:$0xff]
  %v2612 = vld [vmem:[#allocation3 + $0x20] sm:$0xff]
  %v2613 = vld [vmem:[#allocation3 + $0x28] sm:$0xff]
  %v2614 = vld [vmem:[%s5] sm:$0xf]
  %v2615 = vld [vmem:[%s5 + $0x4] sm:$0xf]
  %v2616 = vld [vmem:[%s5 + $0x8] sm:$0xf]
  %v2617 = vld [vmem:[%s5 + $0xc] sm:$0xf]
  %v2618 = vld [vmem:[%s5 + $0x10] sm:$0xf]
  %v2619 = vld [vmem:[%s5 + $0x14] sm:$0xf]
  %v2620 = vld [vmem:[%s5 + $0x18] sm:$0xf]
  %v2621 = vld [vmem:[%s5 + $0x1c] sm:$0xf]
  %v2622 = vld [vmem:[#allocation3 + $0x30] sm:$0x1]
  %s2623 = scalar_lea.vmem %s5, 32
  %v2624 = vld [vmem:[%s2623] sm:$0xf]
  %v2625 = vld [vmem:[%s2623 + $0x4] sm:$0xf]
  %v2626 = vld [vmem:[%s2623 + $0x8] sm:$0xf]
  %v2627 = vld [vmem:[%s2623 + $0xc] sm:$0xf]
  %v2628 = vld [vmem:[%s2623 + $0x10] sm:$0xf]
  %v2629 = vld [vmem:[%s2623 + $0x14] sm:$0xf]
  %v2630 = vld [vmem:[%s2623 + $0x18] sm:$0xf]
  %v2631 = vld [vmem:[%s2623 + $0x1c] sm:$0xf]
  %v2633 = vshrl.u32 %v2608, 16
  %v2635 = vshll.u32 %v2608, 16
  %v2637 = vrot.slane %v2635, 1
  %v2638 = vor.u32 %v2633, %v2637
  %v2640 = vshll.u32 %v2609, 16
  %v2642 = vrot.slane %v2640, 1
  %v2643 = vsel %vm163, %v2638, %v2642
  %v2644 = vshrl.u32 %v2609, 16
  %v2646 = vor.u32 %v2644, %v2642
  %v2648 = vshll.u32 %v2610, 16
  %v2650 = vrot.slane %v2648, 1
  %v2651 = vsel %vm163, %v2646, %v2650
  %v2652 = vshrl.u32 %v2610, 16
  %v2654 = vor.u32 %v2652, %v2650
  %v2656 = vshll.u32 %v2611, 16
  %v2658 = vrot.slane %v2656, 1
  %v2659 = vsel %vm163, %v2654, %v2658
  %v2660 = vshrl.u32 %v2611, 16
  %v2662 = vor.u32 %v2660, %v2658
  %v2664 = vshll.u32 %v2612, 16
  %v2666 = vrot.slane %v2664, 1
  %v2667 = vsel %vm163, %v2662, %v2666
  %v2668 = vshrl.u32 %v2612, 16
  %v2670 = vor.u32 %v2668, %v2666
  %v2672 = vshll.u32 %v2613, 16
  %v2674 = vrot.slane %v2672, 1
  %v2675 = vsel %vm163, %v2670, %v2674
  %v2676 = vshrl.u32 %v2613, 16
  %v2678 = vor.u32 %v2676, %v2674
  %v2680 = vshll.u32 %v2622, 16
  %v2682 = vrot.slane %v2680, 1
  %v2683 = vsel %vm163, %v2678, %v2682
  %v2692 = vunpack.c.l.b16 %v2624
  %v2693 = vunpack.c.l.b16 %v2625
  %v2694 = vunpack.c.l.b16 %v2626
  %v2695 = vunpack.c.l.b16 %v2627
  %v2696 = vunpack.c.l.b16 %v2628
  %v2697 = vunpack.c.l.b16 %v2629
  %v2698 = vunpack.c.l.b16 %v2630
  %v2699 = vunpack.c.l.b16 %v2631
  %v2700 = vpack.c.b16 %v2693, %v2692
  %v2701 = vpack.c.b16 %v2695, %v2694
  %v2702 = vpack.c.b16 %v2697, %v2696
  %v2703 = vpack.c.b16 %v2699, %v2698
  %v2709 = vsel %vm387, %v2643, 0
  %v2712 = vsel %vm387, %v2651, 0
  %v2715 = vsel %vm387, %v2659, 0
  %v2718 = vsel %vm387, %v2667, 0
  %v2721 = vsel %vm387, %v2675, 0
  %v2724 = vsel %vm387, %v2683, 0
  %2726 = vmatprep.subr.bf16.mxu0 0
  %2727 = vmatpush1.bf16.msra.mxu0 %v2700
  %2728 = vmatprep.subr.bf16.mxu0 0
  %2729 = vmatpush1.bf16.msra.mxu0 %v2701
  %2730 = vmatprep.subr.bf16.mxu0 0
  %2731 = vmatpush1.bf16.msra.mxu0 %v2702
  %2732 = vmatprep.subr.bf16.mxu0 0
  %2733 = vmatpush1.bf16.msra.mxu0 %v2703
  %2734 = vmatprep.subr.bf16.mxu0 0
  %2735 = vmatpush1.bf16.msra.mxu0 0
  %2736 = vmatprep.subr.bf16.mxu0 0
  %2737 = vmatpush1.bf16.msra.mxu0 0
  %2738 = vmatprep.subr.bf16.mxu0 0
  %2739 = vmatpush1.bf16.msra.mxu0 0
  %2740 = vmatprep.subr.bf16.mxu0 0
  %2741 = vmatpush1.bf16.msra.mxu0 0
  %2742 = vmatprep.subr.bf16.mxu0 0
  %2743 = vmatpush1.bf16.msra.mxu0 0
  %2744 = vmatprep.subr.bf16.mxu0 0
  %2745 = vmatpush1.bf16.msra.mxu0 0
  %2746 = vmatprep.subr.bf16.mxu0 0
  %2747 = vmatpush1.bf16.msra.mxu0 0
  %2748 = vmatprep.subr.bf16.mxu0 0
  %2749 = vmatpush1.bf16.msra.mxu0 0
  %2750 = vmatprep.subr.bf16.mxu0 0
  %2751 = vmatpush1.bf16.msra.mxu0 0
  %2752 = vmatprep.subr.bf16.mxu0 0
  %2753 = vmatpush1.bf16.msra.mxu0 0
  %2754 = vmatprep.subr.bf16.mxu0 0
  %2755 = vmatpush1.bf16.msra.mxu0 0
  %2756 = vmatprep.subr.bf16.mxu0 0
  %2757 = vmatpush1.bf16.msra.mxu0 0
  %2758 = vmatprep.mubr.bf16.mxu0 0
  %2759 = vmatmul.mubr.bf16.gmra.mrb[0].mxu0 %v2709
  %v2760 = vpop.f32.mrb[0].mxu0
  %v2761 = vadd.f32 0.0, %v2760
  %v2762 = vpop.f32.mrb[0].mxu0
  %v2763 = vpop.f32.mrb[0].mxu0
  %v2764 = vadd.f32 0.0, %v2763
  %v2765 = vpop.f32.mrb[0].mxu0
  %2766 = vmatprep.mubr.bf16.mxu0 0
  %2767 = vmatmul.mubr.bf16.gmra.mrb[0].mxu0 %v2712
  %v2768 = vpop.f32.mrb[0].mxu0
  %v2769 = vadd.f32 0.0, %v2768
  %v2770 = vpop.f32.mrb[0].mxu0
  %v2771 = vpop.f32.mrb[0].mxu0
  %v2772 = vadd.f32 0.0, %v2771
  %v2773 = vpop.f32.mrb[0].mxu0
  %2774 = vmatprep.mubr.bf16.mxu0 0
  %2775 = vmatmul.mubr.bf16.gmra.mrb[0].mxu0 %v2715
  %v2776 = vpop.f32.mrb[0].mxu0
  %v2777 = vadd.f32 0.0, %v2776
  %v2778 = vpop.f32.mrb[0].mxu0
  %v2779 = vpop.f32.mrb[0].mxu0
  %v2780 = vadd.f32 0.0, %v2779
  %v2781 = vpop.f32.mrb[0].mxu0
  %2782 = vmatprep.mubr.bf16.mxu0 0
  %2783 = vmatmul.mubr.bf16.gmra.mrb[0].mxu0 %v2718
  %v2784 = vpop.f32.mrb[0].mxu0
  %v2785 = vadd.f32 0.0, %v2784
  %v2786 = vpop.f32.mrb[0].mxu0
  %v2787 = vpop.f32.mrb[0].mxu0
  %v2788 = vadd.f32 0.0, %v2787
  %v2789 = vpop.f32.mrb[0].mxu0
  %2790 = vmatprep.mubr.bf16.mxu0 0
  %2791 = vmatmul.mubr.bf16.gmra.mrb[0].mxu0 %v2721
  %v2792 = vpop.f32.mrb[0].mxu0
  %v2793 = vadd.f32 0.0, %v2792
  %v2794 = vpop.f32.mrb[0].mxu0
  %v2795 = vpop.f32.mrb[0].mxu0
  %v2796 = vadd.f32 0.0, %v2795
  %v2797 = vpop.f32.mrb[0].mxu0
  %2798 = vmatprep.mubr.bf16.mxu0 0
  %2799 = vmatmul.mubr.bf16.gmra.mrb[0].mxu0 %v2724
  %v2800 = vpop.f32.mrb[0].mxu0
  %v2801 = vadd.f32 0.0, %v2800
  %v2802 = vpop.f32.mrb[0].mxu0
  %v2803 = vpop.f32.mrb[0].mxu0
  %v2804 = vadd.f32 0.0, %v2803
  %v2805 = vpop.f32.mrb[0].mxu0
  %2806 = vdwg.mxu0
  %v2815 = vunpack.c.l.b16 %v2614
  %v2816 = vunpack.c.l.b16 %v2615
  %v2817 = vunpack.c.l.b16 %v2616
  %v2818 = vunpack.c.l.b16 %v2617
  %v2819 = vunpack.c.l.b16 %v2618
  %v2820 = vunpack.c.l.b16 %v2619
  %v2821 = vunpack.c.l.b16 %v2620
  %v2822 = vunpack.c.l.b16 %v2621
  %v2823 = vpack.c.b16 %v2816, %v2815
  %v2824 = vpack.c.b16 %v2818, %v2817
  %v2825 = vpack.c.b16 %v2820, %v2819
  %v2826 = vpack.c.b16 %v2822, %v2821
  %v2831 = vsel %vm387, %v2608, 0
  %v2833 = vsel %vm387, %v2609, 0
  %v2835 = vsel %vm387, %v2610, 0
  %v2837 = vsel %vm387, %v2611, 0
  %v2839 = vsel %vm387, %v2612, 0
  %v2841 = vsel %vm387, %v2613, 0
  %2843 = vmatprep.subr.bf16.mxu0 0
  %2844 = vmatpush1.bf16.msra.mxu0 %v2823
  %2845 = vmatprep.subr.bf16.mxu0 0
  %2846 = vmatpush1.bf16.msra.mxu0 %v2824
  %2847 = vmatprep.subr.bf16.mxu0 0
  %2848 = vmatpush1.bf16.msra.mxu0 %v2825
  %2849 = vmatprep.subr.bf16.mxu0 0
  %2850 = vmatpush1.bf16.msra.mxu0 %v2826
  %2851 = vmatprep.subr.bf16.mxu0 0
  %2852 = vmatpush1.bf16.msra.mxu0 0
  %2853 = vmatprep.subr.bf16.mxu0 0
  %2854 = vmatpush1.bf16.msra.mxu0 0
  %2855 = vmatprep.subr.bf16.mxu0 0
  %2856 = vmatpush1.bf16.msra.mxu0 0
  %2857 = vmatprep.subr.bf16.mxu0 0
  %2858 = vmatpush1.bf16.msra.mxu0 0
  %2859 = vmatprep.subr.bf16.mxu0 0
  %2860 = vmatpush1.bf16.msra.mxu0 0
  %2861 = vmatprep.subr.bf16.mxu0 0
  %2862 = vmatpush1.bf16.msra.mxu0 0
  %2863 = vmatprep.subr.bf16.mxu0 0
  %2864 = vmatpush1.bf16.msra.mxu0 0
  %2865 = vmatprep.subr.bf16.mxu0 0
  %2866 = vmatpush1.bf16.msra.mxu0 0
  %2867 = vmatprep.subr.bf16.mxu0 0
  %2868 = vmatpush1.bf16.msra.mxu0 0
  %2869 = vmatprep.subr.bf16.mxu0 0
  %2870 = vmatpush1.bf16.msra.mxu0 0
  %2871 = vmatprep.subr.bf16.mxu0 0
  %2872 = vmatpush1.bf16.msra.mxu0 0
  %2873 = vmatprep.subr.bf16.mxu0 0
  %2874 = vmatpush1.bf16.msra.mxu0 0
  %2875 = vmatprep.mubr.bf16.mxu0 0
  %2876 = vmatmul.mubr.bf16.gmra.mrb[0].mxu0 %v2831
  %v2877 = vpop.f32.mrb[0].mxu0
  %v2878 = vadd.f32 %v2761, %v2877
  %v2879 = vpop.f32.mrb[0].mxu0
  %v2880 = vpop.f32.mrb[0].mxu0
  %v2881 = vadd.f32 %v2764, %v2880
  %v2882 = vpop.f32.mrb[0].mxu0
  %2883 = vmatprep.mubr.bf16.mxu0 0
  %2884 = vmatmul.mubr.bf16.gmra.mrb[0].mxu0 %v2833
  %v2885 = vpop.f32.mrb[0].mxu0
  %v2886 = vadd.f32 %v2769, %v2885
  %v2887 = vpop.f32.mrb[0].mxu0
  %v2888 = vpop.f32.mrb[0].mxu0
  %v2889 = vadd.f32 %v2772, %v2888
  %v2890 = vpop.f32.mrb[0].mxu0
  %2891 = vmatprep.mubr.bf16.mxu0 0
  %2892 = vmatmul.mubr.bf16.gmra.mrb[0].mxu0 %v2835
  %v2893 = vpop.f32.mrb[0].mxu0
  %v2894 = vadd.f32 %v2777, %v2893
  %v2895 = vpop.f32.mrb[0].mxu0
  %v2896 = vpop.f32.mrb[0].mxu0
  %v2897 = vadd.f32 %v2780, %v2896
  %v2898 = vpop.f32.mrb[0].mxu0
  %2899 = vmatprep.mubr.bf16.mxu0 0
  %2900 = vmatmul.mubr.bf16.gmra.mrb[0].mxu0 %v2837
  %v2901 = vpop.f32.mrb[0].mxu0
  %v2902 = vadd.f32 %v2785, %v2901
  %v2903 = vpop.f32.mrb[0].mxu0
  %v2904 = vpop.f32.mrb[0].mxu0
  %v2905 = vadd.f32 %v2788, %v2904
  %v2906 = vpop.f32.mrb[0].mxu0
  %2907 = vmatprep.mubr.bf16.mxu0 0
  %2908 = vmatmul.mubr.bf16.gmra.mrb[0].mxu0 %v2839
  %v2909 = vpop.f32.mrb[0].mxu0
  %v2910 = vadd.f32 %v2793, %v2909
  %v2911 = vpop.f32.mrb[0].mxu0
  %v2912 = vpop.f32.mrb[0].mxu0
  %v2913 = vadd.f32 %v2796, %v2912
  %v2914 = vpop.f32.mrb[0].mxu0
  %2915 = vmatprep.mubr.bf16.mxu0 0
  %2916 = vmatmul.mubr.bf16.gmra.mrb[0].mxu0 %v2841
  %v2917 = vpop.f32.mrb[0].mxu0
  %v2918 = vadd.f32 %v2801, %v2917
  %v2919 = vpop.f32.mrb[0].mxu0
  %v2920 = vpop.f32.mrb[0].mxu0
  %v2921 = vadd.f32 %v2804, %v2920
  %v2922 = vpop.f32.mrb[0].mxu0
  %2923 = vdwg.mxu0
  %v2924 = vld [vmem:[#allocation3] sm:$0xfe]
  %s2925 = scalar_lea.vmem %s5, 64
  %v2926 = vld [vmem:[%s2925] sm:$0xf]
  %v2927 = vld [vmem:[%s2925 + $0x4] sm:$0xf]
  %v2928 = vld [vmem:[%s2925 + $0x8] sm:$0xf]
  %v2929 = vld [vmem:[%s2925 + $0xc] sm:$0xf]
  %v2930 = vld [vmem:[%s2925 + $0x10] sm:$0xf]
  %v2931 = vld [vmem:[%s2925 + $0x14] sm:$0xf]
  %v2932 = vld [vmem:[%s2925 + $0x18] sm:$0xf]
  %v2933 = vld [vmem:[%s2925 + $0x1c] sm:$0xf]
  %vm2941 = vcmask 1046528
  %v2942 = vrot.slane %v2924, 1
  %v2943 = vrot.slane %v2609, 1
  %v2944 = vsel %vm2941, %v2942, %v2943
  %v2945 = vrot.slane %v2610, 1
  %v2946 = vsel %vm2941, %v2943, %v2945
  %v2947 = vrot.slane %v2611, 1
  %v2948 = vsel %vm2941, %v2945, %v2947
  %v2949 = vrot.slane %v2612, 1
  %v2950 = vsel %vm2941, %v2947, %v2949
  %v2951 = vrot.slane %v2613, 1
  %v2952 = vsel %vm2941, %v2949, %v2951
  %v2953 = vrot.slane %v2622, 1
  %v2954 = vsel %vm2941, %v2951, %v2953
  %v2963 = vunpack.c.l.b16 %v2926
  %v2964 = vunpack.c.l.b16 %v2927
  %v2965 = vunpack.c.l.b16 %v2928
  %v2966 = vunpack.c.l.b16 %v2929
  %v2967 = vunpack.c.l.b16 %v2930
  %v2968 = vunpack.c.l.b16 %v2931
  %v2969 = vunpack.c.l.b16 %v2932
  %v2970 = vunpack.c.l.b16 %v2933
  %v2971 = vpack.c.b16 %v2964, %v2963
  %v2972 = vpack.c.b16 %v2966, %v2965
  %v2973 = vpack.c.b16 %v2968, %v2967
  %v2974 = vpack.c.b16 %v2970, %v2969
  %v2980 = vsel %vm387, %v2944, 0
  %v2983 = vsel %vm387, %v2946, 0
  %v2986 = vsel %vm387, %v2948, 0
  %v2989 = vsel %vm387, %v2950, 0
  %v2992 = vsel %vm387, %v2952, 0
  %v2995 = vsel %vm387, %v2954, 0
  %2997 = vmatprep.subr.bf16.mxu0 0
  %2998 = vmatpush1.bf16.msra.mxu0 %v2971
  %2999 = vmatprep.subr.bf16.mxu0 0
  %3000 = vmatpush1.bf16.msra.mxu0 %v2972
  %3001 = vmatprep.subr.bf16.mxu0 0
  %3002 = vmatpush1.bf16.msra.mxu0 %v2973
  %3003 = vmatprep.subr.bf16.mxu0 0
  %3004 = vmatpush1.bf16.msra.mxu0 %v2974
  %3005 = vmatprep.subr.bf16.mxu0 0
  %3006 = vmatpush1.bf16.msra.mxu0 0
  %3007 = vmatprep.subr.bf16.mxu0 0
  %3008 = vmatpush1.bf16.msra.mxu0 0
  %3009 = vmatprep.subr.bf16.mxu0 0
  %3010 = vmatpush1.bf16.msra.mxu0 0
  %3011 = vmatprep.subr.bf16.mxu0 0
  %3012 = vmatpush1.bf16.msra.mxu0 0
  %3013 = vmatprep.subr.bf16.mxu0 0
  %3014 = vmatpush1.bf16.msra.mxu0 0
  %3015 = vmatprep.subr.bf16.mxu0 0
  %3016 = vmatpush1.bf16.msra.mxu0 0
  %3017 = vmatprep.subr.bf16.mxu0 0
  %3018 = vmatpush1.bf16.msra.mxu0 0
  %3019 = vmatprep.subr.bf16.mxu0 0
  %3020 = vmatpush1.bf16.msra.mxu0 0
  %3021 = vmatprep.subr.bf16.mxu0 0
  %3022 = vmatpush1.bf16.msra.mxu0 0
  %3023 = vmatprep.subr.bf16.mxu0 0
  %3024 = vmatpush1.bf16.msra.mxu0 0
  %3025 = vmatprep.subr.bf16.mxu0 0
  %3026 = vmatpush1.bf16.msra.mxu0 0
  %3027 = vmatprep.subr.bf16.mxu0 0
  %3028 = vmatpush1.bf16.msra.mxu0 0
  %3029 = vmatprep.mubr.bf16.mxu0 0
  %3030 = vmatmul.mubr.bf16.gmra.mrb[0].mxu0 %v2980
  %v3031 = vpop.f32.mrb[0].mxu0
  %v3032 = vadd.f32 0.0, %v3031
  %v3033 = vpop.f32.mrb[0].mxu0
  %v3034 = vpop.f32.mrb[0].mxu0
  %v3035 = vadd.f32 0.0, %v3034
  %v3036 = vpop.f32.mrb[0].mxu0
  %3037 = vmatprep.mubr.bf16.mxu0 0
  %3038 = vmatmul.mubr.bf16.gmra.mrb[0].mxu0 %v2983
  %v3039 = vpop.f32.mrb[0].mxu0
  %v3040 = vadd.f32 0.0, %v3039
  %v3041 = vpop.f32.mrb[0].mxu0
  %v3042 = vpop.f32.mrb[0].mxu0
  %v3043 = vadd.f32 0.0, %v3042
  %v3044 = vpop.f32.mrb[0].mxu0
  %3045 = vmatprep.mubr.bf16.mxu0 0
  %3046 = vmatmul.mubr.bf16.gmra.mrb[0].mxu0 %v2986
  %v3047 = vpop.f32.mrb[0].mxu0
  %v3048 = vadd.f32 0.0, %v3047
  %v3049 = vpop.f32.mrb[0].mxu0
  %v3050 = vpop.f32.mrb[0].mxu0
  %v3051 = vadd.f32 0.0, %v3050
  %v3052 = vpop.f32.mrb[0].mxu0
  %3053 = vmatprep.mubr.bf16.mxu0 0
  %3054 = vmatmul.mubr.bf16.gmra.mrb[0].mxu0 %v2989
  %v3055 = vpop.f32.mrb[0].mxu0
  %v3056 = vadd.f32 0.0, %v3055
  %v3057 = vpop.f32.mrb[0].mxu0
  %v3058 = vpop.f32.mrb[0].mxu0
  %v3059 = vadd.f32 0.0, %v3058
  %v3060 = vpop.f32.mrb[0].mxu0
  %3061 = vmatprep.mubr.bf16.mxu0 0
  %3062 = vmatmul.mubr.bf16.gmra.mrb[0].mxu0 %v2992
  %v3063 = vpop.f32.mrb[0].mxu0
  %v3064 = vadd.f32 0.0, %v3063
  %v3065 = vpop.f32.mrb[0].mxu0
  %v3066 = vpop.f32.mrb[0].mxu0
  %v3067 = vadd.f32 0.0, %v3066
  %v3068 = vpop.f32.mrb[0].mxu0
  %3069 = vmatprep.mubr.bf16.mxu0 0
  %3070 = vmatmul.mubr.bf16.gmra.mrb[0].mxu0 %v2995
  %v3071 = vpop.f32.mrb[0].mxu0
  %v3072 = vadd.f32 0.0, %v3071
  %v3073 = vpop.f32.mrb[0].mxu0
  %v3074 = vpop.f32.mrb[0].mxu0
  %v3075 = vadd.f32 0.0, %v3074
  %v3076 = vpop.f32.mrb[0].mxu0
  %3077 = vdwg.mxu0
  %v3078 = vadd.f32 %v2878, %v3032
  %v3079 = vadd.f32 %v2881, %v3035
  %v3080 = vadd.f32 %v2886, %v3040
  %v3081 = vadd.f32 %v2889, %v3043
  %v3082 = vadd.f32 %v2894, %v3048
  %v3083 = vadd.f32 %v2897, %v3051
  %v3084 = vadd.f32 %v2902, %v3056
  %v3085 = vadd.f32 %v2905, %v3059
  %v3086 = vadd.f32 %v2910, %v3064
  %v3087 = vadd.f32 %v2913, %v3067
  %v3088 = vadd.f32 %v2918, %v3072
  %v3089 = vadd.f32 %v2921, %v3075
  %v3090 = vld [vmem:[#allocation3] sm:$0xc0]
  %v3091 = vld [vmem:[#allocation3 + $0x30] sm:$0x3f]
  %s3092 = scalar_lea.vmem %s5, 96
  %v3093 = vld [vmem:[%s3092] sm:$0xf]
  %v3094 = vld [vmem:[%s3092 + $0x4] sm:$0xf]
  %v3095 = vld [vmem:[%s3092 + $0x8] sm:$0xf]
  %v3096 = vld [vmem:[%s3092 + $0xc] sm:$0xf]
  %v3097 = vld [vmem:[%s3092 + $0x10] sm:$0xf]
  %v3098 = vld [vmem:[%s3092 + $0x14] sm:$0xf]
  %v3099 = vld [vmem:[%s3092 + $0x18] sm:$0xf]
  %v3100 = vld [vmem:[%s3092 + $0x1c] sm:$0xf]
  %v3103 = vrot.slane %v3090, 6
  %v3104 = vrot.slane %v2609, 6
  %v3105 = vsel %vm2103, %v3103, %v3104
  %v3106 = vrot.slane %v2610, 6
  %v3107 = vsel %vm2103, %v3104, %v3106
  %v3108 = vrot.slane %v2611, 6
  %v3109 = vsel %vm2103, %v3106, %v3108
  %v3110 = vrot.slane %v2612, 6
  %v3111 = vsel %vm2103, %v3108, %v3110
  %v3112 = vrot.slane %v2613, 6
  %v3113 = vsel %vm2103, %v3110, %v3112
  %v3114 = vrot.slane %v3091, 6
  %v3115 = vsel %vm2103, %v3112, %v3114
  %v3124 = vunpack.c.l.b16 %v3093
  %v3125 = vunpack.c.l.b16 %v3094
  %v3126 = vunpack.c.l.b16 %v3095
  %v3127 = vunpack.c.l.b16 %v3096
  %v3128 = vunpack.c.l.b16 %v3097
  %v3129 = vunpack.c.l.b16 %v3098
  %v3130 = vunpack.c.l.b16 %v3099
  %v3131 = vunpack.c.l.b16 %v3100
  %v3132 = vpack.c.b16 %v3125, %v3124
  %v3133 = vpack.c.b16 %v3127, %v3126
  %v3134 = vpack.c.b16 %v3129, %v3128
  %v3135 = vpack.c.b16 %v3131, %v3130
  %v3141 = vsel %vm387, %v3105, 0
  %v3144 = vsel %vm387, %v3107, 0
  %v3147 = vsel %vm387, %v3109, 0
  %v3150 = vsel %vm387, %v3111, 0
  %v3153 = vsel %vm387, %v3113, 0
  %v3156 = vsel %vm387, %v3115, 0
  %3158 = vmatprep.subr.bf16.mxu0 0
  %3159 = vmatpush1.bf16.msra.mxu0 %v3132
  %3160 = vmatprep.subr.bf16.mxu0 0
  %3161 = vmatpush1.bf16.msra.mxu0 %v3133
  %3162 = vmatprep.subr.bf16.mxu0 0
  %3163 = vmatpush1.bf16.msra.mxu0 %v3134
  %3164 = vmatprep.subr.bf16.mxu0 0
  %3165 = vmatpush1.bf16.msra.mxu0 %v3135
  %3166 = vmatprep.subr.bf16.mxu0 0
  %3167 = vmatpush1.bf16.msra.mxu0 0
  %3168 = vmatprep.subr.bf16.mxu0 0
  %3169 = vmatpush1.bf16.msra.mxu0 0
  %3170 = vmatprep.subr.bf16.mxu0 0
  %3171 = vmatpush1.bf16.msra.mxu0 0
  %3172 = vmatprep.subr.bf16.mxu0 0
  %3173 = vmatpush1.bf16.msra.mxu0 0
  %3174 = vmatprep.subr.bf16.mxu0 0
  %3175 = vmatpush1.bf16.msra.mxu0 0
  %3176 = vmatprep.subr.bf16.mxu0 0
  %3177 = vmatpush1.bf16.msra.mxu0 0
  %3178 = vmatprep.subr.bf16.mxu0 0
  %3179 = vmatpush1.bf16.msra.mxu0 0
  %3180 = vmatprep.subr.bf16.mxu0 0
  %3181 = vmatpush1.bf16.msra.mxu0 0
  %3182 = vmatprep.subr.bf16.mxu0 0
  %3183 = vmatpush1.bf16.msra.mxu0 0
  %3184 = vmatprep.subr.bf16.mxu0 0
  %3185 = vmatpush1.bf16.msra.mxu0 0
  %3186 = vmatprep.subr.bf16.mxu0 0
  %3187 = vmatpush1.bf16.msra.mxu0 0
  %3188 = vmatprep.subr.bf16.mxu0 0
  %3189 = vmatpush1.bf16.msra.mxu0 0
  %3190 = vmatprep.mubr.bf16.mxu0 0
  %3191 = vmatmul.mubr.bf16.gmra.mrb[0].mxu0 %v3141
  %v3192 = vpop.f32.mrb[0].mxu0
  %v3193 = vadd.f32 0.0, %v3192
  %v3194 = vpop.f32.mrb[0].mxu0
  %v3195 = vpop.f32.mrb[0].mxu0
  %v3196 = vadd.f32 0.0, %v3195
  %v3197 = vpop.f32.mrb[0].mxu0
  %3198 = vmatprep.mubr.bf16.mxu0 0
  %3199 = vmatmul.mubr.bf16.gmra.mrb[0].mxu0 %v3144
  %v3200 = vpop.f32.mrb[0].mxu0
  %v3201 = vadd.f32 0.0, %v3200
  %v3202 = vpop.f32.mrb[0].mxu0
  %v3203 = vpop.f32.mrb[0].mxu0
  %v3204 = vadd.f32 0.0, %v3203
  %v3205 = vpop.f32.mrb[0].mxu0
  %3206 = vmatprep.mubr.bf16.mxu0 0
  %3207 = vmatmul.mubr.bf16.gmra.mrb[0].mxu0 %v3147
  %v3208 = vpop.f32.mrb[0].mxu0
  %v3209 = vadd.f32 0.0, %v3208
  %v3210 = vpop.f32.mrb[0].mxu0
  %v3211 = vpop.f32.mrb[0].mxu0
  %v3212 = vadd.f32 0.0, %v3211
  %v3213 = vpop.f32.mrb[0].mxu0
  %3214 = vmatprep.mubr.bf16.mxu0 0
  %3215 = vmatmul.mubr.bf16.gmra.mrb[0].mxu0 %v3150
  %v3216 = vpop.f32.mrb[0].mxu0
  %v3217 = vadd.f32 0.0, %v3216
  %v3218 = vpop.f32.mrb[0].mxu0
  %v3219 = vpop.f32.mrb[0].mxu0
  %v3220 = vadd.f32 0.0, %v3219
  %v3221 = vpop.f32.mrb[0].mxu0
  %3222 = vmatprep.mubr.bf16.mxu0 0
  %3223 = vmatmul.mubr.bf16.gmra.mrb[0].mxu0 %v3153
  %v3224 = vpop.f32.mrb[0].mxu0
  %v3225 = vadd.f32 0.0, %v3224
  %v3226 = vpop.f32.mrb[0].mxu0
  %v3227 = vpop.f32.mrb[0].mxu0
  %v3228 = vadd.f32 0.0, %v3227
  %v3229 = vpop.f32.mrb[0].mxu0
  %3230 = vmatprep.mubr.bf16.mxu0 0
  %3231 = vmatmul.mubr.bf16.gmra.mrb[0].mxu0 %v3156
  %v3232 = vpop.f32.mrb[0].mxu0
  %v3233 = vadd.f32 0.0, %v3232
  %v3234 = vpop.f32.mrb[0].mxu0
  %v3235 = vpop.f32.mrb[0].mxu0
  %v3236 = vadd.f32 0.0, %v3235
  %v3237 = vpop.f32.mrb[0].mxu0
  %3238 = vdwg.mxu0
  %v3239 = vadd.f32 %v3078, %v3193
  %v3240 = vadd.f32 %v3079, %v3196
  %v3241 = vadd.f32 %v3080, %v3201
  %v3242 = vadd.f32 %v3081, %v3204
  %v3243 = vadd.f32 %v3082, %v3209
  %v3244 = vadd.f32 %v3083, %v3212
  %v3245 = vadd.f32 %v3084, %v3217
  %v3246 = vadd.f32 %v3085, %v3220
  %v3247 = vadd.f32 %v3086, %v3225
  %v3248 = vadd.f32 %v3087, %v3228
  %v3249 = vadd.f32 %v3088, %v3233
  %v3250 = vadd.f32 %v3089, %v3236
  %v3251 = vld [vmem:[#allocation3 + $0x30] sm:$0x7f]
  %s3252 = scalar_lea.vmem %s5, 128
  %v3253 = vld [vmem:[%s3252] sm:$0xf]
  %v3254 = vld [vmem:[%s3252 + $0x4] sm:$0xf]
  %v3255 = vld [vmem:[%s3252 + $0x8] sm:$0xf]
  %v3256 = vld [vmem:[%s3252 + $0xc] sm:$0xf]
  %v3257 = vld [vmem:[%s3252 + $0x10] sm:$0xf]
  %v3258 = vld [vmem:[%s3252 + $0x14] sm:$0xf]
  %v3259 = vld [vmem:[%s3252 + $0x18] sm:$0xf]
  %v3260 = vld [vmem:[%s3252 + $0x1c] sm:$0xf]
  %v3262 = vshrl.u32 %v3090, 16
  %v3264 = vrot.slane %v3262, 6
  %v3265 = vshll.u32 %v3090, 16
  %v3267 = vrot.slane %v3265, 7
  %v3268 = vor.u32 %v3264, %v3267
  %v3269 = vrot.slane %v2644, 6
  %v3270 = vrot.slane %v2640, 7
  %v3271 = vor.u32 %v3269, %v3270
  %v3272 = vsel %vm2306, %v3268, %v3271
  %v3273 = vrot.slane %v2652, 6
  %v3274 = vrot.slane %v2648, 7
  %v3275 = vor.u32 %v3273, %v3274
  %v3276 = vsel %vm2306, %v3271, %v3275
  %v3277 = vrot.slane %v2660, 6
  %v3278 = vrot.slane %v2656, 7
  %v3279 = vor.u32 %v3277, %v3278
  %v3280 = vsel %vm2306, %v3275, %v3279
  %v3281 = vrot.slane %v2668, 6
  %v3282 = vrot.slane %v2664, 7
  %v3283 = vor.u32 %v3281, %v3282
  %v3284 = vsel %vm2306, %v3279, %v3283
  %v3285 = vrot.slane %v2676, 6
  %v3286 = vrot.slane %v2672, 7
  %v3287 = vor.u32 %v3285, %v3286
  %v3288 = vsel %vm2306, %v3283, %v3287
  %v3290 = vshrl.u32 %v3251, 16
  %v3292 = vrot.slane %v3290, 6
  %v3293 = vshll.u32 %v3251, 16
  %v3295 = vrot.slane %v3293, 7
  %v3296 = vor.u32 %v3292, %v3295
  %v3297 = vsel %vm2306, %v3287, %v3296
  %v3306 = vunpack.c.l.b16 %v3253
  %v3307 = vunpack.c.l.b16 %v3254
  %v3308 = vunpack.c.l.b16 %v3255
  %v3309 = vunpack.c.l.b16 %v3256
  %v3310 = vunpack.c.l.b16 %v3257
  %v3311 = vunpack.c.l.b16 %v3258
  %v3312 = vunpack.c.l.b16 %v3259
  %v3313 = vunpack.c.l.b16 %v3260
  %v3314 = vpack.c.b16 %v3307, %v3306
  %v3315 = vpack.c.b16 %v3309, %v3308
  %v3316 = vpack.c.b16 %v3311, %v3310
  %v3317 = vpack.c.b16 %v3313, %v3312
  %v3323 = vsel %vm387, %v3272, 0
  %v3326 = vsel %vm387, %v3276, 0
  %v3329 = vsel %vm387, %v3280, 0
  %v3332 = vsel %vm387, %v3284, 0
  %v3335 = vsel %vm387, %v3288, 0
  %v3338 = vsel %vm387, %v3297, 0
  %3340 = vmatprep.subr.bf16.mxu0 0
  %3341 = vmatpush1.bf16.msra.mxu0 %v3314
  %3342 = vmatprep.subr.bf16.mxu0 0
  %3343 = vmatpush1.bf16.msra.mxu0 %v3315
  %3344 = vmatprep.subr.bf16.mxu0 0
  %3345 = vmatpush1.bf16.msra.mxu0 %v3316
  %3346 = vmatprep.subr.bf16.mxu0 0
  %3347 = vmatpush1.bf16.msra.mxu0 %v3317
  %3348 = vmatprep.subr.bf16.mxu0 0
  %3349 = vmatpush1.bf16.msra.mxu0 0
  %3350 = vmatprep.subr.bf16.mxu0 0
  %3351 = vmatpush1.bf16.msra.mxu0 0
  %3352 = vmatprep.subr.bf16.mxu0 0
  %3353 = vmatpush1.bf16.msra.mxu0 0
  %3354 = vmatprep.subr.bf16.mxu0 0
  %3355 = vmatpush1.bf16.msra.mxu0 0
  %3356 = vmatprep.subr.bf16.mxu0 0
  %3357 = vmatpush1.bf16.msra.mxu0 0
  %3358 = vmatprep.subr.bf16.mxu0 0
  %3359 = vmatpush1.bf16.msra.mxu0 0
  %3360 = vmatprep.subr.bf16.mxu0 0
  %3361 = vmatpush1.bf16.msra.mxu0 0
  %3362 = vmatprep.subr.bf16.mxu0 0
  %3363 = vmatpush1.bf16.msra.mxu0 0
  %3364 = vmatprep.subr.bf16.mxu0 0
  %3365 = vmatpush1.bf16.msra.mxu0 0
  %3366 = vmatprep.subr.bf16.mxu0 0
  %3367 = vmatpush1.bf16.msra.mxu0 0
  %3368 = vmatprep.subr.bf16.mxu0 0
  %3369 = vmatpush1.bf16.msra.mxu0 0
  %3370 = vmatprep.subr.bf16.mxu0 0
  %3371 = vmatpush1.bf16.msra.mxu0 0
  %3372 = vmatprep.mubr.bf16.mxu0 0
  %3373 = vmatmul.mubr.bf16.gmra.mrb[0].mxu0 %v3323
  %v3374 = vpop.f32.mrb[0].mxu0
  %v3375 = vadd.f32 0.0, %v3374
  %v3376 = vpop.f32.mrb[0].mxu0
  %v3377 = vpop.f32.mrb[0].mxu0
  %v3378 = vadd.f32 0.0, %v3377
  %v3379 = vpop.f32.mrb[0].mxu0
  %3380 = vmatprep.mubr.bf16.mxu0 0
  %3381 = vmatmul.mubr.bf16.gmra.mrb[0].mxu0 %v3326
  %v3382 = vpop.f32.mrb[0].mxu0
  %v3383 = vadd.f32 0.0, %v3382
  %v3384 = vpop.f32.mrb[0].mxu0
  %v3385 = vpop.f32.mrb[0].mxu0
  %v3386 = vadd.f32 0.0, %v3385
  %v3387 = vpop.f32.mrb[0].mxu0
  %3388 = vmatprep.mubr.bf16.mxu0 0
  %3389 = vmatmul.mubr.bf16.gmra.mrb[0].mxu0 %v3329
  %v3390 = vpop.f32.mrb[0].mxu0
  %v3391 = vadd.f32 0.0, %v3390
  %v3392 = vpop.f32.mrb[0].mxu0
  %v3393 = vpop.f32.mrb[0].mxu0
  %v3394 = vadd.f32 0.0, %v3393
  %v3395 = vpop.f32.mrb[0].mxu0
  %3396 = vmatprep.mubr.bf16.mxu0 0
  %3397 = vmatmul.mubr.bf16.gmra.mrb[0].mxu0 %v3332
  %v3398 = vpop.f32.mrb[0].mxu0
  %v3399 = vadd.f32 0.0, %v3398
  %v3400 = vpop.f32.mrb[0].mxu0
  %v3401 = vpop.f32.mrb[0].mxu0
  %v3402 = vadd.f32 0.0, %v3401
  %v3403 = vpop.f32.mrb[0].mxu0
  %3404 = vmatprep.mubr.bf16.mxu0 0
  %3405 = vmatmul.mubr.bf16.gmra.mrb[0].mxu0 %v3335
  %v3406 = vpop.f32.mrb[0].mxu0
  %v3407 = vadd.f32 0.0, %v3406
  %v3408 = vpop.f32.mrb[0].mxu0
  %v3409 = vpop.f32.mrb[0].mxu0
  %v3410 = vadd.f32 0.0, %v3409
  %v3411 = vpop.f32.mrb[0].mxu0
  %3412 = vmatprep.mubr.bf16.mxu0 0
  %3413 = vmatmul.mubr.bf16.gmra.mrb[0].mxu0 %v3338
  %v3414 = vpop.f32.mrb[0].mxu0
  %v3415 = vadd.f32 0.0, %v3414
  %v3416 = vpop.f32.mrb[0].mxu0
  %v3417 = vpop.f32.mrb[0].mxu0
  %v3418 = vadd.f32 0.0, %v3417
  %v3419 = vpop.f32.mrb[0].mxu0
  %3420 = vdwg.mxu0
  %v3421 = vadd.f32 %v3239, %v3375
  %v3422 = vadd.f32 %v3240, %v3378
  %v3423 = vadd.f32 %v3241, %v3383
  %v3424 = vadd.f32 %v3242, %v3386
  %v3425 = vadd.f32 %v3243, %v3391
  %v3426 = vadd.f32 %v3244, %v3394
  %v3427 = vadd.f32 %v3245, %v3399
  %v3428 = vadd.f32 %v3246, %v3402
  %v3429 = vadd.f32 %v3247, %v3407
  %v3430 = vadd.f32 %v3248, %v3410
  %v3431 = vadd.f32 %v3249, %v3415
  %v3432 = vadd.f32 %v3250, %v3418
  %v3433 = vld [vmem:[#allocation3] sm:$0x80]
  %s3434 = scalar_lea.vmem %s5, 160
  %v3435 = vld [vmem:[%s3434] sm:$0xf]
  %v3436 = vld [vmem:[%s3434 + $0x4] sm:$0xf]
  %v3437 = vld [vmem:[%s3434 + $0x8] sm:$0xf]
  %v3438 = vld [vmem:[%s3434 + $0xc] sm:$0xf]
  %v3439 = vld [vmem:[%s3434 + $0x10] sm:$0xf]
  %v3440 = vld [vmem:[%s3434 + $0x14] sm:$0xf]
  %v3441 = vld [vmem:[%s3434 + $0x18] sm:$0xf]
  %v3442 = vld [vmem:[%s3434 + $0x1c] sm:$0xf]
  %vm3445 = vcmask 1040384
  %v3446 = vrot.slane %v3433, 7
  %v3447 = vrot.slane %v2609, 7
  %v3448 = vsel %vm3445, %v3446, %v3447
  %v3449 = vrot.slane %v2610, 7
  %v3450 = vsel %vm3445, %v3447, %v3449
  %v3451 = vrot.slane %v2611, 7
  %v3452 = vsel %vm3445, %v3449, %v3451
  %v3453 = vrot.slane %v2612, 7
  %v3454 = vsel %vm3445, %v3451, %v3453
  %v3455 = vrot.slane %v2613, 7
  %v3456 = vsel %vm3445, %v3453, %v3455
  %v3457 = vrot.slane %v3251, 7
  %v3458 = vsel %vm3445, %v3455, %v3457
  %v3467 = vunpack.c.l.b16 %v3435
  %v3468 = vunpack.c.l.b16 %v3436
  %v3469 = vunpack.c.l.b16 %v3437
  %v3470 = vunpack.c.l.b16 %v3438
  %v3471 = vunpack.c.l.b16 %v3439
  %v3472 = vunpack.c.l.b16 %v3440
  %v3473 = vunpack.c.l.b16 %v3441
  %v3474 = vunpack.c.l.b16 %v3442
  %v3475 = vpack.c.b16 %v3468, %v3467
  %v3476 = vpack.c.b16 %v3470, %v3469
  %v3477 = vpack.c.b16 %v3472, %v3471
  %v3478 = vpack.c.b16 %v3474, %v3473
  %v3484 = vsel %vm387, %v3448, 0
  %v3487 = vsel %vm387, %v3450, 0
  %v3490 = vsel %vm387, %v3452, 0
  %v3493 = vsel %vm387, %v3454, 0
  %v3496 = vsel %vm387, %v3456, 0
  %v3499 = vsel %vm387, %v3458, 0
  %3501 = vmatprep.subr.bf16.mxu0 0
  %3502 = vmatpush1.bf16.msra.mxu0 %v3475
  %3503 = vmatprep.subr.bf16.mxu0 0
  %3504 = vmatpush1.bf16.msra.mxu0 %v3476
  %3505 = vmatprep.subr.bf16.mxu0 0
  %3506 = vmatpush1.bf16.msra.mxu0 %v3477
  %3507 = vmatprep.subr.bf16.mxu0 0
  %3508 = vmatpush1.bf16.msra.mxu0 %v3478
  %3509 = vmatprep.subr.bf16.mxu0 0
  %3510 = vmatpush1.bf16.msra.mxu0 0
  %3511 = vmatprep.subr.bf16.mxu0 0
  %3512 = vmatpush1.bf16.msra.mxu0 0
  %3513 = vmatprep.subr.bf16.mxu0 0
  %3514 = vmatpush1.bf16.msra.mxu0 0
  %3515 = vmatprep.subr.bf16.mxu0 0
  %3516 = vmatpush1.bf16.msra.mxu0 0
  %3517 = vmatprep.subr.bf16.mxu0 0
  %3518 = vmatpush1.bf16.msra.mxu0 0
  %3519 = vmatprep.subr.bf16.mxu0 0
  %3520 = vmatpush1.bf16.msra.mxu0 0
  %3521 = vmatprep.subr.bf16.mxu0 0
  %3522 = vmatpush1.bf16.msra.mxu0 0
  %3523 = vmatprep.subr.bf16.mxu0 0
  %3524 = vmatpush1.bf16.msra.mxu0 0
  %3525 = vmatprep.subr.bf16.mxu0 0
  %3526 = vmatpush1.bf16.msra.mxu0 0
  %3527 = vmatprep.subr.bf16.mxu0 0
  %3528 = vmatpush1.bf16.msra.mxu0 0
  %3529 = vmatprep.subr.bf16.mxu0 0
  %3530 = vmatpush1.bf16.msra.mxu0 0
  %3531 = vmatprep.subr.bf16.mxu0 0
  %3532 = vmatpush1.bf16.msra.mxu0 0
  %3533 = vmatprep.mubr.bf16.mxu0 0
  %3534 = vmatmul.mubr.bf16.gmra.mrb[0].mxu0 %v3484
  %v3535 = vpop.f32.mrb[0].mxu0
  %v3536 = vadd.f32 0.0, %v3535
  %v3537 = vpop.f32.mrb[0].mxu0
  %v3538 = vpop.f32.mrb[0].mxu0
  %v3539 = vadd.f32 0.0, %v3538
  %v3540 = vpop.f32.mrb[0].mxu0
  %3541 = vmatprep.mubr.bf16.mxu0 0
  %3542 = vmatmul.mubr.bf16.gmra.mrb[0].mxu0 %v3487
  %v3543 = vpop.f32.mrb[0].mxu0
  %v3544 = vadd.f32 0.0, %v3543
  %v3545 = vpop.f32.mrb[0].mxu0
  %v3546 = vpop.f32.mrb[0].mxu0
  %v3547 = vadd.f32 0.0, %v3546
  %v3548 = vpop.f32.mrb[0].mxu0
  %3549 = vmatprep.mubr.bf16.mxu0 0
  %3550 = vmatmul.mubr.bf16.gmra.mrb[0].mxu0 %v3490
  %v3551 = vpop.f32.mrb[0].mxu0
  %v3552 = vadd.f32 0.0, %v3551
  %v3553 = vpop.f32.mrb[0].mxu0
  %v3554 = vpop.f32.mrb[0].mxu0
  %v3555 = vadd.f32 0.0, %v3554
  %v3556 = vpop.f32.mrb[0].mxu0
  %3557 = vmatprep.mubr.bf16.mxu0 0
  %3558 = vmatmul.mubr.bf16.gmra.mrb[0].mxu0 %v3493
  %v3559 = vpop.f32.mrb[0].mxu0
  %v3560 = vadd.f32 0.0, %v3559
  %v3561 = vpop.f32.mrb[0].mxu0
  %v3562 = vpop.f32.mrb[0].mxu0
  %v3563 = vadd.f32 0.0, %v3562
  %v3564 = vpop.f32.mrb[0].mxu0
  %3565 = vmatprep.mubr.bf16.mxu0 0
  %3566 = vmatmul.mubr.bf16.gmra.mrb[0].mxu0 %v3496
  %v3567 = vpop.f32.mrb[0].mxu0
  %v3568 = vadd.f32 0.0, %v3567
  %v3569 = vpop.f32.mrb[0].mxu0
  %v3570 = vpop.f32.mrb[0].mxu0
  %v3571 = vadd.f32 0.0, %v3570
  %v3572 = vpop.f32.mrb[0].mxu0
  %3573 = vmatprep.mubr.bf16.mxu0 0
  %3574 = vmatmul.mubr.bf16.gmra.mrb[0].mxu0 %v3499
  %v3575 = vpop.f32.mrb[0].mxu0
  %v3576 = vadd.f32 0.0, %v3575
  %v3577 = vpop.f32.mrb[0].mxu0
  %v3578 = vpop.f32.mrb[0].mxu0
  %v3579 = vadd.f32 0.0, %v3578
  %v3580 = vpop.f32.mrb[0].mxu0
  %3581 = vdwg.mxu0
  %v3582 = vadd.f32 %v3421, %v3536
  %v3583 = vadd.f32 %v3422, %v3539
  %v3584 = vadd.f32 %v3423, %v3544
  %v3585 = vadd.f32 %v3424, %v3547
  %v3586 = vadd.f32 %v3425, %v3552
  %v3587 = vadd.f32 %v3426, %v3555
  %v3588 = vadd.f32 %v3427, %v3560
  %v3589 = vadd.f32 %v3428, %v3563
  %v3590 = vadd.f32 %v3429, %v3568
  %v3591 = vadd.f32 %v3430, %v3571
  %v3592 = vadd.f32 %v3431, %v3576
  %v3593 = vadd.f32 %v3432, %v3579
  %v3594 = vld [vmem:[#allocation3 + $0x8] sm:$0xf0]
  %v3595 = vld [vmem:[#allocation3 + $0x10] sm:$0xff]
  %v3596 = vld [vmem:[#allocation3 + $0x18] sm:$0xff]
  %v3597 = vld [vmem:[#allocation3 + $0x20] sm:$0xff]
  %v3598 = vld [vmem:[#allocation3 + $0x28] sm:$0xff]
  %v3599 = vld [vmem:[#allocation3 + $0x30] sm:$0xff]
  %v3600 = vld [vmem:[#allocation3 + $0x38] sm:$0xf]
  %s3601 = scalar_lea.vmem %s5, 192
  %v3602 = vld [vmem:[%s3601] sm:$0xf]
  %v3603 = vld [vmem:[%s3601 + $0x4] sm:$0xf]
  %v3604 = vld [vmem:[%s3601 + $0x8] sm:$0xf]
  %v3605 = vld [vmem:[%s3601 + $0xc] sm:$0xf]
  %v3606 = vld [vmem:[%s3601 + $0x10] sm:$0xf]
  %v3607 = vld [vmem:[%s3601 + $0x14] sm:$0xf]
  %v3608 = vld [vmem:[%s3601 + $0x18] sm:$0xf]
  %v3609 = vld [vmem:[%s3601 + $0x1c] sm:$0xf]
  %vm3617 = vcmask 1043456
  %v3618 = vrot.slane %v3594, 4
  %v3619 = vrot.slane %v3595, 4
  %v3620 = vsel %vm3617, %v3618, %v3619
  %v3621 = vrot.slane %v3596, 4
  %v3622 = vsel %vm3617, %v3619, %v3621
  %v3623 = vrot.slane %v3597, 4
  %v3624 = vsel %vm3617, %v3621, %v3623
  %v3625 = vrot.slane %v3598, 4
  %v3626 = vsel %vm3617, %v3623, %v3625
  %v3627 = vrot.slane %v3599, 4
  %v3628 = vsel %vm3617, %v3625, %v3627
  %v3629 = vrot.slane %v3600, 4
  %v3630 = vsel %vm3617, %v3627, %v3629
  %v3639 = vunpack.c.l.b16 %v3602
  %v3640 = vunpack.c.l.b16 %v3603
  %v3641 = vunpack.c.l.b16 %v3604
  %v3642 = vunpack.c.l.b16 %v3605
  %v3643 = vunpack.c.l.b16 %v3606
  %v3644 = vunpack.c.l.b16 %v3607
  %v3645 = vunpack.c.l.b16 %v3608
  %v3646 = vunpack.c.l.b16 %v3609
  %v3647 = vpack.c.b16 %v3640, %v3639
  %v3648 = vpack.c.b16 %v3642, %v3641
  %v3649 = vpack.c.b16 %v3644, %v3643
  %v3650 = vpack.c.b16 %v3646, %v3645
  %v3656 = vsel %vm387, %v3620, 0
  %v3659 = vsel %vm387, %v3622, 0
  %v3662 = vsel %vm387, %v3624, 0
  %v3665 = vsel %vm387, %v3626, 0
  %v3668 = vsel %vm387, %v3628, 0
  %v3671 = vsel %vm387, %v3630, 0
  %3673 = vmatprep.subr.bf16.mxu0 0
  %3674 = vmatpush1.bf16.msra.mxu0 %v3647
  %3675 = vmatprep.subr.bf16.mxu0 0
  %3676 = vmatpush1.bf16.msra.mxu0 %v3648
  %3677 = vmatprep.subr.bf16.mxu0 0
  %3678 = vmatpush1.bf16.msra.mxu0 %v3649
  %3679 = vmatprep.subr.bf16.mxu0 0
  %3680 = vmatpush1.bf16.msra.mxu0 %v3650
  %3681 = vmatprep.subr.bf16.mxu0 0
  %3682 = vmatpush1.bf16.msra.mxu0 0
  %3683 = vmatprep.subr.bf16.mxu0 0
  %3684 = vmatpush1.bf16.msra.mxu0 0
  %3685 = vmatprep.subr.bf16.mxu0 0
  %3686 = vmatpush1.bf16.msra.mxu0 0
  %3687 = vmatprep.subr.bf16.mxu0 0
  %3688 = vmatpush1.bf16.msra.mxu0 0
  %3689 = vmatprep.subr.bf16.mxu0 0
  %3690 = vmatpush1.bf16.msra.mxu0 0
  %3691 = vmatprep.subr.bf16.mxu0 0
  %3692 = vmatpush1.bf16.msra.mxu0 0
  %3693 = vmatprep.subr.bf16.mxu0 0
  %3694 = vmatpush1.bf16.msra.mxu0 0
  %3695 = vmatprep.subr.bf16.mxu0 0
  %3696 = vmatpush1.bf16.msra.mxu0 0
  %3697 = vmatprep.subr.bf16.mxu0 0
  %3698 = vmatpush1.bf16.msra.mxu0 0
  %3699 = vmatprep.subr.bf16.mxu0 0
  %3700 = vmatpush1.bf16.msra.mxu0 0
  %3701 = vmatprep.subr.bf16.mxu0 0
  %3702 = vmatpush1.bf16.msra.mxu0 0
  %3703 = vmatprep.subr.bf16.mxu0 0
  %3704 = vmatpush1.bf16.msra.mxu0 0
  %3705 = vmatprep.mubr.bf16.mxu0 0
  %3706 = vmatmul.mubr.bf16.gmra.mrb[0].mxu0 %v3656
  %v3707 = vpop.f32.mrb[0].mxu0
  %v3708 = vadd.f32 0.0, %v3707
  %v3709 = vpop.f32.mrb[0].mxu0
  %v3710 = vpop.f32.mrb[0].mxu0
  %v3711 = vadd.f32 0.0, %v3710
  %v3712 = vpop.f32.mrb[0].mxu0
  %3713 = vmatprep.mubr.bf16.mxu0 0
  %3714 = vmatmul.mubr.bf16.gmra.mrb[0].mxu0 %v3659
  %v3715 = vpop.f32.mrb[0].mxu0
  %v3716 = vadd.f32 0.0, %v3715
  %v3717 = vpop.f32.mrb[0].mxu0
  %v3718 = vpop.f32.mrb[0].mxu0
  %v3719 = vadd.f32 0.0, %v3718
  %v3720 = vpop.f32.mrb[0].mxu0
  %3721 = vmatprep.mubr.bf16.mxu0 0
  %3722 = vmatmul.mubr.bf16.gmra.mrb[0].mxu0 %v3662
  %v3723 = vpop.f32.mrb[0].mxu0
  %v3724 = vadd.f32 0.0, %v3723
  %v3725 = vpop.f32.mrb[0].mxu0
  %v3726 = vpop.f32.mrb[0].mxu0
  %v3727 = vadd.f32 0.0, %v3726
  %v3728 = vpop.f32.mrb[0].mxu0
  %3729 = vmatprep.mubr.bf16.mxu0 0
  %3730 = vmatmul.mubr.bf16.gmra.mrb[0].mxu0 %v3665
  %v3731 = vpop.f32.mrb[0].mxu0
  %v3732 = vadd.f32 0.0, %v3731
  %v3733 = vpop.f32.mrb[0].mxu0
  %v3734 = vpop.f32.mrb[0].mxu0
  %v3735 = vadd.f32 0.0, %v3734
  %v3736 = vpop.f32.mrb[0].mxu0
  %3737 = vmatprep.mubr.bf16.mxu0 0
  %3738 = vmatmul.mubr.bf16.gmra.mrb[0].mxu0 %v3668
  %v3739 = vpop.f32.mrb[0].mxu0
  %v3740 = vadd.f32 0.0, %v3739
  %v3741 = vpop.f32.mrb[0].mxu0
  %v3742 = vpop.f32.mrb[0].mxu0
  %v3743 = vadd.f32 0.0, %v3742
  %v3744 = vpop.f32.mrb[0].mxu0
  %3745 = vmatprep.mubr.bf16.mxu0 0
  %3746 = vmatmul.mubr.bf16.gmra.mrb[0].mxu0 %v3671
  %v3747 = vpop.f32.mrb[0].mxu0
  %v3748 = vadd.f32 0.0, %v3747
  %v3749 = vpop.f32.mrb[0].mxu0
  %v3750 = vpop.f32.mrb[0].mxu0
  %v3751 = vadd.f32 0.0, %v3750
  %v3752 = vpop.f32.mrb[0].mxu0
  %3753 = vdwg.mxu0
  %v3754 = vadd.f32 %v3582, %v3708
  %v3755 = vadd.f32 %v3583, %v3711
  %v3756 = vadd.f32 %v3584, %v3716
  %v3757 = vadd.f32 %v3585, %v3719
  %v3758 = vadd.f32 %v3586, %v3724
  %v3759 = vadd.f32 %v3587, %v3727
  %v3760 = vadd.f32 %v3588, %v3732
  %v3761 = vadd.f32 %v3589, %v3735
  %v3762 = vadd.f32 %v3590, %v3740
  %v3763 = vadd.f32 %v3591, %v3743
  %v3764 = vadd.f32 %v3592, %v3748
  %v3765 = vadd.f32 %v3593, %v3751
  %v3766 = vld [vmem:[#allocation3 + $0x38] sm:$0x1f]
  %s3767 = scalar_lea.vmem %s5, 224
  %v3768 = vld [vmem:[%s3767] sm:$0xf]
  %v3769 = vld [vmem:[%s3767 + $0x4] sm:$0xf]
  %v3770 = vld [vmem:[%s3767 + $0x8] sm:$0xf]
  %v3771 = vld [vmem:[%s3767 + $0xc] sm:$0xf]
  %v3772 = vld [vmem:[%s3767 + $0x10] sm:$0xf]
  %v3773 = vld [vmem:[%s3767 + $0x14] sm:$0xf]
  %v3774 = vld [vmem:[%s3767 + $0x18] sm:$0xf]
  %v3775 = vld [vmem:[%s3767 + $0x1c] sm:$0xf]
  %vm3776 = vsmask.f32 3328
  %v3778 = vshrl.u32 %v3594, 16
  %v3780 = vrot.slane %v3778, 4
  %v3781 = vshll.u32 %v3594, 16
  %v3783 = vrot.slane %v3781, 5
  %v3784 = vor.u32 %v3780, %v3783
  %v3786 = vshrl.u32 %v3595, 16
  %v3788 = vrot.slane %v3786, 4
  %v3789 = vshll.u32 %v3595, 16
  %v3791 = vrot.slane %v3789, 5
  %v3792 = vor.u32 %v3788, %v3791
  %v3793 = vsel %vm3776, %v3784, %v3792
  %v3795 = vshrl.u32 %v3596, 16
  %v3797 = vrot.slane %v3795, 4
  %v3798 = vshll.u32 %v3596, 16
  %v3800 = vrot.slane %v3798, 5
  %v3801 = vor.u32 %v3797, %v3800
  %v3802 = vsel %vm3776, %v3792, %v3801
  %v3804 = vshrl.u32 %v3597, 16
  %v3806 = vrot.slane %v3804, 4
  %v3807 = vshll.u32 %v3597, 16
  %v3809 = vrot.slane %v3807, 5
  %v3810 = vor.u32 %v3806, %v3809
  %v3811 = vsel %vm3776, %v3801, %v3810
  %v3813 = vshrl.u32 %v3598, 16
  %v3815 = vrot.slane %v3813, 4
  %v3816 = vshll.u32 %v3598, 16
  %v3818 = vrot.slane %v3816, 5
  %v3819 = vor.u32 %v3815, %v3818
  %v3820 = vsel %vm3776, %v3810, %v3819
  %v3822 = vshrl.u32 %v3599, 16
  %v3824 = vrot.slane %v3822, 4
  %v3825 = vshll.u32 %v3599, 16
  %v3827 = vrot.slane %v3825, 5
  %v3828 = vor.u32 %v3824, %v3827
  %v3829 = vsel %vm3776, %v3819, %v3828
  %v3831 = vshrl.u32 %v3766, 16
  %v3833 = vrot.slane %v3831, 4
  %v3834 = vshll.u32 %v3766, 16
  %v3836 = vrot.slane %v3834, 5
  %v3837 = vor.u32 %v3833, %v3836
  %v3838 = vsel %vm3776, %v3828, %v3837
  %v3847 = vunpack.c.l.b16 %v3768
  %v3848 = vunpack.c.l.b16 %v3769
  %v3849 = vunpack.c.l.b16 %v3770
  %v3850 = vunpack.c.l.b16 %v3771
  %v3851 = vunpack.c.l.b16 %v3772
  %v3852 = vunpack.c.l.b16 %v3773
  %v3853 = vunpack.c.l.b16 %v3774
  %v3854 = vunpack.c.l.b16 %v3775
  %v3855 = vpack.c.b16 %v3848, %v3847
  %v3856 = vpack.c.b16 %v3850, %v3849
  %v3857 = vpack.c.b16 %v3852, %v3851
  %v3858 = vpack.c.b16 %v3854, %v3853
  %v3864 = vsel %vm387, %v3793, 0
  %v3867 = vsel %vm387, %v3802, 0
  %v3870 = vsel %vm387, %v3811, 0
  %v3873 = vsel %vm387, %v3820, 0
  %v3876 = vsel %vm387, %v3829, 0
  %v3879 = vsel %vm387, %v3838, 0
  %3881 = vmatprep.subr.bf16.mxu0 0
  %3882 = vmatpush1.bf16.msra.mxu0 %v3855
  %3883 = vmatprep.subr.bf16.mxu0 0
  %3884 = vmatpush1.bf16.msra.mxu0 %v3856
  %3885 = vmatprep.subr.bf16.mxu0 0
  %3886 = vmatpush1.bf16.msra.mxu0 %v3857
  %3887 = vmatprep.subr.bf16.mxu0 0
  %3888 = vmatpush1.bf16.msra.mxu0 %v3858
  %3889 = vmatprep.subr.bf16.mxu0 0
  %3890 = vmatpush1.bf16.msra.mxu0 0
  %3891 = vmatprep.subr.bf16.mxu0 0
  %3892 = vmatpush1.bf16.msra.mxu0 0
  %3893 = vmatprep.subr.bf16.mxu0 0
  %3894 = vmatpush1.bf16.msra.mxu0 0
  %3895 = vmatprep.subr.bf16.mxu0 0
  %3896 = vmatpush1.bf16.msra.mxu0 0
  %3897 = vmatprep.subr.bf16.mxu0 0
  %3898 = vmatpush1.bf16.msra.mxu0 0
  %3899 = vmatprep.subr.bf16.mxu0 0
  %3900 = vmatpush1.bf16.msra.mxu0 0
  %3901 = vmatprep.subr.bf16.mxu0 0
  %3902 = vmatpush1.bf16.msra.mxu0 0
  %3903 = vmatprep.subr.bf16.mxu0 0
  %3904 = vmatpush1.bf16.msra.mxu0 0
  %3905 = vmatprep.subr.bf16.mxu0 0
  %3906 = vmatpush1.bf16.msra.mxu0 0
  %3907 = vmatprep.subr.bf16.mxu0 0
  %3908 = vmatpush1.bf16.msra.mxu0 0
  %3909 = vmatprep.subr.bf16.mxu0 0
  %3910 = vmatpush1.bf16.msra.mxu0 0
  %3911 = vmatprep.subr.bf16.mxu0 0
  %3912 = vmatpush1.bf16.msra.mxu0 0
  %3913 = vmatprep.mubr.bf16.mxu0 0
  %3914 = vmatmul.mubr.bf16.gmra.mrb[0].mxu0 %v3864
  %v3915 = vpop.f32.mrb[0].mxu0
  %v3916 = vadd.f32 0.0, %v3915
  %v3917 = vpop.f32.mrb[0].mxu0
  %v3918 = vpop.f32.mrb[0].mxu0
  %v3919 = vadd.f32 0.0, %v3918
  %v3920 = vpop.f32.mrb[0].mxu0
  %3921 = vmatprep.mubr.bf16.mxu0 0
  %3922 = vmatmul.mubr.bf16.gmra.mrb[0].mxu0 %v3867
  %v3923 = vpop.f32.mrb[0].mxu0
  %v3924 = vadd.f32 0.0, %v3923
  %v3925 = vpop.f32.mrb[0].mxu0
  %v3926 = vpop.f32.mrb[0].mxu0
  %v3927 = vadd.f32 0.0, %v3926
  %v3928 = vpop.f32.mrb[0].mxu0
  %3929 = vmatprep.mubr.bf16.mxu0 0
  %3930 = vmatmul.mubr.bf16.gmra.mrb[0].mxu0 %v3870
  %v3931 = vpop.f32.mrb[0].mxu0
  %v3932 = vadd.f32 0.0, %v3931
  %v3933 = vpop.f32.mrb[0].mxu0
  %v3934 = vpop.f32.mrb[0].mxu0
  %v3935 = vadd.f32 0.0, %v3934
  %v3936 = vpop.f32.mrb[0].mxu0
  %3937 = vmatprep.mubr.bf16.mxu0 0
  %3938 = vmatmul.mubr.bf16.gmra.mrb[0].mxu0 %v3873
  %v3939 = vpop.f32.mrb[0].mxu0
  %v3940 = vadd.f32 0.0, %v3939
  %v3941 = vpop.f32.mrb[0].mxu0
  %v3942 = vpop.f32.mrb[0].mxu0
  %v3943 = vadd.f32 0.0, %v3942
  %v3944 = vpop.f32.mrb[0].mxu0
  %3945 = vmatprep.mubr.bf16.mxu0 0
  %3946 = vmatmul.mubr.bf16.gmra.mrb[0].mxu0 %v3876
  %v3947 = vpop.f32.mrb[0].mxu0
  %v3948 = vadd.f32 0.0, %v3947
  %v3949 = vpop.f32.mrb[0].mxu0
  %v3950 = vpop.f32.mrb[0].mxu0
  %v3951 = vadd.f32 0.0, %v3950
  %v3952 = vpop.f32.mrb[0].mxu0
  %3953 = vmatprep.mubr.bf16.mxu0 0
  %3954 = vmatmul.mubr.bf16.gmra.mrb[0].mxu0 %v3879
  %v3955 = vpop.f32.mrb[0].mxu0
  %v3956 = vadd.f32 0.0, %v3955
  %v3957 = vpop.f32.mrb[0].mxu0
  %v3958 = vpop.f32.mrb[0].mxu0
  %v3959 = vadd.f32 0.0, %v3958
  %v3960 = vpop.f32.mrb[0].mxu0
  %3961 = vdwg.mxu0
  %v3962 = vadd.f32 %v3754, %v3916
  %v3963 = vadd.f32 %v3755, %v3919
  %v3964 = vadd.f32 %v3756, %v3924
  %v3965 = vadd.f32 %v3757, %v3927
  %v3966 = vadd.f32 %v3758, %v3932
  %v3967 = vadd.f32 %v3759, %v3935
  %v3968 = vadd.f32 %v3760, %v3940
  %v3969 = vadd.f32 %v3761, %v3943
  %v3970 = vadd.f32 %v3762, %v3948
  %v3971 = vadd.f32 %v3763, %v3951
  %v3972 = vadd.f32 %v3764, %v3956
  %v3973 = vadd.f32 %v3765, %v3959
  %v3974 = vld [vmem:[#allocation3 + $0x8] sm:$0xe0]
  %s3975 = scalar_lea.vmem %s5, 256
  %v3976 = vld [vmem:[%s3975] sm:$0xf]
  %v3977 = vld [vmem:[%s3975 + $0x4] sm:$0xf]
  %v3978 = vld [vmem:[%s3975 + $0x8] sm:$0xf]
  %v3979 = vld [vmem:[%s3975 + $0xc] sm:$0xf]
  %v3980 = vld [vmem:[%s3975 + $0x10] sm:$0xf]
  %v3981 = vld [vmem:[%s3975 + $0x14] sm:$0xf]
  %v3982 = vld [vmem:[%s3975 + $0x18] sm:$0xf]
  %v3983 = vld [vmem:[%s3975 + $0x1c] sm:$0xf]
  %vm3986 = vcmask 1042432
  %v3987 = vrot.slane %v3974, 5
  %v3988 = vrot.slane %v3595, 5
  %v3989 = vsel %vm3986, %v3987, %v3988
  %v3990 = vrot.slane %v3596, 5
  %v3991 = vsel %vm3986, %v3988, %v3990
  %v3992 = vrot.slane %v3597, 5
  %v3993 = vsel %vm3986, %v3990, %v3992
  %v3994 = vrot.slane %v3598, 5
  %v3995 = vsel %vm3986, %v3992, %v3994
  %v3996 = vrot.slane %v3599, 5
  %v3997 = vsel %vm3986, %v3994, %v3996
  %v3998 = vrot.slane %v3766, 5
  %v3999 = vsel %vm3986, %v3996, %v3998
  %v4008 = vunpack.c.l.b16 %v3976
  %v4009 = vunpack.c.l.b16 %v3977
  %v4010 = vunpack.c.l.b16 %v3978
  %v4011 = vunpack.c.l.b16 %v3979
  %v4012 = vunpack.c.l.b16 %v3980
  %v4013 = vunpack.c.l.b16 %v3981
  %v4014 = vunpack.c.l.b16 %v3982
  %v4015 = vunpack.c.l.b16 %v3983
  %v4016 = vpack.c.b16 %v4009, %v4008
  %v4017 = vpack.c.b16 %v4011, %v4010
  %v4018 = vpack.c.b16 %v4013, %v4012
  %v4019 = vpack.c.b16 %v4015, %v4014
  %v4025 = vsel %vm387, %v3989, 0
  %v4028 = vsel %vm387, %v3991, 0
  %v4031 = vsel %vm387, %v3993, 0
  %v4034 = vsel %vm387, %v3995, 0
  %v4037 = vsel %vm387, %v3997, 0
  %v4040 = vsel %vm387, %v3999, 0
  %4042 = vmatprep.subr.bf16.mxu0 0
  %4043 = vmatpush1.bf16.msra.mxu0 %v4016
  %4044 = vmatprep.subr.bf16.mxu0 0
  %4045 = vmatpush1.bf16.msra.mxu0 %v4017
  %4046 = vmatprep.subr.bf16.mxu0 0
  %4047 = vmatpush1.bf16.msra.mxu0 %v4018
  %4048 = vmatprep.subr.bf16.mxu0 0
  %4049 = vmatpush1.bf16.msra.mxu0 %v4019
  %4050 = vmatprep.subr.bf16.mxu0 0
  %4051 = vmatpush1.bf16.msra.mxu0 0
  %4052 = vmatprep.subr.bf16.mxu0 0
  %4053 = vmatpush1.bf16.msra.mxu0 0
  %4054 = vmatprep.subr.bf16.mxu0 0
  %4055 = vmatpush1.bf16.msra.mxu0 0
  %4056 = vmatprep.subr.bf16.mxu0 0
  %4057 = vmatpush1.bf16.msra.mxu0 0
  %4058 = vmatprep.subr.bf16.mxu0 0
  %4059 = vmatpush1.bf16.msra.mxu0 0
  %4060 = vmatprep.subr.bf16.mxu0 0
  %4061 = vmatpush1.bf16.msra.mxu0 0
  %4062 = vmatprep.subr.bf16.mxu0 0
  %4063 = vmatpush1.bf16.msra.mxu0 0
  %4064 = vmatprep.subr.bf16.mxu0 0
  %4065 = vmatpush1.bf16.msra.mxu0 0
  %4066 = vmatprep.subr.bf16.mxu0 0
  %4067 = vmatpush1.bf16.msra.mxu0 0
  %4068 = vmatprep.subr.bf16.mxu0 0
  %4069 = vmatpush1.bf16.msra.mxu0 0
  %4070 = vmatprep.subr.bf16.mxu0 0
  %4071 = vmatpush1.bf16.msra.mxu0 0
  %4072 = vmatprep.subr.bf16.mxu0 0
  %4073 = vmatpush1.bf16.msra.mxu0 0
  %4074 = vmatprep.mubr.bf16.mxu0 0
  %4075 = vmatmul.mubr.bf16.gmra.mrb[0].mxu0 %v4025
  %v4076 = vpop.f32.mrb[0].mxu0
  %v4077 = vadd.f32 0.0, %v4076
  %v4078 = vpop.f32.mrb[0].mxu0
  %v4079 = vpop.f32.mrb[0].mxu0
  %v4080 = vadd.f32 0.0, %v4079
  %v4081 = vpop.f32.mrb[0].mxu0
  %4082 = vmatprep.mubr.bf16.mxu0 0
  %4083 = vmatmul.mubr.bf16.gmra.mrb[0].mxu0 %v4028
  %v4084 = vpop.f32.mrb[0].mxu0
  %v4085 = vadd.f32 0.0, %v4084
  %v4086 = vpop.f32.mrb[0].mxu0
  %v4087 = vpop.f32.mrb[0].mxu0
  %v4088 = vadd.f32 0.0, %v4087
  %v4089 = vpop.f32.mrb[0].mxu0
  %4090 = vmatprep.mubr.bf16.mxu0 0
  %4091 = vmatmul.mubr.bf16.gmra.mrb[0].mxu0 %v4031
  %v4092 = vpop.f32.mrb[0].mxu0
  %v4093 = vadd.f32 0.0, %v4092
  %v4094 = vpop.f32.mrb[0].mxu0
  %v4095 = vpop.f32.mrb[0].mxu0
  %v4096 = vadd.f32 0.0, %v4095
  %v4097 = vpop.f32.mrb[0].mxu0
  %4098 = vmatprep.mubr.bf16.mxu0 0
  %4099 = vmatmul.mubr.bf16.gmra.mrb[0].mxu0 %v4034
  %v4100 = vpop.f32.mrb[0].mxu0
  %v4101 = vadd.f32 0.0, %v4100
  %v4102 = vpop.f32.mrb[0].mxu0
  %v4103 = vpop.f32.mrb[0].mxu0
  %v4104 = vadd.f32 0.0, %v4103
  %v4105 = vpop.f32.mrb[0].mxu0
  %4106 = vmatprep.mubr.bf16.mxu0 0
  %4107 = vmatmul.mubr.bf16.gmra.mrb[0].mxu0 %v4037
  %v4108 = vpop.f32.mrb[0].mxu0
  %v4109 = vadd.f32 0.0, %v4108
  %v4110 = vpop.f32.mrb[0].mxu0
  %v4111 = vpop.f32.mrb[0].mxu0
  %v4112 = vadd.f32 0.0, %v4111
  %v4113 = vpop.f32.mrb[0].mxu0
  %4114 = vmatprep.mubr.bf16.mxu0 0
  %4115 = vmatmul.mubr.bf16.gmra.mrb[0].mxu0 %v4040
  %v4116 = vpop.f32.mrb[0].mxu0
  %v4117 = vadd.f32 0.0, %v4116
  %v4118 = vpop.f32.mrb[0].mxu0
  %v4119 = vpop.f32.mrb[0].mxu0
  %v4120 = vadd.f32 0.0, %v4119
  %v4121 = vpop.f32.mrb[0].mxu0
  %4122 = vdwg.mxu0
  %v4123 = vadd.f32 %v3962, %v4077
  %v4124 = vadd.f32 %v3963, %v4080
  %v4125 = vadd.f32 %v3964, %v4085
  %v4126 = vadd.f32 %v3965, %v4088
  %v4127 = vadd.f32 %v3966, %v4093
  %v4128 = vadd.f32 %v3967, %v4096
  %v4129 = vadd.f32 %v3968, %v4101
  %v4130 = vadd.f32 %v3969, %v4104
  %v4131 = vadd.f32 %v3970, %v4109
  %v4132 = vadd.f32 %v3971, %v4112
  %v4133 = vadd.f32 %v3972, %v4117
  %v4134 = vadd.f32 %v3973, %v4120
  %v4135 = vld [vmem:[%s6] sm:$0x1]
  %v4137 = vlaneseq
  %v4138 = vshrl.u32 %v4137, 7
  %v4139 = vsub.s32 0, %v4138
  %v4140 = vrot.slane %v4135, %v4139
  %v4142 = vadd.f32 %v4123, %v4140
  %v4143 = vadd.f32 %v4124, %v4140
  %v4144 = vadd.f32 %v4125, %v4140
  %v4145 = vadd.f32 %v4126, %v4140
  %v4146 = vadd.f32 %v4127, %v4140
  %v4147 = vadd.f32 %v4128, %v4140
  %v4148 = vadd.f32 %v4129, %v4140
  %v4149 = vadd.f32 %v4130, %v4140
  %v4150 = vadd.f32 %v4131, %v4140
  %v4151 = vadd.f32 %v4132, %v4140
  %v4152 = vadd.f32 %v4133, %v4140
  %v4153 = vadd.f32 %v4134, %v4140
  %v4154 = vmax.f32 %v4142, 0.0
  %v4155 = vmax.f32 %v4143, 0.0
  %v4156 = vmax.f32 %v4144, 0.0
  %v4157 = vmax.f32 %v4145, 0.0
  %v4158 = vmax.f32 %v4146, 0.0
  %v4159 = vmax.f32 %v4147, 0.0
  %v4160 = vmax.f32 %v4148, 0.0
  %v4161 = vmax.f32 %v4149, 0.0
  %v4162 = vmax.f32 %v4150, 0.0
  %v4163 = vmax.f32 %v4151, 0.0
  %v4164 = vmax.f32 %v4152, 0.0
  %v4165 = vmax.f32 %v4153, 0.0
  %v4166 = vpack.c.bf16 %v4155, %v4154
  %v4167 = vpack.c.bf16 %v4157, %v4156
  %v4168 = vpack.c.bf16 %v4159, %v4158
  %v4169 = vpack.c.bf16 %v4161, %v4160
  %v4170 = vpack.c.bf16 %v4163, %v4162
  %v4171 = vpack.c.bf16 %v4165, %v4164
  %v4178 = vunpack.c.l.b16 %v4166
  %v4179 = vunpack.c.h.b16 %v4166
  %v4180 = vunpack.c.l.b16 %v4167
  %v4181 = vunpack.c.h.b16 %v4167
  %v4182 = vunpack.c.l.b16 %v4168
  %v4183 = vunpack.c.h.b16 %v4168
  %v4184 = vunpack.c.l.b16 %v4169
  %v4185 = vunpack.c.h.b16 %v4169
  %v4186 = vunpack.c.l.b16 %v4170
  %v4187 = vunpack.c.h.b16 %v4170
  %v4188 = vunpack.c.l.b16 %v4171
  %v4189 = vunpack.c.h.b16 %v4171
  %v4190 = vpack.c.b16 %v4178, %v4178
  %v4191 = vpack.c.b16 %v4179, %v4179
  %v4192 = vpack.c.b16 %v4180, %v4180
  %v4193 = vpack.c.b16 %v4181, %v4181
  %v4194 = vpack.c.b16 %v4182, %v4182
  %v4195 = vpack.c.b16 %v4183, %v4183
  %v4196 = vpack.c.b16 %v4184, %v4184
  %v4197 = vpack.c.b16 %v4185, %v4185
  %v4198 = vpack.c.b16 %v4186, %v4186
  %v4199 = vpack.c.b16 %v4187, %v4187
  %v4200 = vpack.c.b16 %v4188, %v4188
  %v4201 = vpack.c.b16 %v4189, %v4189
  %4214 = vst.msk [vmem:[%s7] sm:$0xf] %vm2606, %v4190
  %4215 = vst.msk [vmem:[%s7 + $0x4] sm:$0xf] %vm2606, %v4191
  %4216 = vst.msk [vmem:[%s7 + $0x8] sm:$0xf] %vm2606, %v4192
  %4217 = vst.msk [vmem:[%s7 + $0xc] sm:$0xf] %vm2606, %v4193
  %4218 = vst.msk [vmem:[%s7 + $0x10] sm:$0xf] %vm2606, %v4194
  %4219 = vst.msk [vmem:[%s7 + $0x14] sm:$0xf] %vm2606, %v4195
  %4220 = vst.msk [vmem:[%s7 + $0x18] sm:$0xf] %vm2606, %v4196
  %4221 = vst.msk [vmem:[%s7 + $0x1c] sm:$0xf] %vm2606, %v4197
  %4222 = vst.msk [vmem:[%s7 + $0x20] sm:$0xf] %vm2606, %v4198
  %4223 = vst.msk [vmem:[%s7 + $0x24] sm:$0xf] %vm2606, %v4199
  %4224 = vst.msk [vmem:[%s7 + $0x28] sm:$0xf] %vm2606, %v4200
  %4225 = vst.msk [vmem:[%s7 + $0x2c] sm:$0xf] %vm2606, %v4201
  %s4226 = scalar_lea.vmem %s0, 160
  %v4227 = vld [vmem:[%s4226] sm:$0xff]
  %v4228 = vld [vmem:[%s4226 + $0x8] sm:$0xff]
  %v4229 = vld [vmem:[%s4226 + $0x10] sm:$0xff]
  %v4230 = vld [vmem:[%s4226 + $0x18] sm:$0xff]
  %v4231 = vld [vmem:[%s4226 + $0x20] sm:$0xff]
  %v4232 = vld [vmem:[%s4226 + $0x28] sm:$0xff]
  %v4233 = vld [vmem:[%s4226 + $0x30] sm:$0xff]
  %v4234 = vld [vmem:[%s4226 + $0x38] sm:$0xff]
  %v4235 = vld [vmem:[%s4226 + $0x40] sm:$0xff]
  %v4236 = vld [vmem:[%s4226 + $0x48] sm:$0xff]
  %v4237 = vld [vmem:[%s4226 + $0x50] sm:$0xff]
  %v4238 = vld [vmem:[%s4226 + $0x58] sm:$0xff]
  %v4239 = vld [vmem:[%s4226 + $0x60] sm:$0xff]
  %v4240 = vld [vmem:[%s4226 + $0x68] sm:$0xff]
  %v4241 = vld [vmem:[%s4226 + $0x70] sm:$0xff]
  %v4242 = vld [vmem:[%s4226 + $0x78] sm:$0xff]
  %v4243 = vld [vmem:[%s4226 + $0x80] sm:$0x33]
  %v4244 = vld [vmem:[%s1] sm:$0xf]
  %v4245 = vld [vmem:[%s1 + $0x4] sm:$0xf]
  %v4246 = vld [vmem:[%s1 + $0x8] sm:$0xf]
  %v4247 = vld [vmem:[%s1 + $0xc] sm:$0xf]
  %v4248 = vld [vmem:[%s1 + $0x10] sm:$0xf]
  %v4249 = vld [vmem:[%s1 + $0x14] sm:$0xf]
  %v4250 = vld [vmem:[%s1 + $0x18] sm:$0xf]
  %v4251 = vld [vmem:[%s1 + $0x1c] sm:$0xf]
  %v4252 = vld [vmem:[%s1 + $0x20] sm:$0xf]
  %v4253 = vld [vmem:[%s1 + $0x24] sm:$0xf]
  %v4254 = vld [vmem:[%s1 + $0x28] sm:$0xf]
  %v4255 = vld [vmem:[%s1 + $0x2c] sm:$0xf]
  %v4256 = vld [vmem:[%s1 + $0x30] sm:$0xf]
  %v4257 = vld [vmem:[%s1 + $0x34] sm:$0xf]
  %v4258 = vld [vmem:[%s1 + $0x38] sm:$0xf]
  %v4259 = vld [vmem:[%s1 + $0x3c] sm:$0xf]
  %v4260 = vld [vmem:[%s1 + $0x40] sm:$0xf]
  %v4261 = vld [vmem:[%s1 + $0x44] sm:$0xf]
  %v4262 = vld [vmem:[%s1 + $0x48] sm:$0xf]
  %v4263 = vld [vmem:[%s1 + $0x4c] sm:$0xf]
  %v4264 = vld [vmem:[%s1 + $0x50] sm:$0xf]
  %v4265 = vld [vmem:[%s1 + $0x54] sm:$0xf]
  %v4266 = vld [vmem:[%s1 + $0x58] sm:$0xf]
  %v4267 = vld [vmem:[%s1 + $0x5c] sm:$0xf]
  %v4268 = vld [vmem:[%s4226 + $0x80] sm:$0x77]
  %v4269 = vld [vmem:[%s69] sm:$0xf]
  %v4270 = vld [vmem:[%s69 + $0x4] sm:$0xf]
  %v4271 = vld [vmem:[%s69 + $0x8] sm:$0xf]
  %v4272 = vld [vmem:[%s69 + $0xc] sm:$0xf]
  %v4273 = vld [vmem:[%s69 + $0x10] sm:$0xf]
  %v4274 = vld [vmem:[%s69 + $0x14] sm:$0xf]
  %v4275 = vld [vmem:[%s69 + $0x18] sm:$0xf]
  %v4276 = vld [vmem:[%s69 + $0x1c] sm:$0xf]
  %v4277 = vld [vmem:[%s69 + $0x20] sm:$0xf]
  %v4278 = vld [vmem:[%s69 + $0x24] sm:$0xf]
  %v4279 = vld [vmem:[%s69 + $0x28] sm:$0xf]
  %v4280 = vld [vmem:[%s69 + $0x2c] sm:$0xf]
  %v4281 = vld [vmem:[%s69 + $0x30] sm:$0xf]
  %v4282 = vld [vmem:[%s69 + $0x34] sm:$0xf]
  %v4283 = vld [vmem:[%s69 + $0x38] sm:$0xf]
  %v4284 = vld [vmem:[%s69 + $0x3c] sm:$0xf]
  %v4285 = vld [vmem:[%s69 + $0x40] sm:$0xf]
  %v4286 = vld [vmem:[%s69 + $0x44] sm:$0xf]
  %v4287 = vld [vmem:[%s69 + $0x48] sm:$0xf]
  %v4288 = vld [vmem:[%s69 + $0x4c] sm:$0xf]
  %v4289 = vld [vmem:[%s69 + $0x50] sm:$0xf]
  %v4290 = vld [vmem:[%s69 + $0x54] sm:$0xf]
  %v4291 = vld [vmem:[%s69 + $0x58] sm:$0xf]
  %v4292 = vld [vmem:[%s69 + $0x5c] sm:$0xf]
  %v4310 = vunpack.c.l.b16 %v4227
  %v4311 = vunpack.c.h.b16 %v4227
  %v4312 = vunpack.c.l.b16 %v4228
  %v4313 = vunpack.c.h.b16 %v4228
  %v4314 = vunpack.c.l.b16 %v4229
  %v4315 = vunpack.c.h.b16 %v4229
  %v4316 = vunpack.c.l.b16 %v4230
  %v4317 = vunpack.c.h.b16 %v4230
  %v4318 = vunpack.c.l.b16 %v4231
  %v4319 = vunpack.c.h.b16 %v4231
  %v4320 = vunpack.c.l.b16 %v4232
  %v4321 = vunpack.c.h.b16 %v4232
  %v4322 = vunpack.c.l.b16 %v4233
  %v4323 = vunpack.c.h.b16 %v4233
  %v4324 = vunpack.c.l.b16 %v4234
  %v4325 = vunpack.c.h.b16 %v4234
  %v4326 = vunpack.c.l.b16 %v4235
  %v4327 = vunpack.c.h.b16 %v4235
  %v4328 = vunpack.c.l.b16 %v4236
  %v4329 = vunpack.c.h.b16 %v4236
  %v4330 = vunpack.c.l.b16 %v4237
  %v4331 = vunpack.c.h.b16 %v4237
  %v4332 = vunpack.c.l.b16 %v4238
  %v4333 = vunpack.c.h.b16 %v4238
  %v4334 = vunpack.c.l.b16 %v4239
  %v4335 = vunpack.c.h.b16 %v4239
  %v4336 = vunpack.c.l.b16 %v4240
  %v4337 = vunpack.c.h.b16 %v4240
  %v4338 = vunpack.c.l.b16 %v4241
  %v4339 = vunpack.c.h.b16 %v4241
  %v4340 = vunpack.c.l.b16 %v4242
  %v4341 = vunpack.c.h.b16 %v4242
  %v4342 = vunpack.c.l.b16 %v4268
  %v4343 = vunpack.c.h.b16 %v4268
  %v4344 = vpack.c.b16 %v4312, %v4310
  %v4345 = vpack.c.b16 %v4313, %v4311
  %v4346 = vpack.c.b16 %v4316, %v4314
  %v4347 = vpack.c.b16 %v4317, %v4315
  %v4348 = vpack.c.b16 %v4320, %v4318
  %v4349 = vpack.c.b16 %v4321, %v4319
  %v4350 = vpack.c.b16 %v4324, %v4322
  %v4351 = vpack.c.b16 %v4325, %v4323
  %v4352 = vpack.c.b16 %v4328, %v4326
  %v4353 = vpack.c.b16 %v4329, %v4327
  %v4354 = vpack.c.b16 %v4332, %v4330
  %v4355 = vpack.c.b16 %v4333, %v4331
  %v4356 = vpack.c.b16 %v4336, %v4334
  %v4357 = vpack.c.b16 %v4337, %v4335
  %v4358 = vpack.c.b16 %v4340, %v4338
  %v4359 = vpack.c.b16 %v4341, %v4339
  %v4360 = vpack.c.b16 %v4342, %v4342
  %v4361 = vpack.c.b16 %v4343, %v4343
  %v4363 = vshrl.u32 %v4344, 16
  %v4365 = vshll.u32 %v4344, 16
  %v4367 = vrot.slane %v4365, 1
  %v4368 = vor.u32 %v4363, %v4367
  %v4370 = vshll.u32 %v4346, 16
  %v4372 = vrot.slane %v4370, 1
  %v4373 = vsel %vm163, %v4368, %v4372
  %v4375 = vshrl.u32 %v4345, 16
  %v4377 = vshll.u32 %v4345, 16
  %v4379 = vrot.slane %v4377, 1
  %v4380 = vor.u32 %v4375, %v4379
  %v4382 = vshll.u32 %v4347, 16
  %v4384 = vrot.slane %v4382, 1
  %v4385 = vsel %vm163, %v4380, %v4384
  %v4386 = vshrl.u32 %v4346, 16
  %v4388 = vor.u32 %v4386, %v4372
  %v4390 = vshll.u32 %v4348, 16
  %v4392 = vrot.slane %v4390, 1
  %v4393 = vsel %vm163, %v4388, %v4392
  %v4394 = vshrl.u32 %v4347, 16
  %v4396 = vor.u32 %v4394, %v4384
  %v4398 = vshll.u32 %v4349, 16
  %v4400 = vrot.slane %v4398, 1
  %v4401 = vsel %vm163, %v4396, %v4400
  %v4402 = vshrl.u32 %v4348, 16
  %v4404 = vor.u32 %v4402, %v4392
  %v4406 = vshll.u32 %v4350, 16
  %v4408 = vrot.slane %v4406, 1
  %v4409 = vsel %vm163, %v4404, %v4408
  %v4410 = vshrl.u32 %v4349, 16
  %v4412 = vor.u32 %v4410, %v4400
  %v4414 = vshll.u32 %v4351, 16
  %v4416 = vrot.slane %v4414, 1
  %v4417 = vsel %vm163, %v4412, %v4416
  %v4418 = vshrl.u32 %v4350, 16
  %v4420 = vor.u32 %v4418, %v4408
  %v4422 = vshll.u32 %v4352, 16
  %v4424 = vrot.slane %v4422, 1
  %v4425 = vsel %vm163, %v4420, %v4424
  %v4426 = vshrl.u32 %v4351, 16
  %v4428 = vor.u32 %v4426, %v4416
  %v4430 = vshll.u32 %v4353, 16
  %v4432 = vrot.slane %v4430, 1
  %v4433 = vsel %vm163, %v4428, %v4432
  %v4434 = vshrl.u32 %v4352, 16
  %v4436 = vor.u32 %v4434, %v4424
  %v4438 = vshll.u32 %v4354, 16
  %v4440 = vrot.slane %v4438, 1
  %v4441 = vsel %vm163, %v4436, %v4440
  %v4442 = vshrl.u32 %v4353, 16
  %v4444 = vor.u32 %v4442, %v4432
  %v4446 = vshll.u32 %v4355, 16
  %v4448 = vrot.slane %v4446, 1
  %v4449 = vsel %vm163, %v4444, %v4448
  %v4450 = vshrl.u32 %v4354, 16
  %v4452 = vor.u32 %v4450, %v4440
  %v4454 = vshll.u32 %v4356, 16
  %v4456 = vrot.slane %v4454, 1
  %v4457 = vsel %vm163, %v4452, %v4456
  %v4458 = vshrl.u32 %v4355, 16
  %v4460 = vor.u32 %v4458, %v4448
  %v4462 = vshll.u32 %v4357, 16
  %v4464 = vrot.slane %v4462, 1
  %v4465 = vsel %vm163, %v4460, %v4464
  %v4466 = vshrl.u32 %v4356, 16
  %v4468 = vor.u32 %v4466, %v4456
  %v4470 = vshll.u32 %v4358, 16
  %v4472 = vrot.slane %v4470, 1
  %v4473 = vsel %vm163, %v4468, %v4472
  %v4474 = vshrl.u32 %v4357, 16
  %v4476 = vor.u32 %v4474, %v4464
  %v4478 = vshll.u32 %v4359, 16
  %v4480 = vrot.slane %v4478, 1
  %v4481 = vsel %vm163, %v4476, %v4480
  %v4482 = vshrl.u32 %v4358, 16
  %v4484 = vor.u32 %v4482, %v4472
  %v4486 = vshll.u32 %v4360, 16
  %v4488 = vrot.slane %v4486, 1
  %v4489 = vsel %vm163, %v4484, %v4488
  %v4490 = vshrl.u32 %v4359, 16
  %v4492 = vor.u32 %v4490, %v4480
  %v4494 = vshll.u32 %v4361, 16
  %v4496 = vrot.slane %v4494, 1
  %v4497 = vsel %vm163, %v4492, %v4496
  %v4498 = vshrl.u32 %v4360, 16
  %v4500 = vor.u32 %v4498, %v4488
  %v4501 = vshrl.u32 %v4361, 16
  %v4503 = vor.u32 %v4501, %v4496
  %v4537 = vunpack.c.l.b16 %v4269
  %v4538 = vunpack.c.l.b16 %v4270
  %v4539 = vunpack.c.l.b16 %v4271
  %v4540 = vunpack.c.l.b16 %v4272
  %v4541 = vunpack.c.l.b16 %v4273
  %v4542 = vunpack.c.l.b16 %v4274
  %v4543 = vunpack.c.l.b16 %v4275
  %v4544 = vunpack.c.l.b16 %v4276
  %v4545 = vunpack.c.l.b16 %v4277
  %v4546 = vunpack.c.l.b16 %v4278
  %v4547 = vunpack.c.l.b16 %v4279
  %v4548 = vunpack.c.l.b16 %v4280
  %v4549 = vunpack.c.l.b16 %v4281
  %v4550 = vunpack.c.l.b16 %v4282
  %v4551 = vunpack.c.l.b16 %v4283
  %v4552 = vunpack.c.l.b16 %v4284
  %v4553 = vunpack.c.l.b16 %v4285
  %v4554 = vunpack.c.l.b16 %v4286
  %v4555 = vunpack.c.l.b16 %v4287
  %v4556 = vunpack.c.l.b16 %v4288
  %v4557 = vunpack.c.l.b16 %v4289
  %v4558 = vunpack.c.l.b16 %v4290
  %v4559 = vunpack.c.l.b16 %v4291
  %v4560 = vunpack.c.l.b16 %v4292
  %v4561 = vpack.c.b16 %v4538, %v4537
  %v4562 = vpack.c.b16 %v4540, %v4539
  %v4563 = vpack.c.b16 %v4542, %v4541
  %v4564 = vpack.c.b16 %v4544, %v4543
  %v4565 = vpack.c.b16 %v4546, %v4545
  %v4566 = vpack.c.b16 %v4548, %v4547
  %v4567 = vpack.c.b16 %v4550, %v4549
  %v4568 = vpack.c.b16 %v4552, %v4551
  %v4569 = vpack.c.b16 %v4554, %v4553
  %v4570 = vpack.c.b16 %v4556, %v4555
  %v4571 = vpack.c.b16 %v4558, %v4557
  %v4572 = vpack.c.b16 %v4560, %v4559
  %v4586 = vsel %vm387, %v4385, 0
  %v4589 = vsel %vm387, %v4401, 0
  %v4592 = vsel %vm387, %v4417, 0
  %v4595 = vsel %vm387, %v4433, 0
  %v4598 = vsel %vm387, %v4449, 0
  %v4601 = vsel %vm387, %v4465, 0
  %v4604 = vsel %vm387, %v4481, 0
  %v4607 = vsel %vm387, %v4497, 0
  %v4610 = vsel %vm387, %v4503, 0
  %4612 = vmatprep.subr.bf16.mxu0 0
  %4613 = vmatpush1.bf16.msra.mxu0 %v4561
  %4614 = vmatprep.subr.bf16.mxu0 0
  %4615 = vmatpush1.bf16.msra.mxu0 %v4562
  %4616 = vmatprep.subr.bf16.mxu0 0
  %4617 = vmatpush1.bf16.msra.mxu0 %v4563
  %4618 = vmatprep.subr.bf16.mxu0 0
  %4619 = vmatpush1.bf16.msra.mxu0 %v4564
  %4620 = vmatprep.subr.bf16.mxu0 0
  %4621 = vmatpush1.bf16.msra.mxu0 %v4565
  %4622 = vmatprep.subr.bf16.mxu0 0
  %4623 = vmatpush1.bf16.msra.mxu0 %v4566
  %4624 = vmatprep.subr.bf16.mxu0 0
  %4625 = vmatpush1.bf16.msra.mxu0 %v4567
  %4626 = vmatprep.subr.bf16.mxu0 0
  %4627 = vmatpush1.bf16.msra.mxu0 %v4568
  %4628 = vmatprep.subr.bf16.mxu0 0
  %4629 = vmatpush1.bf16.msra.mxu0 %v4569
  %4630 = vmatprep.subr.bf16.mxu0 0
  %4631 = vmatpush1.bf16.msra.mxu0 %v4570
  %4632 = vmatprep.subr.bf16.mxu0 0
  %4633 = vmatpush1.bf16.msra.mxu0 %v4571
  %4634 = vmatprep.subr.bf16.mxu0 0
  %4635 = vmatpush1.bf16.msra.mxu0 %v4572
  %4636 = vmatprep.subr.bf16.mxu0 0
  %4637 = vmatpush1.bf16.msra.mxu0 0
  %4638 = vmatprep.subr.bf16.mxu0 0
  %4639 = vmatpush1.bf16.msra.mxu0 0
  %4640 = vmatprep.subr.bf16.mxu0 0
  %4641 = vmatpush1.bf16.msra.mxu0 0
  %4642 = vmatprep.subr.bf16.mxu0 0
  %4643 = vmatpush1.bf16.msra.mxu0 0
  %4644 = vmatprep.mubr.bf16.mxu0 %v4586
  %4645 = vmatmul.mubr.bf16.gmra.mrb[0].mxu0 %v4373
  %v4646 = vpop.f32.mrb[0].mxu0
  %v4647 = vadd.f32 0.0, %v4646
  %v4648 = vpop.f32.mrb[0].mxu0
  %v4649 = vpop.f32.mrb[0].mxu0
  %v4650 = vadd.f32 0.0, %v4649
  %v4651 = vpop.f32.mrb[0].mxu0
  %4652 = vmatprep.mubr.bf16.mxu0 %v4589
  %4653 = vmatmul.mubr.bf16.gmra.mrb[0].mxu0 %v4393
  %v4654 = vpop.f32.mrb[0].mxu0
  %v4655 = vadd.f32 0.0, %v4654
  %v4656 = vpop.f32.mrb[0].mxu0
  %v4657 = vpop.f32.mrb[0].mxu0
  %v4658 = vadd.f32 0.0, %v4657
  %v4659 = vpop.f32.mrb[0].mxu0
  %4660 = vmatprep.mubr.bf16.mxu0 %v4592
  %4661 = vmatmul.mubr.bf16.gmra.mrb[0].mxu0 %v4409
  %v4662 = vpop.f32.mrb[0].mxu0
  %v4663 = vadd.f32 0.0, %v4662
  %v4664 = vpop.f32.mrb[0].mxu0
  %v4665 = vpop.f32.mrb[0].mxu0
  %v4666 = vadd.f32 0.0, %v4665
  %v4667 = vpop.f32.mrb[0].mxu0
  %4668 = vmatprep.mubr.bf16.mxu0 %v4595
  %4669 = vmatmul.mubr.bf16.gmra.mrb[0].mxu0 %v4425
  %v4670 = vpop.f32.mrb[0].mxu0
  %v4671 = vadd.f32 0.0, %v4670
  %v4672 = vpop.f32.mrb[0].mxu0
  %v4673 = vpop.f32.mrb[0].mxu0
  %v4674 = vadd.f32 0.0, %v4673
  %v4675 = vpop.f32.mrb[0].mxu0
  %4676 = vmatprep.mubr.bf16.mxu0 %v4598
  %4677 = vmatmul.mubr.bf16.gmra.mrb[0].mxu0 %v4441
  %v4678 = vpop.f32.mrb[0].mxu0
  %v4679 = vadd.f32 0.0, %v4678
  %v4680 = vpop.f32.mrb[0].mxu0
  %v4681 = vpop.f32.mrb[0].mxu0
  %v4682 = vadd.f32 0.0, %v4681
  %v4683 = vpop.f32.mrb[0].mxu0
  %4684 = vmatprep.mubr.bf16.mxu0 %v4601
  %4685 = vmatmul.mubr.bf16.gmra.mrb[0].mxu0 %v4457
  %v4686 = vpop.f32.mrb[0].mxu0
  %v4687 = vadd.f32 0.0, %v4686
  %v4688 = vpop.f32.mrb[0].mxu0
  %v4689 = vpop.f32.mrb[0].mxu0
  %v4690 = vadd.f32 0.0, %v4689
  %v4691 = vpop.f32.mrb[0].mxu0
  %4692 = vmatprep.mubr.bf16.mxu0 %v4604
  %4693 = vmatmul.mubr.bf16.gmra.mrb[0].mxu0 %v4473
  %v4694 = vpop.f32.mrb[0].mxu0
  %v4695 = vadd.f32 0.0, %v4694
  %v4696 = vpop.f32.mrb[0].mxu0
  %v4697 = vpop.f32.mrb[0].mxu0
  %v4698 = vadd.f32 0.0, %v4697
  %v4699 = vpop.f32.mrb[0].mxu0
  %4700 = vmatprep.mubr.bf16.mxu0 %v4607
  %4701 = vmatmul.mubr.bf16.gmra.mrb[0].mxu0 %v4489
  %v4702 = vpop.f32.mrb[0].mxu0
  %v4703 = vadd.f32 0.0, %v4702
  %v4704 = vpop.f32.mrb[0].mxu0
  %v4705 = vpop.f32.mrb[0].mxu0
  %v4706 = vadd.f32 0.0, %v4705
  %v4707 = vpop.f32.mrb[0].mxu0
  %4708 = vmatprep.mubr.bf16.mxu0 %v4610
  %4709 = vmatmul.mubr.bf16.gmra.mrb[0].mxu0 %v4500
  %v4710 = vpop.f32.mrb[0].mxu0
  %v4711 = vadd.f32 0.0, %v4710
  %v4712 = vpop.f32.mrb[0].mxu0
  %v4713 = vpop.f32.mrb[0].mxu0
  %v4714 = vpop.f32.mrb[0].mxu0
  %4715 = vdwg.mxu0
  %v4717 = vunpack.c.l.b16 %v4243
  %v4718 = vunpack.c.h.b16 %v4243
  %v4719 = vpack.c.b16 %v4717, %v4717
  %v4720 = vpack.c.b16 %v4718, %v4718
  %v4754 = vunpack.c.l.b16 %v4244
  %v4755 = vunpack.c.l.b16 %v4245
  %v4756 = vunpack.c.l.b16 %v4246
  %v4757 = vunpack.c.l.b16 %v4247
  %v4758 = vunpack.c.l.b16 %v4248
  %v4759 = vunpack.c.l.b16 %v4249
  %v4760 = vunpack.c.l.b16 %v4250
  %v4761 = vunpack.c.l.b16 %v4251
  %v4762 = vunpack.c.l.b16 %v4252
  %v4763 = vunpack.c.l.b16 %v4253
  %v4764 = vunpack.c.l.b16 %v4254
  %v4765 = vunpack.c.l.b16 %v4255
  %v4766 = vunpack.c.l.b16 %v4256
  %v4767 = vunpack.c.l.b16 %v4257
  %v4768 = vunpack.c.l.b16 %v4258
  %v4769 = vunpack.c.l.b16 %v4259
  %v4770 = vunpack.c.l.b16 %v4260
  %v4771 = vunpack.c.l.b16 %v4261
  %v4772 = vunpack.c.l.b16 %v4262
  %v4773 = vunpack.c.l.b16 %v4263
  %v4774 = vunpack.c.l.b16 %v4264
  %v4775 = vunpack.c.l.b16 %v4265
  %v4776 = vunpack.c.l.b16 %v4266
  %v4777 = vunpack.c.l.b16 %v4267
  %v4778 = vpack.c.b16 %v4755, %v4754
  %v4779 = vpack.c.b16 %v4757, %v4756
  %v4780 = vpack.c.b16 %v4759, %v4758
  %v4781 = vpack.c.b16 %v4761, %v4760
  %v4782 = vpack.c.b16 %v4763, %v4762
  %v4783 = vpack.c.b16 %v4765, %v4764
  %v4784 = vpack.c.b16 %v4767, %v4766
  %v4785 = vpack.c.b16 %v4769, %v4768
  %v4786 = vpack.c.b16 %v4771, %v4770
  %v4787 = vpack.c.b16 %v4773, %v4772
  %v4788 = vpack.c.b16 %v4775, %v4774
  %v4789 = vpack.c.b16 %v4777, %v4776
  %v4802 = vsel %vm387, %v4345, 0
  %v4804 = vsel %vm387, %v4347, 0
  %v4806 = vsel %vm387, %v4349, 0
  %v4808 = vsel %vm387, %v4351, 0
  %v4810 = vsel %vm387, %v4353, 0
  %v4812 = vsel %vm387, %v4355, 0
  %v4814 = vsel %vm387, %v4357, 0
  %v4816 = vsel %vm387, %v4359, 0
  %v4819 = vsel %vm387, %v4720, 0
  %4821 = vmatprep.subr.bf16.mxu0 0
  %4822 = vmatpush1.bf16.msra.mxu0 %v4778
  %4823 = vmatprep.subr.bf16.mxu0 0
  %4824 = vmatpush1.bf16.msra.mxu0 %v4779
  %4825 = vmatprep.subr.bf16.mxu0 0
  %4826 = vmatpush1.bf16.msra.mxu0 %v4780
  %4827 = vmatprep.subr.bf16.mxu0 0
  %4828 = vmatpush1.bf16.msra.mxu0 %v4781
  %4829 = vmatprep.subr.bf16.mxu0 0
  %4830 = vmatpush1.bf16.msra.mxu0 %v4782
  %4831 = vmatprep.subr.bf16.mxu0 0
  %4832 = vmatpush1.bf16.msra.mxu0 %v4783
  %4833 = vmatprep.subr.bf16.mxu0 0
  %4834 = vmatpush1.bf16.msra.mxu0 %v4784
  %4835 = vmatprep.subr.bf16.mxu0 0
  %4836 = vmatpush1.bf16.msra.mxu0 %v4785
  %4837 = vmatprep.subr.bf16.mxu0 0
  %4838 = vmatpush1.bf16.msra.mxu0 %v4786
  %4839 = vmatprep.subr.bf16.mxu0 0
  %4840 = vmatpush1.bf16.msra.mxu0 %v4787
  %4841 = vmatprep.subr.bf16.mxu0 0
  %4842 = vmatpush1.bf16.msra.mxu0 %v4788
  %4843 = vmatprep.subr.bf16.mxu0 0
  %4844 = vmatpush1.bf16.msra.mxu0 %v4789
  %4845 = vmatprep.subr.bf16.mxu0 0
  %4846 = vmatpush1.bf16.msra.mxu0 0
  %4847 = vmatprep.subr.bf16.mxu0 0
  %4848 = vmatpush1.bf16.msra.mxu0 0
  %4849 = vmatprep.subr.bf16.mxu0 0
  %4850 = vmatpush1.bf16.msra.mxu0 0
  %4851 = vmatprep.subr.bf16.mxu0 0
  %4852 = vmatpush1.bf16.msra.mxu0 0
  %4853 = vmatprep.mubr.bf16.mxu0 %v4802
  %4854 = vmatmul.mubr.bf16.gmra.mrb[0].mxu0 %v4344
  %v4855 = vpop.f32.mrb[0].mxu0
  %v4856 = vadd.f32 %v4647, %v4855
  %v4857 = vpop.f32.mrb[0].mxu0
  %v4858 = vpop.f32.mrb[0].mxu0
  %v4859 = vadd.f32 %v4650, %v4858
  %v4860 = vpop.f32.mrb[0].mxu0
  %4861 = vmatprep.mubr.bf16.mxu0 %v4804
  %4862 = vmatmul.mubr.bf16.gmra.mrb[0].mxu0 %v4346
  %v4863 = vpop.f32.mrb[0].mxu0
  %v4864 = vadd.f32 %v4655, %v4863
  %v4865 = vpop.f32.mrb[0].mxu0
  %v4866 = vpop.f32.mrb[0].mxu0
  %v4867 = vadd.f32 %v4658, %v4866
  %v4868 = vpop.f32.mrb[0].mxu0
  %4869 = vmatprep.mubr.bf16.mxu0 %v4806
  %4870 = vmatmul.mubr.bf16.gmra.mrb[0].mxu0 %v4348
  %v4871 = vpop.f32.mrb[0].mxu0
  %v4872 = vadd.f32 %v4663, %v4871
  %v4873 = vpop.f32.mrb[0].mxu0
  %v4874 = vpop.f32.mrb[0].mxu0
  %v4875 = vadd.f32 %v4666, %v4874
  %v4876 = vpop.f32.mrb[0].mxu0
  %4877 = vmatprep.mubr.bf16.mxu0 %v4808
  %4878 = vmatmul.mubr.bf16.gmra.mrb[0].mxu0 %v4350
  %v4879 = vpop.f32.mrb[0].mxu0
  %v4880 = vadd.f32 %v4671, %v4879
  %v4881 = vpop.f32.mrb[0].mxu0
  %v4882 = vpop.f32.mrb[0].mxu0
  %v4883 = vadd.f32 %v4674, %v4882
  %v4884 = vpop.f32.mrb[0].mxu0
  %4885 = vmatprep.mubr.bf16.mxu0 %v4810
  %4886 = vmatmul.mubr.bf16.gmra.mrb[0].mxu0 %v4352
  %v4887 = vpop.f32.mrb[0].mxu0
  %v4888 = vadd.f32 %v4679, %v4887
  %v4889 = vpop.f32.mrb[0].mxu0
  %v4890 = vpop.f32.mrb[0].mxu0
  %v4891 = vadd.f32 %v4682, %v4890
  %v4892 = vpop.f32.mrb[0].mxu0
  %4893 = vmatprep.mubr.bf16.mxu0 %v4812
  %4894 = vmatmul.mubr.bf16.gmra.mrb[0].mxu0 %v4354
  %v4895 = vpop.f32.mrb[0].mxu0
  %v4896 = vadd.f32 %v4687, %v4895
  %v4897 = vpop.f32.mrb[0].mxu0
  %v4898 = vpop.f32.mrb[0].mxu0
  %v4899 = vadd.f32 %v4690, %v4898
  %v4900 = vpop.f32.mrb[0].mxu0
  %4901 = vmatprep.mubr.bf16.mxu0 %v4814
  %4902 = vmatmul.mubr.bf16.gmra.mrb[0].mxu0 %v4356
  %v4903 = vpop.f32.mrb[0].mxu0
  %v4904 = vadd.f32 %v4695, %v4903
  %v4905 = vpop.f32.mrb[0].mxu0
  %v4906 = vpop.f32.mrb[0].mxu0
  %v4907 = vadd.f32 %v4698, %v4906
  %v4908 = vpop.f32.mrb[0].mxu0
  %4909 = vmatprep.mubr.bf16.mxu0 %v4816
  %4910 = vmatmul.mubr.bf16.gmra.mrb[0].mxu0 %v4358
  %v4911 = vpop.f32.mrb[0].mxu0
  %v4912 = vadd.f32 %v4703, %v4911
  %v4913 = vpop.f32.mrb[0].mxu0
  %v4914 = vpop.f32.mrb[0].mxu0
  %v4915 = vadd.f32 %v4706, %v4914
  %v4916 = vpop.f32.mrb[0].mxu0
  %4917 = vmatprep.mubr.bf16.mxu0 %v4819
  %4918 = vmatmul.mubr.bf16.gmra.mrb[0].mxu0 %v4719
  %v4919 = vpop.f32.mrb[0].mxu0
  %v4920 = vadd.f32 %v4711, %v4919
  %v4921 = vpop.f32.mrb[0].mxu0
  %v4922 = vpop.f32.mrb[0].mxu0
  %v4923 = vpop.f32.mrb[0].mxu0
  %4924 = vdwg.mxu0
  %v4925 = vld [vmem:[%s4226 + $0x8] sm:$0xcc]
  %v4926 = vld [vmem:[%s4226 + $0x10] sm:$0xff]
  %v4927 = vld [vmem:[%s4226 + $0x18] sm:$0xff]
  %v4928 = vld [vmem:[%s4226 + $0x20] sm:$0xff]
  %v4929 = vld [vmem:[%s4226 + $0x28] sm:$0xff]
  %v4930 = vld [vmem:[%s4226 + $0x30] sm:$0xff]
  %v4931 = vld [vmem:[%s4226 + $0x38] sm:$0xff]
  %v4932 = vld [vmem:[%s4226 + $0x40] sm:$0xff]
  %v4933 = vld [vmem:[%s4226 + $0x48] sm:$0xff]
  %v4934 = vld [vmem:[%s4226 + $0x50] sm:$0xff]
  %v4935 = vld [vmem:[%s4226 + $0x58] sm:$0xff]
  %v4936 = vld [vmem:[%s4226 + $0x60] sm:$0xff]
  %v4937 = vld [vmem:[%s4226 + $0x68] sm:$0xff]
  %v4938 = vld [vmem:[%s4226 + $0x70] sm:$0xff]
  %v4939 = vld [vmem:[%s4226 + $0x78] sm:$0xff]
  %v4940 = vld [vmem:[%s4226 + $0x80] sm:$0xff]
  %v4941 = vld [vmem:[%s4226 + $0x88] sm:$0xff]
  %v4942 = vld [vmem:[%s745] sm:$0xf]
  %v4943 = vld [vmem:[%s745 + $0x4] sm:$0xf]
  %v4944 = vld [vmem:[%s745 + $0x8] sm:$0xf]
  %v4945 = vld [vmem:[%s745 + $0xc] sm:$0xf]
  %v4946 = vld [vmem:[%s745 + $0x10] sm:$0xf]
  %v4947 = vld [vmem:[%s745 + $0x14] sm:$0xf]
  %v4948 = vld [vmem:[%s745 + $0x18] sm:$0xf]
  %v4949 = vld [vmem:[%s745 + $0x1c] sm:$0xf]
  %v4950 = vld [vmem:[%s745 + $0x20] sm:$0xf]
  %v4951 = vld [vmem:[%s745 + $0x24] sm:$0xf]
  %v4952 = vld [vmem:[%s745 + $0x28] sm:$0xf]
  %v4953 = vld [vmem:[%s745 + $0x2c] sm:$0xf]
  %v4954 = vld [vmem:[%s745 + $0x30] sm:$0xf]
  %v4955 = vld [vmem:[%s745 + $0x34] sm:$0xf]
  %v4956 = vld [vmem:[%s745 + $0x38] sm:$0xf]
  %v4957 = vld [vmem:[%s745 + $0x3c] sm:$0xf]
  %v4958 = vld [vmem:[%s745 + $0x40] sm:$0xf]
  %v4959 = vld [vmem:[%s745 + $0x44] sm:$0xf]
  %v4960 = vld [vmem:[%s745 + $0x48] sm:$0xf]
  %v4961 = vld [vmem:[%s745 + $0x4c] sm:$0xf]
  %v4962 = vld [vmem:[%s745 + $0x50] sm:$0xf]
  %v4963 = vld [vmem:[%s745 + $0x54] sm:$0xf]
  %v4964 = vld [vmem:[%s745 + $0x58] sm:$0xf]
  %v4965 = vld [vmem:[%s745 + $0x5c] sm:$0xf]
  %v4983 = vunpack.c.l.b16 %v4925
  %v4984 = vunpack.c.h.b16 %v4925
  %v4985 = vunpack.c.l.b16 %v4926
  %v4986 = vunpack.c.h.b16 %v4926
  %v4987 = vunpack.c.l.b16 %v4927
  %v4988 = vunpack.c.h.b16 %v4927
  %v4989 = vunpack.c.l.b16 %v4928
  %v4990 = vunpack.c.h.b16 %v4928
  %v4991 = vunpack.c.l.b16 %v4929
  %v4992 = vunpack.c.h.b16 %v4929
  %v4993 = vunpack.c.l.b16 %v4930
  %v4994 = vunpack.c.h.b16 %v4930
  %v4995 = vunpack.c.l.b16 %v4931
  %v4996 = vunpack.c.h.b16 %v4931
  %v4997 = vunpack.c.l.b16 %v4932
  %v4998 = vunpack.c.h.b16 %v4932
  %v4999 = vunpack.c.l.b16 %v4933
  %v5000 = vunpack.c.h.b16 %v4933
  %v5001 = vunpack.c.l.b16 %v4934
  %v5002 = vunpack.c.h.b16 %v4934
  %v5003 = vunpack.c.l.b16 %v4935
  %v5004 = vunpack.c.h.b16 %v4935
  %v5005 = vunpack.c.l.b16 %v4936
  %v5006 = vunpack.c.h.b16 %v4936
  %v5007 = vunpack.c.l.b16 %v4937
  %v5008 = vunpack.c.h.b16 %v4937
  %v5009 = vunpack.c.l.b16 %v4938
  %v5010 = vunpack.c.h.b16 %v4938
  %v5011 = vunpack.c.l.b16 %v4939
  %v5012 = vunpack.c.h.b16 %v4939
  %v5013 = vunpack.c.l.b16 %v4940
  %v5014 = vunpack.c.h.b16 %v4940
  %v5015 = vunpack.c.l.b16 %v4941
  %v5016 = vunpack.c.h.b16 %v4941
  %v5017 = vpack.c.b16 %v4985, %v4983
  %v5018 = vpack.c.b16 %v4986, %v4984
  %v5019 = vpack.c.b16 %v4989, %v4987
  %v5020 = vpack.c.b16 %v4990, %v4988
  %v5021 = vpack.c.b16 %v4993, %v4991
  %v5022 = vpack.c.b16 %v4994, %v4992
  %v5023 = vpack.c.b16 %v4997, %v4995
  %v5024 = vpack.c.b16 %v4998, %v4996
  %v5025 = vpack.c.b16 %v5001, %v4999
  %v5026 = vpack.c.b16 %v5002, %v5000
  %v5027 = vpack.c.b16 %v5005, %v5003
  %v5028 = vpack.c.b16 %v5006, %v5004
  %v5029 = vpack.c.b16 %v5009, %v5007
  %v5030 = vpack.c.b16 %v5010, %v5008
  %v5031 = vpack.c.b16 %v5013, %v5011
  %v5032 = vpack.c.b16 %v5014, %v5012
  %v5033 = vpack.c.b16 %v5015, %v5015
  %v5034 = vpack.c.b16 %v5016, %v5016
  %v5035 = vrot.slane %v5017, 2
  %v5036 = vrot.slane %v5019, 2
  %v5037 = vsel %vm839, %v5035, %v5036
  %v5038 = vrot.slane %v5018, 2
  %v5039 = vrot.slane %v5020, 2
  %v5040 = vsel %vm839, %v5038, %v5039
  %v5041 = vrot.slane %v5021, 2
  %v5042 = vsel %vm839, %v5036, %v5041
  %v5043 = vrot.slane %v5022, 2
  %v5044 = vsel %vm839, %v5039, %v5043
  %v5045 = vrot.slane %v5023, 2
  %v5046 = vsel %vm839, %v5041, %v5045
  %v5047 = vrot.slane %v5024, 2
  %v5048 = vsel %vm839, %v5043, %v5047
  %v5049 = vrot.slane %v5025, 2
  %v5050 = vsel %vm839, %v5045, %v5049
  %v5051 = vrot.slane %v5026, 2
  %v5052 = vsel %vm839, %v5047, %v5051
  %v5053 = vrot.slane %v5027, 2
  %v5054 = vsel %vm839, %v5049, %v5053
  %v5055 = vrot.slane %v5028, 2
  %v5056 = vsel %vm839, %v5051, %v5055
  %v5057 = vrot.slane %v5029, 2
  %v5058 = vsel %vm839, %v5053, %v5057
  %v5059 = vrot.slane %v5030, 2
  %v5060 = vsel %vm839, %v5055, %v5059
  %v5061 = vrot.slane %v5031, 2
  %v5062 = vsel %vm839, %v5057, %v5061
  %v5063 = vrot.slane %v5032, 2
  %v5064 = vsel %vm839, %v5059, %v5063
  %v5065 = vrot.slane %v5033, 2
  %v5066 = vsel %vm839, %v5061, %v5065
  %v5067 = vrot.slane %v5034, 2
  %v5068 = vsel %vm839, %v5063, %v5067
  %v5102 = vunpack.c.l.b16 %v4942
  %v5103 = vunpack.c.l.b16 %v4943
  %v5104 = vunpack.c.l.b16 %v4944
  %v5105 = vunpack.c.l.b16 %v4945
  %v5106 = vunpack.c.l.b16 %v4946
  %v5107 = vunpack.c.l.b16 %v4947
  %v5108 = vunpack.c.l.b16 %v4948
  %v5109 = vunpack.c.l.b16 %v4949
  %v5110 = vunpack.c.l.b16 %v4950
  %v5111 = vunpack.c.l.b16 %v4951
  %v5112 = vunpack.c.l.b16 %v4952
  %v5113 = vunpack.c.l.b16 %v4953
  %v5114 = vunpack.c.l.b16 %v4954
  %v5115 = vunpack.c.l.b16 %v4955
  %v5116 = vunpack.c.l.b16 %v4956
  %v5117 = vunpack.c.l.b16 %v4957
  %v5118 = vunpack.c.l.b16 %v4958
  %v5119 = vunpack.c.l.b16 %v4959
  %v5120 = vunpack.c.l.b16 %v4960
  %v5121 = vunpack.c.l.b16 %v4961
  %v5122 = vunpack.c.l.b16 %v4962
  %v5123 = vunpack.c.l.b16 %v4963
  %v5124 = vunpack.c.l.b16 %v4964
  %v5125 = vunpack.c.l.b16 %v4965
  %v5126 = vpack.c.b16 %v5103, %v5102
  %v5127 = vpack.c.b16 %v5105, %v5104
  %v5128 = vpack.c.b16 %v5107, %v5106
  %v5129 = vpack.c.b16 %v5109, %v5108
  %v5130 = vpack.c.b16 %v5111, %v5110
  %v5131 = vpack.c.b16 %v5113, %v5112
  %v5132 = vpack.c.b16 %v5115, %v5114
  %v5133 = vpack.c.b16 %v5117, %v5116
  %v5134 = vpack.c.b16 %v5119, %v5118
  %v5135 = vpack.c.b16 %v5121, %v5120
  %v5136 = vpack.c.b16 %v5123, %v5122
  %v5137 = vpack.c.b16 %v5125, %v5124
  %v5151 = vsel %vm387, %v5040, 0
  %v5154 = vsel %vm387, %v5044, 0
  %v5157 = vsel %vm387, %v5048, 0
  %v5160 = vsel %vm387, %v5052, 0
  %v5163 = vsel %vm387, %v5056, 0
  %v5166 = vsel %vm387, %v5060, 0
  %v5169 = vsel %vm387, %v5064, 0
  %v5172 = vsel %vm387, %v5068, 0
  %v5175 = vsel %vm387, %v5067, 0
  %5177 = vmatprep.subr.bf16.mxu0 0
  %5178 = vmatpush1.bf16.msra.mxu0 %v5126
  %5179 = vmatprep.subr.bf16.mxu0 0
  %5180 = vmatpush1.bf16.msra.mxu0 %v5127
  %5181 = vmatprep.subr.bf16.mxu0 0
  %5182 = vmatpush1.bf16.msra.mxu0 %v5128
  %5183 = vmatprep.subr.bf16.mxu0 0
  %5184 = vmatpush1.bf16.msra.mxu0 %v5129
  %5185 = vmatprep.subr.bf16.mxu0 0
  %5186 = vmatpush1.bf16.msra.mxu0 %v5130
  %5187 = vmatprep.subr.bf16.mxu0 0
  %5188 = vmatpush1.bf16.msra.mxu0 %v5131
  %5189 = vmatprep.subr.bf16.mxu0 0
  %5190 = vmatpush1.bf16.msra.mxu0 %v5132
  %5191 = vmatprep.subr.bf16.mxu0 0
  %5192 = vmatpush1.bf16.msra.mxu0 %v5133
  %5193 = vmatprep.subr.bf16.mxu0 0
  %5194 = vmatpush1.bf16.msra.mxu0 %v5134
  %5195 = vmatprep.subr.bf16.mxu0 0
  %5196 = vmatpush1.bf16.msra.mxu0 %v5135
  %5197 = vmatprep.subr.bf16.mxu0 0
  %5198 = vmatpush1.bf16.msra.mxu0 %v5136
  %5199 = vmatprep.subr.bf16.mxu0 0
  %5200 = vmatpush1.bf16.msra.mxu0 %v5137
  %5201 = vmatprep.subr.bf16.mxu0 0
  %5202 = vmatpush1.bf16.msra.mxu0 0
  %5203 = vmatprep.subr.bf16.mxu0 0
  %5204 = vmatpush1.bf16.msra.mxu0 0
  %5205 = vmatprep.subr.bf16.mxu0 0
  %5206 = vmatpush1.bf16.msra.mxu0 0
  %5207 = vmatprep.subr.bf16.mxu0 0
  %5208 = vmatpush1.bf16.msra.mxu0 0
  %5209 = vmatprep.mubr.bf16.mxu0 %v5151
  %5210 = vmatmul.mubr.bf16.gmra.mrb[0].mxu0 %v5037
  %v5211 = vpop.f32.mrb[0].mxu0
  %v5212 = vadd.f32 0.0, %v5211
  %v5213 = vpop.f32.mrb[0].mxu0
  %v5214 = vpop.f32.mrb[0].mxu0
  %v5215 = vadd.f32 0.0, %v5214
  %v5216 = vpop.f32.mrb[0].mxu0
  %5217 = vmatprep.mubr.bf16.mxu0 %v5154
  %5218 = vmatmul.mubr.bf16.gmra.mrb[0].mxu0 %v5042
  %v5219 = vpop.f32.mrb[0].mxu0
  %v5220 = vadd.f32 0.0, %v5219
  %v5221 = vpop.f32.mrb[0].mxu0
  %v5222 = vpop.f32.mrb[0].mxu0
  %v5223 = vadd.f32 0.0, %v5222
  %v5224 = vpop.f32.mrb[0].mxu0
  %5225 = vmatprep.mubr.bf16.mxu0 %v5157
  %5226 = vmatmul.mubr.bf16.gmra.mrb[0].mxu0 %v5046
  %v5227 = vpop.f32.mrb[0].mxu0
  %v5228 = vadd.f32 0.0, %v5227
  %v5229 = vpop.f32.mrb[0].mxu0
  %v5230 = vpop.f32.mrb[0].mxu0
  %v5231 = vadd.f32 0.0, %v5230
  %v5232 = vpop.f32.mrb[0].mxu0
  %5233 = vmatprep.mubr.bf16.mxu0 %v5160
  %5234 = vmatmul.mubr.bf16.gmra.mrb[0].mxu0 %v5050
  %v5235 = vpop.f32.mrb[0].mxu0
  %v5236 = vadd.f32 0.0, %v5235
  %v5237 = vpop.f32.mrb[0].mxu0
  %v5238 = vpop.f32.mrb[0].mxu0
  %v5239 = vadd.f32 0.0, %v5238
  %v5240 = vpop.f32.mrb[0].mxu0
  %5241 = vmatprep.mubr.bf16.mxu0 %v5163
  %5242 = vmatmul.mubr.bf16.gmra.mrb[0].mxu0 %v5054
  %v5243 = vpop.f32.mrb[0].mxu0
  %v5244 = vadd.f32 0.0, %v5243
  %v5245 = vpop.f32.mrb[0].mxu0
  %v5246 = vpop.f32.mrb[0].mxu0
  %v5247 = vadd.f32 0.0, %v5246
  %v5248 = vpop.f32.mrb[0].mxu0
  %5249 = vmatprep.mubr.bf16.mxu0 %v5166
  %5250 = vmatmul.mubr.bf16.gmra.mrb[0].mxu0 %v5058
  %v5251 = vpop.f32.mrb[0].mxu0
  %v5252 = vadd.f32 0.0, %v5251
  %v5253 = vpop.f32.mrb[0].mxu0
  %v5254 = vpop.f32.mrb[0].mxu0
  %v5255 = vadd.f32 0.0, %v5254
  %v5256 = vpop.f32.mrb[0].mxu0
  %5257 = vmatprep.mubr.bf16.mxu0 %v5169
  %5258 = vmatmul.mubr.bf16.gmra.mrb[0].mxu0 %v5062
  %v5259 = vpop.f32.mrb[0].mxu0
  %v5260 = vadd.f32 0.0, %v5259
  %v5261 = vpop.f32.mrb[0].mxu0
  %v5262 = vpop.f32.mrb[0].mxu0
  %v5263 = vadd.f32 0.0, %v5262
  %v5264 = vpop.f32.mrb[0].mxu0
  %5265 = vmatprep.mubr.bf16.mxu0 %v5172
  %5266 = vmatmul.mubr.bf16.gmra.mrb[0].mxu0 %v5066
  %v5267 = vpop.f32.mrb[0].mxu0
  %v5268 = vadd.f32 0.0, %v5267
  %v5269 = vpop.f32.mrb[0].mxu0
  %v5270 = vpop.f32.mrb[0].mxu0
  %v5271 = vadd.f32 0.0, %v5270
  %v5272 = vpop.f32.mrb[0].mxu0
  %5273 = vmatprep.mubr.bf16.mxu0 %v5175
  %5274 = vmatmul.mubr.bf16.gmra.mrb[0].mxu0 %v5065
  %v5275 = vpop.f32.mrb[0].mxu0
  %v5276 = vadd.f32 0.0, %v5275
  %v5277 = vpop.f32.mrb[0].mxu0
  %v5278 = vpop.f32.mrb[0].mxu0
  %v5279 = vpop.f32.mrb[0].mxu0
  %5280 = vdwg.mxu0
  %v5281 = vadd.f32 %v4856, %v5212
  %v5282 = vadd.f32 %v4859, %v5215
  %v5283 = vadd.f32 %v4864, %v5220
  %v5284 = vadd.f32 %v4867, %v5223
  %v5285 = vadd.f32 %v4872, %v5228
  %v5286 = vadd.f32 %v4875, %v5231
  %v5287 = vadd.f32 %v4880, %v5236
  %v5288 = vadd.f32 %v4883, %v5239
  %v5289 = vadd.f32 %v4888, %v5244
  %v5290 = vadd.f32 %v4891, %v5247
  %v5291 = vadd.f32 %v4896, %v5252
  %v5292 = vadd.f32 %v4899, %v5255
  %v5293 = vadd.f32 %v4904, %v5260
  %v5294 = vadd.f32 %v4907, %v5263
  %v5295 = vadd.f32 %v4912, %v5268
  %v5296 = vadd.f32 %v4915, %v5271
  %v5297 = vadd.f32 %v4920, %v5276
  %v5298 = vld [vmem:[%s4226 + $0x8] sm:$0xcc]
  %v5299 = vld [vmem:[%s4226 + $0x10] sm:$0xff]
  %v5300 = vld [vmem:[%s4226 + $0x18] sm:$0xff]
  %v5301 = vld [vmem:[%s4226 + $0x20] sm:$0xff]
  %v5302 = vld [vmem:[%s4226 + $0x28] sm:$0xff]
  %v5303 = vld [vmem:[%s4226 + $0x30] sm:$0xff]
  %v5304 = vld [vmem:[%s4226 + $0x38] sm:$0xff]
  %v5305 = vld [vmem:[%s4226 + $0x40] sm:$0xff]
  %v5306 = vld [vmem:[%s4226 + $0x48] sm:$0xff]
  %v5307 = vld [vmem:[%s4226 + $0x50] sm:$0xff]
  %v5308 = vld [vmem:[%s4226 + $0x58] sm:$0xff]
  %v5309 = vld [vmem:[%s4226 + $0x60] sm:$0xff]
  %v5310 = vld [vmem:[%s4226 + $0x68] sm:$0xff]
  %v5311 = vld [vmem:[%s4226 + $0x70] sm:$0xff]
  %v5312 = vld [vmem:[%s4226 + $0x78] sm:$0xff]
  %v5313 = vld [vmem:[%s4226 + $0x80] sm:$0xff]
  %v5314 = vld [vmem:[%s4226 + $0x88] sm:$0xff]
  %v5315 = vld [vmem:[%s4226 + $0x90] sm:$0x11]
  %v5316 = vld [vmem:[%s1121] sm:$0xf]
  %v5317 = vld [vmem:[%s1121 + $0x4] sm:$0xf]
  %v5318 = vld [vmem:[%s1121 + $0x8] sm:$0xf]
  %v5319 = vld [vmem:[%s1121 + $0xc] sm:$0xf]
  %v5320 = vld [vmem:[%s1121 + $0x10] sm:$0xf]
  %v5321 = vld [vmem:[%s1121 + $0x14] sm:$0xf]
  %v5322 = vld [vmem:[%s1121 + $0x18] sm:$0xf]
  %v5323 = vld [vmem:[%s1121 + $0x1c] sm:$0xf]
  %v5324 = vld [vmem:[%s1121 + $0x20] sm:$0xf]
  %v5325 = vld [vmem:[%s1121 + $0x24] sm:$0xf]
  %v5326 = vld [vmem:[%s1121 + $0x28] sm:$0xf]
  %v5327 = vld [vmem:[%s1121 + $0x2c] sm:$0xf]
  %v5328 = vld [vmem:[%s1121 + $0x30] sm:$0xf]
  %v5329 = vld [vmem:[%s1121 + $0x34] sm:$0xf]
  %v5330 = vld [vmem:[%s1121 + $0x38] sm:$0xf]
  %v5331 = vld [vmem:[%s1121 + $0x3c] sm:$0xf]
  %v5332 = vld [vmem:[%s1121 + $0x40] sm:$0xf]
  %v5333 = vld [vmem:[%s1121 + $0x44] sm:$0xf]
  %v5334 = vld [vmem:[%s1121 + $0x48] sm:$0xf]
  %v5335 = vld [vmem:[%s1121 + $0x4c] sm:$0xf]
  %v5336 = vld [vmem:[%s1121 + $0x50] sm:$0xf]
  %v5337 = vld [vmem:[%s1121 + $0x54] sm:$0xf]
  %v5338 = vld [vmem:[%s1121 + $0x58] sm:$0xf]
  %v5339 = vld [vmem:[%s1121 + $0x5c] sm:$0xf]
  %v5358 = vunpack.c.l.b16 %v5298
  %v5359 = vunpack.c.h.b16 %v5298
  %v5360 = vunpack.c.l.b16 %v5299
  %v5361 = vunpack.c.h.b16 %v5299
  %v5362 = vunpack.c.l.b16 %v5300
  %v5363 = vunpack.c.h.b16 %v5300
  %v5364 = vunpack.c.l.b16 %v5301
  %v5365 = vunpack.c.h.b16 %v5301
  %v5366 = vunpack.c.l.b16 %v5302
  %v5367 = vunpack.c.h.b16 %v5302
  %v5368 = vunpack.c.l.b16 %v5303
  %v5369 = vunpack.c.h.b16 %v5303
  %v5370 = vunpack.c.l.b16 %v5304
  %v5371 = vunpack.c.h.b16 %v5304
  %v5372 = vunpack.c.l.b16 %v5305
  %v5373 = vunpack.c.h.b16 %v5305
  %v5374 = vunpack.c.l.b16 %v5306
  %v5375 = vunpack.c.h.b16 %v5306
  %v5376 = vunpack.c.l.b16 %v5307
  %v5377 = vunpack.c.h.b16 %v5307
  %v5378 = vunpack.c.l.b16 %v5308
  %v5379 = vunpack.c.h.b16 %v5308
  %v5380 = vunpack.c.l.b16 %v5309
  %v5381 = vunpack.c.h.b16 %v5309
  %v5382 = vunpack.c.l.b16 %v5310
  %v5383 = vunpack.c.h.b16 %v5310
  %v5384 = vunpack.c.l.b16 %v5311
  %v5385 = vunpack.c.h.b16 %v5311
  %v5386 = vunpack.c.l.b16 %v5312
  %v5387 = vunpack.c.h.b16 %v5312
  %v5388 = vunpack.c.l.b16 %v5313
  %v5389 = vunpack.c.h.b16 %v5313
  %v5390 = vunpack.c.l.b16 %v5314
  %v5391 = vunpack.c.h.b16 %v5314
  %v5392 = vunpack.c.l.b16 %v5315
  %v5393 = vunpack.c.h.b16 %v5315
  %v5394 = vpack.c.b16 %v5360, %v5358
  %v5395 = vpack.c.b16 %v5361, %v5359
  %v5396 = vpack.c.b16 %v5364, %v5362
  %v5397 = vpack.c.b16 %v5365, %v5363
  %v5398 = vpack.c.b16 %v5368, %v5366
  %v5399 = vpack.c.b16 %v5369, %v5367
  %v5400 = vpack.c.b16 %v5372, %v5370
  %v5401 = vpack.c.b16 %v5373, %v5371
  %v5402 = vpack.c.b16 %v5376, %v5374
  %v5403 = vpack.c.b16 %v5377, %v5375
  %v5404 = vpack.c.b16 %v5380, %v5378
  %v5405 = vpack.c.b16 %v5381, %v5379
  %v5406 = vpack.c.b16 %v5384, %v5382
  %v5407 = vpack.c.b16 %v5385, %v5383
  %v5408 = vpack.c.b16 %v5388, %v5386
  %v5409 = vpack.c.b16 %v5389, %v5387
  %v5410 = vpack.c.b16 %v5392, %v5390
  %v5411 = vpack.c.b16 %v5393, %v5391
  %v5413 = vshrl.u32 %v5394, 16
  %v5415 = vrot.slane %v5413, 2
  %v5416 = vshll.u32 %v5394, 16
  %v5418 = vrot.slane %v5416, 3
  %v5419 = vor.u32 %v5415, %v5418
  %v5421 = vshrl.u32 %v5396, 16
  %v5423 = vrot.slane %v5421, 2
  %v5424 = vshll.u32 %v5396, 16
  %v5426 = vrot.slane %v5424, 3
  %v5427 = vor.u32 %v5423, %v5426
  %v5428 = vsel %vm1218, %v5419, %v5427
  %v5430 = vshrl.u32 %v5395, 16
  %v5432 = vrot.slane %v5430, 2
  %v5433 = vshll.u32 %v5395, 16
  %v5435 = vrot.slane %v5433, 3
  %v5436 = vor.u32 %v5432, %v5435
  %v5438 = vshrl.u32 %v5397, 16
  %v5440 = vrot.slane %v5438, 2
  %v5441 = vshll.u32 %v5397, 16
  %v5443 = vrot.slane %v5441, 3
  %v5444 = vor.u32 %v5440, %v5443
  %v5445 = vsel %vm1218, %v5436, %v5444
  %v5447 = vshrl.u32 %v5398, 16
  %v5449 = vrot.slane %v5447, 2
  %v5450 = vshll.u32 %v5398, 16
  %v5452 = vrot.slane %v5450, 3
  %v5453 = vor.u32 %v5449, %v5452
  %v5454 = vsel %vm1218, %v5427, %v5453
  %v5456 = vshrl.u32 %v5399, 16
  %v5458 = vrot.slane %v5456, 2
  %v5459 = vshll.u32 %v5399, 16
  %v5461 = vrot.slane %v5459, 3
  %v5462 = vor.u32 %v5458, %v5461
  %v5463 = vsel %vm1218, %v5444, %v5462
  %v5465 = vshrl.u32 %v5400, 16
  %v5467 = vrot.slane %v5465, 2
  %v5468 = vshll.u32 %v5400, 16
  %v5470 = vrot.slane %v5468, 3
  %v5471 = vor.u32 %v5467, %v5470
  %v5472 = vsel %vm1218, %v5453, %v5471
  %v5474 = vshrl.u32 %v5401, 16
  %v5476 = vrot.slane %v5474, 2
  %v5477 = vshll.u32 %v5401, 16
  %v5479 = vrot.slane %v5477, 3
  %v5480 = vor.u32 %v5476, %v5479
  %v5481 = vsel %vm1218, %v5462, %v5480
  %v5483 = vshrl.u32 %v5402, 16
  %v5485 = vrot.slane %v5483, 2
  %v5486 = vshll.u32 %v5402, 16
  %v5488 = vrot.slane %v5486, 3
  %v5489 = vor.u32 %v5485, %v5488
  %v5490 = vsel %vm1218, %v5471, %v5489
  %v5492 = vshrl.u32 %v5403, 16
  %v5494 = vrot.slane %v5492, 2
  %v5495 = vshll.u32 %v5403, 16
  %v5497 = vrot.slane %v5495, 3
  %v5498 = vor.u32 %v5494, %v5497
  %v5499 = vsel %vm1218, %v5480, %v5498
  %v5501 = vshrl.u32 %v5404, 16
  %v5503 = vrot.slane %v5501, 2
  %v5504 = vshll.u32 %v5404, 16
  %v5506 = vrot.slane %v5504, 3
  %v5507 = vor.u32 %v5503, %v5506
  %v5508 = vsel %vm1218, %v5489, %v5507
  %v5510 = vshrl.u32 %v5405, 16
  %v5512 = vrot.slane %v5510, 2
  %v5513 = vshll.u32 %v5405, 16
  %v5515 = vrot.slane %v5513, 3
  %v5516 = vor.u32 %v5512, %v5515
  %v5517 = vsel %vm1218, %v5498, %v5516
  %v5519 = vshrl.u32 %v5406, 16
  %v5521 = vrot.slane %v5519, 2
  %v5522 = vshll.u32 %v5406, 16
  %v5524 = vrot.slane %v5522, 3
  %v5525 = vor.u32 %v5521, %v5524
  %v5526 = vsel %vm1218, %v5507, %v5525
  %v5528 = vshrl.u32 %v5407, 16
  %v5530 = vrot.slane %v5528, 2
  %v5531 = vshll.u32 %v5407, 16
  %v5533 = vrot.slane %v5531, 3
  %v5534 = vor.u32 %v5530, %v5533
  %v5535 = vsel %vm1218, %v5516, %v5534
  %v5537 = vshrl.u32 %v5408, 16
  %v5539 = vrot.slane %v5537, 2
  %v5540 = vshll.u32 %v5408, 16
  %v5542 = vrot.slane %v5540, 3
  %v5543 = vor.u32 %v5539, %v5542
  %v5544 = vsel %vm1218, %v5525, %v5543
  %v5546 = vshrl.u32 %v5409, 16
  %v5548 = vrot.slane %v5546, 2
  %v5549 = vshll.u32 %v5409, 16
  %v5551 = vrot.slane %v5549, 3
  %v5552 = vor.u32 %v5548, %v5551
  %v5553 = vsel %vm1218, %v5534, %v5552
  %v5555 = vshrl.u32 %v5410, 16
  %v5557 = vrot.slane %v5555, 2
  %v5558 = vshll.u32 %v5410, 16
  %v5560 = vrot.slane %v5558, 3
  %v5561 = vor.u32 %v5557, %v5560
  %v5562 = vsel %vm1218, %v5543, %v5561
  %v5564 = vshrl.u32 %v5411, 16
  %v5566 = vrot.slane %v5564, 2
  %v5567 = vshll.u32 %v5411, 16
  %v5569 = vrot.slane %v5567, 3
  %v5570 = vor.u32 %v5566, %v5569
  %v5571 = vsel %vm1218, %v5552, %v5570
  %v5605 = vunpack.c.l.b16 %v5316
  %v5606 = vunpack.c.l.b16 %v5317
  %v5607 = vunpack.c.l.b16 %v5318
  %v5608 = vunpack.c.l.b16 %v5319
  %v5609 = vunpack.c.l.b16 %v5320
  %v5610 = vunpack.c.l.b16 %v5321
  %v5611 = vunpack.c.l.b16 %v5322
  %v5612 = vunpack.c.l.b16 %v5323
  %v5613 = vunpack.c.l.b16 %v5324
  %v5614 = vunpack.c.l.b16 %v5325
  %v5615 = vunpack.c.l.b16 %v5326
  %v5616 = vunpack.c.l.b16 %v5327
  %v5617 = vunpack.c.l.b16 %v5328
  %v5618 = vunpack.c.l.b16 %v5329
  %v5619 = vunpack.c.l.b16 %v5330
  %v5620 = vunpack.c.l.b16 %v5331
  %v5621 = vunpack.c.l.b16 %v5332
  %v5622 = vunpack.c.l.b16 %v5333
  %v5623 = vunpack.c.l.b16 %v5334
  %v5624 = vunpack.c.l.b16 %v5335
  %v5625 = vunpack.c.l.b16 %v5336
  %v5626 = vunpack.c.l.b16 %v5337
  %v5627 = vunpack.c.l.b16 %v5338
  %v5628 = vunpack.c.l.b16 %v5339
  %v5629 = vpack.c.b16 %v5606, %v5605
  %v5630 = vpack.c.b16 %v5608, %v5607
  %v5631 = vpack.c.b16 %v5610, %v5609
  %v5632 = vpack.c.b16 %v5612, %v5611
  %v5633 = vpack.c.b16 %v5614, %v5613
  %v5634 = vpack.c.b16 %v5616, %v5615
  %v5635 = vpack.c.b16 %v5618, %v5617
  %v5636 = vpack.c.b16 %v5620, %v5619
  %v5637 = vpack.c.b16 %v5622, %v5621
  %v5638 = vpack.c.b16 %v5624, %v5623
  %v5639 = vpack.c.b16 %v5626, %v5625
  %v5640 = vpack.c.b16 %v5628, %v5627
  %v5654 = vsel %vm387, %v5445, 0
  %v5657 = vsel %vm387, %v5463, 0
  %v5660 = vsel %vm387, %v5481, 0
  %v5663 = vsel %vm387, %v5499, 0
  %v5666 = vsel %vm387, %v5517, 0
  %v5669 = vsel %vm387, %v5535, 0
  %v5672 = vsel %vm387, %v5553, 0
  %v5675 = vsel %vm387, %v5571, 0
  %v5678 = vsel %vm387, %v5570, 0
  %5680 = vmatprep.subr.bf16.mxu0 0
  %5681 = vmatpush1.bf16.msra.mxu0 %v5629
  %5682 = vmatprep.subr.bf16.mxu0 0
  %5683 = vmatpush1.bf16.msra.mxu0 %v5630
  %5684 = vmatprep.subr.bf16.mxu0 0
  %5685 = vmatpush1.bf16.msra.mxu0 %v5631
  %5686 = vmatprep.subr.bf16.mxu0 0
  %5687 = vmatpush1.bf16.msra.mxu0 %v5632
  %5688 = vmatprep.subr.bf16.mxu0 0
  %5689 = vmatpush1.bf16.msra.mxu0 %v5633
  %5690 = vmatprep.subr.bf16.mxu0 0
  %5691 = vmatpush1.bf16.msra.mxu0 %v5634
  %5692 = vmatprep.subr.bf16.mxu0 0
  %5693 = vmatpush1.bf16.msra.mxu0 %v5635
  %5694 = vmatprep.subr.bf16.mxu0 0
  %5695 = vmatpush1.bf16.msra.mxu0 %v5636
  %5696 = vmatprep.subr.bf16.mxu0 0
  %5697 = vmatpush1.bf16.msra.mxu0 %v5637
  %5698 = vmatprep.subr.bf16.mxu0 0
  %5699 = vmatpush1.bf16.msra.mxu0 %v5638
  %5700 = vmatprep.subr.bf16.mxu0 0
  %5701 = vmatpush1.bf16.msra.mxu0 %v5639
  %5702 = vmatprep.subr.bf16.mxu0 0
  %5703 = vmatpush1.bf16.msra.mxu0 %v5640
  %5704 = vmatprep.subr.bf16.mxu0 0
  %5705 = vmatpush1.bf16.msra.mxu0 0
  %5706 = vmatprep.subr.bf16.mxu0 0
  %5707 = vmatpush1.bf16.msra.mxu0 0
  %5708 = vmatprep.subr.bf16.mxu0 0
  %5709 = vmatpush1.bf16.msra.mxu0 0
  %5710 = vmatprep.subr.bf16.mxu0 0
  %5711 = vmatpush1.bf16.msra.mxu0 0
  %5712 = vmatprep.mubr.bf16.mxu0 %v5654
  %5713 = vmatmul.mubr.bf16.gmra.mrb[0].mxu0 %v5428
  %v5714 = vpop.f32.mrb[0].mxu0
  %v5715 = vadd.f32 0.0, %v5714
  %v5716 = vpop.f32.mrb[0].mxu0
  %v5717 = vpop.f32.mrb[0].mxu0
  %v5718 = vadd.f32 0.0, %v5717
  %v5719 = vpop.f32.mrb[0].mxu0
  %5720 = vmatprep.mubr.bf16.mxu0 %v5657
  %5721 = vmatmul.mubr.bf16.gmra.mrb[0].mxu0 %v5454
  %v5722 = vpop.f32.mrb[0].mxu0
  %v5723 = vadd.f32 0.0, %v5722
  %v5724 = vpop.f32.mrb[0].mxu0
  %v5725 = vpop.f32.mrb[0].mxu0
  %v5726 = vadd.f32 0.0, %v5725
  %v5727 = vpop.f32.mrb[0].mxu0
  %5728 = vmatprep.mubr.bf16.mxu0 %v5660
  %5729 = vmatmul.mubr.bf16.gmra.mrb[0].mxu0 %v5472
  %v5730 = vpop.f32.mrb[0].mxu0
  %v5731 = vadd.f32 0.0, %v5730
  %v5732 = vpop.f32.mrb[0].mxu0
  %v5733 = vpop.f32.mrb[0].mxu0
  %v5734 = vadd.f32 0.0, %v5733
  %v5735 = vpop.f32.mrb[0].mxu0
  %5736 = vmatprep.mubr.bf16.mxu0 %v5663
  %5737 = vmatmul.mubr.bf16.gmra.mrb[0].mxu0 %v5490
  %v5738 = vpop.f32.mrb[0].mxu0
  %v5739 = vadd.f32 0.0, %v5738
  %v5740 = vpop.f32.mrb[0].mxu0
  %v5741 = vpop.f32.mrb[0].mxu0
  %v5742 = vadd.f32 0.0, %v5741
  %v5743 = vpop.f32.mrb[0].mxu0
  %5744 = vmatprep.mubr.bf16.mxu0 %v5666
  %5745 = vmatmul.mubr.bf16.gmra.mrb[0].mxu0 %v5508
  %v5746 = vpop.f32.mrb[0].mxu0
  %v5747 = vadd.f32 0.0, %v5746
  %v5748 = vpop.f32.mrb[0].mxu0
  %v5749 = vpop.f32.mrb[0].mxu0
  %v5750 = vadd.f32 0.0, %v5749
  %v5751 = vpop.f32.mrb[0].mxu0
  %5752 = vmatprep.mubr.bf16.mxu0 %v5669
  %5753 = vmatmul.mubr.bf16.gmra.mrb[0].mxu0 %v5526
  %v5754 = vpop.f32.mrb[0].mxu0
  %v5755 = vadd.f32 0.0, %v5754
  %v5756 = vpop.f32.mrb[0].mxu0
  %v5757 = vpop.f32.mrb[0].mxu0
  %v5758 = vadd.f32 0.0, %v5757
  %v5759 = vpop.f32.mrb[0].mxu0
  %5760 = vmatprep.mubr.bf16.mxu0 %v5672
  %5761 = vmatmul.mubr.bf16.gmra.mrb[0].mxu0 %v5544
  %v5762 = vpop.f32.mrb[0].mxu0
  %v5763 = vadd.f32 0.0, %v5762
  %v5764 = vpop.f32.mrb[0].mxu0
  %v5765 = vpop.f32.mrb[0].mxu0
  %v5766 = vadd.f32 0.0, %v5765
  %v5767 = vpop.f32.mrb[0].mxu0
  %5768 = vmatprep.mubr.bf16.mxu0 %v5675
  %5769 = vmatmul.mubr.bf16.gmra.mrb[0].mxu0 %v5562
  %v5770 = vpop.f32.mrb[0].mxu0
  %v5771 = vadd.f32 0.0, %v5770
  %v5772 = vpop.f32.mrb[0].mxu0
  %v5773 = vpop.f32.mrb[0].mxu0
  %v5774 = vadd.f32 0.0, %v5773
  %v5775 = vpop.f32.mrb[0].mxu0
  %5776 = vmatprep.mubr.bf16.mxu0 %v5678
  %5777 = vmatmul.mubr.bf16.gmra.mrb[0].mxu0 %v5561
  %v5778 = vpop.f32.mrb[0].mxu0
  %v5779 = vadd.f32 0.0, %v5778
  %v5780 = vpop.f32.mrb[0].mxu0
  %v5781 = vpop.f32.mrb[0].mxu0
  %v5782 = vpop.f32.mrb[0].mxu0
  %5783 = vdwg.mxu0
  %v5784 = vadd.f32 %v5281, %v5715
  %v5785 = vadd.f32 %v5282, %v5718
  %v5786 = vadd.f32 %v5283, %v5723
  %v5787 = vadd.f32 %v5284, %v5726
  %v5788 = vadd.f32 %v5285, %v5731
  %v5789 = vadd.f32 %v5286, %v5734
  %v5790 = vadd.f32 %v5287, %v5739
  %v5791 = vadd.f32 %v5288, %v5742
  %v5792 = vadd.f32 %v5289, %v5747
  %v5793 = vadd.f32 %v5290, %v5750
  %v5794 = vadd.f32 %v5291, %v5755
  %v5795 = vadd.f32 %v5292, %v5758
  %v5796 = vadd.f32 %v5293, %v5763
  %v5797 = vadd.f32 %v5294, %v5766
  %v5798 = vadd.f32 %v5295, %v5771
  %v5799 = vadd.f32 %v5296, %v5774
  %v5800 = vadd.f32 %v5297, %v5779
  %v5801 = vld [vmem:[%s2] sm:$0x1]
  %v5803 = vlaneseq
  %v5804 = vshrl.u32 %v5803, 7
  %v5805 = vsub.s32 0, %v5804
  %v5806 = vrot.slane %v5801, %v5805
  %v5808 = vadd.f32 %v5784, %v5806
  %v5809 = vadd.f32 %v5785, %v5806
  %v5810 = vadd.f32 %v5786, %v5806
  %v5811 = vadd.f32 %v5787, %v5806
  %v5812 = vadd.f32 %v5788, %v5806
  %v5813 = vadd.f32 %v5789, %v5806
  %v5814 = vadd.f32 %v5790, %v5806
  %v5815 = vadd.f32 %v5791, %v5806
  %v5816 = vadd.f32 %v5792, %v5806
  %v5817 = vadd.f32 %v5793, %v5806
  %v5818 = vadd.f32 %v5794, %v5806
  %v5819 = vadd.f32 %v5795, %v5806
  %v5820 = vadd.f32 %v5796, %v5806
  %v5821 = vadd.f32 %v5797, %v5806
  %v5822 = vadd.f32 %v5798, %v5806
  %v5823 = vadd.f32 %v5799, %v5806
  %v5824 = vadd.f32 %v5800, %v5806
  %v5825 = vmax.f32 %v5808, 0.0
  %v5826 = vmax.f32 %v5809, 0.0
  %v5827 = vmax.f32 %v5810, 0.0
  %v5828 = vmax.f32 %v5811, 0.0
  %v5829 = vmax.f32 %v5812, 0.0
  %v5830 = vmax.f32 %v5813, 0.0
  %v5831 = vmax.f32 %v5814, 0.0
  %v5832 = vmax.f32 %v5815, 0.0
  %v5833 = vmax.f32 %v5816, 0.0
  %v5834 = vmax.f32 %v5817, 0.0
  %v5835 = vmax.f32 %v5818, 0.0
  %v5836 = vmax.f32 %v5819, 0.0
  %v5837 = vmax.f32 %v5820, 0.0
  %v5838 = vmax.f32 %v5821, 0.0
  %v5839 = vmax.f32 %v5822, 0.0
  %v5840 = vmax.f32 %v5823, 0.0
  %v5841 = vmax.f32 %v5824, 0.0
  %v5842 = vpack.c.bf16 %v5826, %v5825
  %v5843 = vpack.c.bf16 %v5828, %v5827
  %v5844 = vpack.c.bf16 %v5830, %v5829
  %v5845 = vpack.c.bf16 %v5832, %v5831
  %v5846 = vpack.c.bf16 %v5834, %v5833
  %v5847 = vpack.c.bf16 %v5836, %v5835
  %v5848 = vpack.c.bf16 %v5838, %v5837
  %v5849 = vpack.c.bf16 %v5840, %v5839
  %v5850 = vpack.c.bf16 %v5841, %v5841
  %5851 = vst [vmem:[#allocation2] sm:$0xff] %v5842
  %5852 = vst [vmem:[#allocation2 + $0x8] sm:$0xff] %v5843
  %5853 = vst [vmem:[#allocation2 + $0x10] sm:$0xff] %v5844
  %5854 = vst [vmem:[#allocation2 + $0x18] sm:$0xff] %v5845
  %5855 = vst [vmem:[#allocation2 + $0x20] sm:$0xff] %v5846
  %5856 = vst [vmem:[#allocation2 + $0x28] sm:$0xff] %v5847
  %5857 = vst [vmem:[#allocation2 + $0x30] sm:$0xff] %v5848
  %5858 = vst [vmem:[#allocation2 + $0x38] sm:$0xff] %v5849
  %5859 = vst [vmem:[#allocation2 + $0x40] sm:$0x3] %v5850
  %v5860 = vld [vmem:[#allocation2] sm:$0xff]
  %v5861 = vld [vmem:[#allocation2 + $0x8] sm:$0xff]
  %v5862 = vld [vmem:[#allocation2 + $0x10] sm:$0xff]
  %v5863 = vld [vmem:[#allocation2 + $0x18] sm:$0xff]
  %v5864 = vld [vmem:[#allocation2 + $0x20] sm:$0xff]
  %v5865 = vld [vmem:[#allocation2 + $0x28] sm:$0xff]
  %v5866 = vld [vmem:[#allocation2 + $0x30] sm:$0xff]
  %v5867 = vld [vmem:[#allocation2 + $0x38] sm:$0xf]
  %v5868 = vld [vmem:[%s3] sm:$0xf]
  %v5869 = vld [vmem:[%s3 + $0x4] sm:$0xf]
  %v5870 = vld [vmem:[%s3 + $0x8] sm:$0xf]
  %v5871 = vld [vmem:[%s3 + $0xc] sm:$0xf]
  %v5872 = vld [vmem:[%s3 + $0x10] sm:$0xf]
  %v5873 = vld [vmem:[%s3 + $0x14] sm:$0xf]
  %v5874 = vld [vmem:[%s3 + $0x18] sm:$0xf]
  %v5875 = vld [vmem:[%s3 + $0x1c] sm:$0xf]
  %v5876 = vld [vmem:[%s3 + $0x20] sm:$0xf]
  %v5877 = vld [vmem:[%s3 + $0x24] sm:$0xf]
  %v5878 = vld [vmem:[%s3 + $0x28] sm:$0xf]
  %v5879 = vld [vmem:[%s3 + $0x2c] sm:$0xf]
  %v5880 = vld [vmem:[%s3 + $0x30] sm:$0xf]
  %v5881 = vld [vmem:[%s3 + $0x34] sm:$0xf]
  %v5882 = vld [vmem:[%s3 + $0x38] sm:$0xf]
  %v5883 = vld [vmem:[%s3 + $0x3c] sm:$0xf]
  %v5884 = vld [vmem:[#allocation2 + $0x38] sm:$0x1f]
  %v5885 = vld [vmem:[%s1692] sm:$0xf]
  %v5886 = vld [vmem:[%s1692 + $0x4] sm:$0xf]
  %v5887 = vld [vmem:[%s1692 + $0x8] sm:$0xf]
  %v5888 = vld [vmem:[%s1692 + $0xc] sm:$0xf]
  %v5889 = vld [vmem:[%s1692 + $0x10] sm:$0xf]
  %v5890 = vld [vmem:[%s1692 + $0x14] sm:$0xf]
  %v5891 = vld [vmem:[%s1692 + $0x18] sm:$0xf]
  %v5892 = vld [vmem:[%s1692 + $0x1c] sm:$0xf]
  %v5893 = vld [vmem:[%s1692 + $0x20] sm:$0xf]
  %v5894 = vld [vmem:[%s1692 + $0x24] sm:$0xf]
  %v5895 = vld [vmem:[%s1692 + $0x28] sm:$0xf]
  %v5896 = vld [vmem:[%s1692 + $0x2c] sm:$0xf]
  %v5897 = vld [vmem:[%s1692 + $0x30] sm:$0xf]
  %v5898 = vld [vmem:[%s1692 + $0x34] sm:$0xf]
  %v5899 = vld [vmem:[%s1692 + $0x38] sm:$0xf]
  %v5900 = vld [vmem:[%s1692 + $0x3c] sm:$0xf]
  %v5902 = vshrl.u32 %v5860, 16
  %v5904 = vshll.u32 %v5860, 16
  %v5906 = vrot.slane %v5904, 1
  %v5907 = vor.u32 %v5902, %v5906
  %v5909 = vshll.u32 %v5861, 16
  %v5911 = vrot.slane %v5909, 1
  %v5912 = vsel %vm163, %v5907, %v5911
  %v5913 = vshrl.u32 %v5861, 16
  %v5915 = vor.u32 %v5913, %v5911
  %v5917 = vshll.u32 %v5862, 16
  %v5919 = vrot.slane %v5917, 1
  %v5920 = vsel %vm163, %v5915, %v5919
  %v5921 = vshrl.u32 %v5862, 16
  %v5923 = vor.u32 %v5921, %v5919
  %v5925 = vshll.u32 %v5863, 16
  %v5927 = vrot.slane %v5925, 1
  %v5928 = vsel %vm163, %v5923, %v5927
  %v5929 = vshrl.u32 %v5863, 16
  %v5931 = vor.u32 %v5929, %v5927
  %v5933 = vshll.u32 %v5864, 16
  %v5935 = vrot.slane %v5933, 1
  %v5936 = vsel %vm163, %v5931, %v5935
  %v5937 = vshrl.u32 %v5864, 16
  %v5939 = vor.u32 %v5937, %v5935
  %v5941 = vshll.u32 %v5865, 16
  %v5943 = vrot.slane %v5941, 1
  %v5944 = vsel %vm163, %v5939, %v5943
  %v5945 = vshrl.u32 %v5865, 16
  %v5947 = vor.u32 %v5945, %v5943
  %v5949 = vshll.u32 %v5866, 16
  %v5951 = vrot.slane %v5949, 1
  %v5952 = vsel %vm163, %v5947, %v5951
  %v5953 = vshrl.u32 %v5866, 16
  %v5955 = vor.u32 %v5953, %v5951
  %v5957 = vshll.u32 %v5884, 16
  %v5959 = vrot.slane %v5957, 1
  %v5960 = vsel %vm163, %v5955, %v5959
  %v5961 = vshrl.u32 %v5884, 16
  %v5963 = vor.u32 %v5961, %v5959
  %v5988 = vunpack.c.l.b16 %v5885
  %v5989 = vunpack.c.l.b16 %v5886
  %v5990 = vunpack.c.l.b16 %v5887
  %v5991 = vunpack.c.l.b16 %v5888
  %v5992 = vunpack.c.l.b16 %v5889
  %v5993 = vunpack.c.l.b16 %v5890
  %v5994 = vunpack.c.l.b16 %v5891
  %v5995 = vunpack.c.l.b16 %v5892
  %v5996 = vunpack.c.l.b16 %v5893
  %v5997 = vunpack.c.l.b16 %v5894
  %v5998 = vunpack.c.l.b16 %v5895
  %v5999 = vunpack.c.l.b16 %v5896
  %v6000 = vunpack.c.l.b16 %v5897
  %v6001 = vunpack.c.l.b16 %v5898
  %v6002 = vunpack.c.l.b16 %v5899
  %v6003 = vunpack.c.l.b16 %v5900
  %v6004 = vpack.c.b16 %v5989, %v5988
  %v6005 = vpack.c.b16 %v5991, %v5990
  %v6006 = vpack.c.b16 %v5993, %v5992
  %v6007 = vpack.c.b16 %v5995, %v5994
  %v6008 = vpack.c.b16 %v5997, %v5996
  %v6009 = vpack.c.b16 %v5999, %v5998
  %v6010 = vpack.c.b16 %v6001, %v6000
  %v6011 = vpack.c.b16 %v6003, %v6002
  %6020 = vmatprep.subr.bf16.mxu0 0
  %6021 = vmatpush1.bf16.msra.mxu0 %v6004
  %6022 = vmatprep.subr.bf16.mxu0 0
  %6023 = vmatpush1.bf16.msra.mxu0 %v6005
  %6024 = vmatprep.subr.bf16.mxu0 0
  %6025 = vmatpush1.bf16.msra.mxu0 %v6006
  %6026 = vmatprep.subr.bf16.mxu0 0
  %6027 = vmatpush1.bf16.msra.mxu0 %v6007
  %6028 = vmatprep.subr.bf16.mxu0 0
  %6029 = vmatpush1.bf16.msra.mxu0 %v6008
  %6030 = vmatprep.subr.bf16.mxu0 0
  %6031 = vmatpush1.bf16.msra.mxu0 %v6009
  %6032 = vmatprep.subr.bf16.mxu0 0
  %6033 = vmatpush1.bf16.msra.mxu0 %v6010
  %6034 = vmatprep.subr.bf16.mxu0 0
  %6035 = vmatpush1.bf16.msra.mxu0 %v6011
  %6036 = vmatprep.subr.bf16.mxu0 0
  %6037 = vmatpush1.bf16.msra.mxu0 0
  %6038 = vmatprep.subr.bf16.mxu0 0
  %6039 = vmatpush1.bf16.msra.mxu0 0
  %6040 = vmatprep.subr.bf16.mxu0 0
  %6041 = vmatpush1.bf16.msra.mxu0 0
  %6042 = vmatprep.subr.bf16.mxu0 0
  %6043 = vmatpush1.bf16.msra.mxu0 0
  %6044 = vmatprep.subr.bf16.mxu0 0
  %6045 = vmatpush1.bf16.msra.mxu0 0
  %6046 = vmatprep.subr.bf16.mxu0 0
  %6047 = vmatpush1.bf16.msra.mxu0 0
  %6048 = vmatprep.subr.bf16.mxu0 0
  %6049 = vmatpush1.bf16.msra.mxu0 0
  %6050 = vmatprep.subr.bf16.mxu0 0
  %6051 = vmatpush1.bf16.msra.mxu0 0
  %6052 = vmatprep.mubr.bf16.mxu0 0
  %6053 = vmatmul.mubr.bf16.gmra.mrb[0].mxu0 %v5912
  %v6054 = vpop.f32.mrb[0].mxu0
  %v6055 = vadd.f32 0.0, %v6054
  %v6056 = vpop.f32.mrb[0].mxu0
  %v6057 = vpop.f32.mrb[0].mxu0
  %v6058 = vadd.f32 0.0, %v6057
  %v6059 = vpop.f32.mrb[0].mxu0
  %6060 = vmatprep.mubr.bf16.mxu0 0
  %6061 = vmatmul.mubr.bf16.gmra.mrb[0].mxu0 %v5920
  %v6062 = vpop.f32.mrb[0].mxu0
  %v6063 = vadd.f32 0.0, %v6062
  %v6064 = vpop.f32.mrb[0].mxu0
  %v6065 = vpop.f32.mrb[0].mxu0
  %v6066 = vadd.f32 0.0, %v6065
  %v6067 = vpop.f32.mrb[0].mxu0
  %6068 = vmatprep.mubr.bf16.mxu0 0
  %6069 = vmatmul.mubr.bf16.gmra.mrb[0].mxu0 %v5928
  %v6070 = vpop.f32.mrb[0].mxu0
  %v6071 = vadd.f32 0.0, %v6070
  %v6072 = vpop.f32.mrb[0].mxu0
  %v6073 = vpop.f32.mrb[0].mxu0
  %v6074 = vadd.f32 0.0, %v6073
  %v6075 = vpop.f32.mrb[0].mxu0
  %6076 = vmatprep.mubr.bf16.mxu0 0
  %6077 = vmatmul.mubr.bf16.gmra.mrb[0].mxu0 %v5936
  %v6078 = vpop.f32.mrb[0].mxu0
  %v6079 = vadd.f32 0.0, %v6078
  %v6080 = vpop.f32.mrb[0].mxu0
  %v6081 = vpop.f32.mrb[0].mxu0
  %v6082 = vadd.f32 0.0, %v6081
  %v6083 = vpop.f32.mrb[0].mxu0
  %6084 = vmatprep.mubr.bf16.mxu0 0
  %6085 = vmatmul.mubr.bf16.gmra.mrb[0].mxu0 %v5944
  %v6086 = vpop.f32.mrb[0].mxu0
  %v6087 = vadd.f32 0.0, %v6086
  %v6088 = vpop.f32.mrb[0].mxu0
  %v6089 = vpop.f32.mrb[0].mxu0
  %v6090 = vadd.f32 0.0, %v6089
  %v6091 = vpop.f32.mrb[0].mxu0
  %6092 = vmatprep.mubr.bf16.mxu0 0
  %6093 = vmatmul.mubr.bf16.gmra.mrb[0].mxu0 %v5952
  %v6094 = vpop.f32.mrb[0].mxu0
  %v6095 = vadd.f32 0.0, %v6094
  %v6096 = vpop.f32.mrb[0].mxu0
  %v6097 = vpop.f32.mrb[0].mxu0
  %v6098 = vadd.f32 0.0, %v6097
  %v6099 = vpop.f32.mrb[0].mxu0
  %6100 = vmatprep.mubr.bf16.mxu0 0
  %6101 = vmatmul.mubr.bf16.gmra.mrb[0].mxu0 %v5960
  %v6102 = vpop.f32.mrb[0].mxu0
  %v6103 = vadd.f32 0.0, %v6102
  %v6104 = vpop.f32.mrb[0].mxu0
  %v6105 = vpop.f32.mrb[0].mxu0
  %v6106 = vadd.f32 0.0, %v6105
  %v6107 = vpop.f32.mrb[0].mxu0
  %6108 = vmatprep.mubr.bf16.mxu0 0
  %6109 = vmatmul.mubr.bf16.gmra.mrb[0].mxu0 %v5963
  %v6110 = vpop.f32.mrb[0].mxu0
  %v6111 = vadd.f32 0.0, %v6110
  %v6112 = vpop.f32.mrb[0].mxu0
  %v6113 = vpop.f32.mrb[0].mxu0
  %v6114 = vpop.f32.mrb[0].mxu0
  %6115 = vdwg.mxu0
  %v6132 = vunpack.c.l.b16 %v5868
  %v6133 = vunpack.c.l.b16 %v5869
  %v6134 = vunpack.c.l.b16 %v5870
  %v6135 = vunpack.c.l.b16 %v5871
  %v6136 = vunpack.c.l.b16 %v5872
  %v6137 = vunpack.c.l.b16 %v5873
  %v6138 = vunpack.c.l.b16 %v5874
  %v6139 = vunpack.c.l.b16 %v5875
  %v6140 = vunpack.c.l.b16 %v5876
  %v6141 = vunpack.c.l.b16 %v5877
  %v6142 = vunpack.c.l.b16 %v5878
  %v6143 = vunpack.c.l.b16 %v5879
  %v6144 = vunpack.c.l.b16 %v5880
  %v6145 = vunpack.c.l.b16 %v5881
  %v6146 = vunpack.c.l.b16 %v5882
  %v6147 = vunpack.c.l.b16 %v5883
  %v6148 = vpack.c.b16 %v6133, %v6132
  %v6149 = vpack.c.b16 %v6135, %v6134
  %v6150 = vpack.c.b16 %v6137, %v6136
  %v6151 = vpack.c.b16 %v6139, %v6138
  %v6152 = vpack.c.b16 %v6141, %v6140
  %v6153 = vpack.c.b16 %v6143, %v6142
  %v6154 = vpack.c.b16 %v6145, %v6144
  %v6155 = vpack.c.b16 %v6147, %v6146
  %6164 = vmatprep.subr.bf16.mxu0 0
  %6165 = vmatpush1.bf16.msra.mxu0 %v6148
  %6166 = vmatprep.subr.bf16.mxu0 0
  %6167 = vmatpush1.bf16.msra.mxu0 %v6149
  %6168 = vmatprep.subr.bf16.mxu0 0
  %6169 = vmatpush1.bf16.msra.mxu0 %v6150
  %6170 = vmatprep.subr.bf16.mxu0 0
  %6171 = vmatpush1.bf16.msra.mxu0 %v6151
  %6172 = vmatprep.subr.bf16.mxu0 0
  %6173 = vmatpush1.bf16.msra.mxu0 %v6152
  %6174 = vmatprep.subr.bf16.mxu0 0
  %6175 = vmatpush1.bf16.msra.mxu0 %v6153
  %6176 = vmatprep.subr.bf16.mxu0 0
  %6177 = vmatpush1.bf16.msra.mxu0 %v6154
  %6178 = vmatprep.subr.bf16.mxu0 0
  %6179 = vmatpush1.bf16.msra.mxu0 %v6155
  %6180 = vmatprep.subr.bf16.mxu0 0
  %6181 = vmatpush1.bf16.msra.mxu0 0
  %6182 = vmatprep.subr.bf16.mxu0 0
  %6183 = vmatpush1.bf16.msra.mxu0 0
  %6184 = vmatprep.subr.bf16.mxu0 0
  %6185 = vmatpush1.bf16.msra.mxu0 0
  %6186 = vmatprep.subr.bf16.mxu0 0
  %6187 = vmatpush1.bf16.msra.mxu0 0
  %6188 = vmatprep.subr.bf16.mxu0 0
  %6189 = vmatpush1.bf16.msra.mxu0 0
  %6190 = vmatprep.subr.bf16.mxu0 0
  %6191 = vmatpush1.bf16.msra.mxu0 0
  %6192 = vmatprep.subr.bf16.mxu0 0
  %6193 = vmatpush1.bf16.msra.mxu0 0
  %6194 = vmatprep.subr.bf16.mxu0 0
  %6195 = vmatpush1.bf16.msra.mxu0 0
  %6196 = vmatprep.mubr.bf16.mxu0 0
  %6197 = vmatmul.mubr.bf16.gmra.mrb[0].mxu0 %v5860
  %v6198 = vpop.f32.mrb[0].mxu0
  %v6199 = vadd.f32 %v6055, %v6198
  %v6200 = vpop.f32.mrb[0].mxu0
  %v6201 = vpop.f32.mrb[0].mxu0
  %v6202 = vadd.f32 %v6058, %v6201
  %v6203 = vpop.f32.mrb[0].mxu0
  %6204 = vmatprep.mubr.bf16.mxu0 0
  %6205 = vmatmul.mubr.bf16.gmra.mrb[0].mxu0 %v5861
  %v6206 = vpop.f32.mrb[0].mxu0
  %v6207 = vadd.f32 %v6063, %v6206
  %v6208 = vpop.f32.mrb[0].mxu0
  %v6209 = vpop.f32.mrb[0].mxu0
  %v6210 = vadd.f32 %v6066, %v6209
  %v6211 = vpop.f32.mrb[0].mxu0
  %6212 = vmatprep.mubr.bf16.mxu0 0
  %6213 = vmatmul.mubr.bf16.gmra.mrb[0].mxu0 %v5862
  %v6214 = vpop.f32.mrb[0].mxu0
  %v6215 = vadd.f32 %v6071, %v6214
  %v6216 = vpop.f32.mrb[0].mxu0
  %v6217 = vpop.f32.mrb[0].mxu0
  %v6218 = vadd.f32 %v6074, %v6217
  %v6219 = vpop.f32.mrb[0].mxu0
  %6220 = vmatprep.mubr.bf16.mxu0 0
  %6221 = vmatmul.mubr.bf16.gmra.mrb[0].mxu0 %v5863
  %v6222 = vpop.f32.mrb[0].mxu0
  %v6223 = vadd.f32 %v6079, %v6222
  %v6224 = vpop.f32.mrb[0].mxu0
  %v6225 = vpop.f32.mrb[0].mxu0
  %v6226 = vadd.f32 %v6082, %v6225
  %v6227 = vpop.f32.mrb[0].mxu0
  %6228 = vmatprep.mubr.bf16.mxu0 0
  %6229 = vmatmul.mubr.bf16.gmra.mrb[0].mxu0 %v5864
  %v6230 = vpop.f32.mrb[0].mxu0
  %v6231 = vadd.f32 %v6087, %v6230
  %v6232 = vpop.f32.mrb[0].mxu0
  %v6233 = vpop.f32.mrb[0].mxu0
  %v6234 = vadd.f32 %v6090, %v6233
  %v6235 = vpop.f32.mrb[0].mxu0
  %6236 = vmatprep.mubr.bf16.mxu0 0
  %6237 = vmatmul.mubr.bf16.gmra.mrb[0].mxu0 %v5865
  %v6238 = vpop.f32.mrb[0].mxu0
  %v6239 = vadd.f32 %v6095, %v6238
  %v6240 = vpop.f32.mrb[0].mxu0
  %v6241 = vpop.f32.mrb[0].mxu0
  %v6242 = vadd.f32 %v6098, %v6241
  %v6243 = vpop.f32.mrb[0].mxu0
  %6244 = vmatprep.mubr.bf16.mxu0 0
  %6245 = vmatmul.mubr.bf16.gmra.mrb[0].mxu0 %v5866
  %v6246 = vpop.f32.mrb[0].mxu0
  %v6247 = vadd.f32 %v6103, %v6246
  %v6248 = vpop.f32.mrb[0].mxu0
  %v6249 = vpop.f32.mrb[0].mxu0
  %v6250 = vadd.f32 %v6106, %v6249
  %v6251 = vpop.f32.mrb[0].mxu0
  %6252 = vmatprep.mubr.bf16.mxu0 0
  %6253 = vmatmul.mubr.bf16.gmra.mrb[0].mxu0 %v5867
  %v6254 = vpop.f32.mrb[0].mxu0
  %v6255 = vadd.f32 %v6111, %v6254
  %v6256 = vpop.f32.mrb[0].mxu0
  %v6257 = vpop.f32.mrb[0].mxu0
  %v6258 = vpop.f32.mrb[0].mxu0
  %6259 = vdwg.mxu0
  %v6260 = vld [vmem:[#allocation2] sm:$0xc0]
  %v6261 = vld [vmem:[#allocation2 + $0x8] sm:$0xff]
  %v6262 = vld [vmem:[#allocation2 + $0x10] sm:$0xff]
  %v6263 = vld [vmem:[#allocation2 + $0x18] sm:$0xff]
  %v6264 = vld [vmem:[#allocation2 + $0x20] sm:$0xff]
  %v6265 = vld [vmem:[#allocation2 + $0x28] sm:$0xff]
  %v6266 = vld [vmem:[#allocation2 + $0x30] sm:$0xff]
  %v6267 = vld [vmem:[#allocation2 + $0x38] sm:$0xff]
  %v6268 = vld [vmem:[#allocation2 + $0x40] sm:$0x3]
  %v6269 = vld [vmem:[%s2077] sm:$0xf]
  %v6270 = vld [vmem:[%s2077 + $0x4] sm:$0xf]
  %v6271 = vld [vmem:[%s2077 + $0x8] sm:$0xf]
  %v6272 = vld [vmem:[%s2077 + $0xc] sm:$0xf]
  %v6273 = vld [vmem:[%s2077 + $0x10] sm:$0xf]
  %v6274 = vld [vmem:[%s2077 + $0x14] sm:$0xf]
  %v6275 = vld [vmem:[%s2077 + $0x18] sm:$0xf]
  %v6276 = vld [vmem:[%s2077 + $0x1c] sm:$0xf]
  %v6277 = vld [vmem:[%s2077 + $0x20] sm:$0xf]
  %v6278 = vld [vmem:[%s2077 + $0x24] sm:$0xf]
  %v6279 = vld [vmem:[%s2077 + $0x28] sm:$0xf]
  %v6280 = vld [vmem:[%s2077 + $0x2c] sm:$0xf]
  %v6281 = vld [vmem:[%s2077 + $0x30] sm:$0xf]
  %v6282 = vld [vmem:[%s2077 + $0x34] sm:$0xf]
  %v6283 = vld [vmem:[%s2077 + $0x38] sm:$0xf]
  %v6284 = vld [vmem:[%s2077 + $0x3c] sm:$0xf]
  %v6294 = vrot.slane %v6260, 6
  %v6295 = vrot.slane %v6261, 6
  %v6296 = vsel %vm2103, %v6294, %v6295
  %v6297 = vrot.slane %v6262, 6
  %v6298 = vsel %vm2103, %v6295, %v6297
  %v6299 = vrot.slane %v6263, 6
  %v6300 = vsel %vm2103, %v6297, %v6299
  %v6301 = vrot.slane %v6264, 6
  %v6302 = vsel %vm2103, %v6299, %v6301
  %v6303 = vrot.slane %v6265, 6
  %v6304 = vsel %vm2103, %v6301, %v6303
  %v6305 = vrot.slane %v6266, 6
  %v6306 = vsel %vm2103, %v6303, %v6305
  %v6307 = vrot.slane %v6267, 6
  %v6308 = vsel %vm2103, %v6305, %v6307
  %v6309 = vrot.slane %v6268, 6
  %v6310 = vsel %vm2103, %v6307, %v6309
  %v6335 = vunpack.c.l.b16 %v6269
  %v6336 = vunpack.c.l.b16 %v6270
  %v6337 = vunpack.c.l.b16 %v6271
  %v6338 = vunpack.c.l.b16 %v6272
  %v6339 = vunpack.c.l.b16 %v6273
  %v6340 = vunpack.c.l.b16 %v6274
  %v6341 = vunpack.c.l.b16 %v6275
  %v6342 = vunpack.c.l.b16 %v6276
  %v6343 = vunpack.c.l.b16 %v6277
  %v6344 = vunpack.c.l.b16 %v6278
  %v6345 = vunpack.c.l.b16 %v6279
  %v6346 = vunpack.c.l.b16 %v6280
  %v6347 = vunpack.c.l.b16 %v6281
  %v6348 = vunpack.c.l.b16 %v6282
  %v6349 = vunpack.c.l.b16 %v6283
  %v6350 = vunpack.c.l.b16 %v6284
  %v6351 = vpack.c.b16 %v6336, %v6335
  %v6352 = vpack.c.b16 %v6338, %v6337
  %v6353 = vpack.c.b16 %v6340, %v6339
  %v6354 = vpack.c.b16 %v6342, %v6341
  %v6355 = vpack.c.b16 %v6344, %v6343
  %v6356 = vpack.c.b16 %v6346, %v6345
  %v6357 = vpack.c.b16 %v6348, %v6347
  %v6358 = vpack.c.b16 %v6350, %v6349
  %6367 = vmatprep.subr.bf16.mxu0 0
  %6368 = vmatpush1.bf16.msra.mxu0 %v6351
  %6369 = vmatprep.subr.bf16.mxu0 0
  %6370 = vmatpush1.bf16.msra.mxu0 %v6352
  %6371 = vmatprep.subr.bf16.mxu0 0
  %6372 = vmatpush1.bf16.msra.mxu0 %v6353
  %6373 = vmatprep.subr.bf16.mxu0 0
  %6374 = vmatpush1.bf16.msra.mxu0 %v6354
  %6375 = vmatprep.subr.bf16.mxu0 0
  %6376 = vmatpush1.bf16.msra.mxu0 %v6355
  %6377 = vmatprep.subr.bf16.mxu0 0
  %6378 = vmatpush1.bf16.msra.mxu0 %v6356
  %6379 = vmatprep.subr.bf16.mxu0 0
  %6380 = vmatpush1.bf16.msra.mxu0 %v6357
  %6381 = vmatprep.subr.bf16.mxu0 0
  %6382 = vmatpush1.bf16.msra.mxu0 %v6358
  %6383 = vmatprep.subr.bf16.mxu0 0
  %6384 = vmatpush1.bf16.msra.mxu0 0
  %6385 = vmatprep.subr.bf16.mxu0 0
  %6386 = vmatpush1.bf16.msra.mxu0 0
  %6387 = vmatprep.subr.bf16.mxu0 0
  %6388 = vmatpush1.bf16.msra.mxu0 0
  %6389 = vmatprep.subr.bf16.mxu0 0
  %6390 = vmatpush1.bf16.msra.mxu0 0
  %6391 = vmatprep.subr.bf16.mxu0 0
  %6392 = vmatpush1.bf16.msra.mxu0 0
  %6393 = vmatprep.subr.bf16.mxu0 0
  %6394 = vmatpush1.bf16.msra.mxu0 0
  %6395 = vmatprep.subr.bf16.mxu0 0
  %6396 = vmatpush1.bf16.msra.mxu0 0
  %6397 = vmatprep.subr.bf16.mxu0 0
  %6398 = vmatpush1.bf16.msra.mxu0 0
  %6399 = vmatprep.mubr.bf16.mxu0 0
  %6400 = vmatmul.mubr.bf16.gmra.mrb[0].mxu0 %v6296
  %v6401 = vpop.f32.mrb[0].mxu0
  %v6402 = vadd.f32 0.0, %v6401
  %v6403 = vpop.f32.mrb[0].mxu0
  %v6404 = vpop.f32.mrb[0].mxu0
  %v6405 = vadd.f32 0.0, %v6404
  %v6406 = vpop.f32.mrb[0].mxu0
  %6407 = vmatprep.mubr.bf16.mxu0 0
  %6408 = vmatmul.mubr.bf16.gmra.mrb[0].mxu0 %v6298
  %v6409 = vpop.f32.mrb[0].mxu0
  %v6410 = vadd.f32 0.0, %v6409
  %v6411 = vpop.f32.mrb[0].mxu0
  %v6412 = vpop.f32.mrb[0].mxu0
  %v6413 = vadd.f32 0.0, %v6412
  %v6414 = vpop.f32.mrb[0].mxu0
  %6415 = vmatprep.mubr.bf16.mxu0 0
  %6416 = vmatmul.mubr.bf16.gmra.mrb[0].mxu0 %v6300
  %v6417 = vpop.f32.mrb[0].mxu0
  %v6418 = vadd.f32 0.0, %v6417
  %v6419 = vpop.f32.mrb[0].mxu0
  %v6420 = vpop.f32.mrb[0].mxu0
  %v6421 = vadd.f32 0.0, %v6420
  %v6422 = vpop.f32.mrb[0].mxu0
  %6423 = vmatprep.mubr.bf16.mxu0 0
  %6424 = vmatmul.mubr.bf16.gmra.mrb[0].mxu0 %v6302
  %v6425 = vpop.f32.mrb[0].mxu0
  %v6426 = vadd.f32 0.0, %v6425
  %v6427 = vpop.f32.mrb[0].mxu0
  %v6428 = vpop.f32.mrb[0].mxu0
  %v6429 = vadd.f32 0.0, %v6428
  %v6430 = vpop.f32.mrb[0].mxu0
  %6431 = vmatprep.mubr.bf16.mxu0 0
  %6432 = vmatmul.mubr.bf16.gmra.mrb[0].mxu0 %v6304
  %v6433 = vpop.f32.mrb[0].mxu0
  %v6434 = vadd.f32 0.0, %v6433
  %v6435 = vpop.f32.mrb[0].mxu0
  %v6436 = vpop.f32.mrb[0].mxu0
  %v6437 = vadd.f32 0.0, %v6436
  %v6438 = vpop.f32.mrb[0].mxu0
  %6439 = vmatprep.mubr.bf16.mxu0 0
  %6440 = vmatmul.mubr.bf16.gmra.mrb[0].mxu0 %v6306
  %v6441 = vpop.f32.mrb[0].mxu0
  %v6442 = vadd.f32 0.0, %v6441
  %v6443 = vpop.f32.mrb[0].mxu0
  %v6444 = vpop.f32.mrb[0].mxu0
  %v6445 = vadd.f32 0.0, %v6444
  %v6446 = vpop.f32.mrb[0].mxu0
  %6447 = vmatprep.mubr.bf16.mxu0 0
  %6448 = vmatmul.mubr.bf16.gmra.mrb[0].mxu0 %v6308
  %v6449 = vpop.f32.mrb[0].mxu0
  %v6450 = vadd.f32 0.0, %v6449
  %v6451 = vpop.f32.mrb[0].mxu0
  %v6452 = vpop.f32.mrb[0].mxu0
  %v6453 = vadd.f32 0.0, %v6452
  %v6454 = vpop.f32.mrb[0].mxu0
  %6455 = vmatprep.mubr.bf16.mxu0 0
  %6456 = vmatmul.mubr.bf16.gmra.mrb[0].mxu0 %v6310
  %v6457 = vpop.f32.mrb[0].mxu0
  %v6458 = vadd.f32 0.0, %v6457
  %v6459 = vpop.f32.mrb[0].mxu0
  %v6460 = vpop.f32.mrb[0].mxu0
  %v6461 = vpop.f32.mrb[0].mxu0
  %6462 = vdwg.mxu0
  %v6463 = vadd.f32 %v6199, %v6402
  %v6464 = vadd.f32 %v6202, %v6405
  %v6465 = vadd.f32 %v6207, %v6410
  %v6466 = vadd.f32 %v6210, %v6413
  %v6467 = vadd.f32 %v6215, %v6418
  %v6468 = vadd.f32 %v6218, %v6421
  %v6469 = vadd.f32 %v6223, %v6426
  %v6470 = vadd.f32 %v6226, %v6429
  %v6471 = vadd.f32 %v6231, %v6434
  %v6472 = vadd.f32 %v6234, %v6437
  %v6473 = vadd.f32 %v6239, %v6442
  %v6474 = vadd.f32 %v6242, %v6445
  %v6475 = vadd.f32 %v6247, %v6450
  %v6476 = vadd.f32 %v6250, %v6453
  %v6477 = vadd.f32 %v6255, %v6458
  %v6478 = vld [vmem:[#allocation2 + $0x40] sm:$0x7]
  %v6479 = vld [vmem:[%s2289] sm:$0xf]
  %v6480 = vld [vmem:[%s2289 + $0x4] sm:$0xf]
  %v6481 = vld [vmem:[%s2289 + $0x8] sm:$0xf]
  %v6482 = vld [vmem:[%s2289 + $0xc] sm:$0xf]
  %v6483 = vld [vmem:[%s2289 + $0x10] sm:$0xf]
  %v6484 = vld [vmem:[%s2289 + $0x14] sm:$0xf]
  %v6485 = vld [vmem:[%s2289 + $0x18] sm:$0xf]
  %v6486 = vld [vmem:[%s2289 + $0x1c] sm:$0xf]
  %v6487 = vld [vmem:[%s2289 + $0x20] sm:$0xf]
  %v6488 = vld [vmem:[%s2289 + $0x24] sm:$0xf]
  %v6489 = vld [vmem:[%s2289 + $0x28] sm:$0xf]
  %v6490 = vld [vmem:[%s2289 + $0x2c] sm:$0xf]
  %v6491 = vld [vmem:[%s2289 + $0x30] sm:$0xf]
  %v6492 = vld [vmem:[%s2289 + $0x34] sm:$0xf]
  %v6493 = vld [vmem:[%s2289 + $0x38] sm:$0xf]
  %v6494 = vld [vmem:[%s2289 + $0x3c] sm:$0xf]
  %v6496 = vshrl.u32 %v6260, 16
  %v6498 = vrot.slane %v6496, 6
  %v6499 = vshll.u32 %v6260, 16
  %v6501 = vrot.slane %v6499, 7
  %v6502 = vor.u32 %v6498, %v6501
  %v6504 = vshrl.u32 %v6261, 16
  %v6506 = vrot.slane %v6504, 6
  %v6507 = vshll.u32 %v6261, 16
  %v6509 = vrot.slane %v6507, 7
  %v6510 = vor.u32 %v6506, %v6509
  %v6511 = vsel %vm2306, %v6502, %v6510
  %v6513 = vshrl.u32 %v6262, 16
  %v6515 = vrot.slane %v6513, 6
  %v6516 = vshll.u32 %v6262, 16
  %v6518 = vrot.slane %v6516, 7
  %v6519 = vor.u32 %v6515, %v6518
  %v6520 = vsel %vm2306, %v6510, %v6519
  %v6522 = vshrl.u32 %v6263, 16
  %v6524 = vrot.slane %v6522, 6
  %v6525 = vshll.u32 %v6263, 16
  %v6527 = vrot.slane %v6525, 7
  %v6528 = vor.u32 %v6524, %v6527
  %v6529 = vsel %vm2306, %v6519, %v6528
  %v6531 = vshrl.u32 %v6264, 16
  %v6533 = vrot.slane %v6531, 6
  %v6534 = vshll.u32 %v6264, 16
  %v6536 = vrot.slane %v6534, 7
  %v6537 = vor.u32 %v6533, %v6536
  %v6538 = vsel %vm2306, %v6528, %v6537
  %v6540 = vshrl.u32 %v6265, 16
  %v6542 = vrot.slane %v6540, 6
  %v6543 = vshll.u32 %v6265, 16
  %v6545 = vrot.slane %v6543, 7
  %v6546 = vor.u32 %v6542, %v6545
  %v6547 = vsel %vm2306, %v6537, %v6546
  %v6549 = vshrl.u32 %v6266, 16
  %v6551 = vrot.slane %v6549, 6
  %v6552 = vshll.u32 %v6266, 16
  %v6554 = vrot.slane %v6552, 7
  %v6555 = vor.u32 %v6551, %v6554
  %v6556 = vsel %vm2306, %v6546, %v6555
  %v6558 = vshrl.u32 %v6267, 16
  %v6560 = vrot.slane %v6558, 6
  %v6561 = vshll.u32 %v6267, 16
  %v6563 = vrot.slane %v6561, 7
  %v6564 = vor.u32 %v6560, %v6563
  %v6565 = vsel %vm2306, %v6555, %v6564
  %v6567 = vshrl.u32 %v6478, 16
  %v6569 = vrot.slane %v6567, 6
  %v6570 = vshll.u32 %v6478, 16
  %v6572 = vrot.slane %v6570, 7
  %v6573 = vor.u32 %v6569, %v6572
  %v6574 = vsel %vm2306, %v6564, %v6573
  %v6599 = vunpack.c.l.b16 %v6479
  %v6600 = vunpack.c.l.b16 %v6480
  %v6601 = vunpack.c.l.b16 %v6481
  %v6602 = vunpack.c.l.b16 %v6482
  %v6603 = vunpack.c.l.b16 %v6483
  %v6604 = vunpack.c.l.b16 %v6484
  %v6605 = vunpack.c.l.b16 %v6485
  %v6606 = vunpack.c.l.b16 %v6486
  %v6607 = vunpack.c.l.b16 %v6487
  %v6608 = vunpack.c.l.b16 %v6488
  %v6609 = vunpack.c.l.b16 %v6489
  %v6610 = vunpack.c.l.b16 %v6490
  %v6611 = vunpack.c.l.b16 %v6491
  %v6612 = vunpack.c.l.b16 %v6492
  %v6613 = vunpack.c.l.b16 %v6493
  %v6614 = vunpack.c.l.b16 %v6494
  %v6615 = vpack.c.b16 %v6600, %v6599
  %v6616 = vpack.c.b16 %v6602, %v6601
  %v6617 = vpack.c.b16 %v6604, %v6603
  %v6618 = vpack.c.b16 %v6606, %v6605
  %v6619 = vpack.c.b16 %v6608, %v6607
  %v6620 = vpack.c.b16 %v6610, %v6609
  %v6621 = vpack.c.b16 %v6612, %v6611
  %v6622 = vpack.c.b16 %v6614, %v6613
  %6631 = vmatprep.subr.bf16.mxu0 0
  %6632 = vmatpush1.bf16.msra.mxu0 %v6615
  %6633 = vmatprep.subr.bf16.mxu0 0
  %6634 = vmatpush1.bf16.msra.mxu0 %v6616
  %6635 = vmatprep.subr.bf16.mxu0 0
  %6636 = vmatpush1.bf16.msra.mxu0 %v6617
  %6637 = vmatprep.subr.bf16.mxu0 0
  %6638 = vmatpush1.bf16.msra.mxu0 %v6618
  %6639 = vmatprep.subr.bf16.mxu0 0
  %6640 = vmatpush1.bf16.msra.mxu0 %v6619
  %6641 = vmatprep.subr.bf16.mxu0 0
  %6642 = vmatpush1.bf16.msra.mxu0 %v6620
  %6643 = vmatprep.subr.bf16.mxu0 0
  %6644 = vmatpush1.bf16.msra.mxu0 %v6621
  %6645 = vmatprep.subr.bf16.mxu0 0
  %6646 = vmatpush1.bf16.msra.mxu0 %v6622
  %6647 = vmatprep.subr.bf16.mxu0 0
  %6648 = vmatpush1.bf16.msra.mxu0 0
  %6649 = vmatprep.subr.bf16.mxu0 0
  %6650 = vmatpush1.bf16.msra.mxu0 0
  %6651 = vmatprep.subr.bf16.mxu0 0
  %6652 = vmatpush1.bf16.msra.mxu0 0
  %6653 = vmatprep.subr.bf16.mxu0 0
  %6654 = vmatpush1.bf16.msra.mxu0 0
  %6655 = vmatprep.subr.bf16.mxu0 0
  %6656 = vmatpush1.bf16.msra.mxu0 0
  %6657 = vmatprep.subr.bf16.mxu0 0
  %6658 = vmatpush1.bf16.msra.mxu0 0
  %6659 = vmatprep.subr.bf16.mxu0 0
  %6660 = vmatpush1.bf16.msra.mxu0 0
  %6661 = vmatprep.subr.bf16.mxu0 0
  %6662 = vmatpush1.bf16.msra.mxu0 0
  %6663 = vmatprep.mubr.bf16.mxu0 0
  %6664 = vmatmul.mubr.bf16.gmra.mrb[0].mxu0 %v6511
  %v6665 = vpop.f32.mrb[0].mxu0
  %v6666 = vadd.f32 0.0, %v6665
  %v6667 = vpop.f32.mrb[0].mxu0
  %v6668 = vpop.f32.mrb[0].mxu0
  %v6669 = vadd.f32 0.0, %v6668
  %v6670 = vpop.f32.mrb[0].mxu0
  %6671 = vmatprep.mubr.bf16.mxu0 0
  %6672 = vmatmul.mubr.bf16.gmra.mrb[0].mxu0 %v6520
  %v6673 = vpop.f32.mrb[0].mxu0
  %v6674 = vadd.f32 0.0, %v6673
  %v6675 = vpop.f32.mrb[0].mxu0
  %v6676 = vpop.f32.mrb[0].mxu0
  %v6677 = vadd.f32 0.0, %v6676
  %v6678 = vpop.f32.mrb[0].mxu0
  %6679 = vmatprep.mubr.bf16.mxu0 0
  %6680 = vmatmul.mubr.bf16.gmra.mrb[0].mxu0 %v6529
  %v6681 = vpop.f32.mrb[0].mxu0
  %v6682 = vadd.f32 0.0, %v6681
  %v6683 = vpop.f32.mrb[0].mxu0
  %v6684 = vpop.f32.mrb[0].mxu0
  %v6685 = vadd.f32 0.0, %v6684
  %v6686 = vpop.f32.mrb[0].mxu0
  %6687 = vmatprep.mubr.bf16.mxu0 0
  %6688 = vmatmul.mubr.bf16.gmra.mrb[0].mxu0 %v6538
  %v6689 = vpop.f32.mrb[0].mxu0
  %v6690 = vadd.f32 0.0, %v6689
  %v6691 = vpop.f32.mrb[0].mxu0
  %v6692 = vpop.f32.mrb[0].mxu0
  %v6693 = vadd.f32 0.0, %v6692
  %v6694 = vpop.f32.mrb[0].mxu0
  %6695 = vmatprep.mubr.bf16.mxu0 0
  %6696 = vmatmul.mubr.bf16.gmra.mrb[0].mxu0 %v6547
  %v6697 = vpop.f32.mrb[0].mxu0
  %v6698 = vadd.f32 0.0, %v6697
  %v6699 = vpop.f32.mrb[0].mxu0
  %v6700 = vpop.f32.mrb[0].mxu0
  %v6701 = vadd.f32 0.0, %v6700
  %v6702 = vpop.f32.mrb[0].mxu0
  %6703 = vmatprep.mubr.bf16.mxu0 0
  %6704 = vmatmul.mubr.bf16.gmra.mrb[0].mxu0 %v6556
  %v6705 = vpop.f32.mrb[0].mxu0
  %v6706 = vadd.f32 0.0, %v6705
  %v6707 = vpop.f32.mrb[0].mxu0
  %v6708 = vpop.f32.mrb[0].mxu0
  %v6709 = vadd.f32 0.0, %v6708
  %v6710 = vpop.f32.mrb[0].mxu0
  %6711 = vmatprep.mubr.bf16.mxu0 0
  %6712 = vmatmul.mubr.bf16.gmra.mrb[0].mxu0 %v6565
  %v6713 = vpop.f32.mrb[0].mxu0
  %v6714 = vadd.f32 0.0, %v6713
  %v6715 = vpop.f32.mrb[0].mxu0
  %v6716 = vpop.f32.mrb[0].mxu0
  %v6717 = vadd.f32 0.0, %v6716
  %v6718 = vpop.f32.mrb[0].mxu0
  %6719 = vmatprep.mubr.bf16.mxu0 0
  %6720 = vmatmul.mubr.bf16.gmra.mrb[0].mxu0 %v6574
  %v6721 = vpop.f32.mrb[0].mxu0
  %v6722 = vadd.f32 0.0, %v6721
  %v6723 = vpop.f32.mrb[0].mxu0
  %v6724 = vpop.f32.mrb[0].mxu0
  %v6725 = vpop.f32.mrb[0].mxu0
  %6726 = vdwg.mxu0
  %v6727 = vadd.f32 %v6463, %v6666
  %v6728 = vadd.f32 %v6464, %v6669
  %v6729 = vadd.f32 %v6465, %v6674
  %v6730 = vadd.f32 %v6466, %v6677
  %v6731 = vadd.f32 %v6467, %v6682
  %v6732 = vadd.f32 %v6468, %v6685
  %v6733 = vadd.f32 %v6469, %v6690
  %v6734 = vadd.f32 %v6470, %v6693
  %v6735 = vadd.f32 %v6471, %v6698
  %v6736 = vadd.f32 %v6472, %v6701
  %v6737 = vadd.f32 %v6473, %v6706
  %v6738 = vadd.f32 %v6474, %v6709
  %v6739 = vadd.f32 %v6475, %v6714
  %v6740 = vadd.f32 %v6476, %v6717
  %v6741 = vadd.f32 %v6477, %v6722
  %v6742 = vld [vmem:[%s4] sm:$0x1]
  %v6744 = vlaneseq
  %v6745 = vshrl.u32 %v6744, 7
  %v6746 = vsub.s32 0, %v6745
  %v6747 = vrot.slane %v6742, %v6746
  %v6749 = vadd.f32 %v6727, %v6747
  %v6750 = vadd.f32 %v6728, %v6747
  %v6751 = vadd.f32 %v6729, %v6747
  %v6752 = vadd.f32 %v6730, %v6747
  %v6753 = vadd.f32 %v6731, %v6747
  %v6754 = vadd.f32 %v6732, %v6747
  %v6755 = vadd.f32 %v6733, %v6747
  %v6756 = vadd.f32 %v6734, %v6747
  %v6757 = vadd.f32 %v6735, %v6747
  %v6758 = vadd.f32 %v6736, %v6747
  %v6759 = vadd.f32 %v6737, %v6747
  %v6760 = vadd.f32 %v6738, %v6747
  %v6761 = vadd.f32 %v6739, %v6747
  %v6762 = vadd.f32 %v6740, %v6747
  %v6763 = vadd.f32 %v6741, %v6747
  %v6764 = vmax.f32 %v6749, 0.0
  %v6765 = vmax.f32 %v6750, 0.0
  %v6766 = vmax.f32 %v6751, 0.0
  %v6767 = vmax.f32 %v6752, 0.0
  %v6768 = vmax.f32 %v6753, 0.0
  %v6769 = vmax.f32 %v6754, 0.0
  %v6770 = vmax.f32 %v6755, 0.0
  %v6771 = vmax.f32 %v6756, 0.0
  %v6772 = vmax.f32 %v6757, 0.0
  %v6773 = vmax.f32 %v6758, 0.0
  %v6774 = vmax.f32 %v6759, 0.0
  %v6775 = vmax.f32 %v6760, 0.0
  %v6776 = vmax.f32 %v6761, 0.0
  %v6777 = vmax.f32 %v6762, 0.0
  %v6778 = vmax.f32 %v6763, 0.0
  %v6779 = vpack.c.bf16 %v6765, %v6764
  %v6780 = vpack.c.bf16 %v6767, %v6766
  %v6781 = vpack.c.bf16 %v6769, %v6768
  %v6782 = vpack.c.bf16 %v6771, %v6770
  %v6783 = vpack.c.bf16 %v6773, %v6772
  %v6784 = vpack.c.bf16 %v6775, %v6774
  %v6785 = vpack.c.bf16 %v6777, %v6776
  %v6786 = vpack.c.bf16 %v6778, %v6778
  %6787 = vst.msk [vmem:[#allocation3] sm:$0xff] %vm387, %v6779
  %6788 = vst.msk [vmem:[#allocation3 + $0x8] sm:$0xff] %vm387, %v6780
  %6789 = vst.msk [vmem:[#allocation3 + $0x10] sm:$0xff] %vm387, %v6781
  %6790 = vst.msk [vmem:[#allocation3 + $0x18] sm:$0xff] %vm387, %v6782
  %6791 = vst.msk [vmem:[#allocation3 + $0x20] sm:$0xff] %vm387, %v6783
  %6792 = vst.msk [vmem:[#allocation3 + $0x28] sm:$0xff] %vm387, %v6784
  %6793 = vst.msk [vmem:[#allocation3 + $0x30] sm:$0xff] %vm387, %v6785
  %6794 = vst.msk [vmem:[#allocation3 + $0x38] sm:$0xf] %vm2606, %v6786
  %v6795 = vld [vmem:[#allocation3] sm:$0xff]
  %v6796 = vld [vmem:[#allocation3 + $0x8] sm:$0xff]
  %v6797 = vld [vmem:[#allocation3 + $0x10] sm:$0xff]
  %v6798 = vld [vmem:[#allocation3 + $0x18] sm:$0xff]
  %v6799 = vld [vmem:[#allocation3 + $0x20] sm:$0xff]
  %v6800 = vld [vmem:[#allocation3 + $0x28] sm:$0xff]
  %v6801 = vld [vmem:[%s5] sm:$0xf]
  %v6802 = vld [vmem:[%s5 + $0x4] sm:$0xf]
  %v6803 = vld [vmem:[%s5 + $0x8] sm:$0xf]
  %v6804 = vld [vmem:[%s5 + $0xc] sm:$0xf]
  %v6805 = vld [vmem:[%s5 + $0x10] sm:$0xf]
  %v6806 = vld [vmem:[%s5 + $0x14] sm:$0xf]
  %v6807 = vld [vmem:[%s5 + $0x18] sm:$0xf]
  %v6808 = vld [vmem:[%s5 + $0x1c] sm:$0xf]
  %v6809 = vld [vmem:[#allocation3 + $0x30] sm:$0x1]
  %v6810 = vld [vmem:[%s2623] sm:$0xf]
  %v6811 = vld [vmem:[%s2623 + $0x4] sm:$0xf]
  %v6812 = vld [vmem:[%s2623 + $0x8] sm:$0xf]
  %v6813 = vld [vmem:[%s2623 + $0xc] sm:$0xf]
  %v6814 = vld [vmem:[%s2623 + $0x10] sm:$0xf]
  %v6815 = vld [vmem:[%s2623 + $0x14] sm:$0xf]
  %v6816 = vld [vmem:[%s2623 + $0x18] sm:$0xf]
  %v6817 = vld [vmem:[%s2623 + $0x1c] sm:$0xf]
  %v6819 = vshrl.u32 %v6795, 16
  %v6821 = vshll.u32 %v6795, 16
  %v6823 = vrot.slane %v6821, 1
  %v6824 = vor.u32 %v6819, %v6823
  %v6826 = vshll.u32 %v6796, 16
  %v6828 = vrot.slane %v6826, 1
  %v6829 = vsel %vm163, %v6824, %v6828
  %v6830 = vshrl.u32 %v6796, 16
  %v6832 = vor.u32 %v6830, %v6828
  %v6834 = vshll.u32 %v6797, 16
  %v6836 = vrot.slane %v6834, 1
  %v6837 = vsel %vm163, %v6832, %v6836
  %v6838 = vshrl.u32 %v6797, 16
  %v6840 = vor.u32 %v6838, %v6836
  %v6842 = vshll.u32 %v6798, 16
  %v6844 = vrot.slane %v6842, 1
  %v6845 = vsel %vm163, %v6840, %v6844
  %v6846 = vshrl.u32 %v6798, 16
  %v6848 = vor.u32 %v6846, %v6844
  %v6850 = vshll.u32 %v6799, 16
  %v6852 = vrot.slane %v6850, 1
  %v6853 = vsel %vm163, %v6848, %v6852
  %v6854 = vshrl.u32 %v6799, 16
  %v6856 = vor.u32 %v6854, %v6852
  %v6858 = vshll.u32 %v6800, 16
  %v6860 = vrot.slane %v6858, 1
  %v6861 = vsel %vm163, %v6856, %v6860
  %v6862 = vshrl.u32 %v6800, 16
  %v6864 = vor.u32 %v6862, %v6860
  %v6866 = vshll.u32 %v6809, 16
  %v6868 = vrot.slane %v6866, 1
  %v6869 = vsel %vm163, %v6864, %v6868
  %v6878 = vunpack.c.l.b16 %v6810
  %v6879 = vunpack.c.l.b16 %v6811
  %v6880 = vunpack.c.l.b16 %v6812
  %v6881 = vunpack.c.l.b16 %v6813
  %v6882 = vunpack.c.l.b16 %v6814
  %v6883 = vunpack.c.l.b16 %v6815
  %v6884 = vunpack.c.l.b16 %v6816
  %v6885 = vunpack.c.l.b16 %v6817
  %v6886 = vpack.c.b16 %v6879, %v6878
  %v6887 = vpack.c.b16 %v6881, %v6880
  %v6888 = vpack.c.b16 %v6883, %v6882
  %v6889 = vpack.c.b16 %v6885, %v6884
  %v6895 = vsel %vm387, %v6829, 0
  %v6898 = vsel %vm387, %v6837, 0
  %v6901 = vsel %vm387, %v6845, 0
  %v6904 = vsel %vm387, %v6853, 0
  %v6907 = vsel %vm387, %v6861, 0
  %v6910 = vsel %vm387, %v6869, 0
  %6912 = vmatprep.subr.bf16.mxu0 0
  %6913 = vmatpush1.bf16.msra.mxu0 %v6886
  %6914 = vmatprep.subr.bf16.mxu0 0
  %6915 = vmatpush1.bf16.msra.mxu0 %v6887
  %6916 = vmatprep.subr.bf16.mxu0 0
  %6917 = vmatpush1.bf16.msra.mxu0 %v6888
  %6918 = vmatprep.subr.bf16.mxu0 0
  %6919 = vmatpush1.bf16.msra.mxu0 %v6889
  %6920 = vmatprep.subr.bf16.mxu0 0
  %6921 = vmatpush1.bf16.msra.mxu0 0
  %6922 = vmatprep.subr.bf16.mxu0 0
  %6923 = vmatpush1.bf16.msra.mxu0 0
  %6924 = vmatprep.subr.bf16.mxu0 0
  %6925 = vmatpush1.bf16.msra.mxu0 0
  %6926 = vmatprep.subr.bf16.mxu0 0
  %6927 = vmatpush1.bf16.msra.mxu0 0
  %6928 = vmatprep.subr.bf16.mxu0 0
  %6929 = vmatpush1.bf16.msra.mxu0 0
  %6930 = vmatprep.subr.bf16.mxu0 0
  %6931 = vmatpush1.bf16.msra.mxu0 0
  %6932 = vmatprep.subr.bf16.mxu0 0
  %6933 = vmatpush1.bf16.msra.mxu0 0
  %6934 = vmatprep.subr.bf16.mxu0 0
  %6935 = vmatpush1.bf16.msra.mxu0 0
  %6936 = vmatprep.subr.bf16.mxu0 0
  %6937 = vmatpush1.bf16.msra.mxu0 0
  %6938 = vmatprep.subr.bf16.mxu0 0
  %6939 = vmatpush1.bf16.msra.mxu0 0
  %6940 = vmatprep.subr.bf16.mxu0 0
  %6941 = vmatpush1.bf16.msra.mxu0 0
  %6942 = vmatprep.subr.bf16.mxu0 0
  %6943 = vmatpush1.bf16.msra.mxu0 0
  %6944 = vmatprep.mubr.bf16.mxu0 0
  %6945 = vmatmul.mubr.bf16.gmra.mrb[0].mxu0 %v6895
  %v6946 = vpop.f32.mrb[0].mxu0
  %v6947 = vadd.f32 0.0, %v6946
  %v6948 = vpop.f32.mrb[0].mxu0
  %v6949 = vpop.f32.mrb[0].mxu0
  %v6950 = vadd.f32 0.0, %v6949
  %v6951 = vpop.f32.mrb[0].mxu0
  %6952 = vmatprep.mubr.bf16.mxu0 0
  %6953 = vmatmul.mubr.bf16.gmra.mrb[0].mxu0 %v6898
  %v6954 = vpop.f32.mrb[0].mxu0
  %v6955 = vadd.f32 0.0, %v6954
  %v6956 = vpop.f32.mrb[0].mxu0
  %v6957 = vpop.f32.mrb[0].mxu0
  %v6958 = vadd.f32 0.0, %v6957
  %v6959 = vpop.f32.mrb[0].mxu0
  %6960 = vmatprep.mubr.bf16.mxu0 0
  %6961 = vmatmul.mubr.bf16.gmra.mrb[0].mxu0 %v6901
  %v6962 = vpop.f32.mrb[0].mxu0
  %v6963 = vadd.f32 0.0, %v6962
  %v6964 = vpop.f32.mrb[0].mxu0
  %v6965 = vpop.f32.mrb[0].mxu0
  %v6966 = vadd.f32 0.0, %v6965
  %v6967 = vpop.f32.mrb[0].mxu0
  %6968 = vmatprep.mubr.bf16.mxu0 0
  %6969 = vmatmul.mubr.bf16.gmra.mrb[0].mxu0 %v6904
  %v6970 = vpop.f32.mrb[0].mxu0
  %v6971 = vadd.f32 0.0, %v6970
  %v6972 = vpop.f32.mrb[0].mxu0
  %v6973 = vpop.f32.mrb[0].mxu0
  %v6974 = vadd.f32 0.0, %v6973
  %v6975 = vpop.f32.mrb[0].mxu0
  %6976 = vmatprep.mubr.bf16.mxu0 0
  %6977 = vmatmul.mubr.bf16.gmra.mrb[0].mxu0 %v6907
  %v6978 = vpop.f32.mrb[0].mxu0
  %v6979 = vadd.f32 0.0, %v6978
  %v6980 = vpop.f32.mrb[0].mxu0
  %v6981 = vpop.f32.mrb[0].mxu0
  %v6982 = vadd.f32 0.0, %v6981
  %v6983 = vpop.f32.mrb[0].mxu0
  %6984 = vmatprep.mubr.bf16.mxu0 0
  %6985 = vmatmul.mubr.bf16.gmra.mrb[0].mxu0 %v6910
  %v6986 = vpop.f32.mrb[0].mxu0
  %v6987 = vadd.f32 0.0, %v6986
  %v6988 = vpop.f32.mrb[0].mxu0
  %v6989 = vpop.f32.mrb[0].mxu0
  %v6990 = vadd.f32 0.0, %v6989
  %v6991 = vpop.f32.mrb[0].mxu0
  %6992 = vdwg.mxu0
  %v7001 = vunpack.c.l.b16 %v6801
  %v7002 = vunpack.c.l.b16 %v6802
  %v7003 = vunpack.c.l.b16 %v6803
  %v7004 = vunpack.c.l.b16 %v6804
  %v7005 = vunpack.c.l.b16 %v6805
  %v7006 = vunpack.c.l.b16 %v6806
  %v7007 = vunpack.c.l.b16 %v6807
  %v7008 = vunpack.c.l.b16 %v6808
  %v7009 = vpack.c.b16 %v7002, %v7001
  %v7010 = vpack.c.b16 %v7004, %v7003
  %v7011 = vpack.c.b16 %v7006, %v7005
  %v7012 = vpack.c.b16 %v7008, %v7007
  %v7017 = vsel %vm387, %v6795, 0
  %v7019 = vsel %vm387, %v6796, 0
  %v7021 = vsel %vm387, %v6797, 0
  %v7023 = vsel %vm387, %v6798, 0
  %v7025 = vsel %vm387, %v6799, 0
  %v7027 = vsel %vm387, %v6800, 0
  %7029 = vmatprep.subr.bf16.mxu0 0
  %7030 = vmatpush1.bf16.msra.mxu0 %v7009
  %7031 = vmatprep.subr.bf16.mxu0 0
  %7032 = vmatpush1.bf16.msra.mxu0 %v7010
  %7033 = vmatprep.subr.bf16.mxu0 0
  %7034 = vmatpush1.bf16.msra.mxu0 %v7011
  %7035 = vmatprep.subr.bf16.mxu0 0
  %7036 = vmatpush1.bf16.msra.mxu0 %v7012
  %7037 = vmatprep.subr.bf16.mxu0 0
  %7038 = vmatpush1.bf16.msra.mxu0 0
  %7039 = vmatprep.subr.bf16.mxu0 0
  %7040 = vmatpush1.bf16.msra.mxu0 0
  %7041 = vmatprep.subr.bf16.mxu0 0
  %7042 = vmatpush1.bf16.msra.mxu0 0
  %7043 = vmatprep.subr.bf16.mxu0 0
  %7044 = vmatpush1.bf16.msra.mxu0 0
  %7045 = vmatprep.subr.bf16.mxu0 0
  %7046 = vmatpush1.bf16.msra.mxu0 0
  %7047 = vmatprep.subr.bf16.mxu0 0
  %7048 = vmatpush1.bf16.msra.mxu0 0
  %7049 = vmatprep.subr.bf16.mxu0 0
  %7050 = vmatpush1.bf16.msra.mxu0 0
  %7051 = vmatprep.subr.bf16.mxu0 0
  %7052 = vmatpush1.bf16.msra.mxu0 0
  %7053 = vmatprep.subr.bf16.mxu0 0
  %7054 = vmatpush1.bf16.msra.mxu0 0
  %7055 = vmatprep.subr.bf16.mxu0 0
  %7056 = vmatpush1.bf16.msra.mxu0 0
  %7057 = vmatprep.subr.bf16.mxu0 0
  %7058 = vmatpush1.bf16.msra.mxu0 0
  %7059 = vmatprep.subr.bf16.mxu0 0
  %7060 = vmatpush1.bf16.msra.mxu0 0
  %7061 = vmatprep.mubr.bf16.mxu0 0
  %7062 = vmatmul.mubr.bf16.gmra.mrb[0].mxu0 %v7017
  %v7063 = vpop.f32.mrb[0].mxu0
  %v7064 = vadd.f32 %v6947, %v7063
  %v7065 = vpop.f32.mrb[0].mxu0
  %v7066 = vpop.f32.mrb[0].mxu0
  %v7067 = vadd.f32 %v6950, %v7066
  %v7068 = vpop.f32.mrb[0].mxu0
  %7069 = vmatprep.mubr.bf16.mxu0 0
  %7070 = vmatmul.mubr.bf16.gmra.mrb[0].mxu0 %v7019
  %v7071 = vpop.f32.mrb[0].mxu0
  %v7072 = vadd.f32 %v6955, %v7071
  %v7073 = vpop.f32.mrb[0].mxu0
  %v7074 = vpop.f32.mrb[0].mxu0
  %v7075 = vadd.f32 %v6958, %v7074
  %v7076 = vpop.f32.mrb[0].mxu0
  %7077 = vmatprep.mubr.bf16.mxu0 0
  %7078 = vmatmul.mubr.bf16.gmra.mrb[0].mxu0 %v7021
  %v7079 = vpop.f32.mrb[0].mxu0
  %v7080 = vadd.f32 %v6963, %v7079
  %v7081 = vpop.f32.mrb[0].mxu0
  %v7082 = vpop.f32.mrb[0].mxu0
  %v7083 = vadd.f32 %v6966, %v7082
  %v7084 = vpop.f32.mrb[0].mxu0
  %7085 = vmatprep.mubr.bf16.mxu0 0
  %7086 = vmatmul.mubr.bf16.gmra.mrb[0].mxu0 %v7023
  %v7087 = vpop.f32.mrb[0].mxu0
  %v7088 = vadd.f32 %v6971, %v7087
  %v7089 = vpop.f32.mrb[0].mxu0
  %v7090 = vpop.f32.mrb[0].mxu0
  %v7091 = vadd.f32 %v6974, %v7090
  %v7092 = vpop.f32.mrb[0].mxu0
  %7093 = vmatprep.mubr.bf16.mxu0 0
  %7094 = vmatmul.mubr.bf16.gmra.mrb[0].mxu0 %v7025
  %v7095 = vpop.f32.mrb[0].mxu0
  %v7096 = vadd.f32 %v6979, %v7095
  %v7097 = vpop.f32.mrb[0].mxu0
  %v7098 = vpop.f32.mrb[0].mxu0
  %v7099 = vadd.f32 %v6982, %v7098
  %v7100 = vpop.f32.mrb[0].mxu0
  %7101 = vmatprep.mubr.bf16.mxu0 0
  %7102 = vmatmul.mubr.bf16.gmra.mrb[0].mxu0 %v7027
  %v7103 = vpop.f32.mrb[0].mxu0
  %v7104 = vadd.f32 %v6987, %v7103
  %v7105 = vpop.f32.mrb[0].mxu0
  %v7106 = vpop.f32.mrb[0].mxu0
  %v7107 = vadd.f32 %v6990, %v7106
  %v7108 = vpop.f32.mrb[0].mxu0
  %7109 = vdwg.mxu0
  %v7110 = vld [vmem:[#allocation3] sm:$0xfe]
  %v7111 = vld [vmem:[%s2925] sm:$0xf]
  %v7112 = vld [vmem:[%s2925 + $0x4] sm:$0xf]
  %v7113 = vld [vmem:[%s2925 + $0x8] sm:$0xf]
  %v7114 = vld [vmem:[%s2925 + $0xc] sm:$0xf]
  %v7115 = vld [vmem:[%s2925 + $0x10] sm:$0xf]
  %v7116 = vld [vmem:[%s2925 + $0x14] sm:$0xf]
  %v7117 = vld [vmem:[%s2925 + $0x18] sm:$0xf]
  %v7118 = vld [vmem:[%s2925 + $0x1c] sm:$0xf]
  %v7126 = vrot.slane %v7110, 1
  %v7127 = vrot.slane %v6796, 1
  %v7128 = vsel %vm2941, %v7126, %v7127
  %v7129 = vrot.slane %v6797, 1
  %v7130 = vsel %vm2941, %v7127, %v7129
  %v7131 = vrot.slane %v6798, 1
  %v7132 = vsel %vm2941, %v7129, %v7131
  %v7133 = vrot.slane %v6799, 1
  %v7134 = vsel %vm2941, %v7131, %v7133
  %v7135 = vrot.slane %v6800, 1
  %v7136 = vsel %vm2941, %v7133, %v7135
  %v7137 = vrot.slane %v6809, 1
  %v7138 = vsel %vm2941, %v7135, %v7137
  %v7147 = vunpack.c.l.b16 %v7111
  %v7148 = vunpack.c.l.b16 %v7112
  %v7149 = vunpack.c.l.b16 %v7113
  %v7150 = vunpack.c.l.b16 %v7114
  %v7151 = vunpack.c.l.b16 %v7115
  %v7152 = vunpack.c.l.b16 %v7116
  %v7153 = vunpack.c.l.b16 %v7117
  %v7154 = vunpack.c.l.b16 %v7118
  %v7155 = vpack.c.b16 %v7148, %v7147
  %v7156 = vpack.c.b16 %v7150, %v7149
  %v7157 = vpack.c.b16 %v7152, %v7151
  %v7158 = vpack.c.b16 %v7154, %v7153
  %v7164 = vsel %vm387, %v7128, 0
  %v7167 = vsel %vm387, %v7130, 0
  %v7170 = vsel %vm387, %v7132, 0
  %v7173 = vsel %vm387, %v7134, 0
  %v7176 = vsel %vm387, %v7136, 0
  %v7179 = vsel %vm387, %v7138, 0
  %7181 = vmatprep.subr.bf16.mxu0 0
  %7182 = vmatpush1.bf16.msra.mxu0 %v7155
  %7183 = vmatprep.subr.bf16.mxu0 0
  %7184 = vmatpush1.bf16.msra.mxu0 %v7156
  %7185 = vmatprep.subr.bf16.mxu0 0
  %7186 = vmatpush1.bf16.msra.mxu0 %v7157
  %7187 = vmatprep.subr.bf16.mxu0 0
  %7188 = vmatpush1.bf16.msra.mxu0 %v7158
  %7189 = vmatprep.subr.bf16.mxu0 0
  %7190 = vmatpush1.bf16.msra.mxu0 0
  %7191 = vmatprep.subr.bf16.mxu0 0
  %7192 = vmatpush1.bf16.msra.mxu0 0
  %7193 = vmatprep.subr.bf16.mxu0 0
  %7194 = vmatpush1.bf16.msra.mxu0 0
  %7195 = vmatprep.subr.bf16.mxu0 0
  %7196 = vmatpush1.bf16.msra.mxu0 0
  %7197 = vmatprep.subr.bf16.mxu0 0
  %7198 = vmatpush1.bf16.msra.mxu0 0
  %7199 = vmatprep.subr.bf16.mxu0 0
  %7200 = vmatpush1.bf16.msra.mxu0 0
  %7201 = vmatprep.subr.bf16.mxu0 0
  %7202 = vmatpush1.bf16.msra.mxu0 0
  %7203 = vmatprep.subr.bf16.mxu0 0
  %7204 = vmatpush1.bf16.msra.mxu0 0
  %7205 = vmatprep.subr.bf16.mxu0 0
  %7206 = vmatpush1.bf16.msra.mxu0 0
  %7207 = vmatprep.subr.bf16.mxu0 0
  %7208 = vmatpush1.bf16.msra.mxu0 0
  %7209 = vmatprep.subr.bf16.mxu0 0
  %7210 = vmatpush1.bf16.msra.mxu0 0
  %7211 = vmatprep.subr.bf16.mxu0 0
  %7212 = vmatpush1.bf16.msra.mxu0 0
  %7213 = vmatprep.mubr.bf16.mxu0 0
  %7214 = vmatmul.mubr.bf16.gmra.mrb[0].mxu0 %v7164
  %v7215 = vpop.f32.mrb[0].mxu0
  %v7216 = vadd.f32 0.0, %v7215
  %v7217 = vpop.f32.mrb[0].mxu0
  %v7218 = vpop.f32.mrb[0].mxu0
  %v7219 = vadd.f32 0.0, %v7218
  %v7220 = vpop.f32.mrb[0].mxu0
  %7221 = vmatprep.mubr.bf16.mxu0 0
  %7222 = vmatmul.mubr.bf16.gmra.mrb[0].mxu0 %v7167
  %v7223 = vpop.f32.mrb[0].mxu0
  %v7224 = vadd.f32 0.0, %v7223
  %v7225 = vpop.f32.mrb[0].mxu0
  %v7226 = vpop.f32.mrb[0].mxu0
  %v7227 = vadd.f32 0.0, %v7226
  %v7228 = vpop.f32.mrb[0].mxu0
  %7229 = vmatprep.mubr.bf16.mxu0 0
  %7230 = vmatmul.mubr.bf16.gmra.mrb[0].mxu0 %v7170
  %v7231 = vpop.f32.mrb[0].mxu0
  %v7232 = vadd.f32 0.0, %v7231
  %v7233 = vpop.f32.mrb[0].mxu0
  %v7234 = vpop.f32.mrb[0].mxu0
  %v7235 = vadd.f32 0.0, %v7234
  %v7236 = vpop.f32.mrb[0].mxu0
  %7237 = vmatprep.mubr.bf16.mxu0 0
  %7238 = vmatmul.mubr.bf16.gmra.mrb[0].mxu0 %v7173
  %v7239 = vpop.f32.mrb[0].mxu0
  %v7240 = vadd.f32 0.0, %v7239
  %v7241 = vpop.f32.mrb[0].mxu0
  %v7242 = vpop.f32.mrb[0].mxu0
  %v7243 = vadd.f32 0.0, %v7242
  %v7244 = vpop.f32.mrb[0].mxu0
  %7245 = vmatprep.mubr.bf16.mxu0 0
  %7246 = vmatmul.mubr.bf16.gmra.mrb[0].mxu0 %v7176
  %v7247 = vpop.f32.mrb[0].mxu0
  %v7248 = vadd.f32 0.0, %v7247
  %v7249 = vpop.f32.mrb[0].mxu0
  %v7250 = vpop.f32.mrb[0].mxu0
  %v7251 = vadd.f32 0.0, %v7250
  %v7252 = vpop.f32.mrb[0].mxu0
  %7253 = vmatprep.mubr.bf16.mxu0 0
  %7254 = vmatmul.mubr.bf16.gmra.mrb[0].mxu0 %v7179
  %v7255 = vpop.f32.mrb[0].mxu0
  %v7256 = vadd.f32 0.0, %v7255
  %v7257 = vpop.f32.mrb[0].mxu0
  %v7258 = vpop.f32.mrb[0].mxu0
  %v7259 = vadd.f32 0.0, %v7258
  %v7260 = vpop.f32.mrb[0].mxu0
  %7261 = vdwg.mxu0
  %v7262 = vadd.f32 %v7064, %v7216
  %v7263 = vadd.f32 %v7067, %v7219
  %v7264 = vadd.f32 %v7072, %v7224
  %v7265 = vadd.f32 %v7075, %v7227
  %v7266 = vadd.f32 %v7080, %v7232
  %v7267 = vadd.f32 %v7083, %v7235
  %v7268 = vadd.f32 %v7088, %v7240
  %v7269 = vadd.f32 %v7091, %v7243
  %v7270 = vadd.f32 %v7096, %v7248
  %v7271 = vadd.f32 %v7099, %v7251
  %v7272 = vadd.f32 %v7104, %v7256
  %v7273 = vadd.f32 %v7107, %v7259
  %v7274 = vld [vmem:[#allocation3] sm:$0xc0]
  %v7275 = vld [vmem:[#allocation3 + $0x30] sm:$0x3f]
  %v7276 = vld [vmem:[%s3092] sm:$0xf]
  %v7277 = vld [vmem:[%s3092 + $0x4] sm:$0xf]
  %v7278 = vld [vmem:[%s3092 + $0x8] sm:$0xf]
  %v7279 = vld [vmem:[%s3092 + $0xc] sm:$0xf]
  %v7280 = vld [vmem:[%s3092 + $0x10] sm:$0xf]
  %v7281 = vld [vmem:[%s3092 + $0x14] sm:$0xf]
  %v7282 = vld [vmem:[%s3092 + $0x18] sm:$0xf]
  %v7283 = vld [vmem:[%s3092 + $0x1c] sm:$0xf]
  %v7286 = vrot.slane %v7274, 6
  %v7287 = vrot.slane %v6796, 6
  %v7288 = vsel %vm2103, %v7286, %v7287
  %v7289 = vrot.slane %v6797, 6
  %v7290 = vsel %vm2103, %v7287, %v7289
  %v7291 = vrot.slane %v6798, 6
  %v7292 = vsel %vm2103, %v7289, %v7291
  %v7293 = vrot.slane %v6799, 6
  %v7294 = vsel %vm2103, %v7291, %v7293
  %v7295 = vrot.slane %v6800, 6
  %v7296 = vsel %vm2103, %v7293, %v7295
  %v7297 = vrot.slane %v7275, 6
  %v7298 = vsel %vm2103, %v7295, %v7297
  %v7307 = vunpack.c.l.b16 %v7276
  %v7308 = vunpack.c.l.b16 %v7277
  %v7309 = vunpack.c.l.b16 %v7278
  %v7310 = vunpack.c.l.b16 %v7279
  %v7311 = vunpack.c.l.b16 %v7280
  %v7312 = vunpack.c.l.b16 %v7281
  %v7313 = vunpack.c.l.b16 %v7282
  %v7314 = vunpack.c.l.b16 %v7283
  %v7315 = vpack.c.b16 %v7308, %v7307
  %v7316 = vpack.c.b16 %v7310, %v7309
  %v7317 = vpack.c.b16 %v7312, %v7311
  %v7318 = vpack.c.b16 %v7314, %v7313
  %v7324 = vsel %vm387, %v7288, 0
  %v7327 = vsel %vm387, %v7290, 0
  %v7330 = vsel %vm387, %v7292, 0
  %v7333 = vsel %vm387, %v7294, 0
  %v7336 = vsel %vm387, %v7296, 0
  %v7339 = vsel %vm387, %v7298, 0
  %7341 = vmatprep.subr.bf16.mxu0 0
  %7342 = vmatpush1.bf16.msra.mxu0 %v7315
  %7343 = vmatprep.subr.bf16.mxu0 0
  %7344 = vmatpush1.bf16.msra.mxu0 %v7316
  %7345 = vmatprep.subr.bf16.mxu0 0
  %7346 = vmatpush1.bf16.msra.mxu0 %v7317
  %7347 = vmatprep.subr.bf16.mxu0 0
  %7348 = vmatpush1.bf16.msra.mxu0 %v7318
  %7349 = vmatprep.subr.bf16.mxu0 0
  %7350 = vmatpush1.bf16.msra.mxu0 0
  %7351 = vmatprep.subr.bf16.mxu0 0
  %7352 = vmatpush1.bf16.msra.mxu0 0
  %7353 = vmatprep.subr.bf16.mxu0 0
  %7354 = vmatpush1.bf16.msra.mxu0 0
  %7355 = vmatprep.subr.bf16.mxu0 0
  %7356 = vmatpush1.bf16.msra.mxu0 0
  %7357 = vmatprep.subr.bf16.mxu0 0
  %7358 = vmatpush1.bf16.msra.mxu0 0
  %7359 = vmatprep.subr.bf16.mxu0 0
  %7360 = vmatpush1.bf16.msra.mxu0 0
  %7361 = vmatprep.subr.bf16.mxu0 0
  %7362 = vmatpush1.bf16.msra.mxu0 0
  %7363 = vmatprep.subr.bf16.mxu0 0
  %7364 = vmatpush1.bf16.msra.mxu0 0
  %7365 = vmatprep.subr.bf16.mxu0 0
  %7366 = vmatpush1.bf16.msra.mxu0 0
  %7367 = vmatprep.subr.bf16.mxu0 0
  %7368 = vmatpush1.bf16.msra.mxu0 0
  %7369 = vmatprep.subr.bf16.mxu0 0
  %7370 = vmatpush1.bf16.msra.mxu0 0
  %7371 = vmatprep.subr.bf16.mxu0 0
  %7372 = vmatpush1.bf16.msra.mxu0 0
  %7373 = vmatprep.mubr.bf16.mxu0 0
  %7374 = vmatmul.mubr.bf16.gmra.mrb[0].mxu0 %v7324
  %v7375 = vpop.f32.mrb[0].mxu0
  %v7376 = vadd.f32 0.0, %v7375
  %v7377 = vpop.f32.mrb[0].mxu0
  %v7378 = vpop.f32.mrb[0].mxu0
  %v7379 = vadd.f32 0.0, %v7378
  %v7380 = vpop.f32.mrb[0].mxu0
  %7381 = vmatprep.mubr.bf16.mxu0 0
  %7382 = vmatmul.mubr.bf16.gmra.mrb[0].mxu0 %v7327
  %v7383 = vpop.f32.mrb[0].mxu0
  %v7384 = vadd.f32 0.0, %v7383
  %v7385 = vpop.f32.mrb[0].mxu0
  %v7386 = vpop.f32.mrb[0].mxu0
  %v7387 = vadd.f32 0.0, %v7386
  %v7388 = vpop.f32.mrb[0].mxu0
  %7389 = vmatprep.mubr.bf16.mxu0 0
  %7390 = vmatmul.mubr.bf16.gmra.mrb[0].mxu0 %v7330
  %v7391 = vpop.f32.mrb[0].mxu0
  %v7392 = vadd.f32 0.0, %v7391
  %v7393 = vpop.f32.mrb[0].mxu0
  %v7394 = vpop.f32.mrb[0].mxu0
  %v7395 = vadd.f32 0.0, %v7394
  %v7396 = vpop.f32.mrb[0].mxu0
  %7397 = vmatprep.mubr.bf16.mxu0 0
  %7398 = vmatmul.mubr.bf16.gmra.mrb[0].mxu0 %v7333
  %v7399 = vpop.f32.mrb[0].mxu0
  %v7400 = vadd.f32 0.0, %v7399
  %v7401 = vpop.f32.mrb[0].mxu0
  %v7402 = vpop.f32.mrb[0].mxu0
  %v7403 = vadd.f32 0.0, %v7402
  %v7404 = vpop.f32.mrb[0].mxu0
  %7405 = vmatprep.mubr.bf16.mxu0 0
  %7406 = vmatmul.mubr.bf16.gmra.mrb[0].mxu0 %v7336
  %v7407 = vpop.f32.mrb[0].mxu0
  %v7408 = vadd.f32 0.0, %v7407
  %v7409 = vpop.f32.mrb[0].mxu0
  %v7410 = vpop.f32.mrb[0].mxu0
  %v7411 = vadd.f32 0.0, %v7410
  %v7412 = vpop.f32.mrb[0].mxu0
  %7413 = vmatprep.mubr.bf16.mxu0 0
  %7414 = vmatmul.mubr.bf16.gmra.mrb[0].mxu0 %v7339
  %v7415 = vpop.f32.mrb[0].mxu0
  %v7416 = vadd.f32 0.0, %v7415
  %v7417 = vpop.f32.mrb[0].mxu0
  %v7418 = vpop.f32.mrb[0].mxu0
  %v7419 = vadd.f32 0.0, %v7418
  %v7420 = vpop.f32.mrb[0].mxu0
  %7421 = vdwg.mxu0
  %v7422 = vadd.f32 %v7262, %v7376
  %v7423 = vadd.f32 %v7263, %v7379
  %v7424 = vadd.f32 %v7264, %v7384
  %v7425 = vadd.f32 %v7265, %v7387
  %v7426 = vadd.f32 %v7266, %v7392
  %v7427 = vadd.f32 %v7267, %v7395
  %v7428 = vadd.f32 %v7268, %v7400
  %v7429 = vadd.f32 %v7269, %v7403
  %v7430 = vadd.f32 %v7270, %v7408
  %v7431 = vadd.f32 %v7271, %v7411
  %v7432 = vadd.f32 %v7272, %v7416
  %v7433 = vadd.f32 %v7273, %v7419
  %v7434 = vld [vmem:[#allocation3 + $0x30] sm:$0x7f]
  %v7435 = vld [vmem:[%s3252] sm:$0xf]
  %v7436 = vld [vmem:[%s3252 + $0x4] sm:$0xf]
  %v7437 = vld [vmem:[%s3252 + $0x8] sm:$0xf]
  %v7438 = vld [vmem:[%s3252 + $0xc] sm:$0xf]
  %v7439 = vld [vmem:[%s3252 + $0x10] sm:$0xf]
  %v7440 = vld [vmem:[%s3252 + $0x14] sm:$0xf]
  %v7441 = vld [vmem:[%s3252 + $0x18] sm:$0xf]
  %v7442 = vld [vmem:[%s3252 + $0x1c] sm:$0xf]
  %v7444 = vshrl.u32 %v7274, 16
  %v7446 = vrot.slane %v7444, 6
  %v7447 = vshll.u32 %v7274, 16
  %v7449 = vrot.slane %v7447, 7
  %v7450 = vor.u32 %v7446, %v7449
  %v7451 = vrot.slane %v6830, 6
  %v7452 = vrot.slane %v6826, 7
  %v7453 = vor.u32 %v7451, %v7452
  %v7454 = vsel %vm2306, %v7450, %v7453
  %v7455 = vrot.slane %v6838, 6
  %v7456 = vrot.slane %v6834, 7
  %v7457 = vor.u32 %v7455, %v7456
  %v7458 = vsel %vm2306, %v7453, %v7457
  %v7459 = vrot.slane %v6846, 6
  %v7460 = vrot.slane %v6842, 7
  %v7461 = vor.u32 %v7459, %v7460
  %v7462 = vsel %vm2306, %v7457, %v7461
  %v7463 = vrot.slane %v6854, 6
  %v7464 = vrot.slane %v6850, 7
  %v7465 = vor.u32 %v7463, %v7464
  %v7466 = vsel %vm2306, %v7461, %v7465
  %v7467 = vrot.slane %v6862, 6
  %v7468 = vrot.slane %v6858, 7
  %v7469 = vor.u32 %v7467, %v7468
  %v7470 = vsel %vm2306, %v7465, %v7469
  %v7472 = vshrl.u32 %v7434, 16
  %v7474 = vrot.slane %v7472, 6
  %v7475 = vshll.u32 %v7434, 16
  %v7477 = vrot.slane %v7475, 7
  %v7478 = vor.u32 %v7474, %v7477
  %v7479 = vsel %vm2306, %v7469, %v7478
  %v7488 = vunpack.c.l.b16 %v7435
  %v7489 = vunpack.c.l.b16 %v7436
  %v7490 = vunpack.c.l.b16 %v7437
  %v7491 = vunpack.c.l.b16 %v7438
  %v7492 = vunpack.c.l.b16 %v7439
  %v7493 = vunpack.c.l.b16 %v7440
  %v7494 = vunpack.c.l.b16 %v7441
  %v7495 = vunpack.c.l.b16 %v7442
  %v7496 = vpack.c.b16 %v7489, %v7488
  %v7497 = vpack.c.b16 %v7491, %v7490
  %v7498 = vpack.c.b16 %v7493, %v7492
  %v7499 = vpack.c.b16 %v7495, %v7494
  %v7505 = vsel %vm387, %v7454, 0
  %v7508 = vsel %vm387, %v7458, 0
  %v7511 = vsel %vm387, %v7462, 0
  %v7514 = vsel %vm387, %v7466, 0
  %v7517 = vsel %vm387, %v7470, 0
  %v7520 = vsel %vm387, %v7479, 0
  %7522 = vmatprep.subr.bf16.mxu0 0
  %7523 = vmatpush1.bf16.msra.mxu0 %v7496
  %7524 = vmatprep.subr.bf16.mxu0 0
  %7525 = vmatpush1.bf16.msra.mxu0 %v7497
  %7526 = vmatprep.subr.bf16.mxu0 0
  %7527 = vmatpush1.bf16.msra.mxu0 %v7498
  %7528 = vmatprep.subr.bf16.mxu0 0
  %7529 = vmatpush1.bf16.msra.mxu0 %v7499
  %7530 = vmatprep.subr.bf16.mxu0 0
  %7531 = vmatpush1.bf16.msra.mxu0 0
  %7532 = vmatprep.subr.bf16.mxu0 0
  %7533 = vmatpush1.bf16.msra.mxu0 0
  %7534 = vmatprep.subr.bf16.mxu0 0
  %7535 = vmatpush1.bf16.msra.mxu0 0
  %7536 = vmatprep.subr.bf16.mxu0 0
  %7537 = vmatpush1.bf16.msra.mxu0 0
  %7538 = vmatprep.subr.bf16.mxu0 0
  %7539 = vmatpush1.bf16.msra.mxu0 0
  %7540 = vmatprep.subr.bf16.mxu0 0
  %7541 = vmatpush1.bf16.msra.mxu0 0
  %7542 = vmatprep.subr.bf16.mxu0 0
  %7543 = vmatpush1.bf16.msra.mxu0 0
  %7544 = vmatprep.subr.bf16.mxu0 0
  %7545 = vmatpush1.bf16.msra.mxu0 0
  %7546 = vmatprep.subr.bf16.mxu0 0
  %7547 = vmatpush1.bf16.msra.mxu0 0
  %7548 = vmatprep.subr.bf16.mxu0 0
  %7549 = vmatpush1.bf16.msra.mxu0 0
  %7550 = vmatprep.subr.bf16.mxu0 0
  %7551 = vmatpush1.bf16.msra.mxu0 0
  %7552 = vmatprep.subr.bf16.mxu0 0
  %7553 = vmatpush1.bf16.msra.mxu0 0
  %7554 = vmatprep.mubr.bf16.mxu0 0
  %7555 = vmatmul.mubr.bf16.gmra.mrb[0].mxu0 %v7505
  %v7556 = vpop.f32.mrb[0].mxu0
  %v7557 = vadd.f32 0.0, %v7556
  %v7558 = vpop.f32.mrb[0].mxu0
  %v7559 = vpop.f32.mrb[0].mxu0
  %v7560 = vadd.f32 0.0, %v7559
  %v7561 = vpop.f32.mrb[0].mxu0
  %7562 = vmatprep.mubr.bf16.mxu0 0
  %7563 = vmatmul.mubr.bf16.gmra.mrb[0].mxu0 %v7508
  %v7564 = vpop.f32.mrb[0].mxu0
  %v7565 = vadd.f32 0.0, %v7564
  %v7566 = vpop.f32.mrb[0].mxu0
  %v7567 = vpop.f32.mrb[0].mxu0
  %v7568 = vadd.f32 0.0, %v7567
  %v7569 = vpop.f32.mrb[0].mxu0
  %7570 = vmatprep.mubr.bf16.mxu0 0
  %7571 = vmatmul.mubr.bf16.gmra.mrb[0].mxu0 %v7511
  %v7572 = vpop.f32.mrb[0].mxu0
  %v7573 = vadd.f32 0.0, %v7572
  %v7574 = vpop.f32.mrb[0].mxu0
  %v7575 = vpop.f32.mrb[0].mxu0
  %v7576 = vadd.f32 0.0, %v7575
  %v7577 = vpop.f32.mrb[0].mxu0
  %7578 = vmatprep.mubr.bf16.mxu0 0
  %7579 = vmatmul.mubr.bf16.gmra.mrb[0].mxu0 %v7514
  %v7580 = vpop.f32.mrb[0].mxu0
  %v7581 = vadd.f32 0.0, %v7580
  %v7582 = vpop.f32.mrb[0].mxu0
  %v7583 = vpop.f32.mrb[0].mxu0
  %v7584 = vadd.f32 0.0, %v7583
  %v7585 = vpop.f32.mrb[0].mxu0
  %7586 = vmatprep.mubr.bf16.mxu0 0
  %7587 = vmatmul.mubr.bf16.gmra.mrb[0].mxu0 %v7517
  %v7588 = vpop.f32.mrb[0].mxu0
  %v7589 = vadd.f32 0.0, %v7588
  %v7590 = vpop.f32.mrb[0].mxu0
  %v7591 = vpop.f32.mrb[0].mxu0
  %v7592 = vadd.f32 0.0, %v7591
  %v7593 = vpop.f32.mrb[0].mxu0
  %7594 = vmatprep.mubr.bf16.mxu0 0
  %7595 = vmatmul.mubr.bf16.gmra.mrb[0].mxu0 %v7520
  %v7596 = vpop.f32.mrb[0].mxu0
  %v7597 = vadd.f32 0.0, %v7596
  %v7598 = vpop.f32.mrb[0].mxu0
  %v7599 = vpop.f32.mrb[0].mxu0
  %v7600 = vadd.f32 0.0, %v7599
  %v7601 = vpop.f32.mrb[0].mxu0
  %7602 = vdwg.mxu0
  %v7603 = vadd.f32 %v7422, %v7557
  %v7604 = vadd.f32 %v7423, %v7560
  %v7605 = vadd.f32 %v7424, %v7565
  %v7606 = vadd.f32 %v7425, %v7568
  %v7607 = vadd.f32 %v7426, %v7573
  %v7608 = vadd.f32 %v7427, %v7576
  %v7609 = vadd.f32 %v7428, %v7581
  %v7610 = vadd.f32 %v7429, %v7584
  %v7611 = vadd.f32 %v7430, %v7589
  %v7612 = vadd.f32 %v7431, %v7592
  %v7613 = vadd.f32 %v7432, %v7597
  %v7614 = vadd.f32 %v7433, %v7600
  %v7615 = vld [vmem:[#allocation3] sm:$0x80]
  %v7616 = vld [vmem:[%s3434] sm:$0xf]
  %v7617 = vld [vmem:[%s3434 + $0x4] sm:$0xf]
  %v7618 = vld [vmem:[%s3434 + $0x8] sm:$0xf]
  %v7619 = vld [vmem:[%s3434 + $0xc] sm:$0xf]
  %v7620 = vld [vmem:[%s3434 + $0x10] sm:$0xf]
  %v7621 = vld [vmem:[%s3434 + $0x14] sm:$0xf]
  %v7622 = vld [vmem:[%s3434 + $0x18] sm:$0xf]
  %v7623 = vld [vmem:[%s3434 + $0x1c] sm:$0xf]
  %v7626 = vrot.slane %v7615, 7
  %v7627 = vrot.slane %v6796, 7
  %v7628 = vsel %vm3445, %v7626, %v7627
  %v7629 = vrot.slane %v6797, 7
  %v7630 = vsel %vm3445, %v7627, %v7629
  %v7631 = vrot.slane %v6798, 7
  %v7632 = vsel %vm3445, %v7629, %v7631
  %v7633 = vrot.slane %v6799, 7
  %v7634 = vsel %vm3445, %v7631, %v7633
  %v7635 = vrot.slane %v6800, 7
  %v7636 = vsel %vm3445, %v7633, %v7635
  %v7637 = vrot.slane %v7434, 7
  %v7638 = vsel %vm3445, %v7635, %v7637
  %v7647 = vunpack.c.l.b16 %v7616
  %v7648 = vunpack.c.l.b16 %v7617
  %v7649 = vunpack.c.l.b16 %v7618
  %v7650 = vunpack.c.l.b16 %v7619
  %v7651 = vunpack.c.l.b16 %v7620
  %v7652 = vunpack.c.l.b16 %v7621
  %v7653 = vunpack.c.l.b16 %v7622
  %v7654 = vunpack.c.l.b16 %v7623
  %v7655 = vpack.c.b16 %v7648, %v7647
  %v7656 = vpack.c.b16 %v7650, %v7649
  %v7657 = vpack.c.b16 %v7652, %v7651
  %v7658 = vpack.c.b16 %v7654, %v7653
  %v7664 = vsel %vm387, %v7628, 0
  %v7667 = vsel %vm387, %v7630, 0
  %v7670 = vsel %vm387, %v7632, 0
  %v7673 = vsel %vm387, %v7634, 0
  %v7676 = vsel %vm387, %v7636, 0
  %v7679 = vsel %vm387, %v7638, 0
  %7681 = vmatprep.subr.bf16.mxu0 0
  %7682 = vmatpush1.bf16.msra.mxu0 %v7655
  %7683 = vmatprep.subr.bf16.mxu0 0
  %7684 = vmatpush1.bf16.msra.mxu0 %v7656
  %7685 = vmatprep.subr.bf16.mxu0 0
  %7686 = vmatpush1.bf16.msra.mxu0 %v7657
  %7687 = vmatprep.subr.bf16.mxu0 0
  %7688 = vmatpush1.bf16.msra.mxu0 %v7658
  %7689 = vmatprep.subr.bf16.mxu0 0
  %7690 = vmatpush1.bf16.msra.mxu0 0
  %7691 = vmatprep.subr.bf16.mxu0 0
  %7692 = vmatpush1.bf16.msra.mxu0 0
  %7693 = vmatprep.subr.bf16.mxu0 0
  %7694 = vmatpush1.bf16.msra.mxu0 0
  %7695 = vmatprep.subr.bf16.mxu0 0
  %7696 = vmatpush1.bf16.msra.mxu0 0
  %7697 = vmatprep.subr.bf16.mxu0 0
  %7698 = vmatpush1.bf16.msra.mxu0 0
  %7699 = vmatprep.subr.bf16.mxu0 0
  %7700 = vmatpush1.bf16.msra.mxu0 0
  %7701 = vmatprep.subr.bf16.mxu0 0
  %7702 = vmatpush1.bf16.msra.mxu0 0
  %7703 = vmatprep.subr.bf16.mxu0 0
  %7704 = vmatpush1.bf16.msra.mxu0 0
  %7705 = vmatprep.subr.bf16.mxu0 0
  %7706 = vmatpush1.bf16.msra.mxu0 0
  %7707 = vmatprep.subr.bf16.mxu0 0
  %7708 = vmatpush1.bf16.msra.mxu0 0
  %7709 = vmatprep.subr.bf16.mxu0 0
  %7710 = vmatpush1.bf16.msra.mxu0 0
  %7711 = vmatprep.subr.bf16.mxu0 0
  %7712 = vmatpush1.bf16.msra.mxu0 0
  %7713 = vmatprep.mubr.bf16.mxu0 0
  %7714 = vmatmul.mubr.bf16.gmra.mrb[0].mxu0 %v7664
  %v7715 = vpop.f32.mrb[0].mxu0
  %v7716 = vadd.f32 0.0, %v7715
  %v7717 = vpop.f32.mrb[0].mxu0
  %v7718 = vpop.f32.mrb[0].mxu0
  %v7719 = vadd.f32 0.0, %v7718
  %v7720 = vpop.f32.mrb[0].mxu0
  %7721 = vmatprep.mubr.bf16.mxu0 0
  %7722 = vmatmul.mubr.bf16.gmra.mrb[0].mxu0 %v7667
  %v7723 = vpop.f32.mrb[0].mxu0
  %v7724 = vadd.f32 0.0, %v7723
  %v7725 = vpop.f32.mrb[0].mxu0
  %v7726 = vpop.f32.mrb[0].mxu0
  %v7727 = vadd.f32 0.0, %v7726
  %v7728 = vpop.f32.mrb[0].mxu0
  %7729 = vmatprep.mubr.bf16.mxu0 0
  %7730 = vmatmul.mubr.bf16.gmra.mrb[0].mxu0 %v7670
  %v7731 = vpop.f32.mrb[0].mxu0
  %v7732 = vadd.f32 0.0, %v7731
  %v7733 = vpop.f32.mrb[0].mxu0
  %v7734 = vpop.f32.mrb[0].mxu0
  %v7735 = vadd.f32 0.0, %v7734
  %v7736 = vpop.f32.mrb[0].mxu0
  %7737 = vmatprep.mubr.bf16.mxu0 0
  %7738 = vmatmul.mubr.bf16.gmra.mrb[0].mxu0 %v7673
  %v7739 = vpop.f32.mrb[0].mxu0
  %v7740 = vadd.f32 0.0, %v7739
  %v7741 = vpop.f32.mrb[0].mxu0
  %v7742 = vpop.f32.mrb[0].mxu0
  %v7743 = vadd.f32 0.0, %v7742
  %v7744 = vpop.f32.mrb[0].mxu0
  %7745 = vmatprep.mubr.bf16.mxu0 0
  %7746 = vmatmul.mubr.bf16.gmra.mrb[0].mxu0 %v7676
  %v7747 = vpop.f32.mrb[0].mxu0
  %v7748 = vadd.f32 0.0, %v7747
  %v7749 = vpop.f32.mrb[0].mxu0
  %v7750 = vpop.f32.mrb[0].mxu0
  %v7751 = vadd.f32 0.0, %v7750
  %v7752 = vpop.f32.mrb[0].mxu0
  %7753 = vmatprep.mubr.bf16.mxu0 0
  %7754 = vmatmul.mubr.bf16.gmra.mrb[0].mxu0 %v7679
  %v7755 = vpop.f32.mrb[0].mxu0
  %v7756 = vadd.f32 0.0, %v7755
  %v7757 = vpop.f32.mrb[0].mxu0
  %v7758 = vpop.f32.mrb[0].mxu0
  %v7759 = vadd.f32 0.0, %v7758
  %v7760 = vpop.f32.mrb[0].mxu0
  %7761 = vdwg.mxu0
  %v7762 = vadd.f32 %v7603, %v7716
  %v7763 = vadd.f32 %v7604, %v7719
  %v7764 = vadd.f32 %v7605, %v7724
  %v7765 = vadd.f32 %v7606, %v7727
  %v7766 = vadd.f32 %v7607, %v7732
  %v7767 = vadd.f32 %v7608, %v7735
  %v7768 = vadd.f32 %v7609, %v7740
  %v7769 = vadd.f32 %v7610, %v7743
  %v7770 = vadd.f32 %v7611, %v7748
  %v7771 = vadd.f32 %v7612, %v7751
  %v7772 = vadd.f32 %v7613, %v7756
  %v7773 = vadd.f32 %v7614, %v7759
  %v7774 = vld [vmem:[#allocation3 + $0x8] sm:$0xf0]
  %v7775 = vld [vmem:[#allocation3 + $0x10] sm:$0xff]
  %v7776 = vld [vmem:[#allocation3 + $0x18] sm:$0xff]
  %v7777 = vld [vmem:[#allocation3 + $0x20] sm:$0xff]
  %v7778 = vld [vmem:[#allocation3 + $0x28] sm:$0xff]
  %v7779 = vld [vmem:[#allocation3 + $0x30] sm:$0xff]
  %v7780 = vld [vmem:[#allocation3 + $0x38] sm:$0xf]
  %v7781 = vld [vmem:[%s3601] sm:$0xf]
  %v7782 = vld [vmem:[%s3601 + $0x4] sm:$0xf]
  %v7783 = vld [vmem:[%s3601 + $0x8] sm:$0xf]
  %v7784 = vld [vmem:[%s3601 + $0xc] sm:$0xf]
  %v7785 = vld [vmem:[%s3601 + $0x10] sm:$0xf]
  %v7786 = vld [vmem:[%s3601 + $0x14] sm:$0xf]
  %v7787 = vld [vmem:[%s3601 + $0x18] sm:$0xf]
  %v7788 = vld [vmem:[%s3601 + $0x1c] sm:$0xf]
  %v7796 = vrot.slane %v7774, 4
  %v7797 = vrot.slane %v7775, 4
  %v7798 = vsel %vm3617, %v7796, %v7797
  %v7799 = vrot.slane %v7776, 4
  %v7800 = vsel %vm3617, %v7797, %v7799
  %v7801 = vrot.slane %v7777, 4
  %v7802 = vsel %vm3617, %v7799, %v7801
  %v7803 = vrot.slane %v7778, 4
  %v7804 = vsel %vm3617, %v7801, %v7803
  %v7805 = vrot.slane %v7779, 4
  %v7806 = vsel %vm3617, %v7803, %v7805
  %v7807 = vrot.slane %v7780, 4
  %v7808 = vsel %vm3617, %v7805, %v7807
  %v7817 = vunpack.c.l.b16 %v7781
  %v7818 = vunpack.c.l.b16 %v7782
  %v7819 = vunpack.c.l.b16 %v7783
  %v7820 = vunpack.c.l.b16 %v7784
  %v7821 = vunpack.c.l.b16 %v7785
  %v7822 = vunpack.c.l.b16 %v7786
  %v7823 = vunpack.c.l.b16 %v7787
  %v7824 = vunpack.c.l.b16 %v7788
  %v7825 = vpack.c.b16 %v7818, %v7817
  %v7826 = vpack.c.b16 %v7820, %v7819
  %v7827 = vpack.c.b16 %v7822, %v7821
  %v7828 = vpack.c.b16 %v7824, %v7823
  %v7834 = vsel %vm387, %v7798, 0
  %v7837 = vsel %vm387, %v7800, 0
  %v7840 = vsel %vm387, %v7802, 0
  %v7843 = vsel %vm387, %v7804, 0
  %v7846 = vsel %vm387, %v7806, 0
  %v7849 = vsel %vm387, %v7808, 0
  %7851 = vmatprep.subr.bf16.mxu0 0
  %7852 = vmatpush1.bf16.msra.mxu0 %v7825
  %7853 = vmatprep.subr.bf16.mxu0 0
  %7854 = vmatpush1.bf16.msra.mxu0 %v7826
  %7855 = vmatprep.subr.bf16.mxu0 0
  %7856 = vmatpush1.bf16.msra.mxu0 %v7827
  %7857 = vmatprep.subr.bf16.mxu0 0
  %7858 = vmatpush1.bf16.msra.mxu0 %v7828
  %7859 = vmatprep.subr.bf16.mxu0 0
  %7860 = vmatpush1.bf16.msra.mxu0 0
  %7861 = vmatprep.subr.bf16.mxu0 0
  %7862 = vmatpush1.bf16.msra.mxu0 0
  %7863 = vmatprep.subr.bf16.mxu0 0
  %7864 = vmatpush1.bf16.msra.mxu0 0
  %7865 = vmatprep.subr.bf16.mxu0 0
  %7866 = vmatpush1.bf16.msra.mxu0 0
  %7867 = vmatprep.subr.bf16.mxu0 0
  %7868 = vmatpush1.bf16.msra.mxu0 0
  %7869 = vmatprep.subr.bf16.mxu0 0
  %7870 = vmatpush1.bf16.msra.mxu0 0
  %7871 = vmatprep.subr.bf16.mxu0 0
  %7872 = vmatpush1.bf16.msra.mxu0 0
  %7873 = vmatprep.subr.bf16.mxu0 0
  %7874 = vmatpush1.bf16.msra.mxu0 0
  %7875 = vmatprep.subr.bf16.mxu0 0
  %7876 = vmatpush1.bf16.msra.mxu0 0
  %7877 = vmatprep.subr.bf16.mxu0 0
  %7878 = vmatpush1.bf16.msra.mxu0 0
  %7879 = vmatprep.subr.bf16.mxu0 0
  %7880 = vmatpush1.bf16.msra.mxu0 0
  %7881 = vmatprep.subr.bf16.mxu0 0
  %7882 = vmatpush1.bf16.msra.mxu0 0
  %7883 = vmatprep.mubr.bf16.mxu0 0
  %7884 = vmatmul.mubr.bf16.gmra.mrb[0].mxu0 %v7834
  %v7885 = vpop.f32.mrb[0].mxu0
  %v7886 = vadd.f32 0.0, %v7885
  %v7887 = vpop.f32.mrb[0].mxu0
  %v7888 = vpop.f32.mrb[0].mxu0
  %v7889 = vadd.f32 0.0, %v7888
  %v7890 = vpop.f32.mrb[0].mxu0
  %7891 = vmatprep.mubr.bf16.mxu0 0
  %7892 = vmatmul.mubr.bf16.gmra.mrb[0].mxu0 %v7837
  %v7893 = vpop.f32.mrb[0].mxu0
  %v7894 = vadd.f32 0.0, %v7893
  %v7895 = vpop.f32.mrb[0].mxu0
  %v7896 = vpop.f32.mrb[0].mxu0
  %v7897 = vadd.f32 0.0, %v7896
  %v7898 = vpop.f32.mrb[0].mxu0
  %7899 = vmatprep.mubr.bf16.mxu0 0
  %7900 = vmatmul.mubr.bf16.gmra.mrb[0].mxu0 %v7840
  %v7901 = vpop.f32.mrb[0].mxu0
  %v7902 = vadd.f32 0.0, %v7901
  %v7903 = vpop.f32.mrb[0].mxu0
  %v7904 = vpop.f32.mrb[0].mxu0
  %v7905 = vadd.f32 0.0, %v7904
  %v7906 = vpop.f32.mrb[0].mxu0
  %7907 = vmatprep.mubr.bf16.mxu0 0
  %7908 = vmatmul.mubr.bf16.gmra.mrb[0].mxu0 %v7843
  %v7909 = vpop.f32.mrb[0].mxu0
  %v7910 = vadd.f32 0.0, %v7909
  %v7911 = vpop.f32.mrb[0].mxu0
  %v7912 = vpop.f32.mrb[0].mxu0
  %v7913 = vadd.f32 0.0, %v7912
  %v7914 = vpop.f32.mrb[0].mxu0
  %7915 = vmatprep.mubr.bf16.mxu0 0
  %7916 = vmatmul.mubr.bf16.gmra.mrb[0].mxu0 %v7846
  %v7917 = vpop.f32.mrb[0].mxu0
  %v7918 = vadd.f32 0.0, %v7917
  %v7919 = vpop.f32.mrb[0].mxu0
  %v7920 = vpop.f32.mrb[0].mxu0
  %v7921 = vadd.f32 0.0, %v7920
  %v7922 = vpop.f32.mrb[0].mxu0
  %7923 = vmatprep.mubr.bf16.mxu0 0
  %7924 = vmatmul.mubr.bf16.gmra.mrb[0].mxu0 %v7849
  %v7925 = vpop.f32.mrb[0].mxu0
  %v7926 = vadd.f32 0.0, %v7925
  %v7927 = vpop.f32.mrb[0].mxu0
  %v7928 = vpop.f32.mrb[0].mxu0
  %v7929 = vadd.f32 0.0, %v7928
  %v7930 = vpop.f32.mrb[0].mxu0
  %7931 = vdwg.mxu0
  %v7932 = vadd.f32 %v7762, %v7886
  %v7933 = vadd.f32 %v7763, %v7889
  %v7934 = vadd.f32 %v7764, %v7894
  %v7935 = vadd.f32 %v7765, %v7897
  %v7936 = vadd.f32 %v7766, %v7902
  %v7937 = vadd.f32 %v7767, %v7905
  %v7938 = vadd.f32 %v7768, %v7910
  %v7939 = vadd.f32 %v7769, %v7913
  %v7940 = vadd.f32 %v7770, %v7918
  %v7941 = vadd.f32 %v7771, %v7921
  %v7942 = vadd.f32 %v7772, %v7926
  %v7943 = vadd.f32 %v7773, %v7929
  %v7944 = vld [vmem:[#allocation3 + $0x38] sm:$0x1f]
  %v7945 = vld [vmem:[%s3767] sm:$0xf]
  %v7946 = vld [vmem:[%s3767 + $0x4] sm:$0xf]
  %v7947 = vld [vmem:[%s3767 + $0x8] sm:$0xf]
  %v7948 = vld [vmem:[%s3767 + $0xc] sm:$0xf]
  %v7949 = vld [vmem:[%s3767 + $0x10] sm:$0xf]
  %v7950 = vld [vmem:[%s3767 + $0x14] sm:$0xf]
  %v7951 = vld [vmem:[%s3767 + $0x18] sm:$0xf]
  %v7952 = vld [vmem:[%s3767 + $0x1c] sm:$0xf]
  %v7954 = vshrl.u32 %v7774, 16
  %v7956 = vrot.slane %v7954, 4
  %v7957 = vshll.u32 %v7774, 16
  %v7959 = vrot.slane %v7957, 5
  %v7960 = vor.u32 %v7956, %v7959
  %v7962 = vshrl.u32 %v7775, 16
  %v7964 = vrot.slane %v7962, 4
  %v7965 = vshll.u32 %v7775, 16
  %v7967 = vrot.slane %v7965, 5
  %v7968 = vor.u32 %v7964, %v7967
  %v7969 = vsel %vm3776, %v7960, %v7968
  %v7971 = vshrl.u32 %v7776, 16
  %v7973 = vrot.slane %v7971, 4
  %v7974 = vshll.u32 %v7776, 16
  %v7976 = vrot.slane %v7974, 5
  %v7977 = vor.u32 %v7973, %v7976
  %v7978 = vsel %vm3776, %v7968, %v7977
  %v7980 = vshrl.u32 %v7777, 16
  %v7982 = vrot.slane %v7980, 4
  %v7983 = vshll.u32 %v7777, 16
  %v7985 = vrot.slane %v7983, 5
  %v7986 = vor.u32 %v7982, %v7985
  %v7987 = vsel %vm3776, %v7977, %v7986
  %v7989 = vshrl.u32 %v7778, 16
  %v7991 = vrot.slane %v7989, 4
  %v7992 = vshll.u32 %v7778, 16
  %v7994 = vrot.slane %v7992, 5
  %v7995 = vor.u32 %v7991, %v7994
  %v7996 = vsel %vm3776, %v7986, %v7995
  %v7998 = vshrl.u32 %v7779, 16
  %v8000 = vrot.slane %v7998, 4
  %v8001 = vshll.u32 %v7779, 16
  %v8003 = vrot.slane %v8001, 5
  %v8004 = vor.u32 %v8000, %v8003
  %v8005 = vsel %vm3776, %v7995, %v8004
  %v8007 = vshrl.u32 %v7944, 16
  %v8009 = vrot.slane %v8007, 4
  %v8010 = vshll.u32 %v7944, 16
  %v8012 = vrot.slane %v8010, 5
  %v8013 = vor.u32 %v8009, %v8012
  %v8014 = vsel %vm3776, %v8004, %v8013
  %v8023 = vunpack.c.l.b16 %v7945
  %v8024 = vunpack.c.l.b16 %v7946
  %v8025 = vunpack.c.l.b16 %v7947
  %v8026 = vunpack.c.l.b16 %v7948
  %v8027 = vunpack.c.l.b16 %v7949
  %v8028 = vunpack.c.l.b16 %v7950
  %v8029 = vunpack.c.l.b16 %v7951
  %v8030 = vunpack.c.l.b16 %v7952
  %v8031 = vpack.c.b16 %v8024, %v8023
  %v8032 = vpack.c.b16 %v8026, %v8025
  %v8033 = vpack.c.b16 %v8028, %v8027
  %v8034 = vpack.c.b16 %v8030, %v8029
  %v8040 = vsel %vm387, %v7969, 0
  %v8043 = vsel %vm387, %v7978, 0
  %v8046 = vsel %vm387, %v7987, 0
  %v8049 = vsel %vm387, %v7996, 0
  %v8052 = vsel %vm387, %v8005, 0
  %v8055 = vsel %vm387, %v8014, 0
  %8057 = vmatprep.subr.bf16.mxu0 0
  %8058 = vmatpush1.bf16.msra.mxu0 %v8031
  %8059 = vmatprep.subr.bf16.mxu0 0
  %8060 = vmatpush1.bf16.msra.mxu0 %v8032
  %8061 = vmatprep.subr.bf16.mxu0 0
  %8062 = vmatpush1.bf16.msra.mxu0 %v8033
  %8063 = vmatprep.subr.bf16.mxu0 0
  %8064 = vmatpush1.bf16.msra.mxu0 %v8034
  %8065 = vmatprep.subr.bf16.mxu0 0
  %8066 = vmatpush1.bf16.msra.mxu0 0
  %8067 = vmatprep.subr.bf16.mxu0 0
  %8068 = vmatpush1.bf16.msra.mxu0 0
  %8069 = vmatprep.subr.bf16.mxu0 0
  %8070 = vmatpush1.bf16.msra.mxu0 0
  %8071 = vmatprep.subr.bf16.mxu0 0
  %8072 = vmatpush1.bf16.msra.mxu0 0
  %8073 = vmatprep.subr.bf16.mxu0 0
  %8074 = vmatpush1.bf16.msra.mxu0 0
  %8075 = vmatprep.subr.bf16.mxu0 0
  %8076 = vmatpush1.bf16.msra.mxu0 0
  %8077 = vmatprep.subr.bf16.mxu0 0
  %8078 = vmatpush1.bf16.msra.mxu0 0
  %8079 = vmatprep.subr.bf16.mxu0 0
  %8080 = vmatpush1.bf16.msra.mxu0 0
  %8081 = vmatprep.subr.bf16.mxu0 0
  %8082 = vmatpush1.bf16.msra.mxu0 0
  %8083 = vmatprep.subr.bf16.mxu0 0
  %8084 = vmatpush1.bf16.msra.mxu0 0
  %8085 = vmatprep.subr.bf16.mxu0 0
  %8086 = vmatpush1.bf16.msra.mxu0 0
  %8087 = vmatprep.subr.bf16.mxu0 0
  %8088 = vmatpush1.bf16.msra.mxu0 0
  %8089 = vmatprep.mubr.bf16.mxu0 0
  %8090 = vmatmul.mubr.bf16.gmra.mrb[0].mxu0 %v8040
  %v8091 = vpop.f32.mrb[0].mxu0
  %v8092 = vadd.f32 0.0, %v8091
  %v8093 = vpop.f32.mrb[0].mxu0
  %v8094 = vpop.f32.mrb[0].mxu0
  %v8095 = vadd.f32 0.0, %v8094
  %v8096 = vpop.f32.mrb[0].mxu0
  %8097 = vmatprep.mubr.bf16.mxu0 0
  %8098 = vmatmul.mubr.bf16.gmra.mrb[0].mxu0 %v8043
  %v8099 = vpop.f32.mrb[0].mxu0
  %v8100 = vadd.f32 0.0, %v8099
  %v8101 = vpop.f32.mrb[0].mxu0
  %v8102 = vpop.f32.mrb[0].mxu0
  %v8103 = vadd.f32 0.0, %v8102
  %v8104 = vpop.f32.mrb[0].mxu0
  %8105 = vmatprep.mubr.bf16.mxu0 0
  %8106 = vmatmul.mubr.bf16.gmra.mrb[0].mxu0 %v8046
  %v8107 = vpop.f32.mrb[0].mxu0
  %v8108 = vadd.f32 0.0, %v8107
  %v8109 = vpop.f32.mrb[0].mxu0
  %v8110 = vpop.f32.mrb[0].mxu0
  %v8111 = vadd.f32 0.0, %v8110
  %v8112 = vpop.f32.mrb[0].mxu0
  %8113 = vmatprep.mubr.bf16.mxu0 0
  %8114 = vmatmul.mubr.bf16.gmra.mrb[0].mxu0 %v8049
  %v8115 = vpop.f32.mrb[0].mxu0
  %v8116 = vadd.f32 0.0, %v8115
  %v8117 = vpop.f32.mrb[0].mxu0
  %v8118 = vpop.f32.mrb[0].mxu0
  %v8119 = vadd.f32 0.0, %v8118
  %v8120 = vpop.f32.mrb[0].mxu0
  %8121 = vmatprep.mubr.bf16.mxu0 0
  %8122 = vmatmul.mubr.bf16.gmra.mrb[0].mxu0 %v8052
  %v8123 = vpop.f32.mrb[0].mxu0
  %v8124 = vadd.f32 0.0, %v8123
  %v8125 = vpop.f32.mrb[0].mxu0
  %v8126 = vpop.f32.mrb[0].mxu0
  %v8127 = vadd.f32 0.0, %v8126
  %v8128 = vpop.f32.mrb[0].mxu0
  %8129 = vmatprep.mubr.bf16.mxu0 0
  %8130 = vmatmul.mubr.bf16.gmra.mrb[0].mxu0 %v8055
  %v8131 = vpop.f32.mrb[0].mxu0
  %v8132 = vadd.f32 0.0, %v8131
  %v8133 = vpop.f32.mrb[0].mxu0
  %v8134 = vpop.f32.mrb[0].mxu0
  %v8135 = vadd.f32 0.0, %v8134
  %v8136 = vpop.f32.mrb[0].mxu0
  %8137 = vdwg.mxu0
  %v8138 = vadd.f32 %v7932, %v8092
  %v8139 = vadd.f32 %v7933, %v8095
  %v8140 = vadd.f32 %v7934, %v8100
  %v8141 = vadd.f32 %v7935, %v8103
  %v8142 = vadd.f32 %v7936, %v8108
  %v8143 = vadd.f32 %v7937, %v8111
  %v8144 = vadd.f32 %v7938, %v8116
  %v8145 = vadd.f32 %v7939, %v8119
  %v8146 = vadd.f32 %v7940, %v8124
  %v8147 = vadd.f32 %v7941, %v8127
  %v8148 = vadd.f32 %v7942, %v8132
  %v8149 = vadd.f32 %v7943, %v8135
  %v8150 = vld [vmem:[#allocation3 + $0x8] sm:$0xe0]
  %v8151 = vld [vmem:[%s3975] sm:$0xf]
  %v8152 = vld [vmem:[%s3975 + $0x4] sm:$0xf]
  %v8153 = vld [vmem:[%s3975 + $0x8] sm:$0xf]
  %v8154 = vld [vmem:[%s3975 + $0xc] sm:$0xf]
  %v8155 = vld [vmem:[%s3975 + $0x10] sm:$0xf]
  %v8156 = vld [vmem:[%s3975 + $0x14] sm:$0xf]
  %v8157 = vld [vmem:[%s3975 + $0x18] sm:$0xf]
  %v8158 = vld [vmem:[%s3975 + $0x1c] sm:$0xf]
  %v8161 = vrot.slane %v8150, 5
  %v8162 = vrot.slane %v7775, 5
  %v8163 = vsel %vm3986, %v8161, %v8162
  %v8164 = vrot.slane %v7776, 5
  %v8165 = vsel %vm3986, %v8162, %v8164
  %v8166 = vrot.slane %v7777, 5
  %v8167 = vsel %vm3986, %v8164, %v8166
  %v8168 = vrot.slane %v7778, 5
  %v8169 = vsel %vm3986, %v8166, %v8168
  %v8170 = vrot.slane %v7779, 5
  %v8171 = vsel %vm3986, %v8168, %v8170
  %v8172 = vrot.slane %v7944, 5
  %v8173 = vsel %vm3986, %v8170, %v8172
  %v8182 = vunpack.c.l.b16 %v8151
  %v8183 = vunpack.c.l.b16 %v8152
  %v8184 = vunpack.c.l.b16 %v8153
  %v8185 = vunpack.c.l.b16 %v8154
  %v8186 = vunpack.c.l.b16 %v8155
  %v8187 = vunpack.c.l.b16 %v8156
  %v8188 = vunpack.c.l.b16 %v8157
  %v8189 = vunpack.c.l.b16 %v8158
  %v8190 = vpack.c.b16 %v8183, %v8182
  %v8191 = vpack.c.b16 %v8185, %v8184
  %v8192 = vpack.c.b16 %v8187, %v8186
  %v8193 = vpack.c.b16 %v8189, %v8188
  %v8199 = vsel %vm387, %v8163, 0
  %v8202 = vsel %vm387, %v8165, 0
  %v8205 = vsel %vm387, %v8167, 0
  %v8208 = vsel %vm387, %v8169, 0
  %v8211 = vsel %vm387, %v8171, 0
  %v8214 = vsel %vm387, %v8173, 0
  %8216 = vmatprep.subr.bf16.mxu0 0
  %8217 = vmatpush1.bf16.msra.mxu0 %v8190
  %8218 = vmatprep.subr.bf16.mxu0 0
  %8219 = vmatpush1.bf16.msra.mxu0 %v8191
  %8220 = vmatprep.subr.bf16.mxu0 0
  %8221 = vmatpush1.bf16.msra.mxu0 %v8192
  %8222 = vmatprep.subr.bf16.mxu0 0
  %8223 = vmatpush1.bf16.msra.mxu0 %v8193
  %8224 = vmatprep.subr.bf16.mxu0 0
  %8225 = vmatpush1.bf16.msra.mxu0 0
  %8226 = vmatprep.subr.bf16.mxu0 0
  %8227 = vmatpush1.bf16.msra.mxu0 0
  %8228 = vmatprep.subr.bf16.mxu0 0
  %8229 = vmatpush1.bf16.msra.mxu0 0
  %8230 = vmatprep.subr.bf16.mxu0 0
  %8231 = vmatpush1.bf16.msra.mxu0 0
  %8232 = vmatprep.subr.bf16.mxu0 0
  %8233 = vmatpush1.bf16.msra.mxu0 0
  %8234 = vmatprep.subr.bf16.mxu0 0
  %8235 = vmatpush1.bf16.msra.mxu0 0
  %8236 = vmatprep.subr.bf16.mxu0 0
  %8237 = vmatpush1.bf16.msra.mxu0 0
  %8238 = vmatprep.subr.bf16.mxu0 0
  %8239 = vmatpush1.bf16.msra.mxu0 0
  %8240 = vmatprep.subr.bf16.mxu0 0
  %8241 = vmatpush1.bf16.msra.mxu0 0
  %8242 = vmatprep.subr.bf16.mxu0 0
  %8243 = vmatpush1.bf16.msra.mxu0 0
  %8244 = vmatprep.subr.bf16.mxu0 0
  %8245 = vmatpush1.bf16.msra.mxu0 0
  %8246 = vmatprep.subr.bf16.mxu0 0
  %8247 = vmatpush1.bf16.msra.mxu0 0
  %8248 = vmatprep.mubr.bf16.mxu0 0
  %8249 = vmatmul.mubr.bf16.gmra.mrb[0].mxu0 %v8199
  %v8250 = vpop.f32.mrb[0].mxu0
  %v8251 = vadd.f32 0.0, %v8250
  %v8252 = vpop.f32.mrb[0].mxu0
  %v8253 = vpop.f32.mrb[0].mxu0
  %v8254 = vadd.f32 0.0, %v8253
  %v8255 = vpop.f32.mrb[0].mxu0
  %8256 = vmatprep.mubr.bf16.mxu0 0
  %8257 = vmatmul.mubr.bf16.gmra.mrb[0].mxu0 %v8202
  %v8258 = vpop.f32.mrb[0].mxu0
  %v8259 = vadd.f32 0.0, %v8258
  %v8260 = vpop.f32.mrb[0].mxu0
  %v8261 = vpop.f32.mrb[0].mxu0
  %v8262 = vadd.f32 0.0, %v8261
  %v8263 = vpop.f32.mrb[0].mxu0
  %8264 = vmatprep.mubr.bf16.mxu0 0
  %8265 = vmatmul.mubr.bf16.gmra.mrb[0].mxu0 %v8205
  %v8266 = vpop.f32.mrb[0].mxu0
  %v8267 = vadd.f32 0.0, %v8266
  %v8268 = vpop.f32.mrb[0].mxu0
  %v8269 = vpop.f32.mrb[0].mxu0
  %v8270 = vadd.f32 0.0, %v8269
  %v8271 = vpop.f32.mrb[0].mxu0
  %8272 = vmatprep.mubr.bf16.mxu0 0
  %8273 = vmatmul.mubr.bf16.gmra.mrb[0].mxu0 %v8208
  %v8274 = vpop.f32.mrb[0].mxu0
  %v8275 = vadd.f32 0.0, %v8274
  %v8276 = vpop.f32.mrb[0].mxu0
  %v8277 = vpop.f32.mrb[0].mxu0
  %v8278 = vadd.f32 0.0, %v8277
  %v8279 = vpop.f32.mrb[0].mxu0
  %8280 = vmatprep.mubr.bf16.mxu0 0
  %8281 = vmatmul.mubr.bf16.gmra.mrb[0].mxu0 %v8211
  %v8282 = vpop.f32.mrb[0].mxu0
  %v8283 = vadd.f32 0.0, %v8282
  %v8284 = vpop.f32.mrb[0].mxu0
  %v8285 = vpop.f32.mrb[0].mxu0
  %v8286 = vadd.f32 0.0, %v8285
  %v8287 = vpop.f32.mrb[0].mxu0
  %8288 = vmatprep.mubr.bf16.mxu0 0
  %8289 = vmatmul.mubr.bf16.gmra.mrb[0].mxu0 %v8214
  %v8290 = vpop.f32.mrb[0].mxu0
  %v8291 = vadd.f32 0.0, %v8290
  %v8292 = vpop.f32.mrb[0].mxu0
  %v8293 = vpop.f32.mrb[0].mxu0
  %v8294 = vadd.f32 0.0, %v8293
  %v8295 = vpop.f32.mrb[0].mxu0
  %8296 = vdwg.mxu0
  %v8297 = vadd.f32 %v8138, %v8251
  %v8298 = vadd.f32 %v8139, %v8254
  %v8299 = vadd.f32 %v8140, %v8259
  %v8300 = vadd.f32 %v8141, %v8262
  %v8301 = vadd.f32 %v8142, %v8267
  %v8302 = vadd.f32 %v8143, %v8270
  %v8303 = vadd.f32 %v8144, %v8275
  %v8304 = vadd.f32 %v8145, %v8278
  %v8305 = vadd.f32 %v8146, %v8283
  %v8306 = vadd.f32 %v8147, %v8286
  %v8307 = vadd.f32 %v8148, %v8291
  %v8308 = vadd.f32 %v8149, %v8294
  %v8309 = vld [vmem:[%s6] sm:$0x1]
  %v8311 = vlaneseq
  %v8312 = vshrl.u32 %v8311, 7
  %v8313 = vsub.s32 0, %v8312
  %v8314 = vrot.slane %v8309, %v8313
  %v8316 = vadd.f32 %v8297, %v8314
  %v8317 = vadd.f32 %v8298, %v8314
  %v8318 = vadd.f32 %v8299, %v8314
  %v8319 = vadd.f32 %v8300, %v8314
  %v8320 = vadd.f32 %v8301, %v8314
  %v8321 = vadd.f32 %v8302, %v8314
  %v8322 = vadd.f32 %v8303, %v8314
  %v8323 = vadd.f32 %v8304, %v8314
  %v8324 = vadd.f32 %v8305, %v8314
  %v8325 = vadd.f32 %v8306, %v8314
  %v8326 = vadd.f32 %v8307, %v8314
  %v8327 = vadd.f32 %v8308, %v8314
  %v8328 = vmax.f32 %v8316, 0.0
  %v8329 = vmax.f32 %v8317, 0.0
  %v8330 = vmax.f32 %v8318, 0.0
  %v8331 = vmax.f32 %v8319, 0.0
  %v8332 = vmax.f32 %v8320, 0.0
  %v8333 = vmax.f32 %v8321, 0.0
  %v8334 = vmax.f32 %v8322, 0.0
  %v8335 = vmax.f32 %v8323, 0.0
  %v8336 = vmax.f32 %v8324, 0.0
  %v8337 = vmax.f32 %v8325, 0.0
  %v8338 = vmax.f32 %v8326, 0.0
  %v8339 = vmax.f32 %v8327, 0.0
  %v8340 = vpack.c.bf16 %v8329, %v8328
  %v8341 = vpack.c.bf16 %v8331, %v8330
  %v8342 = vpack.c.bf16 %v8333, %v8332
  %v8343 = vpack.c.bf16 %v8335, %v8334
  %v8344 = vpack.c.bf16 %v8337, %v8336
  %v8345 = vpack.c.bf16 %v8339, %v8338
  %v8352 = vunpack.c.l.b16 %v8340
  %v8353 = vunpack.c.h.b16 %v8340
  %v8354 = vunpack.c.l.b16 %v8341
  %v8355 = vunpack.c.h.b16 %v8341
  %v8356 = vunpack.c.l.b16 %v8342
  %v8357 = vunpack.c.h.b16 %v8342
  %v8358 = vunpack.c.l.b16 %v8343
  %v8359 = vunpack.c.h.b16 %v8343
  %v8360 = vunpack.c.l.b16 %v8344
  %v8361 = vunpack.c.h.b16 %v8344
  %v8362 = vunpack.c.l.b16 %v8345
  %v8363 = vunpack.c.h.b16 %v8345
  %v8364 = vpack.c.b16 %v8352, %v8352
  %v8365 = vpack.c.b16 %v8353, %v8353
  %v8366 = vpack.c.b16 %v8354, %v8354
  %v8367 = vpack.c.b16 %v8355, %v8355
  %v8368 = vpack.c.b16 %v8356, %v8356
  %v8369 = vpack.c.b16 %v8357, %v8357
  %v8370 = vpack.c.b16 %v8358, %v8358
  %v8371 = vpack.c.b16 %v8359, %v8359
  %v8372 = vpack.c.b16 %v8360, %v8360
  %v8373 = vpack.c.b16 %v8361, %v8361
  %v8374 = vpack.c.b16 %v8362, %v8362
  %v8375 = vpack.c.b16 %v8363, %v8363
  %s8388 = scalar_lea.vmem %s7, 48
  %8389 = vst.msk [vmem:[%s8388] sm:$0xf] %vm2606, %v8364
  %8390 = vst.msk [vmem:[%s8388 + $0x4] sm:$0xf] %vm2606, %v8365
  %8391 = vst.msk [vmem:[%s8388 + $0x8] sm:$0xf] %vm2606, %v8366
  %8392 = vst.msk [vmem:[%s8388 + $0xc] sm:$0xf] %vm2606, %v8367
  %8393 = vst.msk [vmem:[%s8388 + $0x10] sm:$0xf] %vm2606, %v8368
  %8394 = vst.msk [vmem:[%s8388 + $0x14] sm:$0xf] %vm2606, %v8369
  %8395 = vst.msk [vmem:[%s8388 + $0x18] sm:$0xf] %vm2606, %v8370
  %8396 = vst.msk [vmem:[%s8388 + $0x1c] sm:$0xf] %vm2606, %v8371
  %8397 = vst.msk [vmem:[%s8388 + $0x20] sm:$0xf] %vm2606, %v8372
  %8398 = vst.msk [vmem:[%s8388 + $0x24] sm:$0xf] %vm2606, %v8373
  %8399 = vst.msk [vmem:[%s8388 + $0x28] sm:$0xf] %vm2606, %v8374
  %8400 = vst.msk [vmem:[%s8388 + $0x2c] sm:$0xf] %vm2606, %v8375
  // Predicated region
  $region30: #{dueling_dqn_forward.2} parent=0 // pred_check
    _
  $region31: #{dueling_dqn_forward.2} parent=0 // pred_check_branch
    %8402 = sbr.rel (0) target = $region33
  $region32: #{dueling_dqn_forward.2} parent=0 // pred_region
    _
  $region33: #{dueling_dqn_forward.2} parent=0 // pred_fallthru
    _
  // Predicated region
  $region34: #{dueling_dqn_forward.2} parent=0 // pred_check
    _
  $region35: #{dueling_dqn_forward.2} parent=0 // pred_check_branch
    %8404 = sbr.rel (0) target = $region37
  $region36: #{dueling_dqn_forward.2} parent=0 // pred_region
    _
  $region37: #{dueling_dqn_forward.2} parent=0 // pred_fallthru
    _

// kernel: dueling_dqn_forward.3
$region0: #{dueling_dqn_forward.3}
  #allocation0 [shape = 'u32[]', space=smem, size = 0x4, offset = 0x4, fixed_abs, tag = 'smem constant byte address 0x4 - core index']
  #allocation1 [shape = 'u32[144,128]{1,0:T(1,128)}', space=vmem, size = 0x12000, scoped, tag = 'internal scratch']
  %s0 = inlined_call_operand.vmem [shape: bf16[2,4096], index: 0, kind: input, shape index: {}]
  %s1 = inlined_call_operand.vmem [shape: bf16[4096,256], index: 1, kind: input, shape index: {}]
  %s2 = inlined_call_operand.vmem [shape: f32[1,256], index: 2, kind: input, shape index: {}]
  %s3 = inlined_call_operand.vmem [shape: bf16[256,128], index: 3, kind: input, shape index: {}]
  %s4 = inlined_call_operand.vmem [shape: f32[1,128], index: 4, kind: input, shape index: {}]
  %s5 = inlined_call_operand.hbm [shape: f32[2,128], index: 5, kind: output, shape index: {}]
  %s6 = sld [smem:[#allocation0]]
  $region30: #{dueling_dqn_forward.3} parent=0
    _
  %s8 = ssub.s32 1, %s6
  %s9 = scalar_select 0, %s8, %s6
  $region1: #{dueling_dqn_forward.3} parent=0
    #allocation2 [shape = 'u8[1024]{0}', space=vmem, size = 0x400, scoped, tag = 'output window, operand 0, single buffered']
    #allocation3 [shape = 's32[1]{0}', space=sflag, size = 0x4, scoped, tag = 'scoped memory for dueling_dqn_forward.3']
    %10 = vsyncpa [#allocation3], 0
    // Predicated region
    $region2: #{dueling_dqn_forward.3} parent=1 // pred_check
      _
    $region3: #{dueling_dqn_forward.3} parent=1 // pred_check_branch
      %12 = sbr.rel (0) target = $region5
    $region4: #{dueling_dqn_forward.3} parent=1 // pred_region
      _
    $region5: #{dueling_dqn_forward.3} parent=1 // pred_fallthru
      _
    // Predicated region
    $region6: #{dueling_dqn_forward.3} parent=1 // pred_check
      _
    $region7: #{dueling_dqn_forward.3} parent=1 // pred_check_branch
      %14 = sbr.rel (0) target = $region9
    $region8: #{dueling_dqn_forward.3} parent=1 // pred_region
      _
    $region9: #{dueling_dqn_forward.3} parent=1 // pred_fallthru
      _
    // Predicated region
    $region10: #{dueling_dqn_forward.3} parent=1 // pred_check
      _
    $region11: #{dueling_dqn_forward.3} parent=1 // pred_check_branch
      %16 = sbr.rel (0) target = $region13
    $region12: #{dueling_dqn_forward.3} parent=1 // pred_region
      _
    $region13: #{dueling_dqn_forward.3} parent=1 // pred_fallthru
      _
    // Predicated region
    $region14: #{dueling_dqn_forward.3} parent=1 // pred_check
      _
    $region15: #{dueling_dqn_forward.3} parent=1 // pred_check_branch
      %18 = sbr.rel (0) target = $region17
    $region16: #{dueling_dqn_forward.3} parent=1 // pred_region
      _
    $region17: #{dueling_dqn_forward.3} parent=1 // pred_fallthru
      _
    // Predicated region
    $region18: #{dueling_dqn_forward.3} parent=1 // pred_check
      _
    $region19: #{dueling_dqn_forward.3} parent=1 // pred_check_branch
      %20 = sbr.rel (0) target = $region21
    $region20: #{dueling_dqn_forward.3} parent=1 // pred_region
      _
    $region21: #{dueling_dqn_forward.3} parent=1 // pred_fallthru
      _
    %v22 = vld [vmem:[%s0] sm:$0xff]
    %v23 = vld [vmem:[%s0 + $0x8] sm:$0xff]
    %v24 = vld [vmem:[%s0 + $0x10] sm:$0xff]
    %v25 = vld [vmem:[%s0 + $0x18] sm:$0xff]
    %v26 = vld [vmem:[%s1] sm:$0xff]
    %v27 = vld [vmem:[%s1 + $0x8] sm:$0xff]
    %v28 = vld [vmem:[%s1 + $0x10] sm:$0xff]
    %v29 = vld [vmem:[%s1 + $0x18] sm:$0xff]
    %v30 = vld [vmem:[%s1 + $0x20] sm:$0xff]
    %v31 = vld [vmem:[%s1 + $0x28] sm:$0xff]
    %v32 = vld [vmem:[%s1 + $0x30] sm:$0xff]
    %v33 = vld [vmem:[%s1 + $0x38] sm:$0xff]
    %v34 = vld [vmem:[%s1 + $0x40] sm:$0xff]
    %v35 = vld [vmem:[%s1 + $0x48] sm:$0xff]
    %v36 = vld [vmem:[%s1 + $0x50] sm:$0xff]
    %v37 = vld [vmem:[%s1 + $0x58] sm:$0xff]
    %v38 = vld [vmem:[%s1 + $0x60] sm:$0xff]
    %v39 = vld [vmem:[%s1 + $0x68] sm:$0xff]
    %v40 = vld [vmem:[%s1 + $0x70] sm:$0xff]
    %v41 = vld [vmem:[%s1 + $0x78] sm:$0xff]
    %v42 = vld [vmem:[%s1 + $0x80] sm:$0xff]
    %v43 = vld [vmem:[%s1 + $0x88] sm:$0xff]
    %v44 = vld [vmem:[%s1 + $0x90] sm:$0xff]
    %v45 = vld [vmem:[%s1 + $0x98] sm:$0xff]
    %v46 = vld [vmem:[%s1 + $0xa0] sm:$0xff]
    %v47 = vld [vmem:[%s1 + $0xa8] sm:$0xff]
    %v48 = vld [vmem:[%s1 + $0xb0] sm:$0xff]
    %v49 = vld [vmem:[%s1 + $0xb8] sm:$0xff]
    %v50 = vld [vmem:[%s1 + $0xc0] sm:$0xff]
    %v51 = vld [vmem:[%s1 + $0xc8] sm:$0xff]
    %v52 = vld [vmem:[%s1 + $0xd0] sm:$0xff]
    %v53 = vld [vmem:[%s1 + $0xd8] sm:$0xff]
    %v54 = vld [vmem:[%s1 + $0xe0] sm:$0xff]
    %v55 = vld [vmem:[%s1 + $0xe8] sm:$0xff]
    %v56 = vld [vmem:[%s1 + $0xf0] sm:$0xff]
    %v57 = vld [vmem:[%s1 + $0xf8] sm:$0xff]
    %v58 = vld [vmem:[%s1 + $0x100] sm:$0xff]
    %v59 = vld [vmem:[%s1 + $0x108] sm:$0xff]
    %v60 = vld [vmem:[%s1 + $0x110] sm:$0xff]
    %v61 = vld [vmem:[%s1 + $0x118] sm:$0xff]
    %v62 = vld [vmem:[%s1 + $0x120] sm:$0xff]
    %v63 = vld [vmem:[%s1 + $0x128] sm:$0xff]
    %v64 = vld [vmem:[%s1 + $0x130] sm:$0xff]
    %v65 = vld [vmem:[%s1 + $0x138] sm:$0xff]
    %v66 = vld [vmem:[%s1 + $0x140] sm:$0xff]
    %v67 = vld [vmem:[%s1 + $0x148] sm:$0xff]
    %v68 = vld [vmem:[%s1 + $0x150] sm:$0xff]
    %v69 = vld [vmem:[%s1 + $0x158] sm:$0xff]
    %v70 = vld [vmem:[%s1 + $0x160] sm:$0xff]
    %v71 = vld [vmem:[%s1 + $0x168] sm:$0xff]
    %v72 = vld [vmem:[%s1 + $0x170] sm:$0xff]
    %v73 = vld [vmem:[%s1 + $0x178] sm:$0xff]
    %v74 = vld [vmem:[%s1 + $0x180] sm:$0xff]
    %v75 = vld [vmem:[%s1 + $0x188] sm:$0xff]
    %v76 = vld [vmem:[%s1 + $0x190] sm:$0xff]
    %v77 = vld [vmem:[%s1 + $0x198] sm:$0xff]
    %v78 = vld [vmem:[%s1 + $0x1a0] sm:$0xff]
    %v79 = vld [vmem:[%s1 + $0x1a8] sm:$0xff]
    %v80 = vld [vmem:[%s1 + $0x1b0] sm:$0xff]
    %v81 = vld [vmem:[%s1 + $0x1b8] sm:$0xff]
    %v82 = vld [vmem:[%s1 + $0x1c0] sm:$0xff]
    %v83 = vld [vmem:[%s1 + $0x1c8] sm:$0xff]
    %v84 = vld [vmem:[%s1 + $0x1d0] sm:$0xff]
    %v85 = vld [vmem:[%s1 + $0x1d8] sm:$0xff]
    %v86 = vld [vmem:[%s1 + $0x1e0] sm:$0xff]
    %v87 = vld [vmem:[%s1 + $0x1e8] sm:$0xff]
    %v88 = vld [vmem:[%s1 + $0x1f0] sm:$0xff]
    %v89 = vld [vmem:[%s1 + $0x1f8] sm:$0xff]
    %v90 = vld [vmem:[%s1 + $0x200] sm:$0xff]
    %v91 = vld [vmem:[%s1 + $0x208] sm:$0xff]
    %v92 = vld [vmem:[%s1 + $0x210] sm:$0xff]
    %v93 = vld [vmem:[%s1 + $0x218] sm:$0xff]
    %v94 = vld [vmem:[%s1 + $0x220] sm:$0xff]
    %v95 = vld [vmem:[%s1 + $0x228] sm:$0xff]
    %v96 = vld [vmem:[%s1 + $0x230] sm:$0xff]
    %v97 = vld [vmem:[%s1 + $0x238] sm:$0xff]
    %v98 = vld [vmem:[%s1 + $0x240] sm:$0xff]
    %v99 = vld [vmem:[%s1 + $0x248] sm:$0xff]
    %v100 = vld [vmem:[%s1 + $0x250] sm:$0xff]
    %v101 = vld [vmem:[%s1 + $0x258] sm:$0xff]
    %v102 = vld [vmem:[%s1 + $0x260] sm:$0xff]
    %v103 = vld [vmem:[%s1 + $0x268] sm:$0xff]
    %v104 = vld [vmem:[%s1 + $0x270] sm:$0xff]
    %v105 = vld [vmem:[%s1 + $0x278] sm:$0xff]
    %v106 = vld [vmem:[%s1 + $0x280] sm:$0xff]
    %v107 = vld [vmem:[%s1 + $0x288] sm:$0xff]
    %v108 = vld [vmem:[%s1 + $0x290] sm:$0xff]
    %v109 = vld [vmem:[%s1 + $0x298] sm:$0xff]
    %v110 = vld [vmem:[%s1 + $0x2a0] sm:$0xff]
    %v111 = vld [vmem:[%s1 + $0x2a8] sm:$0xff]
    %v112 = vld [vmem:[%s1 + $0x2b0] sm:$0xff]
    %v113 = vld [vmem:[%s1 + $0x2b8] sm:$0xff]
    %v114 = vld [vmem:[%s1 + $0x2c0] sm:$0xff]
    %v115 = vld [vmem:[%s1 + $0x2c8] sm:$0xff]
    %v116 = vld [vmem:[%s1 + $0x2d0] sm:$0xff]
    %v117 = vld [vmem:[%s1 + $0x2d8] sm:$0xff]
    %v118 = vld [vmem:[%s1 + $0x2e0] sm:$0xff]
    %v119 = vld [vmem:[%s1 + $0x2e8] sm:$0xff]
    %v120 = vld [vmem:[%s1 + $0x2f0] sm:$0xff]
    %v121 = vld [vmem:[%s1 + $0x2f8] sm:$0xff]
    %v122 = vld [vmem:[%s1 + $0x300] sm:$0xff]
    %v123 = vld [vmem:[%s1 + $0x308] sm:$0xff]
    %v124 = vld [vmem:[%s1 + $0x310] sm:$0xff]
    %v125 = vld [vmem:[%s1 + $0x318] sm:$0xff]
    %v126 = vld [vmem:[%s1 + $0x320] sm:$0xff]
    %v127 = vld [vmem:[%s1 + $0x328] sm:$0xff]
    %v128 = vld [vmem:[%s1 + $0x330] sm:$0xff]
    %v129 = vld [vmem:[%s1 + $0x338] sm:$0xff]
    %v130 = vld [vmem:[%s1 + $0x340] sm:$0xff]
    %v131 = vld [vmem:[%s1 + $0x348] sm:$0xff]
    %v132 = vld [vmem:[%s1 + $0x350] sm:$0xff]
    %v133 = vld [vmem:[%s1 + $0x358] sm:$0xff]
    %v134 = vld [vmem:[%s1 + $0x360] sm:$0xff]
    %v135 = vld [vmem:[%s1 + $0x368] sm:$0xff]
    %v136 = vld [vmem:[%s1 + $0x370] sm:$0xff]
    %v137 = vld [vmem:[%s1 + $0x378] sm:$0xff]
    %v138 = vld [vmem:[%s1 + $0x380] sm:$0xff]
    %v139 = vld [vmem:[%s1 + $0x388] sm:$0xff]
    %v140 = vld [vmem:[%s1 + $0x390] sm:$0xff]
    %v141 = vld [vmem:[%s1 + $0x398] sm:$0xff]
    %v142 = vld [vmem:[%s1 + $0x3a0] sm:$0xff]
    %v143 = vld [vmem:[%s1 + $0x3a8] sm:$0xff]
    %v144 = vld [vmem:[%s1 + $0x3b0] sm:$0xff]
    %v145 = vld [vmem:[%s1 + $0x3b8] sm:$0xff]
    %v146 = vld [vmem:[%s1 + $0x3c0] sm:$0xff]
    %v147 = vld [vmem:[%s1 + $0x3c8] sm:$0xff]
    %v148 = vld [vmem:[%s1 + $0x3d0] sm:$0xff]
    %v149 = vld [vmem:[%s1 + $0x3d8] sm:$0xff]
    %v150 = vld [vmem:[%s1 + $0x3e0] sm:$0xff]
    %v151 = vld [vmem:[%s1 + $0x3e8] sm:$0xff]
    %v152 = vld [vmem:[%s1 + $0x3f0] sm:$0xff]
    %v153 = vld [vmem:[%s1 + $0x3f8] sm:$0xff]
    %v154 = vld [vmem:[%s1 + $0x400] sm:$0xff]
    %v155 = vld [vmem:[%s1 + $0x408] sm:$0xff]
    %v156 = vld [vmem:[%s1 + $0x410] sm:$0xff]
    %v157 = vld [vmem:[%s1 + $0x418] sm:$0xff]
    %v158 = vld [vmem:[%s1 + $0x420] sm:$0xff]
    %v159 = vld [vmem:[%s1 + $0x428] sm:$0xff]
    %v160 = vld [vmem:[%s1 + $0x430] sm:$0xff]
    %v161 = vld [vmem:[%s1 + $0x438] sm:$0xff]
    %v162 = vld [vmem:[%s1 + $0x440] sm:$0xff]
    %v163 = vld [vmem:[%s1 + $0x448] sm:$0xff]
    %v164 = vld [vmem:[%s1 + $0x450] sm:$0xff]
    %v165 = vld [vmem:[%s1 + $0x458] sm:$0xff]
    %v166 = vld [vmem:[%s1 + $0x460] sm:$0xff]
    %v167 = vld [vmem:[%s1 + $0x468] sm:$0xff]
    %v168 = vld [vmem:[%s1 + $0x470] sm:$0xff]
    %v169 = vld [vmem:[%s1 + $0x478] sm:$0xff]
    %v170 = vld [vmem:[%s1 + $0x480] sm:$0xff]
    %v171 = vld [vmem:[%s1 + $0x488] sm:$0xff]
    %v172 = vld [vmem:[%s1 + $0x490] sm:$0xff]
    %v173 = vld [vmem:[%s1 + $0x498] sm:$0xff]
    %v174 = vld [vmem:[%s1 + $0x4a0] sm:$0xff]
    %v175 = vld [vmem:[%s1 + $0x4a8] sm:$0xff]
    %v176 = vld [vmem:[%s1 + $0x4b0] sm:$0xff]
    %v177 = vld [vmem:[%s1 + $0x4b8] sm:$0xff]
    %v178 = vld [vmem:[%s1 + $0x4c0] sm:$0xff]
    %v179 = vld [vmem:[%s1 + $0x4c8] sm:$0xff]
    %v180 = vld [vmem:[%s1 + $0x4d0] sm:$0xff]
    %v181 = vld [vmem:[%s1 + $0x4d8] sm:$0xff]
    %v182 = vld [vmem:[%s1 + $0x4e0] sm:$0xff]
    %v183 = vld [vmem:[%s1 + $0x4e8] sm:$0xff]
    %v184 = vld [vmem:[%s1 + $0x4f0] sm:$0xff]
    %v185 = vld [vmem:[%s1 + $0x4f8] sm:$0xff]
    %v186 = vld [vmem:[%s1 + $0x500] sm:$0xff]
    %v187 = vld [vmem:[%s1 + $0x508] sm:$0xff]
    %v188 = vld [vmem:[%s1 + $0x510] sm:$0xff]
    %v189 = vld [vmem:[%s1 + $0x518] sm:$0xff]
    %v190 = vld [vmem:[%s1 + $0x520] sm:$0xff]
    %v191 = vld [vmem:[%s1 + $0x528] sm:$0xff]
    %v192 = vld [vmem:[%s1 + $0x530] sm:$0xff]
    %v193 = vld [vmem:[%s1 + $0x538] sm:$0xff]
    %v194 = vld [vmem:[%s1 + $0x540] sm:$0xff]
    %v195 = vld [vmem:[%s1 + $0x548] sm:$0xff]
    %v196 = vld [vmem:[%s1 + $0x550] sm:$0xff]
    %v197 = vld [vmem:[%s1 + $0x558] sm:$0xff]
    %v198 = vld [vmem:[%s1 + $0x560] sm:$0xff]
    %v199 = vld [vmem:[%s1 + $0x568] sm:$0xff]
    %v200 = vld [vmem:[%s1 + $0x570] sm:$0xff]
    %v201 = vld [vmem:[%s1 + $0x578] sm:$0xff]
    %v202 = vld [vmem:[%s1 + $0x580] sm:$0xff]
    %v203 = vld [vmem:[%s1 + $0x588] sm:$0xff]
    %v204 = vld [vmem:[%s1 + $0x590] sm:$0xff]
    %v205 = vld [vmem:[%s1 + $0x598] sm:$0xff]
    %v206 = vld [vmem:[%s1 + $0x5a0] sm:$0xff]
    %v207 = vld [vmem:[%s1 + $0x5a8] sm:$0xff]
    %v208 = vld [vmem:[%s1 + $0x5b0] sm:$0xff]
    %v209 = vld [vmem:[%s1 + $0x5b8] sm:$0xff]
    %v210 = vld [vmem:[%s1 + $0x5c0] sm:$0xff]
    %v211 = vld [vmem:[%s1 + $0x5c8] sm:$0xff]
    %v212 = vld [vmem:[%s1 + $0x5d0] sm:$0xff]
    %v213 = vld [vmem:[%s1 + $0x5d8] sm:$0xff]
    %v214 = vld [vmem:[%s1 + $0x5e0] sm:$0xff]
    %v215 = vld [vmem:[%s1 + $0x5e8] sm:$0xff]
    %v216 = vld [vmem:[%s1 + $0x5f0] sm:$0xff]
    %v217 = vld [vmem:[%s1 + $0x5f8] sm:$0xff]
    %v218 = vld [vmem:[%s1 + $0x600] sm:$0xff]
    %v219 = vld [vmem:[%s1 + $0x608] sm:$0xff]
    %v220 = vld [vmem:[%s1 + $0x610] sm:$0xff]
    %v221 = vld [vmem:[%s1 + $0x618] sm:$0xff]
    %v222 = vld [vmem:[%s1 + $0x620] sm:$0xff]
    %v223 = vld [vmem:[%s1 + $0x628] sm:$0xff]
    %v224 = vld [vmem:[%s1 + $0x630] sm:$0xff]
    %v225 = vld [vmem:[%s1 + $0x638] sm:$0xff]
    %v226 = vld [vmem:[%s1 + $0x640] sm:$0xff]
    %v227 = vld [vmem:[%s1 + $0x648] sm:$0xff]
    %v228 = vld [vmem:[%s1 + $0x650] sm:$0xff]
    %v229 = vld [vmem:[%s1 + $0x658] sm:$0xff]
    %v230 = vld [vmem:[%s1 + $0x660] sm:$0xff]
    %v231 = vld [vmem:[%s1 + $0x668] sm:$0xff]
    %v232 = vld [vmem:[%s1 + $0x670] sm:$0xff]
    %v233 = vld [vmem:[%s1 + $0x678] sm:$0xff]
    %v234 = vld [vmem:[%s1 + $0x680] sm:$0xff]
    %v235 = vld [vmem:[%s1 + $0x688] sm:$0xff]
    %v236 = vld [vmem:[%s1 + $0x690] sm:$0xff]
    %v237 = vld [vmem:[%s1 + $0x698] sm:$0xff]
    %v238 = vld [vmem:[%s1 + $0x6a0] sm:$0xff]
    %v239 = vld [vmem:[%s1 + $0x6a8] sm:$0xff]
    %v240 = vld [vmem:[%s1 + $0x6b0] sm:$0xff]
    %v241 = vld [vmem:[%s1 + $0x6b8] sm:$0xff]
    %v242 = vld [vmem:[%s1 + $0x6c0] sm:$0xff]
    %v243 = vld [vmem:[%s1 + $0x6c8] sm:$0xff]
    %v244 = vld [vmem:[%s1 + $0x6d0] sm:$0xff]
    %v245 = vld [vmem:[%s1 + $0x6d8] sm:$0xff]
    %v246 = vld [vmem:[%s1 + $0x6e0] sm:$0xff]
    %v247 = vld [vmem:[%s1 + $0x6e8] sm:$0xff]
    %v248 = vld [vmem:[%s1 + $0x6f0] sm:$0xff]
    %v249 = vld [vmem:[%s1 + $0x6f8] sm:$0xff]
    %v250 = vld [vmem:[%s1 + $0x700] sm:$0xff]
    %v251 = vld [vmem:[%s1 + $0x708] sm:$0xff]
    %v252 = vld [vmem:[%s1 + $0x710] sm:$0xff]
    %v253 = vld [vmem:[%s1 + $0x718] sm:$0xff]
    %v254 = vld [vmem:[%s1 + $0x720] sm:$0xff]
    %v255 = vld [vmem:[%s1 + $0x728] sm:$0xff]
    %v256 = vld [vmem:[%s1 + $0x730] sm:$0xff]
    %v257 = vld [vmem:[%s1 + $0x738] sm:$0xff]
    %v258 = vld [vmem:[%s1 + $0x740] sm:$0xff]
    %v259 = vld [vmem:[%s1 + $0x748] sm:$0xff]
    %v260 = vld [vmem:[%s1 + $0x750] sm:$0xff]
    %v261 = vld [vmem:[%s1 + $0x758] sm:$0xff]
    %v262 = vld [vmem:[%s1 + $0x760] sm:$0xff]
    %v263 = vld [vmem:[%s1 + $0x768] sm:$0xff]
    %v264 = vld [vmem:[%s1 + $0x770] sm:$0xff]
    %v265 = vld [vmem:[%s1 + $0x778] sm:$0xff]
    %v266 = vld [vmem:[%s1 + $0x780] sm:$0xff]
    %v267 = vld [vmem:[%s1 + $0x788] sm:$0xff]
    %v268 = vld [vmem:[%s1 + $0x790] sm:$0xff]
    %v269 = vld [vmem:[%s1 + $0x798] sm:$0xff]
    %v270 = vld [vmem:[%s1 + $0x7a0] sm:$0xff]
    %v271 = vld [vmem:[%s1 + $0x7a8] sm:$0xff]
    %v272 = vld [vmem:[%s1 + $0x7b0] sm:$0xff]
    %v273 = vld [vmem:[%s1 + $0x7b8] sm:$0xff]
    %v274 = vld [vmem:[%s1 + $0x7c0] sm:$0xff]
    %v275 = vld [vmem:[%s1 + $0x7c8] sm:$0xff]
    %v276 = vld [vmem:[%s1 + $0x7d0] sm:$0xff]
    %v277 = vld [vmem:[%s1 + $0x7d8] sm:$0xff]
    %v278 = vld [vmem:[%s1 + $0x7e0] sm:$0xff]
    %v279 = vld [vmem:[%s1 + $0x7e8] sm:$0xff]
    %v280 = vld [vmem:[%s1 + $0x7f0] sm:$0xff]
    %v281 = vld [vmem:[%s1 + $0x7f8] sm:$0xff]
    %v282 = vld [vmem:[%s1 + $0x800] sm:$0xff]
    %v283 = vld [vmem:[%s1 + $0x808] sm:$0xff]
    %v284 = vld [vmem:[%s1 + $0x810] sm:$0xff]
    %v285 = vld [vmem:[%s1 + $0x818] sm:$0xff]
    %v286 = vld [vmem:[%s1 + $0x820] sm:$0xff]
    %v287 = vld [vmem:[%s1 + $0x828] sm:$0xff]
    %v288 = vld [vmem:[%s1 + $0x830] sm:$0xff]
    %v289 = vld [vmem:[%s1 + $0x838] sm:$0xff]
    %v290 = vld [vmem:[%s1 + $0x840] sm:$0xff]
    %v291 = vld [vmem:[%s1 + $0x848] sm:$0xff]
    %v292 = vld [vmem:[%s1 + $0x850] sm:$0xff]
    %v293 = vld [vmem:[%s1 + $0x858] sm:$0xff]
    %v294 = vld [vmem:[%s1 + $0x860] sm:$0xff]
    %v295 = vld [vmem:[%s1 + $0x868] sm:$0xff]
    %v296 = vld [vmem:[%s1 + $0x870] sm:$0xff]
    %v297 = vld [vmem:[%s1 + $0x878] sm:$0xff]
    %v298 = vld [vmem:[%s1 + $0x880] sm:$0xff]
    %v299 = vld [vmem:[%s1 + $0x888] sm:$0xff]
    %v300 = vld [vmem:[%s1 + $0x890] sm:$0xff]
    %v301 = vld [vmem:[%s1 + $0x898] sm:$0xff]
    %v302 = vld [vmem:[%s1 + $0x8a0] sm:$0xff]
    %v303 = vld [vmem:[%s1 + $0x8a8] sm:$0xff]
    %v304 = vld [vmem:[%s1 + $0x8b0] sm:$0xff]
    %v305 = vld [vmem:[%s1 + $0x8b8] sm:$0xff]
    %v306 = vld [vmem:[%s1 + $0x8c0] sm:$0xff]
    %v307 = vld [vmem:[%s1 + $0x8c8] sm:$0xff]
    %v308 = vld [vmem:[%s1 + $0x8d0] sm:$0xff]
    %v309 = vld [vmem:[%s1 + $0x8d8] sm:$0xff]
    %v310 = vld [vmem:[%s1 + $0x8e0] sm:$0xff]
    %v311 = vld [vmem:[%s1 + $0x8e8] sm:$0xff]
    %v312 = vld [vmem:[%s1 + $0x8f0] sm:$0xff]
    %v313 = vld [vmem:[%s1 + $0x8f8] sm:$0xff]
    %v314 = vld [vmem:[%s1 + $0x900] sm:$0xff]
    %v315 = vld [vmem:[%s1 + $0x908] sm:$0xff]
    %v316 = vld [vmem:[%s1 + $0x910] sm:$0xff]
    %v317 = vld [vmem:[%s1 + $0x918] sm:$0xff]
    %v318 = vld [vmem:[%s1 + $0x920] sm:$0xff]
    %v319 = vld [vmem:[%s1 + $0x928] sm:$0xff]
    %v320 = vld [vmem:[%s1 + $0x930] sm:$0xff]
    %v321 = vld [vmem:[%s1 + $0x938] sm:$0xff]
    %v322 = vld [vmem:[%s1 + $0x940] sm:$0xff]
    %v323 = vld [vmem:[%s1 + $0x948] sm:$0xff]
    %v324 = vld [vmem:[%s1 + $0x950] sm:$0xff]
    %v325 = vld [vmem:[%s1 + $0x958] sm:$0xff]
    %v326 = vld [vmem:[%s1 + $0x960] sm:$0xff]
    %v327 = vld [vmem:[%s1 + $0x968] sm:$0xff]
    %v328 = vld [vmem:[%s1 + $0x970] sm:$0xff]
    %v329 = vld [vmem:[%s1 + $0x978] sm:$0xff]
    %v330 = vld [vmem:[%s1 + $0x980] sm:$0xff]
    %v331 = vld [vmem:[%s1 + $0x988] sm:$0xff]
    %v332 = vld [vmem:[%s1 + $0x990] sm:$0xff]
    %v333 = vld [vmem:[%s1 + $0x998] sm:$0xff]
    %v334 = vld [vmem:[%s1 + $0x9a0] sm:$0xff]
    %v335 = vld [vmem:[%s1 + $0x9a8] sm:$0xff]
    %v336 = vld [vmem:[%s1 + $0x9b0] sm:$0xff]
    %v337 = vld [vmem:[%s1 + $0x9b8] sm:$0xff]
    %v338 = vld [vmem:[%s1 + $0x9c0] sm:$0xff]
    %v339 = vld [vmem:[%s1 + $0x9c8] sm:$0xff]
    %v340 = vld [vmem:[%s1 + $0x9d0] sm:$0xff]
    %v341 = vld [vmem:[%s1 + $0x9d8] sm:$0xff]
    %v342 = vld [vmem:[%s1 + $0x9e0] sm:$0xff]
    %v343 = vld [vmem:[%s1 + $0x9e8] sm:$0xff]
    %v344 = vld [vmem:[%s1 + $0x9f0] sm:$0xff]
    %v345 = vld [vmem:[%s1 + $0x9f8] sm:$0xff]
    %v346 = vld [vmem:[%s1 + $0xa00] sm:$0xff]
    %v347 = vld [vmem:[%s1 + $0xa08] sm:$0xff]
    %v348 = vld [vmem:[%s1 + $0xa10] sm:$0xff]
    %v349 = vld [vmem:[%s1 + $0xa18] sm:$0xff]
    %v350 = vld [vmem:[%s1 + $0xa20] sm:$0xff]
    %v351 = vld [vmem:[%s1 + $0xa28] sm:$0xff]
    %v352 = vld [vmem:[%s1 + $0xa30] sm:$0xff]
    %v353 = vld [vmem:[%s1 + $0xa38] sm:$0xff]
    %v354 = vld [vmem:[%s1 + $0xa40] sm:$0xff]
    %v355 = vld [vmem:[%s1 + $0xa48] sm:$0xff]
    %v356 = vld [vmem:[%s1 + $0xa50] sm:$0xff]
    %v357 = vld [vmem:[%s1 + $0xa58] sm:$0xff]
    %v358 = vld [vmem:[%s1 + $0xa60] sm:$0xff]
    %v359 = vld [vmem:[%s1 + $0xa68] sm:$0xff]
    %v360 = vld [vmem:[%s1 + $0xa70] sm:$0xff]
    %v361 = vld [vmem:[%s1 + $0xa78] sm:$0xff]
    %v362 = vld [vmem:[%s1 + $0xa80] sm:$0xff]
    %v363 = vld [vmem:[%s1 + $0xa88] sm:$0xff]
    %v364 = vld [vmem:[%s1 + $0xa90] sm:$0xff]
    %v365 = vld [vmem:[%s1 + $0xa98] sm:$0xff]
    %v366 = vld [vmem:[%s1 + $0xaa0] sm:$0xff]
    %v367 = vld [vmem:[%s1 + $0xaa8] sm:$0xff]
    %v368 = vld [vmem:[%s1 + $0xab0] sm:$0xff]
    %v369 = vld [vmem:[%s1 + $0xab8] sm:$0xff]
    %v370 = vld [vmem:[%s1 + $0xac0] sm:$0xff]
    %v371 = vld [vmem:[%s1 + $0xac8] sm:$0xff]
    %v372 = vld [vmem:[%s1 + $0xad0] sm:$0xff]
    %v373 = vld [vmem:[%s1 + $0xad8] sm:$0xff]
    %v374 = vld [vmem:[%s1 + $0xae0] sm:$0xff]
    %v375 = vld [vmem:[%s1 + $0xae8] sm:$0xff]
    %v376 = vld [vmem:[%s1 + $0xaf0] sm:$0xff]
    %v377 = vld [vmem:[%s1 + $0xaf8] sm:$0xff]
    %v378 = vld [vmem:[%s1 + $0xb00] sm:$0xff]
    %v379 = vld [vmem:[%s1 + $0xb08] sm:$0xff]
    %v380 = vld [vmem:[%s1 + $0xb10] sm:$0xff]
    %v381 = vld [vmem:[%s1 + $0xb18] sm:$0xff]
    %v382 = vld [vmem:[%s1 + $0xb20] sm:$0xff]
    %v383 = vld [vmem:[%s1 + $0xb28] sm:$0xff]
    %v384 = vld [vmem:[%s1 + $0xb30] sm:$0xff]
    %v385 = vld [vmem:[%s1 + $0xb38] sm:$0xff]
    %v386 = vld [vmem:[%s1 + $0xb40] sm:$0xff]
    %v387 = vld [vmem:[%s1 + $0xb48] sm:$0xff]
    %v388 = vld [vmem:[%s1 + $0xb50] sm:$0xff]
    %v389 = vld [vmem:[%s1 + $0xb58] sm:$0xff]
    %v390 = vld [vmem:[%s1 + $0xb60] sm:$0xff]
    %v391 = vld [vmem:[%s1 + $0xb68] sm:$0xff]
    %v392 = vld [vmem:[%s1 + $0xb70] sm:$0xff]
    %v393 = vld [vmem:[%s1 + $0xb78] sm:$0xff]
    %v394 = vld [vmem:[%s1 + $0xb80] sm:$0xff]
    %v395 = vld [vmem:[%s1 + $0xb88] sm:$0xff]
    %v396 = vld [vmem:[%s1 + $0xb90] sm:$0xff]
    %v397 = vld [vmem:[%s1 + $0xb98] sm:$0xff]
    %v398 = vld [vmem:[%s1 + $0xba0] sm:$0xff]
    %v399 = vld [vmem:[%s1 + $0xba8] sm:$0xff]
    %v400 = vld [vmem:[%s1 + $0xbb0] sm:$0xff]
    %v401 = vld [vmem:[%s1 + $0xbb8] sm:$0xff]
    %v402 = vld [vmem:[%s1 + $0xbc0] sm:$0xff]
    %v403 = vld [vmem:[%s1 + $0xbc8] sm:$0xff]
    %v404 = vld [vmem:[%s1 + $0xbd0] sm:$0xff]
    %v405 = vld [vmem:[%s1 + $0xbd8] sm:$0xff]
    %v406 = vld [vmem:[%s1 + $0xbe0] sm:$0xff]
    %v407 = vld [vmem:[%s1 + $0xbe8] sm:$0xff]
    %v408 = vld [vmem:[%s1 + $0xbf0] sm:$0xff]
    %v409 = vld [vmem:[%s1 + $0xbf8] sm:$0xff]
    %v410 = vld [vmem:[%s1 + $0xc00] sm:$0xff]
    %v411 = vld [vmem:[%s1 + $0xc08] sm:$0xff]
    %v412 = vld [vmem:[%s1 + $0xc10] sm:$0xff]
    %v413 = vld [vmem:[%s1 + $0xc18] sm:$0xff]
    %v414 = vld [vmem:[%s1 + $0xc20] sm:$0xff]
    %v415 = vld [vmem:[%s1 + $0xc28] sm:$0xff]
    %v416 = vld [vmem:[%s1 + $0xc30] sm:$0xff]
    %v417 = vld [vmem:[%s1 + $0xc38] sm:$0xff]
    %v418 = vld [vmem:[%s1 + $0xc40] sm:$0xff]
    %v419 = vld [vmem:[%s1 + $0xc48] sm:$0xff]
    %v420 = vld [vmem:[%s1 + $0xc50] sm:$0xff]
    %v421 = vld [vmem:[%s1 + $0xc58] sm:$0xff]
    %v422 = vld [vmem:[%s1 + $0xc60] sm:$0xff]
    %v423 = vld [vmem:[%s1 + $0xc68] sm:$0xff]
    %v424 = vld [vmem:[%s1 + $0xc70] sm:$0xff]
    %v425 = vld [vmem:[%s1 + $0xc78] sm:$0xff]
    %v426 = vld [vmem:[%s1 + $0xc80] sm:$0xff]
    %v427 = vld [vmem:[%s1 + $0xc88] sm:$0xff]
    %v428 = vld [vmem:[%s1 + $0xc90] sm:$0xff]
    %v429 = vld [vmem:[%s1 + $0xc98] sm:$0xff]
    %v430 = vld [vmem:[%s1 + $0xca0] sm:$0xff]
    %v431 = vld [vmem:[%s1 + $0xca8] sm:$0xff]
    %v432 = vld [vmem:[%s1 + $0xcb0] sm:$0xff]
    %v433 = vld [vmem:[%s1 + $0xcb8] sm:$0xff]
    %v434 = vld [vmem:[%s1 + $0xcc0] sm:$0xff]
    %v435 = vld [vmem:[%s1 + $0xcc8] sm:$0xff]
    %v436 = vld [vmem:[%s1 + $0xcd0] sm:$0xff]
    %v437 = vld [vmem:[%s1 + $0xcd8] sm:$0xff]
    %v438 = vld [vmem:[%s1 + $0xce0] sm:$0xff]
    %v439 = vld [vmem:[%s1 + $0xce8] sm:$0xff]
    %v440 = vld [vmem:[%s1 + $0xcf0] sm:$0xff]
    %v441 = vld [vmem:[%s1 + $0xcf8] sm:$0xff]
    %v442 = vld [vmem:[%s1 + $0xd00] sm:$0xff]
    %v443 = vld [vmem:[%s1 + $0xd08] sm:$0xff]
    %v444 = vld [vmem:[%s1 + $0xd10] sm:$0xff]
    %v445 = vld [vmem:[%s1 + $0xd18] sm:$0xff]
    %v446 = vld [vmem:[%s1 + $0xd20] sm:$0xff]
    %v447 = vld [vmem:[%s1 + $0xd28] sm:$0xff]
    %v448 = vld [vmem:[%s1 + $0xd30] sm:$0xff]
    %v449 = vld [vmem:[%s1 + $0xd38] sm:$0xff]
    %v450 = vld [vmem:[%s1 + $0xd40] sm:$0xff]
    %v451 = vld [vmem:[%s1 + $0xd48] sm:$0xff]
    %v452 = vld [vmem:[%s1 + $0xd50] sm:$0xff]
    %v453 = vld [vmem:[%s1 + $0xd58] sm:$0xff]
    %v454 = vld [vmem:[%s1 + $0xd60] sm:$0xff]
    %v455 = vld [vmem:[%s1 + $0xd68] sm:$0xff]
    %v456 = vld [vmem:[%s1 + $0xd70] sm:$0xff]
    %v457 = vld [vmem:[%s1 + $0xd78] sm:$0xff]
    %v458 = vld [vmem:[%s1 + $0xd80] sm:$0xff]
    %v459 = vld [vmem:[%s1 + $0xd88] sm:$0xff]
    %v460 = vld [vmem:[%s1 + $0xd90] sm:$0xff]
    %v461 = vld [vmem:[%s1 + $0xd98] sm:$0xff]
    %v462 = vld [vmem:[%s1 + $0xda0] sm:$0xff]
    %v463 = vld [vmem:[%s1 + $0xda8] sm:$0xff]
    %v464 = vld [vmem:[%s1 + $0xdb0] sm:$0xff]
    %v465 = vld [vmem:[%s1 + $0xdb8] sm:$0xff]
    %v466 = vld [vmem:[%s1 + $0xdc0] sm:$0xff]
    %v467 = vld [vmem:[%s1 + $0xdc8] sm:$0xff]
    %v468 = vld [vmem:[%s1 + $0xdd0] sm:$0xff]
    %v469 = vld [vmem:[%s1 + $0xdd8] sm:$0xff]
    %v470 = vld [vmem:[%s1 + $0xde0] sm:$0xff]
    %v471 = vld [vmem:[%s1 + $0xde8] sm:$0xff]
    %v472 = vld [vmem:[%s1 + $0xdf0] sm:$0xff]
    %v473 = vld [vmem:[%s1 + $0xdf8] sm:$0xff]
    %v474 = vld [vmem:[%s1 + $0xe00] sm:$0xff]
    %v475 = vld [vmem:[%s1 + $0xe08] sm:$0xff]
    %v476 = vld [vmem:[%s1 + $0xe10] sm:$0xff]
    %v477 = vld [vmem:[%s1 + $0xe18] sm:$0xff]
    %v478 = vld [vmem:[%s1 + $0xe20] sm:$0xff]
    %v479 = vld [vmem:[%s1 + $0xe28] sm:$0xff]
    %v480 = vld [vmem:[%s1 + $0xe30] sm:$0xff]
    %v481 = vld [vmem:[%s1 + $0xe38] sm:$0xff]
    %v482 = vld [vmem:[%s1 + $0xe40] sm:$0xff]
    %v483 = vld [vmem:[%s1 + $0xe48] sm:$0xff]
    %v484 = vld [vmem:[%s1 + $0xe50] sm:$0xff]
    %v485 = vld [vmem:[%s1 + $0xe58] sm:$0xff]
    %v486 = vld [vmem:[%s1 + $0xe60] sm:$0xff]
    %v487 = vld [vmem:[%s1 + $0xe68] sm:$0xff]
    %v488 = vld [vmem:[%s1 + $0xe70] sm:$0xff]
    %v489 = vld [vmem:[%s1 + $0xe78] sm:$0xff]
    %v490 = vld [vmem:[%s1 + $0xe80] sm:$0xff]
    %v491 = vld [vmem:[%s1 + $0xe88] sm:$0xff]
    %v492 = vld [vmem:[%s1 + $0xe90] sm:$0xff]
    %v493 = vld [vmem:[%s1 + $0xe98] sm:$0xff]
    %v494 = vld [vmem:[%s1 + $0xea0] sm:$0xff]
    %v495 = vld [vmem:[%s1 + $0xea8] sm:$0xff]
    %v496 = vld [vmem:[%s1 + $0xeb0] sm:$0xff]
    %v497 = vld [vmem:[%s1 + $0xeb8] sm:$0xff]
    %v498 = vld [vmem:[%s1 + $0xec0] sm:$0xff]
    %v499 = vld [vmem:[%s1 + $0xec8] sm:$0xff]
    %v500 = vld [vmem:[%s1 + $0xed0] sm:$0xff]
    %v501 = vld [vmem:[%s1 + $0xed8] sm:$0xff]
    %v502 = vld [vmem:[%s1 + $0xee0] sm:$0xff]
    %v503 = vld [vmem:[%s1 + $0xee8] sm:$0xff]
    %v504 = vld [vmem:[%s1 + $0xef0] sm:$0xff]
    %v505 = vld [vmem:[%s1 + $0xef8] sm:$0xff]
    %v506 = vld [vmem:[%s1 + $0xf00] sm:$0xff]
    %v507 = vld [vmem:[%s1 + $0xf08] sm:$0xff]
    %v508 = vld [vmem:[%s1 + $0xf10] sm:$0xff]
    %v509 = vld [vmem:[%s1 + $0xf18] sm:$0xff]
    %v510 = vld [vmem:[%s1 + $0xf20] sm:$0xff]
    %v511 = vld [vmem:[%s1 + $0xf28] sm:$0xff]
    %v512 = vld [vmem:[%s1 + $0xf30] sm:$0xff]
    %v513 = vld [vmem:[%s1 + $0xf38] sm:$0xff]
    %v514 = vld [vmem:[%s1 + $0xf40] sm:$0xff]
    %v515 = vld [vmem:[%s1 + $0xf48] sm:$0xff]
    %v516 = vld [vmem:[%s1 + $0xf50] sm:$0xff]
    %v517 = vld [vmem:[%s1 + $0xf58] sm:$0xff]
    %v518 = vld [vmem:[%s1 + $0xf60] sm:$0xff]
    %v519 = vld [vmem:[%s1 + $0xf68] sm:$0xff]
    %v520 = vld [vmem:[%s1 + $0xf70] sm:$0xff]
    %v521 = vld [vmem:[%s1 + $0xf78] sm:$0xff]
    %v522 = vld [vmem:[%s1 + $0xf80] sm:$0xff]
    %v523 = vld [vmem:[%s1 + $0xf88] sm:$0xff]
    %v524 = vld [vmem:[%s1 + $0xf90] sm:$0xff]
    %v525 = vld [vmem:[%s1 + $0xf98] sm:$0xff]
    %v526 = vld [vmem:[%s1 + $0xfa0] sm:$0xff]
    %v527 = vld [vmem:[%s1 + $0xfa8] sm:$0xff]
    %v528 = vld [vmem:[%s1 + $0xfb0] sm:$0xff]
    %v529 = vld [vmem:[%s1 + $0xfb8] sm:$0xff]
    %v530 = vld [vmem:[%s1 + $0xfc0] sm:$0xff]
    %v531 = vld [vmem:[%s1 + $0xfc8] sm:$0xff]
    %v532 = vld [vmem:[%s1 + $0xfd0] sm:$0xff]
    %v533 = vld [vmem:[%s1 + $0xfd8] sm:$0xff]
    %v534 = vld [vmem:[%s1 + $0xfe0] sm:$0xff]
    %v535 = vld [vmem:[%s1 + $0xfe8] sm:$0xff]
    %v536 = vld [vmem:[%s1 + $0xff0] sm:$0xff]
    %v537 = vld [vmem:[%s1 + $0xff8] sm:$0xff]
    %v538 = vld [vmem:[%s2] sm:$0x3]
    %v540 = vlaneseq
    %v541 = vshrl.u32 %v540, 7
    %v542 = vsub.s32 0, %v541
    %v543 = vrot.slane %v538, %v542
    %v544 = vlaneseq
    %v545 = vshrl.u32 %v544, 7
    %v546 = vsub.s32 1, %v545
    %v547 = vrot.slane %v538, %v546
    %v554 = vcombine.high %v22, %v22
    %v556 = vunpack.c.l.s4 1966171168
    %v557 = vunpack.c.0.s8 %v556
    %v558 = vlaneseq
    %v559 = vshrl.u32 %v558, 7
    %v560 = vsub.s32 %v557, %v559
    %v561 = vrot.slane %v22, %v560
    %v563 = vunpack.c.l.s4 1966171168
    %v564 = vunpack.c.0.s8 %v563
    %v565 = vlaneseq
    %v566 = vshrl.u32 %v565, 7
    %v567 = vsub.s32 %v564, %v566
    %v568 = vrot.slane %v554, %v567
    %v569 = vcombine.high %v561, %v561
    %v570 = vcombine.high %v568, %v568
    %v572 = vunpack.c.l.s4 1966171168
    %v573 = vunpack.c.0.s8 %v572
    %v574 = vlaneseq
    %v575 = vshrl.u32 %v574, 7
    %v576 = vsub.s32 %v573, %v575
    %v577 = vrot.slane %v561, %v576
    %v579 = vunpack.c.l.s4 1966171168
    %v580 = vunpack.c.0.s8 %v579
    %v581 = vlaneseq
    %v582 = vshrl.u32 %v581, 7
    %v583 = vsub.s32 %v580, %v582
    %v584 = vrot.slane %v568, %v583
    %v586 = vunpack.c.l.s4 1966171168
    %v587 = vunpack.c.0.s8 %v586
    %v588 = vlaneseq
    %v589 = vshrl.u32 %v588, 7
    %v590 = vsub.s32 %v587, %v589
    %v591 = vrot.slane %v569, %v590
    %v593 = vunpack.c.l.s4 1966171168
    %v594 = vunpack.c.0.s8 %v593
    %v595 = vlaneseq
    %v596 = vshrl.u32 %v595, 7
    %v597 = vsub.s32 %v594, %v596
    %v598 = vrot.slane %v570, %v597
    %v599 = vcombine.high %v577, %v577
    %v600 = vcombine.high %v584, %v584
    %v601 = vcombine.high %v591, %v591
    %v602 = vcombine.high %v598, %v598
    %v603 = vcombine.high %v23, %v23
    %v605 = vunpack.c.l.s4 1966171168
    %v606 = vunpack.c.0.s8 %v605
    %v607 = vlaneseq
    %v608 = vshrl.u32 %v607, 7
    %v609 = vsub.s32 %v606, %v608
    %v610 = vrot.slane %v23, %v609
    %v612 = vunpack.c.l.s4 1966171168
    %v613 = vunpack.c.0.s8 %v612
    %v614 = vlaneseq
    %v615 = vshrl.u32 %v614, 7
    %v616 = vsub.s32 %v613, %v615
    %v617 = vrot.slane %v603, %v616
    %v618 = vcombine.high %v610, %v610
    %v619 = vcombine.high %v617, %v617
    %v621 = vunpack.c.l.s4 1966171168
    %v622 = vunpack.c.0.s8 %v621
    %v623 = vlaneseq
    %v624 = vshrl.u32 %v623, 7
    %v625 = vsub.s32 %v622, %v624
    %v626 = vrot.slane %v610, %v625
    %v628 = vunpack.c.l.s4 1966171168
    %v629 = vunpack.c.0.s8 %v628
    %v630 = vlaneseq
    %v631 = vshrl.u32 %v630, 7
    %v632 = vsub.s32 %v629, %v631
    %v633 = vrot.slane %v617, %v632
    %v635 = vunpack.c.l.s4 1966171168
    %v636 = vunpack.c.0.s8 %v635
    %v637 = vlaneseq
    %v638 = vshrl.u32 %v637, 7
    %v639 = vsub.s32 %v636, %v638
    %v640 = vrot.slane %v618, %v639
    %v642 = vunpack.c.l.s4 1966171168
    %v643 = vunpack.c.0.s8 %v642
    %v644 = vlaneseq
    %v645 = vshrl.u32 %v644, 7
    %v646 = vsub.s32 %v643, %v645
    %v647 = vrot.slane %v619, %v646
    %v648 = vcombine.high %v626, %v626
    %v649 = vcombine.high %v633, %v633
    %v650 = vcombine.high %v640, %v640
    %v651 = vcombine.high %v647, %v647
    %v652 = vcombine.high %v24, %v24
    %v654 = vunpack.c.l.s4 1966171168
    %v655 = vunpack.c.0.s8 %v654
    %v656 = vlaneseq
    %v657 = vshrl.u32 %v656, 7
    %v658 = vsub.s32 %v655, %v657
    %v659 = vrot.slane %v24, %v658
    %v661 = vunpack.c.l.s4 1966171168
    %v662 = vunpack.c.0.s8 %v661
    %v663 = vlaneseq
    %v664 = vshrl.u32 %v663, 7
    %v665 = vsub.s32 %v662, %v664
    %v666 = vrot.slane %v652, %v665
    %v667 = vcombine.high %v659, %v659
    %v668 = vcombine.high %v666, %v666
    %v670 = vunpack.c.l.s4 1966171168
    %v671 = vunpack.c.0.s8 %v670
    %v672 = vlaneseq
    %v673 = vshrl.u32 %v672, 7
    %v674 = vsub.s32 %v671, %v673
    %v675 = vrot.slane %v659, %v674
    %v677 = vunpack.c.l.s4 1966171168
    %v678 = vunpack.c.0.s8 %v677
    %v679 = vlaneseq
    %v680 = vshrl.u32 %v679, 7
    %v681 = vsub.s32 %v678, %v680
    %v682 = vrot.slane %v666, %v681
    %v684 = vunpack.c.l.s4 1966171168
    %v685 = vunpack.c.0.s8 %v684
    %v686 = vlaneseq
    %v687 = vshrl.u32 %v686, 7
    %v688 = vsub.s32 %v685, %v687
    %v689 = vrot.slane %v667, %v688
    %v691 = vunpack.c.l.s4 1966171168
    %v692 = vunpack.c.0.s8 %v691
    %v693 = vlaneseq
    %v694 = vshrl.u32 %v693, 7
    %v695 = vsub.s32 %v692, %v694
    %v696 = vrot.slane %v668, %v695
    %v697 = vcombine.high %v675, %v675
    %v698 = vcombine.high %v682, %v682
    %v699 = vcombine.high %v689, %v689
    %v700 = vcombine.high %v696, %v696
    %v701 = vcombine.high %v25, %v25
    %v703 = vunpack.c.l.s4 1966171168
    %v704 = vunpack.c.0.s8 %v703
    %v705 = vlaneseq
    %v706 = vshrl.u32 %v705, 7
    %v707 = vsub.s32 %v704, %v706
    %v708 = vrot.slane %v25, %v707
    %v710 = vunpack.c.l.s4 1966171168
    %v711 = vunpack.c.0.s8 %v710
    %v712 = vlaneseq
    %v713 = vshrl.u32 %v712, 7
    %v714 = vsub.s32 %v711, %v713
    %v715 = vrot.slane %v701, %v714
    %v716 = vcombine.high %v708, %v708
    %v717 = vcombine.high %v715, %v715
    %v719 = vunpack.c.l.s4 1966171168
    %v720 = vunpack.c.0.s8 %v719
    %v721 = vlaneseq
    %v722 = vshrl.u32 %v721, 7
    %v723 = vsub.s32 %v720, %v722
    %v724 = vrot.slane %v708, %v723
    %v726 = vunpack.c.l.s4 1966171168
    %v727 = vunpack.c.0.s8 %v726
    %v728 = vlaneseq
    %v729 = vshrl.u32 %v728, 7
    %v730 = vsub.s32 %v727, %v729
    %v731 = vrot.slane %v715, %v730
    %v733 = vunpack.c.l.s4 1966171168
    %v734 = vunpack.c.0.s8 %v733
    %v735 = vlaneseq
    %v736 = vshrl.u32 %v735, 7
    %v737 = vsub.s32 %v734, %v736
    %v738 = vrot.slane %v716, %v737
    %v740 = vunpack.c.l.s4 1966171168
    %v741 = vunpack.c.0.s8 %v740
    %v742 = vlaneseq
    %v743 = vshrl.u32 %v742, 7
    %v744 = vsub.s32 %v741, %v743
    %v745 = vrot.slane %v717, %v744
    %v746 = vcombine.high %v724, %v724
    %v747 = vcombine.high %v731, %v731
    %v748 = vcombine.high %v738, %v738
    %v749 = vcombine.high %v745, %v745
    %v1294 = vunpack.c.l.b16 %v26
    %v1295 = vunpack.c.h.b16 %v26
    %v1296 = vunpack.c.l.b16 %v27
    %v1297 = vunpack.c.h.b16 %v27
    %v1298 = vunpack.c.l.b16 %v28
    %v1299 = vunpack.c.h.b16 %v28
    %v1300 = vunpack.c.l.b16 %v29
    %v1301 = vunpack.c.h.b16 %v29
    %v1302 = vunpack.c.l.b16 %v30
    %v1303 = vunpack.c.h.b16 %v30
    %v1304 = vunpack.c.l.b16 %v31
    %v1305 = vunpack.c.h.b16 %v31
    %v1306 = vunpack.c.l.b16 %v32
    %v1307 = vunpack.c.h.b16 %v32
    %v1308 = vunpack.c.l.b16 %v33
    %v1309 = vunpack.c.h.b16 %v33
    %v1310 = vunpack.c.l.b16 %v34
    %v1311 = vunpack.c.h.b16 %v34
    %v1312 = vunpack.c.l.b16 %v35
    %v1313 = vunpack.c.h.b16 %v35
    %v1314 = vunpack.c.l.b16 %v36
    %v1315 = vunpack.c.h.b16 %v36
    %v1316 = vunpack.c.l.b16 %v37
    %v1317 = vunpack.c.h.b16 %v37
    %v1318 = vunpack.c.l.b16 %v38
    %v1319 = vunpack.c.h.b16 %v38
    %v1320 = vunpack.c.l.b16 %v39
    %v1321 = vunpack.c.h.b16 %v39
    %v1322 = vunpack.c.l.b16 %v40
    %v1323 = vunpack.c.h.b16 %v40
    %v1324 = vunpack.c.l.b16 %v41
    %v1325 = vunpack.c.h.b16 %v41
    %v1326 = vunpack.c.l.b16 %v42
    %v1327 = vunpack.c.h.b16 %v42
    %v1328 = vunpack.c.l.b16 %v43
    %v1329 = vunpack.c.h.b16 %v43
    %v1330 = vunpack.c.l.b16 %v44
    %v1331 = vunpack.c.h.b16 %v44
    %v1332 = vunpack.c.l.b16 %v45
    %v1333 = vunpack.c.h.b16 %v45
    %v1334 = vunpack.c.l.b16 %v46
    %v1335 = vunpack.c.h.b16 %v46
    %v1336 = vunpack.c.l.b16 %v47
    %v1337 = vunpack.c.h.b16 %v47
    %v1338 = vunpack.c.l.b16 %v48
    %v1339 = vunpack.c.h.b16 %v48
    %v1340 = vunpack.c.l.b16 %v49
    %v1341 = vunpack.c.h.b16 %v49
    %v1342 = vunpack.c.l.b16 %v50
    %v1343 = vunpack.c.h.b16 %v50
    %v1344 = vunpack.c.l.b16 %v51
    %v1345 = vunpack.c.h.b16 %v51
    %v1346 = vunpack.c.l.b16 %v52
    %v1347 = vunpack.c.h.b16 %v52
    %v1348 = vunpack.c.l.b16 %v53
    %v1349 = vunpack.c.h.b16 %v53
    %v1350 = vunpack.c.l.b16 %v54
    %v1351 = vunpack.c.h.b16 %v54
    %v1352 = vunpack.c.l.b16 %v55
    %v1353 = vunpack.c.h.b16 %v55
    %v1354 = vunpack.c.l.b16 %v56
    %v1355 = vunpack.c.h.b16 %v56
    %v1356 = vunpack.c.l.b16 %v57
    %v1357 = vunpack.c.h.b16 %v57
    %v1358 = vunpack.c.l.b16 %v58
    %v1359 = vunpack.c.h.b16 %v58
    %v1360 = vunpack.c.l.b16 %v59
    %v1361 = vunpack.c.h.b16 %v59
    %v1362 = vunpack.c.l.b16 %v60
    %v1363 = vunpack.c.h.b16 %v60
    %v1364 = vunpack.c.l.b16 %v61
    %v1365 = vunpack.c.h.b16 %v61
    %v1366 = vunpack.c.l.b16 %v62
    %v1367 = vunpack.c.h.b16 %v62
    %v1368 = vunpack.c.l.b16 %v63
    %v1369 = vunpack.c.h.b16 %v63
    %v1370 = vunpack.c.l.b16 %v64
    %v1371 = vunpack.c.h.b16 %v64
    %v1372 = vunpack.c.l.b16 %v65
    %v1373 = vunpack.c.h.b16 %v65
    %v1374 = vunpack.c.l.b16 %v66
    %v1375 = vunpack.c.h.b16 %v66
    %v1376 = vunpack.c.l.b16 %v67
    %v1377 = vunpack.c.h.b16 %v67
    %v1378 = vunpack.c.l.b16 %v68
    %v1379 = vunpack.c.h.b16 %v68
    %v1380 = vunpack.c.l.b16 %v69
    %v1381 = vunpack.c.h.b16 %v69
    %v1382 = vunpack.c.l.b16 %v70
    %v1383 = vunpack.c.h.b16 %v70
    %v1384 = vunpack.c.l.b16 %v71
    %v1385 = vunpack.c.h.b16 %v71
    %v1386 = vunpack.c.l.b16 %v72
    %v1387 = vunpack.c.h.b16 %v72
    %v1388 = vunpack.c.l.b16 %v73
    %v1389 = vunpack.c.h.b16 %v73
    %v1390 = vunpack.c.l.b16 %v74
    %v1391 = vunpack.c.h.b16 %v74
    %v1392 = vunpack.c.l.b16 %v75
    %v1393 = vunpack.c.h.b16 %v75
    %v1394 = vunpack.c.l.b16 %v76
    %v1395 = vunpack.c.h.b16 %v76
    %v1396 = vunpack.c.l.b16 %v77
    %v1397 = vunpack.c.h.b16 %v77
    %v1398 = vunpack.c.l.b16 %v78
    %v1399 = vunpack.c.h.b16 %v78
    %v1400 = vunpack.c.l.b16 %v79
    %v1401 = vunpack.c.h.b16 %v79
    %v1402 = vunpack.c.l.b16 %v80
    %v1403 = vunpack.c.h.b16 %v80
    %v1404 = vunpack.c.l.b16 %v81
    %v1405 = vunpack.c.h.b16 %v81
    %v1406 = vunpack.c.l.b16 %v82
    %v1407 = vunpack.c.h.b16 %v82
    %v1408 = vunpack.c.l.b16 %v83
    %v1409 = vunpack.c.h.b16 %v83
    %v1410 = vunpack.c.l.b16 %v84
    %v1411 = vunpack.c.h.b16 %v84
    %v1412 = vunpack.c.l.b16 %v85
    %v1413 = vunpack.c.h.b16 %v85
    %v1414 = vunpack.c.l.b16 %v86
    %v1415 = vunpack.c.h.b16 %v86
    %v1416 = vunpack.c.l.b16 %v87
    %v1417 = vunpack.c.h.b16 %v87
    %v1418 = vunpack.c.l.b16 %v88
    %v1419 = vunpack.c.h.b16 %v88
    %v1420 = vunpack.c.l.b16 %v89
    %v1421 = vunpack.c.h.b16 %v89
    %v1422 = vunpack.c.l.b16 %v90
    %v1423 = vunpack.c.h.b16 %v90
    %v1424 = vunpack.c.l.b16 %v91
    %v1425 = vunpack.c.h.b16 %v91
    %v1426 = vunpack.c.l.b16 %v92
    %v1427 = vunpack.c.h.b16 %v92
    %v1428 = vunpack.c.l.b16 %v93
    %v1429 = vunpack.c.h.b16 %v93
    %v1430 = vunpack.c.l.b16 %v94
    %v1431 = vunpack.c.h.b16 %v94
    %v1432 = vunpack.c.l.b16 %v95
    %v1433 = vunpack.c.h.b16 %v95
    %v1434 = vunpack.c.l.b16 %v96
    %v1435 = vunpack.c.h.b16 %v96
    %v1436 = vunpack.c.l.b16 %v97
    %v1437 = vunpack.c.h.b16 %v97
    %v1438 = vunpack.c.l.b16 %v98
    %v1439 = vunpack.c.h.b16 %v98
    %v1440 = vunpack.c.l.b16 %v99
    %v1441 = vunpack.c.h.b16 %v99
    %v1442 = vunpack.c.l.b16 %v100
    %v1443 = vunpack.c.h.b16 %v100
    %v1444 = vunpack.c.l.b16 %v101
    %v1445 = vunpack.c.h.b16 %v101
    %v1446 = vunpack.c.l.b16 %v102
    %v1447 = vunpack.c.h.b16 %v102
    %v1448 = vunpack.c.l.b16 %v103
    %v1449 = vunpack.c.h.b16 %v103
    %v1450 = vunpack.c.l.b16 %v104
    %v1451 = vunpack.c.h.b16 %v104
    %v1452 = vunpack.c.l.b16 %v105
    %v1453 = vunpack.c.h.b16 %v105
    %v1454 = vunpack.c.l.b16 %v106
    %v1455 = vunpack.c.h.b16 %v106
    %v1456 = vunpack.c.l.b16 %v107
    %v1457 = vunpack.c.h.b16 %v107
    %v1458 = vunpack.c.l.b16 %v108
    %v1459 = vunpack.c.h.b16 %v108
    %v1460 = vunpack.c.l.b16 %v109
    %v1461 = vunpack.c.h.b16 %v109
    %v1462 = vunpack.c.l.b16 %v110
    %v1463 = vunpack.c.h.b16 %v110
    %v1464 = vunpack.c.l.b16 %v111
    %v1465 = vunpack.c.h.b16 %v111
    %v1466 = vunpack.c.l.b16 %v112
    %v1467 = vunpack.c.h.b16 %v112
    %v1468 = vunpack.c.l.b16 %v113
    %v1469 = vunpack.c.h.b16 %v113
    %v1470 = vunpack.c.l.b16 %v114
    %v1471 = vunpack.c.h.b16 %v114
    %v1472 = vunpack.c.l.b16 %v115
    %v1473 = vunpack.c.h.b16 %v115
    %v1474 = vunpack.c.l.b16 %v116
    %v1475 = vunpack.c.h.b16 %v116
    %v1476 = vunpack.c.l.b16 %v117
    %v1477 = vunpack.c.h.b16 %v117
    %v1478 = vunpack.c.l.b16 %v118
    %v1479 = vunpack.c.h.b16 %v118
    %v1480 = vunpack.c.l.b16 %v119
    %v1481 = vunpack.c.h.b16 %v119
    %v1482 = vunpack.c.l.b16 %v120
    %v1483 = vunpack.c.h.b16 %v120
    %v1484 = vunpack.c.l.b16 %v121
    %v1485 = vunpack.c.h.b16 %v121
    %v1486 = vunpack.c.l.b16 %v122
    %v1487 = vunpack.c.h.b16 %v122
    %v1488 = vunpack.c.l.b16 %v123
    %v1489 = vunpack.c.h.b16 %v123
    %v1490 = vunpack.c.l.b16 %v124
    %v1491 = vunpack.c.h.b16 %v124
    %v1492 = vunpack.c.l.b16 %v125
    %v1493 = vunpack.c.h.b16 %v125
    %v1494 = vunpack.c.l.b16 %v126
    %v1495 = vunpack.c.h.b16 %v126
    %v1496 = vunpack.c.l.b16 %v127
    %v1497 = vunpack.c.h.b16 %v127
    %v1498 = vunpack.c.l.b16 %v128
    %v1499 = vunpack.c.h.b16 %v128
    %v1500 = vunpack.c.l.b16 %v129
    %v1501 = vunpack.c.h.b16 %v129
    %v1502 = vunpack.c.l.b16 %v130
    %v1503 = vunpack.c.h.b16 %v130
    %v1504 = vunpack.c.l.b16 %v131
    %v1505 = vunpack.c.h.b16 %v131
    %v1506 = vunpack.c.l.b16 %v132
    %v1507 = vunpack.c.h.b16 %v132
    %v1508 = vunpack.c.l.b16 %v133
    %v1509 = vunpack.c.h.b16 %v133
    %v1510 = vunpack.c.l.b16 %v134
    %v1511 = vunpack.c.h.b16 %v134
    %v1512 = vunpack.c.l.b16 %v135
    %v1513 = vunpack.c.h.b16 %v135
    %v1514 = vunpack.c.l.b16 %v136
    %v1515 = vunpack.c.h.b16 %v136
    %v1516 = vunpack.c.l.b16 %v137
    %v1517 = vunpack.c.h.b16 %v137
    %v1518 = vunpack.c.l.b16 %v138
    %v1519 = vunpack.c.h.b16 %v138
    %v1520 = vunpack.c.l.b16 %v139
    %v1521 = vunpack.c.h.b16 %v139
    %v1522 = vunpack.c.l.b16 %v140
    %v1523 = vunpack.c.h.b16 %v140
    %v1524 = vunpack.c.l.b16 %v141
    %v1525 = vunpack.c.h.b16 %v141
    %v1526 = vunpack.c.l.b16 %v142
    %v1527 = vunpack.c.h.b16 %v142
    %v1528 = vunpack.c.l.b16 %v143
    %v1529 = vunpack.c.h.b16 %v143
    %v1530 = vunpack.c.l.b16 %v144
    %v1531 = vunpack.c.h.b16 %v144
    %v1532 = vunpack.c.l.b16 %v145
    %v1533 = vunpack.c.h.b16 %v145
    %v1534 = vunpack.c.l.b16 %v146
    %v1535 = vunpack.c.h.b16 %v146
    %v1536 = vunpack.c.l.b16 %v147
    %v1537 = vunpack.c.h.b16 %v147
    %v1538 = vunpack.c.l.b16 %v148
    %v1539 = vunpack.c.h.b16 %v148
    %v1540 = vunpack.c.l.b16 %v149
    %v1541 = vunpack.c.h.b16 %v149
    %v1542 = vunpack.c.l.b16 %v150
    %v1543 = vunpack.c.h.b16 %v150
    %v1544 = vunpack.c.l.b16 %v151
    %v1545 = vunpack.c.h.b16 %v151
    %v1546 = vunpack.c.l.b16 %v152
    %v1547 = vunpack.c.h.b16 %v152
    %v1548 = vunpack.c.l.b16 %v153
    %v1549 = vunpack.c.h.b16 %v153
    %v1550 = vunpack.c.l.b16 %v154
    %v1551 = vunpack.c.h.b16 %v154
    %v1552 = vunpack.c.l.b16 %v155
    %v1553 = vunpack.c.h.b16 %v155
    %v1554 = vunpack.c.l.b16 %v156
    %v1555 = vunpack.c.h.b16 %v156
    %v1556 = vunpack.c.l.b16 %v157
    %v1557 = vunpack.c.h.b16 %v157
    %v1558 = vunpack.c.l.b16 %v158
    %v1559 = vunpack.c.h.b16 %v158
    %v1560 = vunpack.c.l.b16 %v159
    %v1561 = vunpack.c.h.b16 %v159
    %v1562 = vunpack.c.l.b16 %v160
    %v1563 = vunpack.c.h.b16 %v160
    %v1564 = vunpack.c.l.b16 %v161
    %v1565 = vunpack.c.h.b16 %v161
    %v1566 = vunpack.c.l.b16 %v162
    %v1567 = vunpack.c.h.b16 %v162
    %v1568 = vunpack.c.l.b16 %v163
    %v1569 = vunpack.c.h.b16 %v163
    %v1570 = vunpack.c.l.b16 %v164
    %v1571 = vunpack.c.h.b16 %v164
    %v1572 = vunpack.c.l.b16 %v165
    %v1573 = vunpack.c.h.b16 %v165
    %v1574 = vunpack.c.l.b16 %v166
    %v1575 = vunpack.c.h.b16 %v166
    %v1576 = vunpack.c.l.b16 %v167
    %v1577 = vunpack.c.h.b16 %v167
    %v1578 = vunpack.c.l.b16 %v168
    %v1579 = vunpack.c.h.b16 %v168
    %v1580 = vunpack.c.l.b16 %v169
    %v1581 = vunpack.c.h.b16 %v169
    %v1582 = vunpack.c.l.b16 %v170
    %v1583 = vunpack.c.h.b16 %v170
    %v1584 = vunpack.c.l.b16 %v171
    %v1585 = vunpack.c.h.b16 %v171
    %v1586 = vunpack.c.l.b16 %v172
    %v1587 = vunpack.c.h.b16 %v172
    %v1588 = vunpack.c.l.b16 %v173
    %v1589 = vunpack.c.h.b16 %v173
    %v1590 = vunpack.c.l.b16 %v174
    %v1591 = vunpack.c.h.b16 %v174
    %v1592 = vunpack.c.l.b16 %v175
    %v1593 = vunpack.c.h.b16 %v175
    %v1594 = vunpack.c.l.b16 %v176
    %v1595 = vunpack.c.h.b16 %v176
    %v1596 = vunpack.c.l.b16 %v177
    %v1597 = vunpack.c.h.b16 %v177
    %v1598 = vunpack.c.l.b16 %v178
    %v1599 = vunpack.c.h.b16 %v178
    %v1600 = vunpack.c.l.b16 %v179
    %v1601 = vunpack.c.h.b16 %v179
    %v1602 = vunpack.c.l.b16 %v180
    %v1603 = vunpack.c.h.b16 %v180
    %v1604 = vunpack.c.l.b16 %v181
    %v1605 = vunpack.c.h.b16 %v181
    %v1606 = vunpack.c.l.b16 %v182
    %v1607 = vunpack.c.h.b16 %v182
    %v1608 = vunpack.c.l.b16 %v183
    %v1609 = vunpack.c.h.b16 %v183
    %v1610 = vunpack.c.l.b16 %v184
    %v1611 = vunpack.c.h.b16 %v184
    %v1612 = vunpack.c.l.b16 %v185
    %v1613 = vunpack.c.h.b16 %v185
    %v1614 = vunpack.c.l.b16 %v186
    %v1615 = vunpack.c.h.b16 %v186
    %v1616 = vunpack.c.l.b16 %v187
    %v1617 = vunpack.c.h.b16 %v187
    %v1618 = vunpack.c.l.b16 %v188
    %v1619 = vunpack.c.h.b16 %v188
    %v1620 = vunpack.c.l.b16 %v189
    %v1621 = vunpack.c.h.b16 %v189
    %v1622 = vunpack.c.l.b16 %v190
    %v1623 = vunpack.c.h.b16 %v190
    %v1624 = vunpack.c.l.b16 %v191
    %v1625 = vunpack.c.h.b16 %v191
    %v1626 = vunpack.c.l.b16 %v192
    %v1627 = vunpack.c.h.b16 %v192
    %v1628 = vunpack.c.l.b16 %v193
    %v1629 = vunpack.c.h.b16 %v193
    %v1630 = vunpack.c.l.b16 %v194
    %v1631 = vunpack.c.h.b16 %v194
    %v1632 = vunpack.c.l.b16 %v195
    %v1633 = vunpack.c.h.b16 %v195
    %v1634 = vunpack.c.l.b16 %v196
    %v1635 = vunpack.c.h.b16 %v196
    %v1636 = vunpack.c.l.b16 %v197
    %v1637 = vunpack.c.h.b16 %v197
    %v1638 = vunpack.c.l.b16 %v198
    %v1639 = vunpack.c.h.b16 %v198
    %v1640 = vunpack.c.l.b16 %v199
    %v1641 = vunpack.c.h.b16 %v199
    %v1642 = vunpack.c.l.b16 %v200
    %v1643 = vunpack.c.h.b16 %v200
    %v1644 = vunpack.c.l.b16 %v201
    %v1645 = vunpack.c.h.b16 %v201
    %v1646 = vunpack.c.l.b16 %v202
    %v1647 = vunpack.c.h.b16 %v202
    %v1648 = vunpack.c.l.b16 %v203
    %v1649 = vunpack.c.h.b16 %v203
    %v1650 = vunpack.c.l.b16 %v204
    %v1651 = vunpack.c.h.b16 %v204
    %v1652 = vunpack.c.l.b16 %v205
    %v1653 = vunpack.c.h.b16 %v205
    %v1654 = vunpack.c.l.b16 %v206
    %v1655 = vunpack.c.h.b16 %v206
    %v1656 = vunpack.c.l.b16 %v207
    %v1657 = vunpack.c.h.b16 %v207
    %v1658 = vunpack.c.l.b16 %v208
    %v1659 = vunpack.c.h.b16 %v208
    %v1660 = vunpack.c.l.b16 %v209
    %v1661 = vunpack.c.h.b16 %v209
    %v1662 = vunpack.c.l.b16 %v210
    %v1663 = vunpack.c.h.b16 %v210
    %v1664 = vunpack.c.l.b16 %v211
    %v1665 = vunpack.c.h.b16 %v211
    %v1666 = vunpack.c.l.b16 %v212
    %v1667 = vunpack.c.h.b16 %v212
    %v1668 = vunpack.c.l.b16 %v213
    %v1669 = vunpack.c.h.b16 %v213
    %v1670 = vunpack.c.l.b16 %v214
    %v1671 = vunpack.c.h.b16 %v214
    %v1672 = vunpack.c.l.b16 %v215
    %v1673 = vunpack.c.h.b16 %v215
    %v1674 = vunpack.c.l.b16 %v216
    %v1675 = vunpack.c.h.b16 %v216
    %v1676 = vunpack.c.l.b16 %v217
    %v1677 = vunpack.c.h.b16 %v217
    %v1678 = vunpack.c.l.b16 %v218
    %v1679 = vunpack.c.h.b16 %v218
    %v1680 = vunpack.c.l.b16 %v219
    %v1681 = vunpack.c.h.b16 %v219
    %v1682 = vunpack.c.l.b16 %v220
    %v1683 = vunpack.c.h.b16 %v220
    %v1684 = vunpack.c.l.b16 %v221
    %v1685 = vunpack.c.h.b16 %v221
    %v1686 = vunpack.c.l.b16 %v222
    %v1687 = vunpack.c.h.b16 %v222
    %v1688 = vunpack.c.l.b16 %v223
    %v1689 = vunpack.c.h.b16 %v223
    %v1690 = vunpack.c.l.b16 %v224
    %v1691 = vunpack.c.h.b16 %v224
    %v1692 = vunpack.c.l.b16 %v225
    %v1693 = vunpack.c.h.b16 %v225
    %v1694 = vunpack.c.l.b16 %v226
    %v1695 = vunpack.c.h.b16 %v226
    %v1696 = vunpack.c.l.b16 %v227
    %v1697 = vunpack.c.h.b16 %v227
    %v1698 = vunpack.c.l.b16 %v228
    %v1699 = vunpack.c.h.b16 %v228
    %v1700 = vunpack.c.l.b16 %v229
    %v1701 = vunpack.c.h.b16 %v229
    %v1702 = vunpack.c.l.b16 %v230
    %v1703 = vunpack.c.h.b16 %v230
    %v1704 = vunpack.c.l.b16 %v231
    %v1705 = vunpack.c.h.b16 %v231
    %v1706 = vunpack.c.l.b16 %v232
    %v1707 = vunpack.c.h.b16 %v232
    %v1708 = vunpack.c.l.b16 %v233
    %v1709 = vunpack.c.h.b16 %v233
    %v1710 = vunpack.c.l.b16 %v234
    %v1711 = vunpack.c.h.b16 %v234
    %v1712 = vunpack.c.l.b16 %v235
    %v1713 = vunpack.c.h.b16 %v235
    %v1714 = vunpack.c.l.b16 %v236
    %v1715 = vunpack.c.h.b16 %v236
    %v1716 = vunpack.c.l.b16 %v237
    %v1717 = vunpack.c.h.b16 %v237
    %v1718 = vunpack.c.l.b16 %v238
    %v1719 = vunpack.c.h.b16 %v238
    %v1720 = vunpack.c.l.b16 %v239
    %v1721 = vunpack.c.h.b16 %v239
    %v1722 = vunpack.c.l.b16 %v240
    %v1723 = vunpack.c.h.b16 %v240
    %v1724 = vunpack.c.l.b16 %v241
    %v1725 = vunpack.c.h.b16 %v241
    %v1726 = vunpack.c.l.b16 %v242
    %v1727 = vunpack.c.h.b16 %v242
    %v1728 = vunpack.c.l.b16 %v243
    %v1729 = vunpack.c.h.b16 %v243
    %v1730 = vunpack.c.l.b16 %v244
    %v1731 = vunpack.c.h.b16 %v244
    %v1732 = vunpack.c.l.b16 %v245
    %v1733 = vunpack.c.h.b16 %v245
    %v1734 = vunpack.c.l.b16 %v246
    %v1735 = vunpack.c.h.b16 %v246
    %v1736 = vunpack.c.l.b16 %v247
    %v1737 = vunpack.c.h.b16 %v247
    %v1738 = vunpack.c.l.b16 %v248
    %v1739 = vunpack.c.h.b16 %v248
    %v1740 = vunpack.c.l.b16 %v249
    %v1741 = vunpack.c.h.b16 %v249
    %v1742 = vunpack.c.l.b16 %v250
    %v1743 = vunpack.c.h.b16 %v250
    %v1744 = vunpack.c.l.b16 %v251
    %v1745 = vunpack.c.h.b16 %v251
    %v1746 = vunpack.c.l.b16 %v252
    %v1747 = vunpack.c.h.b16 %v252
    %v1748 = vunpack.c.l.b16 %v253
    %v1749 = vunpack.c.h.b16 %v253
    %v1750 = vunpack.c.l.b16 %v254
    %v1751 = vunpack.c.h.b16 %v254
    %v1752 = vunpack.c.l.b16 %v255
    %v1753 = vunpack.c.h.b16 %v255
    %v1754 = vunpack.c.l.b16 %v256
    %v1755 = vunpack.c.h.b16 %v256
    %v1756 = vunpack.c.l.b16 %v257
    %v1757 = vunpack.c.h.b16 %v257
    %v1758 = vunpack.c.l.b16 %v258
    %v1759 = vunpack.c.h.b16 %v258
    %v1760 = vunpack.c.l.b16 %v259
    %v1761 = vunpack.c.h.b16 %v259
    %v1762 = vunpack.c.l.b16 %v260
    %v1763 = vunpack.c.h.b16 %v260
    %v1764 = vunpack.c.l.b16 %v261
    %v1765 = vunpack.c.h.b16 %v261
    %v1766 = vunpack.c.l.b16 %v262
    %v1767 = vunpack.c.h.b16 %v262
    %v1768 = vunpack.c.l.b16 %v263
    %v1769 = vunpack.c.h.b16 %v263
    %v1770 = vunpack.c.l.b16 %v264
    %v1771 = vunpack.c.h.b16 %v264
    %v1772 = vunpack.c.l.b16 %v265
    %v1773 = vunpack.c.h.b16 %v265
    %v1774 = vunpack.c.l.b16 %v266
    %v1775 = vunpack.c.h.b16 %v266
    %v1776 = vunpack.c.l.b16 %v267
    %v1777 = vunpack.c.h.b16 %v267
    %v1778 = vunpack.c.l.b16 %v268
    %v1779 = vunpack.c.h.b16 %v268
    %v1780 = vunpack.c.l.b16 %v269
    %v1781 = vunpack.c.h.b16 %v269
    %v1782 = vunpack.c.l.b16 %v270
    %v1783 = vunpack.c.h.b16 %v270
    %v1784 = vunpack.c.l.b16 %v271
    %v1785 = vunpack.c.h.b16 %v271
    %v1786 = vunpack.c.l.b16 %v272
    %v1787 = vunpack.c.h.b16 %v272
    %v1788 = vunpack.c.l.b16 %v273
    %v1789 = vunpack.c.h.b16 %v273
    %v1790 = vunpack.c.l.b16 %v274
    %v1791 = vunpack.c.h.b16 %v274
    %v1792 = vunpack.c.l.b16 %v275
    %v1793 = vunpack.c.h.b16 %v275
    %v1794 = vunpack.c.l.b16 %v276
    %v1795 = vunpack.c.h.b16 %v276
    %v1796 = vunpack.c.l.b16 %v277
    %v1797 = vunpack.c.h.b16 %v277
    %v1798 = vunpack.c.l.b16 %v278
    %v1799 = vunpack.c.h.b16 %v278
    %v1800 = vunpack.c.l.b16 %v279
    %v1801 = vunpack.c.h.b16 %v279
    %v1802 = vunpack.c.l.b16 %v280
    %v1803 = vunpack.c.h.b16 %v280
    %v1804 = vunpack.c.l.b16 %v281
    %v1805 = vunpack.c.h.b16 %v281
    %v1806 = vunpack.c.l.b16 %v282
    %v1807 = vunpack.c.h.b16 %v282
    %v1808 = vunpack.c.l.b16 %v283
    %v1809 = vunpack.c.h.b16 %v283
    %v1810 = vunpack.c.l.b16 %v284
    %v1811 = vunpack.c.h.b16 %v284
    %v1812 = vunpack.c.l.b16 %v285
    %v1813 = vunpack.c.h.b16 %v285
    %v1814 = vunpack.c.l.b16 %v286
    %v1815 = vunpack.c.h.b16 %v286
    %v1816 = vunpack.c.l.b16 %v287
    %v1817 = vunpack.c.h.b16 %v287
    %v1818 = vunpack.c.l.b16 %v288
    %v1819 = vunpack.c.h.b16 %v288
    %v1820 = vunpack.c.l.b16 %v289
    %v1821 = vunpack.c.h.b16 %v289
    %v1822 = vunpack.c.l.b16 %v290
    %v1823 = vunpack.c.h.b16 %v290
    %v1824 = vunpack.c.l.b16 %v291
    %v1825 = vunpack.c.h.b16 %v291
    %v1826 = vunpack.c.l.b16 %v292
    %v1827 = vunpack.c.h.b16 %v292
    %v1828 = vunpack.c.l.b16 %v293
    %v1829 = vunpack.c.h.b16 %v293
    %v1830 = vunpack.c.l.b16 %v294
    %v1831 = vunpack.c.h.b16 %v294
    %v1832 = vunpack.c.l.b16 %v295
    %v1833 = vunpack.c.h.b16 %v295
    %v1834 = vunpack.c.l.b16 %v296
    %v1835 = vunpack.c.h.b16 %v296
    %v1836 = vunpack.c.l.b16 %v297
    %v1837 = vunpack.c.h.b16 %v297
    %v1838 = vunpack.c.l.b16 %v298
    %v1839 = vunpack.c.h.b16 %v298
    %v1840 = vunpack.c.l.b16 %v299
    %v1841 = vunpack.c.h.b16 %v299
    %v1842 = vunpack.c.l.b16 %v300
    %v1843 = vunpack.c.h.b16 %v300
    %v1844 = vunpack.c.l.b16 %v301
    %v1845 = vunpack.c.h.b16 %v301
    %v1846 = vunpack.c.l.b16 %v302
    %v1847 = vunpack.c.h.b16 %v302
    %v1848 = vunpack.c.l.b16 %v303
    %v1849 = vunpack.c.h.b16 %v303
    %v1850 = vunpack.c.l.b16 %v304
    %v1851 = vunpack.c.h.b16 %v304
    %v1852 = vunpack.c.l.b16 %v305
    %v1853 = vunpack.c.h.b16 %v305
    %v1854 = vunpack.c.l.b16 %v306
    %v1855 = vunpack.c.h.b16 %v306
    %v1856 = vunpack.c.l.b16 %v307
    %v1857 = vunpack.c.h.b16 %v307
    %v1858 = vunpack.c.l.b16 %v308
    %v1859 = vunpack.c.h.b16 %v308
    %v1860 = vunpack.c.l.b16 %v309
    %v1861 = vunpack.c.h.b16 %v309
    %v1862 = vunpack.c.l.b16 %v310
    %v1863 = vunpack.c.h.b16 %v310
    %v1864 = vunpack.c.l.b16 %v311
    %v1865 = vunpack.c.h.b16 %v311
    %v1866 = vunpack.c.l.b16 %v312
    %v1867 = vunpack.c.h.b16 %v312
    %v1868 = vunpack.c.l.b16 %v313
    %v1869 = vunpack.c.h.b16 %v313
    %v1870 = vunpack.c.l.b16 %v314
    %v1871 = vunpack.c.h.b16 %v314
    %v1872 = vunpack.c.l.b16 %v315
    %v1873 = vunpack.c.h.b16 %v315
    %v1874 = vunpack.c.l.b16 %v316
    %v1875 = vunpack.c.h.b16 %v316
    %v1876 = vunpack.c.l.b16 %v317
    %v1877 = vunpack.c.h.b16 %v317
    %v1878 = vunpack.c.l.b16 %v318
    %v1879 = vunpack.c.h.b16 %v318
    %v1880 = vunpack.c.l.b16 %v319
    %v1881 = vunpack.c.h.b16 %v319
    %v1882 = vunpack.c.l.b16 %v320
    %v1883 = vunpack.c.h.b16 %v320
    %v1884 = vunpack.c.l.b16 %v321
    %v1885 = vunpack.c.h.b16 %v321
    %v1886 = vunpack.c.l.b16 %v322
    %v1887 = vunpack.c.h.b16 %v322
    %v1888 = vunpack.c.l.b16 %v323
    %v1889 = vunpack.c.h.b16 %v323
    %v1890 = vunpack.c.l.b16 %v324
    %v1891 = vunpack.c.h.b16 %v324
    %v1892 = vunpack.c.l.b16 %v325
    %v1893 = vunpack.c.h.b16 %v325
    %v1894 = vunpack.c.l.b16 %v326
    %v1895 = vunpack.c.h.b16 %v326
    %v1896 = vunpack.c.l.b16 %v327
    %v1897 = vunpack.c.h.b16 %v327
    %v1898 = vunpack.c.l.b16 %v328
    %v1899 = vunpack.c.h.b16 %v328
    %v1900 = vunpack.c.l.b16 %v329
    %v1901 = vunpack.c.h.b16 %v329
    %v1902 = vunpack.c.l.b16 %v330
    %v1903 = vunpack.c.h.b16 %v330
    %v1904 = vunpack.c.l.b16 %v331
    %v1905 = vunpack.c.h.b16 %v331
    %v1906 = vunpack.c.l.b16 %v332
    %v1907 = vunpack.c.h.b16 %v332
    %v1908 = vunpack.c.l.b16 %v333
    %v1909 = vunpack.c.h.b16 %v333
    %v1910 = vunpack.c.l.b16 %v334
    %v1911 = vunpack.c.h.b16 %v334
    %v1912 = vunpack.c.l.b16 %v335
    %v1913 = vunpack.c.h.b16 %v335
    %v1914 = vunpack.c.l.b16 %v336
    %v1915 = vunpack.c.h.b16 %v336
    %v1916 = vunpack.c.l.b16 %v337
    %v1917 = vunpack.c.h.b16 %v337
    %v1918 = vunpack.c.l.b16 %v338
    %v1919 = vunpack.c.h.b16 %v338
    %v1920 = vunpack.c.l.b16 %v339
    %v1921 = vunpack.c.h.b16 %v339
    %v1922 = vunpack.c.l.b16 %v340
    %v1923 = vunpack.c.h.b16 %v340
    %v1924 = vunpack.c.l.b16 %v341
    %v1925 = vunpack.c.h.b16 %v341
    %v1926 = vunpack.c.l.b16 %v342
    %v1927 = vunpack.c.h.b16 %v342
    %v1928 = vunpack.c.l.b16 %v343
    %v1929 = vunpack.c.h.b16 %v343
    %v1930 = vunpack.c.l.b16 %v344
    %v1931 = vunpack.c.h.b16 %v344
    %v1932 = vunpack.c.l.b16 %v345
    %v1933 = vunpack.c.h.b16 %v345
    %v1934 = vunpack.c.l.b16 %v346
    %v1935 = vunpack.c.h.b16 %v346
    %v1936 = vunpack.c.l.b16 %v347
    %v1937 = vunpack.c.h.b16 %v347
    %v1938 = vunpack.c.l.b16 %v348
    %v1939 = vunpack.c.h.b16 %v348
    %v1940 = vunpack.c.l.b16 %v349
    %v1941 = vunpack.c.h.b16 %v349
    %v1942 = vunpack.c.l.b16 %v350
    %v1943 = vunpack.c.h.b16 %v350
    %v1944 = vunpack.c.l.b16 %v351
    %v1945 = vunpack.c.h.b16 %v351
    %v1946 = vunpack.c.l.b16 %v352
    %v1947 = vunpack.c.h.b16 %v352
    %v1948 = vunpack.c.l.b16 %v353
    %v1949 = vunpack.c.h.b16 %v353
    %v1950 = vunpack.c.l.b16 %v354
    %v1951 = vunpack.c.h.b16 %v354
    %v1952 = vunpack.c.l.b16 %v355
    %v1953 = vunpack.c.h.b16 %v355
    %v1954 = vunpack.c.l.b16 %v356
    %v1955 = vunpack.c.h.b16 %v356
    %v1956 = vunpack.c.l.b16 %v357
    %v1957 = vunpack.c.h.b16 %v357
    %v1958 = vunpack.c.l.b16 %v358
    %v1959 = vunpack.c.h.b16 %v358
    %v1960 = vunpack.c.l.b16 %v359
    %v1961 = vunpack.c.h.b16 %v359
    %v1962 = vunpack.c.l.b16 %v360
    %v1963 = vunpack.c.h.b16 %v360
    %v1964 = vunpack.c.l.b16 %v361
    %v1965 = vunpack.c.h.b16 %v361
    %v1966 = vunpack.c.l.b16 %v362
    %v1967 = vunpack.c.h.b16 %v362
    %v1968 = vunpack.c.l.b16 %v363
    %v1969 = vunpack.c.h.b16 %v363
    %v1970 = vunpack.c.l.b16 %v364
    %v1971 = vunpack.c.h.b16 %v364
    %v1972 = vunpack.c.l.b16 %v365
    %v1973 = vunpack.c.h.b16 %v365
    %v1974 = vunpack.c.l.b16 %v366
    %v1975 = vunpack.c.h.b16 %v366
    %v1976 = vunpack.c.l.b16 %v367
    %v1977 = vunpack.c.h.b16 %v367
    %v1978 = vunpack.c.l.b16 %v368
    %v1979 = vunpack.c.h.b16 %v368
    %v1980 = vunpack.c.l.b16 %v369
    %v1981 = vunpack.c.h.b16 %v369
    %v1982 = vunpack.c.l.b16 %v370
    %v1983 = vunpack.c.h.b16 %v370
    %v1984 = vunpack.c.l.b16 %v371
    %v1985 = vunpack.c.h.b16 %v371
    %v1986 = vunpack.c.l.b16 %v372
    %v1987 = vunpack.c.h.b16 %v372
    %v1988 = vunpack.c.l.b16 %v373
    %v1989 = vunpack.c.h.b16 %v373
    %v1990 = vunpack.c.l.b16 %v374
    %v1991 = vunpack.c.h.b16 %v374
    %v1992 = vunpack.c.l.b16 %v375
    %v1993 = vunpack.c.h.b16 %v375
    %v1994 = vunpack.c.l.b16 %v376
    %v1995 = vunpack.c.h.b16 %v376
    %v1996 = vunpack.c.l.b16 %v377
    %v1997 = vunpack.c.h.b16 %v377
    %v1998 = vunpack.c.l.b16 %v378
    %v1999 = vunpack.c.h.b16 %v378
    %v2000 = vunpack.c.l.b16 %v379
    %v2001 = vunpack.c.h.b16 %v379
    %v2002 = vunpack.c.l.b16 %v380
    %v2003 = vunpack.c.h.b16 %v380
    %v2004 = vunpack.c.l.b16 %v381
    %v2005 = vunpack.c.h.b16 %v381
    %v2006 = vunpack.c.l.b16 %v382
    %v2007 = vunpack.c.h.b16 %v382
    %v2008 = vunpack.c.l.b16 %v383
    %v2009 = vunpack.c.h.b16 %v383
    %v2010 = vunpack.c.l.b16 %v384
    %v2011 = vunpack.c.h.b16 %v384
    %v2012 = vunpack.c.l.b16 %v385
    %v2013 = vunpack.c.h.b16 %v385
    %v2014 = vunpack.c.l.b16 %v386
    %v2015 = vunpack.c.h.b16 %v386
    %v2016 = vunpack.c.l.b16 %v387
    %v2017 = vunpack.c.h.b16 %v387
    %v2018 = vunpack.c.l.b16 %v388
    %v2019 = vunpack.c.h.b16 %v388
    %v2020 = vunpack.c.l.b16 %v389
    %v2021 = vunpack.c.h.b16 %v389
    %v2022 = vunpack.c.l.b16 %v390
    %v2023 = vunpack.c.h.b16 %v390
    %v2024 = vunpack.c.l.b16 %v391
    %v2025 = vunpack.c.h.b16 %v391
    %v2026 = vunpack.c.l.b16 %v392
    %v2027 = vunpack.c.h.b16 %v392
    %v2028 = vunpack.c.l.b16 %v393
    %v2029 = vunpack.c.h.b16 %v393
    %v2030 = vunpack.c.l.b16 %v394
    %v2031 = vunpack.c.h.b16 %v394
    %v2032 = vunpack.c.l.b16 %v395
    %v2033 = vunpack.c.h.b16 %v395
    %v2034 = vunpack.c.l.b16 %v396
    %v2035 = vunpack.c.h.b16 %v396
    %v2036 = vunpack.c.l.b16 %v397
    %v2037 = vunpack.c.h.b16 %v397
    %v2038 = vunpack.c.l.b16 %v398
    %v2039 = vunpack.c.h.b16 %v398
    %v2040 = vunpack.c.l.b16 %v399
    %v2041 = vunpack.c.h.b16 %v399
    %v2042 = vunpack.c.l.b16 %v400
    %v2043 = vunpack.c.h.b16 %v400
    %v2044 = vunpack.c.l.b16 %v401
    %v2045 = vunpack.c.h.b16 %v401
    %v2046 = vunpack.c.l.b16 %v402
    %v2047 = vunpack.c.h.b16 %v402
    %v2048 = vunpack.c.l.b16 %v403
    %v2049 = vunpack.c.h.b16 %v403
    %v2050 = vunpack.c.l.b16 %v404
    %v2051 = vunpack.c.h.b16 %v404
    %v2052 = vunpack.c.l.b16 %v405
    %v2053 = vunpack.c.h.b16 %v405
    %v2054 = vunpack.c.l.b16 %v406
    %v2055 = vunpack.c.h.b16 %v406
    %v2056 = vunpack.c.l.b16 %v407
    %v2057 = vunpack.c.h.b16 %v407
    %v2058 = vunpack.c.l.b16 %v408
    %v2059 = vunpack.c.h.b16 %v408
    %v2060 = vunpack.c.l.b16 %v409
    %v2061 = vunpack.c.h.b16 %v409
    %v2062 = vunpack.c.l.b16 %v410
    %v2063 = vunpack.c.h.b16 %v410
    %v2064 = vunpack.c.l.b16 %v411
    %v2065 = vunpack.c.h.b16 %v411
    %v2066 = vunpack.c.l.b16 %v412
    %v2067 = vunpack.c.h.b16 %v412
    %v2068 = vunpack.c.l.b16 %v413
    %v2069 = vunpack.c.h.b16 %v413
    %v2070 = vunpack.c.l.b16 %v414
    %v2071 = vunpack.c.h.b16 %v414
    %v2072 = vunpack.c.l.b16 %v415
    %v2073 = vunpack.c.h.b16 %v415
    %v2074 = vunpack.c.l.b16 %v416
    %v2075 = vunpack.c.h.b16 %v416
    %v2076 = vunpack.c.l.b16 %v417
    %v2077 = vunpack.c.h.b16 %v417
    %v2078 = vunpack.c.l.b16 %v418
    %v2079 = vunpack.c.h.b16 %v418
    %v2080 = vunpack.c.l.b16 %v419
    %v2081 = vunpack.c.h.b16 %v419
    %v2082 = vunpack.c.l.b16 %v420
    %v2083 = vunpack.c.h.b16 %v420
    %v2084 = vunpack.c.l.b16 %v421
    %v2085 = vunpack.c.h.b16 %v421
    %v2086 = vunpack.c.l.b16 %v422
    %v2087 = vunpack.c.h.b16 %v422
    %v2088 = vunpack.c.l.b16 %v423
    %v2089 = vunpack.c.h.b16 %v423
    %v2090 = vunpack.c.l.b16 %v424
    %v2091 = vunpack.c.h.b16 %v424
    %v2092 = vunpack.c.l.b16 %v425
    %v2093 = vunpack.c.h.b16 %v425
    %v2094 = vunpack.c.l.b16 %v426
    %v2095 = vunpack.c.h.b16 %v426
    %v2096 = vunpack.c.l.b16 %v427
    %v2097 = vunpack.c.h.b16 %v427
    %v2098 = vunpack.c.l.b16 %v428
    %v2099 = vunpack.c.h.b16 %v428
    %v2100 = vunpack.c.l.b16 %v429
    %v2101 = vunpack.c.h.b16 %v429
    %v2102 = vunpack.c.l.b16 %v430
    %v2103 = vunpack.c.h.b16 %v430
    %v2104 = vunpack.c.l.b16 %v431
    %v2105 = vunpack.c.h.b16 %v431
    %v2106 = vunpack.c.l.b16 %v432
    %v2107 = vunpack.c.h.b16 %v432
    %v2108 = vunpack.c.l.b16 %v433
    %v2109 = vunpack.c.h.b16 %v433
    %v2110 = vunpack.c.l.b16 %v434
    %v2111 = vunpack.c.h.b16 %v434
    %v2112 = vunpack.c.l.b16 %v435
    %v2113 = vunpack.c.h.b16 %v435
    %v2114 = vunpack.c.l.b16 %v436
    %v2115 = vunpack.c.h.b16 %v436
    %v2116 = vunpack.c.l.b16 %v437
    %v2117 = vunpack.c.h.b16 %v437
    %v2118 = vunpack.c.l.b16 %v438
    %v2119 = vunpack.c.h.b16 %v438
    %v2120 = vunpack.c.l.b16 %v439
    %v2121 = vunpack.c.h.b16 %v439
    %v2122 = vunpack.c.l.b16 %v440
    %v2123 = vunpack.c.h.b16 %v440
    %v2124 = vunpack.c.l.b16 %v441
    %v2125 = vunpack.c.h.b16 %v441
    %v2126 = vunpack.c.l.b16 %v442
    %v2127 = vunpack.c.h.b16 %v442
    %v2128 = vunpack.c.l.b16 %v443
    %v2129 = vunpack.c.h.b16 %v443
    %v2130 = vunpack.c.l.b16 %v444
    %v2131 = vunpack.c.h.b16 %v444
    %v2132 = vunpack.c.l.b16 %v445
    %v2133 = vunpack.c.h.b16 %v445
    %v2134 = vunpack.c.l.b16 %v446
    %v2135 = vunpack.c.h.b16 %v446
    %v2136 = vunpack.c.l.b16 %v447
    %v2137 = vunpack.c.h.b16 %v447
    %v2138 = vunpack.c.l.b16 %v448
    %v2139 = vunpack.c.h.b16 %v448
    %v2140 = vunpack.c.l.b16 %v449
    %v2141 = vunpack.c.h.b16 %v449
    %v2142 = vunpack.c.l.b16 %v450
    %v2143 = vunpack.c.h.b16 %v450
    %v2144 = vunpack.c.l.b16 %v451
    %v2145 = vunpack.c.h.b16 %v451
    %v2146 = vunpack.c.l.b16 %v452
    %v2147 = vunpack.c.h.b16 %v452
    %v2148 = vunpack.c.l.b16 %v453
    %v2149 = vunpack.c.h.b16 %v453
    %v2150 = vunpack.c.l.b16 %v454
    %v2151 = vunpack.c.h.b16 %v454
    %v2152 = vunpack.c.l.b16 %v455
    %v2153 = vunpack.c.h.b16 %v455
    %v2154 = vunpack.c.l.b16 %v456
    %v2155 = vunpack.c.h.b16 %v456
    %v2156 = vunpack.c.l.b16 %v457
    %v2157 = vunpack.c.h.b16 %v457
    %v2158 = vunpack.c.l.b16 %v458
    %v2159 = vunpack.c.h.b16 %v458
    %v2160 = vunpack.c.l.b16 %v459
    %v2161 = vunpack.c.h.b16 %v459
    %v2162 = vunpack.c.l.b16 %v460
    %v2163 = vunpack.c.h.b16 %v460
    %v2164 = vunpack.c.l.b16 %v461
    %v2165 = vunpack.c.h.b16 %v461
    %v2166 = vunpack.c.l.b16 %v462
    %v2167 = vunpack.c.h.b16 %v462
    %v2168 = vunpack.c.l.b16 %v463
    %v2169 = vunpack.c.h.b16 %v463
    %v2170 = vunpack.c.l.b16 %v464
    %v2171 = vunpack.c.h.b16 %v464
    %v2172 = vunpack.c.l.b16 %v465
    %v2173 = vunpack.c.h.b16 %v465
    %v2174 = vunpack.c.l.b16 %v466
    %v2175 = vunpack.c.h.b16 %v466
    %v2176 = vunpack.c.l.b16 %v467
    %v2177 = vunpack.c.h.b16 %v467
    %v2178 = vunpack.c.l.b16 %v468
    %v2179 = vunpack.c.h.b16 %v468
    %v2180 = vunpack.c.l.b16 %v469
    %v2181 = vunpack.c.h.b16 %v469
    %v2182 = vunpack.c.l.b16 %v470
    %v2183 = vunpack.c.h.b16 %v470
    %v2184 = vunpack.c.l.b16 %v471
    %v2185 = vunpack.c.h.b16 %v471
    %v2186 = vunpack.c.l.b16 %v472
    %v2187 = vunpack.c.h.b16 %v472
    %v2188 = vunpack.c.l.b16 %v473
    %v2189 = vunpack.c.h.b16 %v473
    %v2190 = vunpack.c.l.b16 %v474
    %v2191 = vunpack.c.h.b16 %v474
    %v2192 = vunpack.c.l.b16 %v475
    %v2193 = vunpack.c.h.b16 %v475
    %v2194 = vunpack.c.l.b16 %v476
    %v2195 = vunpack.c.h.b16 %v476
    %v2196 = vunpack.c.l.b16 %v477
    %v2197 = vunpack.c.h.b16 %v477
    %v2198 = vunpack.c.l.b16 %v478
    %v2199 = vunpack.c.h.b16 %v478
    %v2200 = vunpack.c.l.b16 %v479
    %v2201 = vunpack.c.h.b16 %v479
    %v2202 = vunpack.c.l.b16 %v480
    %v2203 = vunpack.c.h.b16 %v480
    %v2204 = vunpack.c.l.b16 %v481
    %v2205 = vunpack.c.h.b16 %v481
    %v2206 = vunpack.c.l.b16 %v482
    %v2207 = vunpack.c.h.b16 %v482
    %v2208 = vunpack.c.l.b16 %v483
    %v2209 = vunpack.c.h.b16 %v483
    %v2210 = vunpack.c.l.b16 %v484
    %v2211 = vunpack.c.h.b16 %v484
    %v2212 = vunpack.c.l.b16 %v485
    %v2213 = vunpack.c.h.b16 %v485
    %v2214 = vunpack.c.l.b16 %v486
    %v2215 = vunpack.c.h.b16 %v486
    %v2216 = vunpack.c.l.b16 %v487
    %v2217 = vunpack.c.h.b16 %v487
    %v2218 = vunpack.c.l.b16 %v488
    %v2219 = vunpack.c.h.b16 %v488
    %v2220 = vunpack.c.l.b16 %v489
    %v2221 = vunpack.c.h.b16 %v489
    %v2222 = vunpack.c.l.b16 %v490
    %v2223 = vunpack.c.h.b16 %v490
    %v2224 = vunpack.c.l.b16 %v491
    %v2225 = vunpack.c.h.b16 %v491
    %v2226 = vunpack.c.l.b16 %v492
    %v2227 = vunpack.c.h.b16 %v492
    %v2228 = vunpack.c.l.b16 %v493
    %v2229 = vunpack.c.h.b16 %v493
    %v2230 = vunpack.c.l.b16 %v494
    %v2231 = vunpack.c.h.b16 %v494
    %v2232 = vunpack.c.l.b16 %v495
    %v2233 = vunpack.c.h.b16 %v495
    %v2234 = vunpack.c.l.b16 %v496
    %v2235 = vunpack.c.h.b16 %v496
    %v2236 = vunpack.c.l.b16 %v497
    %v2237 = vunpack.c.h.b16 %v497
    %v2238 = vunpack.c.l.b16 %v498
    %v2239 = vunpack.c.h.b16 %v498
    %v2240 = vunpack.c.l.b16 %v499
    %v2241 = vunpack.c.h.b16 %v499
    %v2242 = vunpack.c.l.b16 %v500
    %v2243 = vunpack.c.h.b16 %v500
    %v2244 = vunpack.c.l.b16 %v501
    %v2245 = vunpack.c.h.b16 %v501
    %v2246 = vunpack.c.l.b16 %v502
    %v2247 = vunpack.c.h.b16 %v502
    %v2248 = vunpack.c.l.b16 %v503
    %v2249 = vunpack.c.h.b16 %v503
    %v2250 = vunpack.c.l.b16 %v504
    %v2251 = vunpack.c.h.b16 %v504
    %v2252 = vunpack.c.l.b16 %v505
    %v2253 = vunpack.c.h.b16 %v505
    %v2254 = vunpack.c.l.b16 %v506
    %v2255 = vunpack.c.h.b16 %v506
    %v2256 = vunpack.c.l.b16 %v507
    %v2257 = vunpack.c.h.b16 %v507
    %v2258 = vunpack.c.l.b16 %v508
    %v2259 = vunpack.c.h.b16 %v508
    %v2260 = vunpack.c.l.b16 %v509
    %v2261 = vunpack.c.h.b16 %v509
    %v2262 = vunpack.c.l.b16 %v510
    %v2263 = vunpack.c.h.b16 %v510
    %v2264 = vunpack.c.l.b16 %v511
    %v2265 = vunpack.c.h.b16 %v511
    %v2266 = vunpack.c.l.b16 %v512
    %v2267 = vunpack.c.h.b16 %v512
    %v2268 = vunpack.c.l.b16 %v513
    %v2269 = vunpack.c.h.b16 %v513
    %v2270 = vunpack.c.l.b16 %v514
    %v2271 = vunpack.c.h.b16 %v514
    %v2272 = vunpack.c.l.b16 %v515
    %v2273 = vunpack.c.h.b16 %v515
    %v2274 = vunpack.c.l.b16 %v516
    %v2275 = vunpack.c.h.b16 %v516
    %v2276 = vunpack.c.l.b16 %v517
    %v2277 = vunpack.c.h.b16 %v517
    %v2278 = vunpack.c.l.b16 %v518
    %v2279 = vunpack.c.h.b16 %v518
    %v2280 = vunpack.c.l.b16 %v519
    %v2281 = vunpack.c.h.b16 %v519
    %v2282 = vunpack.c.l.b16 %v520
    %v2283 = vunpack.c.h.b16 %v520
    %v2284 = vunpack.c.l.b16 %v521
    %v2285 = vunpack.c.h.b16 %v521
    %v2286 = vunpack.c.l.b16 %v522
    %v2287 = vunpack.c.h.b16 %v522
    %v2288 = vunpack.c.l.b16 %v523
    %v2289 = vunpack.c.h.b16 %v523
    %v2290 = vunpack.c.l.b16 %v524
    %v2291 = vunpack.c.h.b16 %v524
    %v2292 = vunpack.c.l.b16 %v525
    %v2293 = vunpack.c.h.b16 %v525
    %v2294 = vunpack.c.l.b16 %v526
    %v2295 = vunpack.c.h.b16 %v526
    %v2296 = vunpack.c.l.b16 %v527
    %v2297 = vunpack.c.h.b16 %v527
    %v2298 = vunpack.c.l.b16 %v528
    %v2299 = vunpack.c.h.b16 %v528
    %v2300 = vunpack.c.l.b16 %v529
    %v2301 = vunpack.c.h.b16 %v529
    %v2302 = vunpack.c.l.b16 %v530
    %v2303 = vunpack.c.h.b16 %v530
    %v2304 = vunpack.c.l.b16 %v531
    %v2305 = vunpack.c.h.b16 %v531
    %v2306 = vunpack.c.l.b16 %v532
    %v2307 = vunpack.c.h.b16 %v532
    %v2308 = vunpack.c.l.b16 %v533
    %v2309 = vunpack.c.h.b16 %v533
    %v2310 = vunpack.c.l.b16 %v534
    %v2311 = vunpack.c.h.b16 %v534
    %v2312 = vunpack.c.l.b16 %v535
    %v2313 = vunpack.c.h.b16 %v535
    %v2314 = vunpack.c.l.b16 %v536
    %v2315 = vunpack.c.h.b16 %v536
    %v2316 = vunpack.c.l.b16 %v537
    %v2317 = vunpack.c.h.b16 %v537
    %v2318 = vpack.c.b16 %v1296, %v1294
    %v2319 = vpack.c.b16 %v1297, %v1295
    %v2320 = vpack.c.b16 %v1300, %v1298
    %v2321 = vpack.c.b16 %v1301, %v1299
    %v2322 = vpack.c.b16 %v1304, %v1302
    %v2323 = vpack.c.b16 %v1305, %v1303
    %v2324 = vpack.c.b16 %v1308, %v1306
    %v2325 = vpack.c.b16 %v1309, %v1307
    %v2326 = vpack.c.b16 %v1312, %v1310
    %v2327 = vpack.c.b16 %v1313, %v1311
    %v2328 = vpack.c.b16 %v1316, %v1314
    %v2329 = vpack.c.b16 %v1317, %v1315
    %v2330 = vpack.c.b16 %v1320, %v1318
    %v2331 = vpack.c.b16 %v1321, %v1319
    %v2332 = vpack.c.b16 %v1324, %v1322
    %v2333 = vpack.c.b16 %v1325, %v1323
    %v2334 = vpack.c.b16 %v1328, %v1326
    %v2335 = vpack.c.b16 %v1329, %v1327
    %v2336 = vpack.c.b16 %v1332, %v1330
    %v2337 = vpack.c.b16 %v1333, %v1331
    %v2338 = vpack.c.b16 %v1336, %v1334
    %v2339 = vpack.c.b16 %v1337, %v1335
    %v2340 = vpack.c.b16 %v1340, %v1338
    %v2341 = vpack.c.b16 %v1341, %v1339
    %v2342 = vpack.c.b16 %v1344, %v1342
    %v2343 = vpack.c.b16 %v1345, %v1343
    %v2344 = vpack.c.b16 %v1348, %v1346
    %v2345 = vpack.c.b16 %v1349, %v1347
    %v2346 = vpack.c.b16 %v1352, %v1350
    %v2347 = vpack.c.b16 %v1353, %v1351
    %v2348 = vpack.c.b16 %v1356, %v1354
    %v2349 = vpack.c.b16 %v1357, %v1355
    %v2350 = vpack.c.b16 %v1360, %v1358
    %v2351 = vpack.c.b16 %v1361, %v1359
    %v2352 = vpack.c.b16 %v1364, %v1362
    %v2353 = vpack.c.b16 %v1365, %v1363
    %v2354 = vpack.c.b16 %v1368, %v1366
    %v2355 = vpack.c.b16 %v1369, %v1367
    %v2356 = vpack.c.b16 %v1372, %v1370
    %v2357 = vpack.c.b16 %v1373, %v1371
    %v2358 = vpack.c.b16 %v1376, %v1374
    %v2359 = vpack.c.b16 %v1377, %v1375
    %v2360 = vpack.c.b16 %v1380, %v1378
    %v2361 = vpack.c.b16 %v1381, %v1379
    %v2362 = vpack.c.b16 %v1384, %v1382
    %v2363 = vpack.c.b16 %v1385, %v1383
    %v2364 = vpack.c.b16 %v1388, %v1386
    %v2365 = vpack.c.b16 %v1389, %v1387
    %v2366 = vpack.c.b16 %v1392, %v1390
    %v2367 = vpack.c.b16 %v1393, %v1391
    %v2368 = vpack.c.b16 %v1396, %v1394
    %v2369 = vpack.c.b16 %v1397, %v1395
    %v2370 = vpack.c.b16 %v1400, %v1398
    %v2371 = vpack.c.b16 %v1401, %v1399
    %v2372 = vpack.c.b16 %v1404, %v1402
    %v2373 = vpack.c.b16 %v1405, %v1403
    %v2374 = vpack.c.b16 %v1408, %v1406
    %v2375 = vpack.c.b16 %v1409, %v1407
    %v2376 = vpack.c.b16 %v1412, %v1410
    %v2377 = vpack.c.b16 %v1413, %v1411
    %v2378 = vpack.c.b16 %v1416, %v1414
    %v2379 = vpack.c.b16 %v1417, %v1415
    %v2380 = vpack.c.b16 %v1420, %v1418
    %v2381 = vpack.c.b16 %v1421, %v1419
    %v2382 = vpack.c.b16 %v1424, %v1422
    %v2383 = vpack.c.b16 %v1425, %v1423
    %v2384 = vpack.c.b16 %v1428, %v1426
    %v2385 = vpack.c.b16 %v1429, %v1427
    %v2386 = vpack.c.b16 %v1432, %v1430
    %v2387 = vpack.c.b16 %v1433, %v1431
    %v2388 = vpack.c.b16 %v1436, %v1434
    %v2389 = vpack.c.b16 %v1437, %v1435
    %v2390 = vpack.c.b16 %v1440, %v1438
    %v2391 = vpack.c.b16 %v1441, %v1439
    %v2392 = vpack.c.b16 %v1444, %v1442
    %v2393 = vpack.c.b16 %v1445, %v1443
    %v2394 = vpack.c.b16 %v1448, %v1446
    %v2395 = vpack.c.b16 %v1449, %v1447
    %v2396 = vpack.c.b16 %v1452, %v1450
    %v2397 = vpack.c.b16 %v1453, %v1451
    %v2398 = vpack.c.b16 %v1456, %v1454
    %v2399 = vpack.c.b16 %v1457, %v1455
    %v2400 = vpack.c.b16 %v1460, %v1458
    %v2401 = vpack.c.b16 %v1461, %v1459
    %v2402 = vpack.c.b16 %v1464, %v1462
    %v2403 = vpack.c.b16 %v1465, %v1463
    %v2404 = vpack.c.b16 %v1468, %v1466
    %v2405 = vpack.c.b16 %v1469, %v1467
    %v2406 = vpack.c.b16 %v1472, %v1470
    %v2407 = vpack.c.b16 %v1473, %v1471
    %v2408 = vpack.c.b16 %v1476, %v1474
    %v2409 = vpack.c.b16 %v1477, %v1475
    %v2410 = vpack.c.b16 %v1480, %v1478
    %v2411 = vpack.c.b16 %v1481, %v1479
    %v2412 = vpack.c.b16 %v1484, %v1482
    %v2413 = vpack.c.b16 %v1485, %v1483
    %v2414 = vpack.c.b16 %v1488, %v1486
    %v2415 = vpack.c.b16 %v1489, %v1487
    %v2416 = vpack.c.b16 %v1492, %v1490
    %v2417 = vpack.c.b16 %v1493, %v1491
    %v2418 = vpack.c.b16 %v1496, %v1494
    %v2419 = vpack.c.b16 %v1497, %v1495
    %v2420 = vpack.c.b16 %v1500, %v1498
    %v2421 = vpack.c.b16 %v1501, %v1499
    %v2422 = vpack.c.b16 %v1504, %v1502
    %v2423 = vpack.c.b16 %v1505, %v1503
    %v2424 = vpack.c.b16 %v1508, %v1506
    %v2425 = vpack.c.b16 %v1509, %v1507
    %v2426 = vpack.c.b16 %v1512, %v1510
    %v2427 = vpack.c.b16 %v1513, %v1511
    %v2428 = vpack.c.b16 %v1516, %v1514
    %v2429 = vpack.c.b16 %v1517, %v1515
    %v2430 = vpack.c.b16 %v1520, %v1518
    %v2431 = vpack.c.b16 %v1521, %v1519
    %v2432 = vpack.c.b16 %v1524, %v1522
    %v2433 = vpack.c.b16 %v1525, %v1523
    %v2434 = vpack.c.b16 %v1528, %v1526
    %v2435 = vpack.c.b16 %v1529, %v1527
    %v2436 = vpack.c.b16 %v1532, %v1530
    %v2437 = vpack.c.b16 %v1533, %v1531
    %v2438 = vpack.c.b16 %v1536, %v1534
    %v2439 = vpack.c.b16 %v1537, %v1535
    %v2440 = vpack.c.b16 %v1540, %v1538
    %v2441 = vpack.c.b16 %v1541, %v1539
    %v2442 = vpack.c.b16 %v1544, %v1542
    %v2443 = vpack.c.b16 %v1545, %v1543
    %v2444 = vpack.c.b16 %v1548, %v1546
    %v2445 = vpack.c.b16 %v1549, %v1547
    %v2446 = vpack.c.b16 %v1552, %v1550
    %v2447 = vpack.c.b16 %v1553, %v1551
    %v2448 = vpack.c.b16 %v1556, %v1554
    %v2449 = vpack.c.b16 %v1557, %v1555
    %v2450 = vpack.c.b16 %v1560, %v1558
    %v2451 = vpack.c.b16 %v1561, %v1559
    %v2452 = vpack.c.b16 %v1564, %v1562
    %v2453 = vpack.c.b16 %v1565, %v1563
    %v2454 = vpack.c.b16 %v1568, %v1566
    %v2455 = vpack.c.b16 %v1569, %v1567
    %v2456 = vpack.c.b16 %v1572, %v1570
    %v2457 = vpack.c.b16 %v1573, %v1571
    %v2458 = vpack.c.b16 %v1576, %v1574
    %v2459 = vpack.c.b16 %v1577, %v1575
    %v2460 = vpack.c.b16 %v1580, %v1578
    %v2461 = vpack.c.b16 %v1581, %v1579
    %v2462 = vpack.c.b16 %v1584, %v1582
    %v2463 = vpack.c.b16 %v1585, %v1583
    %v2464 = vpack.c.b16 %v1588, %v1586
    %v2465 = vpack.c.b16 %v1589, %v1587
    %v2466 = vpack.c.b16 %v1592, %v1590
    %v2467 = vpack.c.b16 %v1593, %v1591
    %v2468 = vpack.c.b16 %v1596, %v1594
    %v2469 = vpack.c.b16 %v1597, %v1595
    %v2470 = vpack.c.b16 %v1600, %v1598
    %v2471 = vpack.c.b16 %v1601, %v1599
    %v2472 = vpack.c.b16 %v1604, %v1602
    %v2473 = vpack.c.b16 %v1605, %v1603
    %v2474 = vpack.c.b16 %v1608, %v1606
    %v2475 = vpack.c.b16 %v1609, %v1607
    %v2476 = vpack.c.b16 %v1612, %v1610
    %v2477 = vpack.c.b16 %v1613, %v1611
    %v2478 = vpack.c.b16 %v1616, %v1614
    %v2479 = vpack.c.b16 %v1617, %v1615
    %v2480 = vpack.c.b16 %v1620, %v1618
    %v2481 = vpack.c.b16 %v1621, %v1619
    %v2482 = vpack.c.b16 %v1624, %v1622
    %v2483 = vpack.c.b16 %v1625, %v1623
    %v2484 = vpack.c.b16 %v1628, %v1626
    %v2485 = vpack.c.b16 %v1629, %v1627
    %v2486 = vpack.c.b16 %v1632, %v1630
    %v2487 = vpack.c.b16 %v1633, %v1631
    %v2488 = vpack.c.b16 %v1636, %v1634
    %v2489 = vpack.c.b16 %v1637, %v1635
    %v2490 = vpack.c.b16 %v1640, %v1638
    %v2491 = vpack.c.b16 %v1641, %v1639
    %v2492 = vpack.c.b16 %v1644, %v1642
    %v2493 = vpack.c.b16 %v1645, %v1643
    %v2494 = vpack.c.b16 %v1648, %v1646
    %v2495 = vpack.c.b16 %v1649, %v1647
    %v2496 = vpack.c.b16 %v1652, %v1650
    %v2497 = vpack.c.b16 %v1653, %v1651
    %v2498 = vpack.c.b16 %v1656, %v1654
    %v2499 = vpack.c.b16 %v1657, %v1655
    %v2500 = vpack.c.b16 %v1660, %v1658
    %v2501 = vpack.c.b16 %v1661, %v1659
    %v2502 = vpack.c.b16 %v1664, %v1662
    %v2503 = vpack.c.b16 %v1665, %v1663
    %v2504 = vpack.c.b16 %v1668, %v1666
    %v2505 = vpack.c.b16 %v1669, %v1667
    %v2506 = vpack.c.b16 %v1672, %v1670
    %v2507 = vpack.c.b16 %v1673, %v1671
    %v2508 = vpack.c.b16 %v1676, %v1674
    %v2509 = vpack.c.b16 %v1677, %v1675
    %v2510 = vpack.c.b16 %v1680, %v1678
    %v2511 = vpack.c.b16 %v1681, %v1679
    %v2512 = vpack.c.b16 %v1684, %v1682
    %v2513 = vpack.c.b16 %v1685, %v1683
    %v2514 = vpack.c.b16 %v1688, %v1686
    %v2515 = vpack.c.b16 %v1689, %v1687
    %v2516 = vpack.c.b16 %v1692, %v1690
    %v2517 = vpack.c.b16 %v1693, %v1691
    %v2518 = vpack.c.b16 %v1696, %v1694
    %v2519 = vpack.c.b16 %v1697, %v1695
    %v2520 = vpack.c.b16 %v1700, %v1698
    %v2521 = vpack.c.b16 %v1701, %v1699
    %v2522 = vpack.c.b16 %v1704, %v1702
    %v2523 = vpack.c.b16 %v1705, %v1703
    %v2524 = vpack.c.b16 %v1708, %v1706
    %v2525 = vpack.c.b16 %v1709, %v1707
    %v2526 = vpack.c.b16 %v1712, %v1710
    %v2527 = vpack.c.b16 %v1713, %v1711
    %v2528 = vpack.c.b16 %v1716, %v1714
    %v2529 = vpack.c.b16 %v1717, %v1715
    %v2530 = vpack.c.b16 %v1720, %v1718
    %v2531 = vpack.c.b16 %v1721, %v1719
    %v2532 = vpack.c.b16 %v1724, %v1722
    %v2533 = vpack.c.b16 %v1725, %v1723
    %v2534 = vpack.c.b16 %v1728, %v1726
    %v2535 = vpack.c.b16 %v1729, %v1727
    %v2536 = vpack.c.b16 %v1732, %v1730
    %v2537 = vpack.c.b16 %v1733, %v1731
    %v2538 = vpack.c.b16 %v1736, %v1734
    %v2539 = vpack.c.b16 %v1737, %v1735
    %v2540 = vpack.c.b16 %v1740, %v1738
    %v2541 = vpack.c.b16 %v1741, %v1739
    %v2542 = vpack.c.b16 %v1744, %v1742
    %v2543 = vpack.c.b16 %v1745, %v1743
    %v2544 = vpack.c.b16 %v1748, %v1746
    %v2545 = vpack.c.b16 %v1749, %v1747
    %v2546 = vpack.c.b16 %v1752, %v1750
    %v2547 = vpack.c.b16 %v1753, %v1751
    %v2548 = vpack.c.b16 %v1756, %v1754
    %v2549 = vpack.c.b16 %v1757, %v1755
    %v2550 = vpack.c.b16 %v1760, %v1758
    %v2551 = vpack.c.b16 %v1761, %v1759
    %v2552 = vpack.c.b16 %v1764, %v1762
    %v2553 = vpack.c.b16 %v1765, %v1763
    %v2554 = vpack.c.b16 %v1768, %v1766
    %v2555 = vpack.c.b16 %v1769, %v1767
    %v2556 = vpack.c.b16 %v1772, %v1770
    %v2557 = vpack.c.b16 %v1773, %v1771
    %v2558 = vpack.c.b16 %v1776, %v1774
    %v2559 = vpack.c.b16 %v1777, %v1775
    %v2560 = vpack.c.b16 %v1780, %v1778
    %v2561 = vpack.c.b16 %v1781, %v1779
    %v2562 = vpack.c.b16 %v1784, %v1782
    %v2563 = vpack.c.b16 %v1785, %v1783
    %v2564 = vpack.c.b16 %v1788, %v1786
    %v2565 = vpack.c.b16 %v1789, %v1787
    %v2566 = vpack.c.b16 %v1792, %v1790
    %v2567 = vpack.c.b16 %v1793, %v1791
    %v2568 = vpack.c.b16 %v1796, %v1794
    %v2569 = vpack.c.b16 %v1797, %v1795
    %v2570 = vpack.c.b16 %v1800, %v1798
    %v2571 = vpack.c.b16 %v1801, %v1799
    %v2572 = vpack.c.b16 %v1804, %v1802
    %v2573 = vpack.c.b16 %v1805, %v1803
    %v2574 = vpack.c.b16 %v1808, %v1806
    %v2575 = vpack.c.b16 %v1809, %v1807
    %v2576 = vpack.c.b16 %v1812, %v1810
    %v2577 = vpack.c.b16 %v1813, %v1811
    %v2578 = vpack.c.b16 %v1816, %v1814
    %v2579 = vpack.c.b16 %v1817, %v1815
    %v2580 = vpack.c.b16 %v1820, %v1818
    %v2581 = vpack.c.b16 %v1821, %v1819
    %v2582 = vpack.c.b16 %v1824, %v1822
    %v2583 = vpack.c.b16 %v1825, %v1823
    %v2584 = vpack.c.b16 %v1828, %v1826
    %v2585 = vpack.c.b16 %v1829, %v1827
    %v2586 = vpack.c.b16 %v1832, %v1830
    %v2587 = vpack.c.b16 %v1833, %v1831
    %v2588 = vpack.c.b16 %v1836, %v1834
    %v2589 = vpack.c.b16 %v1837, %v1835
    %v2590 = vpack.c.b16 %v1840, %v1838
    %v2591 = vpack.c.b16 %v1841, %v1839
    %v2592 = vpack.c.b16 %v1844, %v1842
    %v2593 = vpack.c.b16 %v1845, %v1843
    %v2594 = vpack.c.b16 %v1848, %v1846
    %v2595 = vpack.c.b16 %v1849, %v1847
    %v2596 = vpack.c.b16 %v1852, %v1850
    %v2597 = vpack.c.b16 %v1853, %v1851
    %v2598 = vpack.c.b16 %v1856, %v1854
    %v2599 = vpack.c.b16 %v1857, %v1855
    %v2600 = vpack.c.b16 %v1860, %v1858
    %v2601 = vpack.c.b16 %v1861, %v1859
    %v2602 = vpack.c.b16 %v1864, %v1862
    %v2603 = vpack.c.b16 %v1865, %v1863
    %v2604 = vpack.c.b16 %v1868, %v1866
    %v2605 = vpack.c.b16 %v1869, %v1867
    %v2606 = vpack.c.b16 %v1872, %v1870
    %v2607 = vpack.c.b16 %v1873, %v1871
    %v2608 = vpack.c.b16 %v1876, %v1874
    %v2609 = vpack.c.b16 %v1877, %v1875
    %v2610 = vpack.c.b16 %v1880, %v1878
    %v2611 = vpack.c.b16 %v1881, %v1879
    %v2612 = vpack.c.b16 %v1884, %v1882
    %v2613 = vpack.c.b16 %v1885, %v1883
    %v2614 = vpack.c.b16 %v1888, %v1886
    %v2615 = vpack.c.b16 %v1889, %v1887
    %v2616 = vpack.c.b16 %v1892, %v1890
    %v2617 = vpack.c.b16 %v1893, %v1891
    %v2618 = vpack.c.b16 %v1896, %v1894
    %v2619 = vpack.c.b16 %v1897, %v1895
    %v2620 = vpack.c.b16 %v1900, %v1898
    %v2621 = vpack.c.b16 %v1901, %v1899
    %v2622 = vpack.c.b16 %v1904, %v1902
    %v2623 = vpack.c.b16 %v1905, %v1903
    %v2624 = vpack.c.b16 %v1908, %v1906
    %v2625 = vpack.c.b16 %v1909, %v1907
    %v2626 = vpack.c.b16 %v1912, %v1910
    %v2627 = vpack.c.b16 %v1913, %v1911
    %v2628 = vpack.c.b16 %v1916, %v1914
    %v2629 = vpack.c.b16 %v1917, %v1915
    %v2630 = vpack.c.b16 %v1920, %v1918
    %v2631 = vpack.c.b16 %v1921, %v1919
    %v2632 = vpack.c.b16 %v1924, %v1922
    %v2633 = vpack.c.b16 %v1925, %v1923
    %v2634 = vpack.c.b16 %v1928, %v1926
    %v2635 = vpack.c.b16 %v1929, %v1927
    %v2636 = vpack.c.b16 %v1932, %v1930
    %v2637 = vpack.c.b16 %v1933, %v1931
    %v2638 = vpack.c.b16 %v1936, %v1934
    %v2639 = vpack.c.b16 %v1937, %v1935
    %v2640 = vpack.c.b16 %v1940, %v1938
    %v2641 = vpack.c.b16 %v1941, %v1939
    %v2642 = vpack.c.b16 %v1944, %v1942
    %v2643 = vpack.c.b16 %v1945, %v1943
    %v2644 = vpack.c.b16 %v1948, %v1946
    %v2645 = vpack.c.b16 %v1949, %v1947
    %v2646 = vpack.c.b16 %v1952, %v1950
    %v2647 = vpack.c.b16 %v1953, %v1951
    %v2648 = vpack.c.b16 %v1956, %v1954
    %v2649 = vpack.c.b16 %v1957, %v1955
    %v2650 = vpack.c.b16 %v1960, %v1958
    %v2651 = vpack.c.b16 %v1961, %v1959
    %v2652 = vpack.c.b16 %v1964, %v1962
    %v2653 = vpack.c.b16 %v1965, %v1963
    %v2654 = vpack.c.b16 %v1968, %v1966
    %v2655 = vpack.c.b16 %v1969, %v1967
    %v2656 = vpack.c.b16 %v1972, %v1970
    %v2657 = vpack.c.b16 %v1973, %v1971
    %v2658 = vpack.c.b16 %v1976, %v1974
    %v2659 = vpack.c.b16 %v1977, %v1975
    %v2660 = vpack.c.b16 %v1980, %v1978
    %v2661 = vpack.c.b16 %v1981, %v1979
    %v2662 = vpack.c.b16 %v1984, %v1982
    %v2663 = vpack.c.b16 %v1985, %v1983
    %v2664 = vpack.c.b16 %v1988, %v1986
    %v2665 = vpack.c.b16 %v1989, %v1987
    %v2666 = vpack.c.b16 %v1992, %v1990
    %v2667 = vpack.c.b16 %v1993, %v1991
    %v2668 = vpack.c.b16 %v1996, %v1994
    %v2669 = vpack.c.b16 %v1997, %v1995
    %v2670 = vpack.c.b16 %v2000, %v1998
    %v2671 = vpack.c.b16 %v2001, %v1999
    %v2672 = vpack.c.b16 %v2004, %v2002
    %v2673 = vpack.c.b16 %v2005, %v2003
    %v2674 = vpack.c.b16 %v2008, %v2006
    %v2675 = vpack.c.b16 %v2009, %v2007
    %v2676 = vpack.c.b16 %v2012, %v2010
    %v2677 = vpack.c.b16 %v2013, %v2011
    %v2678 = vpack.c.b16 %v2016, %v2014
    %v2679 = vpack.c.b16 %v2017, %v2015
    %v2680 = vpack.c.b16 %v2020, %v2018
    %v2681 = vpack.c.b16 %v2021, %v2019
    %v2682 = vpack.c.b16 %v2024, %v2022
    %v2683 = vpack.c.b16 %v2025, %v2023
    %v2684 = vpack.c.b16 %v2028, %v2026
    %v2685 = vpack.c.b16 %v2029, %v2027
    %v2686 = vpack.c.b16 %v2032, %v2030
    %v2687 = vpack.c.b16 %v2033, %v2031
    %v2688 = vpack.c.b16 %v2036, %v2034
    %v2689 = vpack.c.b16 %v2037, %v2035
    %v2690 = vpack.c.b16 %v2040, %v2038
    %v2691 = vpack.c.b16 %v2041, %v2039
    %v2692 = vpack.c.b16 %v2044, %v2042
    %v2693 = vpack.c.b16 %v2045, %v2043
    %v2694 = vpack.c.b16 %v2048, %v2046
    %v2695 = vpack.c.b16 %v2049, %v2047
    %v2696 = vpack.c.b16 %v2052, %v2050
    %v2697 = vpack.c.b16 %v2053, %v2051
    %v2698 = vpack.c.b16 %v2056, %v2054
    %v2699 = vpack.c.b16 %v2057, %v2055
    %v2700 = vpack.c.b16 %v2060, %v2058
    %v2701 = vpack.c.b16 %v2061, %v2059
    %v2702 = vpack.c.b16 %v2064, %v2062
    %v2703 = vpack.c.b16 %v2065, %v2063
    %v2704 = vpack.c.b16 %v2068, %v2066
    %v2705 = vpack.c.b16 %v2069, %v2067
    %v2706 = vpack.c.b16 %v2072, %v2070
    %v2707 = vpack.c.b16 %v2073, %v2071
    %v2708 = vpack.c.b16 %v2076, %v2074
    %v2709 = vpack.c.b16 %v2077, %v2075
    %v2710 = vpack.c.b16 %v2080, %v2078
    %v2711 = vpack.c.b16 %v2081, %v2079
    %v2712 = vpack.c.b16 %v2084, %v2082
    %v2713 = vpack.c.b16 %v2085, %v2083
    %v2714 = vpack.c.b16 %v2088, %v2086
    %v2715 = vpack.c.b16 %v2089, %v2087
    %v2716 = vpack.c.b16 %v2092, %v2090
    %v2717 = vpack.c.b16 %v2093, %v2091
    %v2718 = vpack.c.b16 %v2096, %v2094
    %v2719 = vpack.c.b16 %v2097, %v2095
    %v2720 = vpack.c.b16 %v2100, %v2098
    %v2721 = vpack.c.b16 %v2101, %v2099
    %v2722 = vpack.c.b16 %v2104, %v2102
    %v2723 = vpack.c.b16 %v2105, %v2103
    %v2724 = vpack.c.b16 %v2108, %v2106
    %v2725 = vpack.c.b16 %v2109, %v2107
    %v2726 = vpack.c.b16 %v2112, %v2110
    %v2727 = vpack.c.b16 %v2113, %v2111
    %v2728 = vpack.c.b16 %v2116, %v2114
    %v2729 = vpack.c.b16 %v2117, %v2115
    %v2730 = vpack.c.b16 %v2120, %v2118
    %v2731 = vpack.c.b16 %v2121, %v2119
    %v2732 = vpack.c.b16 %v2124, %v2122
    %v2733 = vpack.c.b16 %v2125, %v2123
    %v2734 = vpack.c.b16 %v2128, %v2126
    %v2735 = vpack.c.b16 %v2129, %v2127
    %v2736 = vpack.c.b16 %v2132, %v2130
    %v2737 = vpack.c.b16 %v2133, %v2131
    %v2738 = vpack.c.b16 %v2136, %v2134
    %v2739 = vpack.c.b16 %v2137, %v2135
    %v2740 = vpack.c.b16 %v2140, %v2138
    %v2741 = vpack.c.b16 %v2141, %v2139
    %v2742 = vpack.c.b16 %v2144, %v2142
    %v2743 = vpack.c.b16 %v2145, %v2143
    %v2744 = vpack.c.b16 %v2148, %v2146
    %v2745 = vpack.c.b16 %v2149, %v2147
    %v2746 = vpack.c.b16 %v2152, %v2150
    %v2747 = vpack.c.b16 %v2153, %v2151
    %v2748 = vpack.c.b16 %v2156, %v2154
    %v2749 = vpack.c.b16 %v2157, %v2155
    %v2750 = vpack.c.b16 %v2160, %v2158
    %v2751 = vpack.c.b16 %v2161, %v2159
    %v2752 = vpack.c.b16 %v2164, %v2162
    %v2753 = vpack.c.b16 %v2165, %v2163
    %v2754 = vpack.c.b16 %v2168, %v2166
    %v2755 = vpack.c.b16 %v2169, %v2167
    %v2756 = vpack.c.b16 %v2172, %v2170
    %v2757 = vpack.c.b16 %v2173, %v2171
    %v2758 = vpack.c.b16 %v2176, %v2174
    %v2759 = vpack.c.b16 %v2177, %v2175
    %v2760 = vpack.c.b16 %v2180, %v2178
    %v2761 = vpack.c.b16 %v2181, %v2179
    %v2762 = vpack.c.b16 %v2184, %v2182
    %v2763 = vpack.c.b16 %v2185, %v2183
    %v2764 = vpack.c.b16 %v2188, %v2186
    %v2765 = vpack.c.b16 %v2189, %v2187
    %v2766 = vpack.c.b16 %v2192, %v2190
    %v2767 = vpack.c.b16 %v2193, %v2191
    %v2768 = vpack.c.b16 %v2196, %v2194
    %v2769 = vpack.c.b16 %v2197, %v2195
    %v2770 = vpack.c.b16 %v2200, %v2198
    %v2771 = vpack.c.b16 %v2201, %v2199
    %v2772 = vpack.c.b16 %v2204, %v2202
    %v2773 = vpack.c.b16 %v2205, %v2203
    %v2774 = vpack.c.b16 %v2208, %v2206
    %v2775 = vpack.c.b16 %v2209, %v2207
    %v2776 = vpack.c.b16 %v2212, %v2210
    %v2777 = vpack.c.b16 %v2213, %v2211
    %v2778 = vpack.c.b16 %v2216, %v2214
    %v2779 = vpack.c.b16 %v2217, %v2215
    %v2780 = vpack.c.b16 %v2220, %v2218
    %v2781 = vpack.c.b16 %v2221, %v2219
    %v2782 = vpack.c.b16 %v2224, %v2222
    %v2783 = vpack.c.b16 %v2225, %v2223
    %v2784 = vpack.c.b16 %v2228, %v2226
    %v2785 = vpack.c.b16 %v2229, %v2227
    %v2786 = vpack.c.b16 %v2232, %v2230
    %v2787 = vpack.c.b16 %v2233, %v2231
    %v2788 = vpack.c.b16 %v2236, %v2234
    %v2789 = vpack.c.b16 %v2237, %v2235
    %v2790 = vpack.c.b16 %v2240, %v2238
    %v2791 = vpack.c.b16 %v2241, %v2239
    %v2792 = vpack.c.b16 %v2244, %v2242
    %v2793 = vpack.c.b16 %v2245, %v2243
    %v2794 = vpack.c.b16 %v2248, %v2246
    %v2795 = vpack.c.b16 %v2249, %v2247
    %v2796 = vpack.c.b16 %v2252, %v2250
    %v2797 = vpack.c.b16 %v2253, %v2251
    %v2798 = vpack.c.b16 %v2256, %v2254
    %v2799 = vpack.c.b16 %v2257, %v2255
    %v2800 = vpack.c.b16 %v2260, %v2258
    %v2801 = vpack.c.b16 %v2261, %v2259
    %v2802 = vpack.c.b16 %v2264, %v2262
    %v2803 = vpack.c.b16 %v2265, %v2263
    %v2804 = vpack.c.b16 %v2268, %v2266
    %v2805 = vpack.c.b16 %v2269, %v2267
    %v2806 = vpack.c.b16 %v2272, %v2270
    %v2807 = vpack.c.b16 %v2273, %v2271
    %v2808 = vpack.c.b16 %v2276, %v2274
    %v2809 = vpack.c.b16 %v2277, %v2275
    %v2810 = vpack.c.b16 %v2280, %v2278
    %v2811 = vpack.c.b16 %v2281, %v2279
    %v2812 = vpack.c.b16 %v2284, %v2282
    %v2813 = vpack.c.b16 %v2285, %v2283
    %v2814 = vpack.c.b16 %v2288, %v2286
    %v2815 = vpack.c.b16 %v2289, %v2287
    %v2816 = vpack.c.b16 %v2292, %v2290
    %v2817 = vpack.c.b16 %v2293, %v2291
    %v2818 = vpack.c.b16 %v2296, %v2294
    %v2819 = vpack.c.b16 %v2297, %v2295
    %v2820 = vpack.c.b16 %v2300, %v2298
    %v2821 = vpack.c.b16 %v2301, %v2299
    %v2822 = vpack.c.b16 %v2304, %v2302
    %v2823 = vpack.c.b16 %v2305, %v2303
    %v2824 = vpack.c.b16 %v2308, %v2306
    %v2825 = vpack.c.b16 %v2309, %v2307
    %v2826 = vpack.c.b16 %v2312, %v2310
    %v2827 = vpack.c.b16 %v2313, %v2311
    %v2828 = vpack.c.b16 %v2316, %v2314
    %v2829 = vpack.c.b16 %v2317, %v2315
    %3342 = vmatprep.subr.bf16.mxu0 %v2319
    %3343 = vmatpush1.bf16.msra.mxu0 %v2318
    %3344 = vmatprep.subr.bf16.mxu0 %v2321
    %3345 = vmatpush1.bf16.msra.mxu0 %v2320
    %3346 = vmatprep.subr.bf16.mxu0 %v2323
    %3347 = vmatpush1.bf16.msra.mxu0 %v2322
    %3348 = vmatprep.subr.bf16.mxu0 %v2325
    %3349 = vmatpush1.bf16.msra.mxu0 %v2324
    %3350 = vmatprep.subr.bf16.mxu0 %v2327
    %3351 = vmatpush1.bf16.msra.mxu0 %v2326
    %3352 = vmatprep.subr.bf16.mxu0 %v2329
    %3353 = vmatpush1.bf16.msra.mxu0 %v2328
    %3354 = vmatprep.subr.bf16.mxu0 %v2331
    %3355 = vmatpush1.bf16.msra.mxu0 %v2330
    %3356 = vmatprep.subr.bf16.mxu0 %v2333
    %3357 = vmatpush1.bf16.msra.mxu0 %v2332
    %3358 = vmatprep.subr.bf16.mxu0 %v2335
    %3359 = vmatpush1.bf16.msra.mxu0 %v2334
    %3360 = vmatprep.subr.bf16.mxu0 %v2337
    %3361 = vmatpush1.bf16.msra.mxu0 %v2336
    %3362 = vmatprep.subr.bf16.mxu0 %v2339
    %3363 = vmatpush1.bf16.msra.mxu0 %v2338
    %3364 = vmatprep.subr.bf16.mxu0 %v2341
    %3365 = vmatpush1.bf16.msra.mxu0 %v2340
    %3366 = vmatprep.subr.bf16.mxu0 %v2343
    %3367 = vmatpush1.bf16.msra.mxu0 %v2342
    %3368 = vmatprep.subr.bf16.mxu0 %v2345
    %3369 = vmatpush1.bf16.msra.mxu0 %v2344
    %3370 = vmatprep.subr.bf16.mxu0 %v2347
    %3371 = vmatpush1.bf16.msra.mxu0 %v2346
    %3372 = vmatprep.subr.bf16.mxu0 %v2349
    %3373 = vmatpush1.bf16.msra.mxu0 %v2348
    %3374 = vmatprep.mubr.bf16.mxu0 %v591
    %3375 = vmatmul.mubr.bf16.gmra.mrb[0].mxu0 %v577
    %v3376 = vpop.f32.mrb[0].mxu0
    %v3377 = vadd.f32 %v543, %v3376
    %v3378 = vpop.f32.mrb[0].mxu0
    %v3379 = vadd.f32 %v547, %v3378
    %v3380 = vpop.f32.mrb[0].mxu0
    %v3381 = vpop.f32.mrb[0].mxu0
    %3382 = vdwg.mxu0
    %3383 = vmatprep.subr.bf16.mxu0 %v2351
    %3384 = vmatpush1.bf16.msra.mxu0 %v2350
    %3385 = vmatprep.subr.bf16.mxu0 %v2353
    %3386 = vmatpush1.bf16.msra.mxu0 %v2352
    %3387 = vmatprep.subr.bf16.mxu0 %v2355
    %3388 = vmatpush1.bf16.msra.mxu0 %v2354
    %3389 = vmatprep.subr.bf16.mxu0 %v2357
    %3390 = vmatpush1.bf16.msra.mxu0 %v2356
    %3391 = vmatprep.subr.bf16.mxu0 %v2359
    %3392 = vmatpush1.bf16.msra.mxu0 %v2358
    %3393 = vmatprep.subr.bf16.mxu0 %v2361
    %3394 = vmatpush1.bf16.msra.mxu0 %v2360
    %3395 = vmatprep.subr.bf16.mxu0 %v2363
    %3396 = vmatpush1.bf16.msra.mxu0 %v2362
    %3397 = vmatprep.subr.bf16.mxu0 %v2365
    %3398 = vmatpush1.bf16.msra.mxu0 %v2364
    %3399 = vmatprep.subr.bf16.mxu0 %v2367
    %3400 = vmatpush1.bf16.msra.mxu0 %v2366
    %3401 = vmatprep.subr.bf16.mxu0 %v2369
    %3402 = vmatpush1.bf16.msra.mxu0 %v2368
    %3403 = vmatprep.subr.bf16.mxu0 %v2371
    %3404 = vmatpush1.bf16.msra.mxu0 %v2370
    %3405 = vmatprep.subr.bf16.mxu0 %v2373
    %3406 = vmatpush1.bf16.msra.mxu0 %v2372
    %3407 = vmatprep.subr.bf16.mxu0 %v2375
    %3408 = vmatpush1.bf16.msra.mxu0 %v2374
    %3409 = vmatprep.subr.bf16.mxu0 %v2377
    %3410 = vmatpush1.bf16.msra.mxu0 %v2376
    %3411 = vmatprep.subr.bf16.mxu0 %v2379
    %3412 = vmatpush1.bf16.msra.mxu0 %v2378
    %3413 = vmatprep.subr.bf16.mxu0 %v2381
    %3414 = vmatpush1.bf16.msra.mxu0 %v2380
    %3415 = vmatprep.mubr.bf16.mxu0 %v601
    %3416 = vmatmul.mubr.bf16.gmra.mrb[0].mxu0 %v599
    %v3417 = vpop.f32.mrb[0].mxu0
    %v3418 = vadd.f32 %v3377, %v3417
    %v3419 = vpop.f32.mrb[0].mxu0
    %v3420 = vadd.f32 %v3379, %v3419
    %v3421 = vpop.f32.mrb[0].mxu0
    %v3422 = vpop.f32.mrb[0].mxu0
    %3423 = vdwg.mxu0
    %3424 = vmatprep.subr.bf16.mxu0 %v2383
    %3425 = vmatpush1.bf16.msra.mxu0 %v2382
    %3426 = vmatprep.subr.bf16.mxu0 %v2385
    %3427 = vmatpush1.bf16.msra.mxu0 %v2384
    %3428 = vmatprep.subr.bf16.mxu0 %v2387
    %3429 = vmatpush1.bf16.msra.mxu0 %v2386
    %3430 = vmatprep.subr.bf16.mxu0 %v2389
    %3431 = vmatpush1.bf16.msra.mxu0 %v2388
    %3432 = vmatprep.subr.bf16.mxu0 %v2391
    %3433 = vmatpush1.bf16.msra.mxu0 %v2390
    %3434 = vmatprep.subr.bf16.mxu0 %v2393
    %3435 = vmatpush1.bf16.msra.mxu0 %v2392
    %3436 = vmatprep.subr.bf16.mxu0 %v2395
    %3437 = vmatpush1.bf16.msra.mxu0 %v2394
    %3438 = vmatprep.subr.bf16.mxu0 %v2397
    %3439 = vmatpush1.bf16.msra.mxu0 %v2396
    %3440 = vmatprep.subr.bf16.mxu0 %v2399
    %3441 = vmatpush1.bf16.msra.mxu0 %v2398
    %3442 = vmatprep.subr.bf16.mxu0 %v2401
    %3443 = vmatpush1.bf16.msra.mxu0 %v2400
    %3444 = vmatprep.subr.bf16.mxu0 %v2403
    %3445 = vmatpush1.bf16.msra.mxu0 %v2402
    %3446 = vmatprep.subr.bf16.mxu0 %v2405
    %3447 = vmatpush1.bf16.msra.mxu0 %v2404
    %3448 = vmatprep.subr.bf16.mxu0 %v2407
    %3449 = vmatpush1.bf16.msra.mxu0 %v2406
    %3450 = vmatprep.subr.bf16.mxu0 %v2409
    %3451 = vmatpush1.bf16.msra.mxu0 %v2408
    %3452 = vmatprep.subr.bf16.mxu0 %v2411
    %3453 = vmatpush1.bf16.msra.mxu0 %v2410
    %3454 = vmatprep.subr.bf16.mxu0 %v2413
    %3455 = vmatpush1.bf16.msra.mxu0 %v2412
    %3456 = vmatprep.mubr.bf16.mxu0 %v598
    %3457 = vmatmul.mubr.bf16.gmra.mrb[0].mxu0 %v584
    %v3458 = vpop.f32.mrb[0].mxu0
    %v3459 = vadd.f32 %v3418, %v3458
    %v3460 = vpop.f32.mrb[0].mxu0
    %v3461 = vadd.f32 %v3420, %v3460
    %v3462 = vpop.f32.mrb[0].mxu0
    %v3463 = vpop.f32.mrb[0].mxu0
    %3464 = vdwg.mxu0
    %3465 = vmatprep.subr.bf16.mxu0 %v2415
    %3466 = vmatpush1.bf16.msra.mxu0 %v2414
    %3467 = vmatprep.subr.bf16.mxu0 %v2417
    %3468 = vmatpush1.bf16.msra.mxu0 %v2416
    %3469 = vmatprep.subr.bf16.mxu0 %v2419
    %3470 = vmatpush1.bf16.msra.mxu0 %v2418
    %3471 = vmatprep.subr.bf16.mxu0 %v2421
    %3472 = vmatpush1.bf16.msra.mxu0 %v2420
    %3473 = vmatprep.subr.bf16.mxu0 %v2423
    %3474 = vmatpush1.bf16.msra.mxu0 %v2422
    %3475 = vmatprep.subr.bf16.mxu0 %v2425
    %3476 = vmatpush1.bf16.msra.mxu0 %v2424
    %3477 = vmatprep.subr.bf16.mxu0 %v2427
    %3478 = vmatpush1.bf16.msra.mxu0 %v2426
    %3479 = vmatprep.subr.bf16.mxu0 %v2429
    %3480 = vmatpush1.bf16.msra.mxu0 %v2428
    %3481 = vmatprep.subr.bf16.mxu0 %v2431
    %3482 = vmatpush1.bf16.msra.mxu0 %v2430
    %3483 = vmatprep.subr.bf16.mxu0 %v2433
    %3484 = vmatpush1.bf16.msra.mxu0 %v2432
    %3485 = vmatprep.subr.bf16.mxu0 %v2435
    %3486 = vmatpush1.bf16.msra.mxu0 %v2434
    %3487 = vmatprep.subr.bf16.mxu0 %v2437
    %3488 = vmatpush1.bf16.msra.mxu0 %v2436
    %3489 = vmatprep.subr.bf16.mxu0 %v2439
    %3490 = vmatpush1.bf16.msra.mxu0 %v2438
    %3491 = vmatprep.subr.bf16.mxu0 %v2441
    %3492 = vmatpush1.bf16.msra.mxu0 %v2440
    %3493 = vmatprep.subr.bf16.mxu0 %v2443
    %3494 = vmatpush1.bf16.msra.mxu0 %v2442
    %3495 = vmatprep.subr.bf16.mxu0 %v2445
    %3496 = vmatpush1.bf16.msra.mxu0 %v2444
    %3497 = vmatprep.mubr.bf16.mxu0 %v602
    %3498 = vmatmul.mubr.bf16.gmra.mrb[0].mxu0 %v600
    %v3499 = vpop.f32.mrb[0].mxu0
    %v3500 = vadd.f32 %v3459, %v3499
    %v3501 = vpop.f32.mrb[0].mxu0
    %v3502 = vadd.f32 %v3461, %v3501
    %v3503 = vpop.f32.mrb[0].mxu0
    %v3504 = vpop.f32.mrb[0].mxu0
    %3505 = vdwg.mxu0
    %3506 = vmatprep.subr.bf16.mxu0 %v2447
    %3507 = vmatpush1.bf16.msra.mxu0 %v2446
    %3508 = vmatprep.subr.bf16.mxu0 %v2449
    %3509 = vmatpush1.bf16.msra.mxu0 %v2448
    %3510 = vmatprep.subr.bf16.mxu0 %v2451
    %3511 = vmatpush1.bf16.msra.mxu0 %v2450
    %3512 = vmatprep.subr.bf16.mxu0 %v2453
    %3513 = vmatpush1.bf16.msra.mxu0 %v2452
    %3514 = vmatprep.subr.bf16.mxu0 %v2455
    %3515 = vmatpush1.bf16.msra.mxu0 %v2454
    %3516 = vmatprep.subr.bf16.mxu0 %v2457
    %3517 = vmatpush1.bf16.msra.mxu0 %v2456
    %3518 = vmatprep.subr.bf16.mxu0 %v2459
    %3519 = vmatpush1.bf16.msra.mxu0 %v2458
    %3520 = vmatprep.subr.bf16.mxu0 %v2461
    %3521 = vmatpush1.bf16.msra.mxu0 %v2460
    %3522 = vmatprep.subr.bf16.mxu0 %v2463
    %3523 = vmatpush1.bf16.msra.mxu0 %v2462
    %3524 = vmatprep.subr.bf16.mxu0 %v2465
    %3525 = vmatpush1.bf16.msra.mxu0 %v2464
    %3526 = vmatprep.subr.bf16.mxu0 %v2467
    %3527 = vmatpush1.bf16.msra.mxu0 %v2466
    %3528 = vmatprep.subr.bf16.mxu0 %v2469
    %3529 = vmatpush1.bf16.msra.mxu0 %v2468
    %3530 = vmatprep.subr.bf16.mxu0 %v2471
    %3531 = vmatpush1.bf16.msra.mxu0 %v2470
    %3532 = vmatprep.subr.bf16.mxu0 %v2473
    %3533 = vmatpush1.bf16.msra.mxu0 %v2472
    %3534 = vmatprep.subr.bf16.mxu0 %v2475
    %3535 = vmatpush1.bf16.msra.mxu0 %v2474
    %3536 = vmatprep.subr.bf16.mxu0 %v2477
    %3537 = vmatpush1.bf16.msra.mxu0 %v2476
    %3538 = vmatprep.mubr.bf16.mxu0 %v640
    %3539 = vmatmul.mubr.bf16.gmra.mrb[0].mxu0 %v626
    %v3540 = vpop.f32.mrb[0].mxu0
    %v3541 = vadd.f32 %v3500, %v3540
    %v3542 = vpop.f32.mrb[0].mxu0
    %v3543 = vadd.f32 %v3502, %v3542
    %v3544 = vpop.f32.mrb[0].mxu0
    %v3545 = vpop.f32.mrb[0].mxu0
    %3546 = vdwg.mxu0
    %3547 = vmatprep.subr.bf16.mxu0 %v2479
    %3548 = vmatpush1.bf16.msra.mxu0 %v2478
    %3549 = vmatprep.subr.bf16.mxu0 %v2481
    %3550 = vmatpush1.bf16.msra.mxu0 %v2480
    %3551 = vmatprep.subr.bf16.mxu0 %v2483
    %3552 = vmatpush1.bf16.msra.mxu0 %v2482
    %3553 = vmatprep.subr.bf16.mxu0 %v2485
    %3554 = vmatpush1.bf16.msra.mxu0 %v2484
    %3555 = vmatprep.subr.bf16.mxu0 %v2487
    %3556 = vmatpush1.bf16.msra.mxu0 %v2486
    %3557 = vmatprep.subr.bf16.mxu0 %v2489
    %3558 = vmatpush1.bf16.msra.mxu0 %v2488
    %3559 = vmatprep.subr.bf16.mxu0 %v2491
    %3560 = vmatpush1.bf16.msra.mxu0 %v2490
    %3561 = vmatprep.subr.bf16.mxu0 %v2493
    %3562 = vmatpush1.bf16.msra.mxu0 %v2492
    %3563 = vmatprep.subr.bf16.mxu0 %v2495
    %3564 = vmatpush1.bf16.msra.mxu0 %v2494
    %3565 = vmatprep.subr.bf16.mxu0 %v2497
    %3566 = vmatpush1.bf16.msra.mxu0 %v2496
    %3567 = vmatprep.subr.bf16.mxu0 %v2499
    %3568 = vmatpush1.bf16.msra.mxu0 %v2498
    %3569 = vmatprep.subr.bf16.mxu0 %v2501
    %3570 = vmatpush1.bf16.msra.mxu0 %v2500
    %3571 = vmatprep.subr.bf16.mxu0 %v2503
    %3572 = vmatpush1.bf16.msra.mxu0 %v2502
    %3573 = vmatprep.subr.bf16.mxu0 %v2505
    %3574 = vmatpush1.bf16.msra.mxu0 %v2504
    %3575 = vmatprep.subr.bf16.mxu0 %v2507
    %3576 = vmatpush1.bf16.msra.mxu0 %v2506
    %3577 = vmatprep.subr.bf16.mxu0 %v2509
    %3578 = vmatpush1.bf16.msra.mxu0 %v2508
    %3579 = vmatprep.mubr.bf16.mxu0 %v650
    %3580 = vmatmul.mubr.bf16.gmra.mrb[0].mxu0 %v648
    %v3581 = vpop.f32.mrb[0].mxu0
    %v3582 = vadd.f32 %v3541, %v3581
    %v3583 = vpop.f32.mrb[0].mxu0
    %v3584 = vadd.f32 %v3543, %v3583
    %v3585 = vpop.f32.mrb[0].mxu0
    %v3586 = vpop.f32.mrb[0].mxu0
    %3587 = vdwg.mxu0
    %3588 = vmatprep.subr.bf16.mxu0 %v2511
    %3589 = vmatpush1.bf16.msra.mxu0 %v2510
    %3590 = vmatprep.subr.bf16.mxu0 %v2513
    %3591 = vmatpush1.bf16.msra.mxu0 %v2512
    %3592 = vmatprep.subr.bf16.mxu0 %v2515
    %3593 = vmatpush1.bf16.msra.mxu0 %v2514
    %3594 = vmatprep.subr.bf16.mxu0 %v2517
    %3595 = vmatpush1.bf16.msra.mxu0 %v2516
    %3596 = vmatprep.subr.bf16.mxu0 %v2519
    %3597 = vmatpush1.bf16.msra.mxu0 %v2518
    %3598 = vmatprep.subr.bf16.mxu0 %v2521
    %3599 = vmatpush1.bf16.msra.mxu0 %v2520
    %3600 = vmatprep.subr.bf16.mxu0 %v2523
    %3601 = vmatpush1.bf16.msra.mxu0 %v2522
    %3602 = vmatprep.subr.bf16.mxu0 %v2525
    %3603 = vmatpush1.bf16.msra.mxu0 %v2524
    %3604 = vmatprep.subr.bf16.mxu0 %v2527
    %3605 = vmatpush1.bf16.msra.mxu0 %v2526
    %3606 = vmatprep.subr.bf16.mxu0 %v2529
    %3607 = vmatpush1.bf16.msra.mxu0 %v2528
    %3608 = vmatprep.subr.bf16.mxu0 %v2531
    %3609 = vmatpush1.bf16.msra.mxu0 %v2530
    %3610 = vmatprep.subr.bf16.mxu0 %v2533
    %3611 = vmatpush1.bf16.msra.mxu0 %v2532
    %3612 = vmatprep.subr.bf16.mxu0 %v2535
    %3613 = vmatpush1.bf16.msra.mxu0 %v2534
    %3614 = vmatprep.subr.bf16.mxu0 %v2537
    %3615 = vmatpush1.bf16.msra.mxu0 %v2536
    %3616 = vmatprep.subr.bf16.mxu0 %v2539
    %3617 = vmatpush1.bf16.msra.mxu0 %v2538
    %3618 = vmatprep.subr.bf16.mxu0 %v2541
    %3619 = vmatpush1.bf16.msra.mxu0 %v2540
    %3620 = vmatprep.mubr.bf16.mxu0 %v647
    %3621 = vmatmul.mubr.bf16.gmra.mrb[0].mxu0 %v633
    %v3622 = vpop.f32.mrb[0].mxu0
    %v3623 = vadd.f32 %v3582, %v3622
    %v3624 = vpop.f32.mrb[0].mxu0
    %v3625 = vadd.f32 %v3584, %v3624
    %v3626 = vpop.f32.mrb[0].mxu0
    %v3627 = vpop.f32.mrb[0].mxu0
    %3628 = vdwg.mxu0
    %3629 = vmatprep.subr.bf16.mxu0 %v2543
    %3630 = vmatpush1.bf16.msra.mxu0 %v2542
    %3631 = vmatprep.subr.bf16.mxu0 %v2545
    %3632 = vmatpush1.bf16.msra.mxu0 %v2544
    %3633 = vmatprep.subr.bf16.mxu0 %v2547
    %3634 = vmatpush1.bf16.msra.mxu0 %v2546
    %3635 = vmatprep.subr.bf16.mxu0 %v2549
    %3636 = vmatpush1.bf16.msra.mxu0 %v2548
    %3637 = vmatprep.subr.bf16.mxu0 %v2551
    %3638 = vmatpush1.bf16.msra.mxu0 %v2550
    %3639 = vmatprep.subr.bf16.mxu0 %v2553
    %3640 = vmatpush1.bf16.msra.mxu0 %v2552
    %3641 = vmatprep.subr.bf16.mxu0 %v2555
    %3642 = vmatpush1.bf16.msra.mxu0 %v2554
    %3643 = vmatprep.subr.bf16.mxu0 %v2557
    %3644 = vmatpush1.bf16.msra.mxu0 %v2556
    %3645 = vmatprep.subr.bf16.mxu0 %v2559
    %3646 = vmatpush1.bf16.msra.mxu0 %v2558
    %3647 = vmatprep.subr.bf16.mxu0 %v2561
    %3648 = vmatpush1.bf16.msra.mxu0 %v2560
    %3649 = vmatprep.subr.bf16.mxu0 %v2563
    %3650 = vmatpush1.bf16.msra.mxu0 %v2562
    %3651 = vmatprep.subr.bf16.mxu0 %v2565
    %3652 = vmatpush1.bf16.msra.mxu0 %v2564
    %3653 = vmatprep.subr.bf16.mxu0 %v2567
    %3654 = vmatpush1.bf16.msra.mxu0 %v2566
    %3655 = vmatprep.subr.bf16.mxu0 %v2569
    %3656 = vmatpush1.bf16.msra.mxu0 %v2568
    %3657 = vmatprep.subr.bf16.mxu0 %v2571
    %3658 = vmatpush1.bf16.msra.mxu0 %v2570
    %3659 = vmatprep.subr.bf16.mxu0 %v2573
    %3660 = vmatpush1.bf16.msra.mxu0 %v2572
    %3661 = vmatprep.mubr.bf16.mxu0 %v651
    %3662 = vmatmul.mubr.bf16.gmra.mrb[0].mxu0 %v649
    %v3663 = vpop.f32.mrb[0].mxu0
    %v3664 = vadd.f32 %v3623, %v3663
    %v3665 = vpop.f32.mrb[0].mxu0
    %v3666 = vadd.f32 %v3625, %v3665
    %v3667 = vpop.f32.mrb[0].mxu0
    %v3668 = vpop.f32.mrb[0].mxu0
    %3669 = vdwg.mxu0
    %3670 = vmatprep.subr.bf16.mxu0 %v2575
    %3671 = vmatpush1.bf16.msra.mxu0 %v2574
    %3672 = vmatprep.subr.bf16.mxu0 %v2577
    %3673 = vmatpush1.bf16.msra.mxu0 %v2576
    %3674 = vmatprep.subr.bf16.mxu0 %v2579
    %3675 = vmatpush1.bf16.msra.mxu0 %v2578
    %3676 = vmatprep.subr.bf16.mxu0 %v2581
    %3677 = vmatpush1.bf16.msra.mxu0 %v2580
    %3678 = vmatprep.subr.bf16.mxu0 %v2583
    %3679 = vmatpush1.bf16.msra.mxu0 %v2582
    %3680 = vmatprep.subr.bf16.mxu0 %v2585
    %3681 = vmatpush1.bf16.msra.mxu0 %v2584
    %3682 = vmatprep.subr.bf16.mxu0 %v2587
    %3683 = vmatpush1.bf16.msra.mxu0 %v2586
    %3684 = vmatprep.subr.bf16.mxu0 %v2589
    %3685 = vmatpush1.bf16.msra.mxu0 %v2588
    %3686 = vmatprep.subr.bf16.mxu0 %v2591
    %3687 = vmatpush1.bf16.msra.mxu0 %v2590
    %3688 = vmatprep.subr.bf16.mxu0 %v2593
    %3689 = vmatpush1.bf16.msra.mxu0 %v2592
    %3690 = vmatprep.subr.bf16.mxu0 %v2595
    %3691 = vmatpush1.bf16.msra.mxu0 %v2594
    %3692 = vmatprep.subr.bf16.mxu0 %v2597
    %3693 = vmatpush1.bf16.msra.mxu0 %v2596
    %3694 = vmatprep.subr.bf16.mxu0 %v2599
    %3695 = vmatpush1.bf16.msra.mxu0 %v2598
    %3696 = vmatprep.subr.bf16.mxu0 %v2601
    %3697 = vmatpush1.bf16.msra.mxu0 %v2600
    %3698 = vmatprep.subr.bf16.mxu0 %v2603
    %3699 = vmatpush1.bf16.msra.mxu0 %v2602
    %3700 = vmatprep.subr.bf16.mxu0 %v2605
    %3701 = vmatpush1.bf16.msra.mxu0 %v2604
    %3702 = vmatprep.mubr.bf16.mxu0 %v689
    %3703 = vmatmul.mubr.bf16.gmra.mrb[0].mxu0 %v675
    %v3704 = vpop.f32.mrb[0].mxu0
    %v3705 = vadd.f32 %v3664, %v3704
    %v3706 = vpop.f32.mrb[0].mxu0
    %v3707 = vadd.f32 %v3666, %v3706
    %v3708 = vpop.f32.mrb[0].mxu0
    %v3709 = vpop.f32.mrb[0].mxu0
    %3710 = vdwg.mxu0
    %3711 = vmatprep.subr.bf16.mxu0 %v2607
    %3712 = vmatpush1.bf16.msra.mxu0 %v2606
    %3713 = vmatprep.subr.bf16.mxu0 %v2609
    %3714 = vmatpush1.bf16.msra.mxu0 %v2608
    %3715 = vmatprep.subr.bf16.mxu0 %v2611
    %3716 = vmatpush1.bf16.msra.mxu0 %v2610
    %3717 = vmatprep.subr.bf16.mxu0 %v2613
    %3718 = vmatpush1.bf16.msra.mxu0 %v2612
    %3719 = vmatprep.subr.bf16.mxu0 %v2615
    %3720 = vmatpush1.bf16.msra.mxu0 %v2614
    %3721 = vmatprep.subr.bf16.mxu0 %v2617
    %3722 = vmatpush1.bf16.msra.mxu0 %v2616
    %3723 = vmatprep.subr.bf16.mxu0 %v2619
    %3724 = vmatpush1.bf16.msra.mxu0 %v2618
    %3725 = vmatprep.subr.bf16.mxu0 %v2621
    %3726 = vmatpush1.bf16.msra.mxu0 %v2620
    %3727 = vmatprep.subr.bf16.mxu0 %v2623
    %3728 = vmatpush1.bf16.msra.mxu0 %v2622
    %3729 = vmatprep.subr.bf16.mxu0 %v2625
    %3730 = vmatpush1.bf16.msra.mxu0 %v2624
    %3731 = vmatprep.subr.bf16.mxu0 %v2627
    %3732 = vmatpush1.bf16.msra.mxu0 %v2626
    %3733 = vmatprep.subr.bf16.mxu0 %v2629
    %3734 = vmatpush1.bf16.msra.mxu0 %v2628
    %3735 = vmatprep.subr.bf16.mxu0 %v2631
    %3736 = vmatpush1.bf16.msra.mxu0 %v2630
    %3737 = vmatprep.subr.bf16.mxu0 %v2633
    %3738 = vmatpush1.bf16.msra.mxu0 %v2632
    %3739 = vmatprep.subr.bf16.mxu0 %v2635
    %3740 = vmatpush1.bf16.msra.mxu0 %v2634
    %3741 = vmatprep.subr.bf16.mxu0 %v2637
    %3742 = vmatpush1.bf16.msra.mxu0 %v2636
    %3743 = vmatprep.mubr.bf16.mxu0 %v699
    %3744 = vmatmul.mubr.bf16.gmra.mrb[0].mxu0 %v697
    %v3745 = vpop.f32.mrb[0].mxu0
    %v3746 = vadd.f32 %v3705, %v3745
    %v3747 = vpop.f32.mrb[0].mxu0
    %v3748 = vadd.f32 %v3707, %v3747
    %v3749 = vpop.f32.mrb[0].mxu0
    %v3750 = vpop.f32.mrb[0].mxu0
    %3751 = vdwg.mxu0
    %3752 = vmatprep.subr.bf16.mxu0 %v2639
    %3753 = vmatpush1.bf16.msra.mxu0 %v2638
    %3754 = vmatprep.subr.bf16.mxu0 %v2641
    %3755 = vmatpush1.bf16.msra.mxu0 %v2640
    %3756 = vmatprep.subr.bf16.mxu0 %v2643
    %3757 = vmatpush1.bf16.msra.mxu0 %v2642
    %3758 = vmatprep.subr.bf16.mxu0 %v2645
    %3759 = vmatpush1.bf16.msra.mxu0 %v2644
    %3760 = vmatprep.subr.bf16.mxu0 %v2647
    %3761 = vmatpush1.bf16.msra.mxu0 %v2646
    %3762 = vmatprep.subr.bf16.mxu0 %v2649
    %3763 = vmatpush1.bf16.msra.mxu0 %v2648
    %3764 = vmatprep.subr.bf16.mxu0 %v2651
    %3765 = vmatpush1.bf16.msra.mxu0 %v2650
    %3766 = vmatprep.subr.bf16.mxu0 %v2653
    %3767 = vmatpush1.bf16.msra.mxu0 %v2652
    %3768 = vmatprep.subr.bf16.mxu0 %v2655
    %3769 = vmatpush1.bf16.msra.mxu0 %v2654
    %3770 = vmatprep.subr.bf16.mxu0 %v2657
    %3771 = vmatpush1.bf16.msra.mxu0 %v2656
    %3772 = vmatprep.subr.bf16.mxu0 %v2659
    %3773 = vmatpush1.bf16.msra.mxu0 %v2658
    %3774 = vmatprep.subr.bf16.mxu0 %v2661
    %3775 = vmatpush1.bf16.msra.mxu0 %v2660
    %3776 = vmatprep.subr.bf16.mxu0 %v2663
    %3777 = vmatpush1.bf16.msra.mxu0 %v2662
    %3778 = vmatprep.subr.bf16.mxu0 %v2665
    %3779 = vmatpush1.bf16.msra.mxu0 %v2664
    %3780 = vmatprep.subr.bf16.mxu0 %v2667
    %3781 = vmatpush1.bf16.msra.mxu0 %v2666
    %3782 = vmatprep.subr.bf16.mxu0 %v2669
    %3783 = vmatpush1.bf16.msra.mxu0 %v2668
    %3784 = vmatprep.mubr.bf16.mxu0 %v696
    %3785 = vmatmul.mubr.bf16.gmra.mrb[0].mxu0 %v682
    %v3786 = vpop.f32.mrb[0].mxu0
    %v3787 = vadd.f32 %v3746, %v3786
    %v3788 = vpop.f32.mrb[0].mxu0
    %v3789 = vadd.f32 %v3748, %v3788
    %v3790 = vpop.f32.mrb[0].mxu0
    %v3791 = vpop.f32.mrb[0].mxu0
    %3792 = vdwg.mxu0
    %3793 = vmatprep.subr.bf16.mxu0 %v2671
    %3794 = vmatpush1.bf16.msra.mxu0 %v2670
    %3795 = vmatprep.subr.bf16.mxu0 %v2673
    %3796 = vmatpush1.bf16.msra.mxu0 %v2672
    %3797 = vmatprep.subr.bf16.mxu0 %v2675
    %3798 = vmatpush1.bf16.msra.mxu0 %v2674
    %3799 = vmatprep.subr.bf16.mxu0 %v2677
    %3800 = vmatpush1.bf16.msra.mxu0 %v2676
    %3801 = vmatprep.subr.bf16.mxu0 %v2679
    %3802 = vmatpush1.bf16.msra.mxu0 %v2678
    %3803 = vmatprep.subr.bf16.mxu0 %v2681
    %3804 = vmatpush1.bf16.msra.mxu0 %v2680
    %3805 = vmatprep.subr.bf16.mxu0 %v2683
    %3806 = vmatpush1.bf16.msra.mxu0 %v2682
    %3807 = vmatprep.subr.bf16.mxu0 %v2685
    %3808 = vmatpush1.bf16.msra.mxu0 %v2684
    %3809 = vmatprep.subr.bf16.mxu0 %v2687
    %3810 = vmatpush1.bf16.msra.mxu0 %v2686
    %3811 = vmatprep.subr.bf16.mxu0 %v2689
    %3812 = vmatpush1.bf16.msra.mxu0 %v2688
    %3813 = vmatprep.subr.bf16.mxu0 %v2691
    %3814 = vmatpush1.bf16.msra.mxu0 %v2690
    %3815 = vmatprep.subr.bf16.mxu0 %v2693
    %3816 = vmatpush1.bf16.msra.mxu0 %v2692
    %3817 = vmatprep.subr.bf16.mxu0 %v2695
    %3818 = vmatpush1.bf16.msra.mxu0 %v2694
    %3819 = vmatprep.subr.bf16.mxu0 %v2697
    %3820 = vmatpush1.bf16.msra.mxu0 %v2696
    %3821 = vmatprep.subr.bf16.mxu0 %v2699
    %3822 = vmatpush1.bf16.msra.mxu0 %v2698
    %3823 = vmatprep.subr.bf16.mxu0 %v2701
    %3824 = vmatpush1.bf16.msra.mxu0 %v2700
    %3825 = vmatprep.mubr.bf16.mxu0 %v700
    %3826 = vmatmul.mubr.bf16.gmra.mrb[0].mxu0 %v698
    %v3827 = vpop.f32.mrb[0].mxu0
    %v3828 = vadd.f32 %v3787, %v3827
    %v3829 = vpop.f32.mrb[0].mxu0
    %v3830 = vadd.f32 %v3789, %v3829
    %v3831 = vpop.f32.mrb[0].mxu0
    %v3832 = vpop.f32.mrb[0].mxu0
    %3833 = vdwg.mxu0
    %3834 = vmatprep.subr.bf16.mxu0 %v2703
    %3835 = vmatpush1.bf16.msra.mxu0 %v2702
    %3836 = vmatprep.subr.bf16.mxu0 %v2705
    %3837 = vmatpush1.bf16.msra.mxu0 %v2704
    %3838 = vmatprep.subr.bf16.mxu0 %v2707
    %3839 = vmatpush1.bf16.msra.mxu0 %v2706
    %3840 = vmatprep.subr.bf16.mxu0 %v2709
    %3841 = vmatpush1.bf16.msra.mxu0 %v2708
    %3842 = vmatprep.subr.bf16.mxu0 %v2711
    %3843 = vmatpush1.bf16.msra.mxu0 %v2710
    %3844 = vmatprep.subr.bf16.mxu0 %v2713
    %3845 = vmatpush1.bf16.msra.mxu0 %v2712
    %3846 = vmatprep.subr.bf16.mxu0 %v2715
    %3847 = vmatpush1.bf16.msra.mxu0 %v2714
    %3848 = vmatprep.subr.bf16.mxu0 %v2717
    %3849 = vmatpush1.bf16.msra.mxu0 %v2716
    %3850 = vmatprep.subr.bf16.mxu0 %v2719
    %3851 = vmatpush1.bf16.msra.mxu0 %v2718
    %3852 = vmatprep.subr.bf16.mxu0 %v2721
    %3853 = vmatpush1.bf16.msra.mxu0 %v2720
    %3854 = vmatprep.subr.bf16.mxu0 %v2723
    %3855 = vmatpush1.bf16.msra.mxu0 %v2722
    %3856 = vmatprep.subr.bf16.mxu0 %v2725
    %3857 = vmatpush1.bf16.msra.mxu0 %v2724
    %3858 = vmatprep.subr.bf16.mxu0 %v2727
    %3859 = vmatpush1.bf16.msra.mxu0 %v2726
    %3860 = vmatprep.subr.bf16.mxu0 %v2729
    %3861 = vmatpush1.bf16.msra.mxu0 %v2728
    %3862 = vmatprep.subr.bf16.mxu0 %v2731
    %3863 = vmatpush1.bf16.msra.mxu0 %v2730
    %3864 = vmatprep.subr.bf16.mxu0 %v2733
    %3865 = vmatpush1.bf16.msra.mxu0 %v2732
    %3866 = vmatprep.mubr.bf16.mxu0 %v738
    %3867 = vmatmul.mubr.bf16.gmra.mrb[0].mxu0 %v724
    %v3868 = vpop.f32.mrb[0].mxu0
    %v3869 = vadd.f32 %v3828, %v3868
    %v3870 = vpop.f32.mrb[0].mxu0
    %v3871 = vadd.f32 %v3830, %v3870
    %v3872 = vpop.f32.mrb[0].mxu0
    %v3873 = vpop.f32.mrb[0].mxu0
    %3874 = vdwg.mxu0
    %3875 = vmatprep.subr.bf16.mxu0 %v2735
    %3876 = vmatpush1.bf16.msra.mxu0 %v2734
    %3877 = vmatprep.subr.bf16.mxu0 %v2737
    %3878 = vmatpush1.bf16.msra.mxu0 %v2736
    %3879 = vmatprep.subr.bf16.mxu0 %v2739
    %3880 = vmatpush1.bf16.msra.mxu0 %v2738
    %3881 = vmatprep.subr.bf16.mxu0 %v2741
    %3882 = vmatpush1.bf16.msra.mxu0 %v2740
    %3883 = vmatprep.subr.bf16.mxu0 %v2743
    %3884 = vmatpush1.bf16.msra.mxu0 %v2742
    %3885 = vmatprep.subr.bf16.mxu0 %v2745
    %3886 = vmatpush1.bf16.msra.mxu0 %v2744
    %3887 = vmatprep.subr.bf16.mxu0 %v2747
    %3888 = vmatpush1.bf16.msra.mxu0 %v2746
    %3889 = vmatprep.subr.bf16.mxu0 %v2749
    %3890 = vmatpush1.bf16.msra.mxu0 %v2748
    %3891 = vmatprep.subr.bf16.mxu0 %v2751
    %3892 = vmatpush1.bf16.msra.mxu0 %v2750
    %3893 = vmatprep.subr.bf16.mxu0 %v2753
    %3894 = vmatpush1.bf16.msra.mxu0 %v2752
    %3895 = vmatprep.subr.bf16.mxu0 %v2755
    %3896 = vmatpush1.bf16.msra.mxu0 %v2754
    %3897 = vmatprep.subr.bf16.mxu0 %v2757
    %3898 = vmatpush1.bf16.msra.mxu0 %v2756
    %3899 = vmatprep.subr.bf16.mxu0 %v2759
    %3900 = vmatpush1.bf16.msra.mxu0 %v2758
    %3901 = vmatprep.subr.bf16.mxu0 %v2761
    %3902 = vmatpush1.bf16.msra.mxu0 %v2760
    %3903 = vmatprep.subr.bf16.mxu0 %v2763
    %3904 = vmatpush1.bf16.msra.mxu0 %v2762
    %3905 = vmatprep.subr.bf16.mxu0 %v2765
    %3906 = vmatpush1.bf16.msra.mxu0 %v2764
    %3907 = vmatprep.mubr.bf16.mxu0 %v748
    %3908 = vmatmul.mubr.bf16.gmra.mrb[0].mxu0 %v746
    %v3909 = vpop.f32.mrb[0].mxu0
    %v3910 = vadd.f32 %v3869, %v3909
    %v3911 = vpop.f32.mrb[0].mxu0
    %v3912 = vadd.f32 %v3871, %v3911
    %v3913 = vpop.f32.mrb[0].mxu0
    %v3914 = vpop.f32.mrb[0].mxu0
    %3915 = vdwg.mxu0
    %3916 = vmatprep.subr.bf16.mxu0 %v2767
    %3917 = vmatpush1.bf16.msra.mxu0 %v2766
    %3918 = vmatprep.subr.bf16.mxu0 %v2769
    %3919 = vmatpush1.bf16.msra.mxu0 %v2768
    %3920 = vmatprep.subr.bf16.mxu0 %v2771
    %3921 = vmatpush1.bf16.msra.mxu0 %v2770
    %3922 = vmatprep.subr.bf16.mxu0 %v2773
    %3923 = vmatpush1.bf16.msra.mxu0 %v2772
    %3924 = vmatprep.subr.bf16.mxu0 %v2775
    %3925 = vmatpush1.bf16.msra.mxu0 %v2774
    %3926 = vmatprep.subr.bf16.mxu0 %v2777
    %3927 = vmatpush1.bf16.msra.mxu0 %v2776
    %3928 = vmatprep.subr.bf16.mxu0 %v2779
    %3929 = vmatpush1.bf16.msra.mxu0 %v2778
    %3930 = vmatprep.subr.bf16.mxu0 %v2781
    %3931 = vmatpush1.bf16.msra.mxu0 %v2780
    %3932 = vmatprep.subr.bf16.mxu0 %v2783
    %3933 = vmatpush1.bf16.msra.mxu0 %v2782
    %3934 = vmatprep.subr.bf16.mxu0 %v2785
    %3935 = vmatpush1.bf16.msra.mxu0 %v2784
    %3936 = vmatprep.subr.bf16.mxu0 %v2787
    %3937 = vmatpush1.bf16.msra.mxu0 %v2786
    %3938 = vmatprep.subr.bf16.mxu0 %v2789
    %3939 = vmatpush1.bf16.msra.mxu0 %v2788
    %3940 = vmatprep.subr.bf16.mxu0 %v2791
    %3941 = vmatpush1.bf16.msra.mxu0 %v2790
    %3942 = vmatprep.subr.bf16.mxu0 %v2793
    %3943 = vmatpush1.bf16.msra.mxu0 %v2792
    %3944 = vmatprep.subr.bf16.mxu0 %v2795
    %3945 = vmatpush1.bf16.msra.mxu0 %v2794
    %3946 = vmatprep.subr.bf16.mxu0 %v2797
    %3947 = vmatpush1.bf16.msra.mxu0 %v2796
    %3948 = vmatprep.mubr.bf16.mxu0 %v745
    %3949 = vmatmul.mubr.bf16.gmra.mrb[0].mxu0 %v731
    %v3950 = vpop.f32.mrb[0].mxu0
    %v3951 = vadd.f32 %v3910, %v3950
    %v3952 = vpop.f32.mrb[0].mxu0
    %v3953 = vadd.f32 %v3912, %v3952
    %v3954 = vpop.f32.mrb[0].mxu0
    %v3955 = vpop.f32.mrb[0].mxu0
    %3956 = vdwg.mxu0
    %3957 = vmatprep.subr.bf16.mxu0 %v2799
    %3958 = vmatpush1.bf16.msra.mxu0 %v2798
    %3959 = vmatprep.subr.bf16.mxu0 %v2801
    %3960 = vmatpush1.bf16.msra.mxu0 %v2800
    %3961 = vmatprep.subr.bf16.mxu0 %v2803
    %3962 = vmatpush1.bf16.msra.mxu0 %v2802
    %3963 = vmatprep.subr.bf16.mxu0 %v2805
    %3964 = vmatpush1.bf16.msra.mxu0 %v2804
    %3965 = vmatprep.subr.bf16.mxu0 %v2807
    %3966 = vmatpush1.bf16.msra.mxu0 %v2806
    %3967 = vmatprep.subr.bf16.mxu0 %v2809
    %3968 = vmatpush1.bf16.msra.mxu0 %v2808
    %3969 = vmatprep.subr.bf16.mxu0 %v2811
    %3970 = vmatpush1.bf16.msra.mxu0 %v2810
    %3971 = vmatprep.subr.bf16.mxu0 %v2813
    %3972 = vmatpush1.bf16.msra.mxu0 %v2812
    %3973 = vmatprep.subr.bf16.mxu0 %v2815
    %3974 = vmatpush1.bf16.msra.mxu0 %v2814
    %3975 = vmatprep.subr.bf16.mxu0 %v2817
    %3976 = vmatpush1.bf16.msra.mxu0 %v2816
    %3977 = vmatprep.subr.bf16.mxu0 %v2819
    %3978 = vmatpush1.bf16.msra.mxu0 %v2818
    %3979 = vmatprep.subr.bf16.mxu0 %v2821
    %3980 = vmatpush1.bf16.msra.mxu0 %v2820
    %3981 = vmatprep.subr.bf16.mxu0 %v2823
    %3982 = vmatpush1.bf16.msra.mxu0 %v2822
    %3983 = vmatprep.subr.bf16.mxu0 %v2825
    %3984 = vmatpush1.bf16.msra.mxu0 %v2824
    %3985 = vmatprep.subr.bf16.mxu0 %v2827
    %3986 = vmatpush1.bf16.msra.mxu0 %v2826
    %3987 = vmatprep.subr.bf16.mxu0 %v2829
    %3988 = vmatpush1.bf16.msra.mxu0 %v2828
    %3989 = vmatprep.mubr.bf16.mxu0 %v749
    %3990 = vmatmul.mubr.bf16.gmra.mrb[0].mxu0 %v747
    %v3991 = vpop.f32.mrb[0].mxu0
    %v3992 = vadd.f32 %v3951, %v3991
    %v3993 = vpop.f32.mrb[0].mxu0
    %v3994 = vadd.f32 %v3953, %v3993
    %v3995 = vpop.f32.mrb[0].mxu0
    %v3996 = vpop.f32.mrb[0].mxu0
    %3997 = vdwg.mxu0
    %v3998 = vmax.f32 %v3992, 0.0
    %v3999 = vmax.f32 %v3994, 0.0
    %v4000 = vpack.c.bf16 %v3998, %v3998
    %v4001 = vpack.c.bf16 %v3999, %v3999
    %v4002 = vld [vmem:[%s3] sm:$0xf]
    %v4003 = vld [vmem:[%s3 + $0x4] sm:$0xf]
    %v4004 = vld [vmem:[%s3 + $0x8] sm:$0xf]
    %v4005 = vld [vmem:[%s3 + $0xc] sm:$0xf]
    %v4006 = vld [vmem:[%s3 + $0x10] sm:$0xf]
    %v4007 = vld [vmem:[%s3 + $0x14] sm:$0xf]
    %v4008 = vld [vmem:[%s3 + $0x18] sm:$0xf]
    %v4009 = vld [vmem:[%s3 + $0x1c] sm:$0xf]
    %v4010 = vld [vmem:[%s3 + $0x20] sm:$0xf]
    %v4011 = vld [vmem:[%s3 + $0x24] sm:$0xf]
    %v4012 = vld [vmem:[%s3 + $0x28] sm:$0xf]
    %v4013 = vld [vmem:[%s3 + $0x2c] sm:$0xf]
    %v4014 = vld [vmem:[%s3 + $0x30] sm:$0xf]
    %v4015 = vld [vmem:[%s3 + $0x34] sm:$0xf]
    %v4016 = vld [vmem:[%s3 + $0x38] sm:$0xf]
    %v4017 = vld [vmem:[%s3 + $0x3c] sm:$0xf]
    %v4018 = vld [vmem:[%s3 + $0x40] sm:$0xf]
    %v4019 = vld [vmem:[%s3 + $0x44] sm:$0xf]
    %v4020 = vld [vmem:[%s3 + $0x48] sm:$0xf]
    %v4021 = vld [vmem:[%s3 + $0x4c] sm:$0xf]
    %v4022 = vld [vmem:[%s3 + $0x50] sm:$0xf]
    %v4023 = vld [vmem:[%s3 + $0x54] sm:$0xf]
    %v4024 = vld [vmem:[%s3 + $0x58] sm:$0xf]
    %v4025 = vld [vmem:[%s3 + $0x5c] sm:$0xf]
    %v4026 = vld [vmem:[%s3 + $0x60] sm:$0xf]
    %v4027 = vld [vmem:[%s3 + $0x64] sm:$0xf]
    %v4028 = vld [vmem:[%s3 + $0x68] sm:$0xf]
    %v4029 = vld [vmem:[%s3 + $0x6c] sm:$0xf]
    %v4030 = vld [vmem:[%s3 + $0x70] sm:$0xf]
    %v4031 = vld [vmem:[%s3 + $0x74] sm:$0xf]
    %v4032 = vld [vmem:[%s3 + $0x78] sm:$0xf]
    %v4033 = vld [vmem:[%s3 + $0x7c] sm:$0xf]
    %v4034 = vld [vmem:[%s4] sm:$0x1]
    %v4036 = vlaneseq
    %v4037 = vshrl.u32 %v4036, 7
    %v4038 = vsub.s32 0, %v4037
    %v4039 = vrot.slane %v4034, %v4038
    %v4073 = vunpack.c.l.b16 %v4002
    %v4074 = vunpack.c.l.b16 %v4003
    %v4075 = vunpack.c.l.b16 %v4004
    %v4076 = vunpack.c.l.b16 %v4005
    %v4077 = vunpack.c.l.b16 %v4006
    %v4078 = vunpack.c.l.b16 %v4007
    %v4079 = vunpack.c.l.b16 %v4008
    %v4080 = vunpack.c.l.b16 %v4009
    %v4081 = vunpack.c.l.b16 %v4010
    %v4082 = vunpack.c.l.b16 %v4011
    %v4083 = vunpack.c.l.b16 %v4012
    %v4084 = vunpack.c.l.b16 %v4013
    %v4085 = vunpack.c.l.b16 %v4014
    %v4086 = vunpack.c.l.b16 %v4015
    %v4087 = vunpack.c.l.b16 %v4016
    %v4088 = vunpack.c.l.b16 %v4017
    %v4089 = vunpack.c.l.b16 %v4018
    %v4090 = vunpack.c.l.b16 %v4019
    %v4091 = vunpack.c.l.b16 %v4020
    %v4092 = vunpack.c.l.b16 %v4021
    %v4093 = vunpack.c.l.b16 %v4022
    %v4094 = vunpack.c.l.b16 %v4023
    %v4095 = vunpack.c.l.b16 %v4024
    %v4096 = vunpack.c.l.b16 %v4025
    %v4097 = vunpack.c.l.b16 %v4026
    %v4098 = vunpack.c.l.b16 %v4027
    %v4099 = vunpack.c.l.b16 %v4028
    %v4100 = vunpack.c.l.b16 %v4029
    %v4101 = vunpack.c.l.b16 %v4030
    %v4102 = vunpack.c.l.b16 %v4031
    %v4103 = vunpack.c.l.b16 %v4032
    %v4104 = vunpack.c.l.b16 %v4033
    %v4105 = vpack.c.b16 %v4074, %v4073
    %v4106 = vpack.c.b16 %v4076, %v4075
    %v4107 = vpack.c.b16 %v4078, %v4077
    %v4108 = vpack.c.b16 %v4080, %v4079
    %v4109 = vpack.c.b16 %v4082, %v4081
    %v4110 = vpack.c.b16 %v4084, %v4083
    %v4111 = vpack.c.b16 %v4086, %v4085
    %v4112 = vpack.c.b16 %v4088, %v4087
    %v4113 = vpack.c.b16 %v4090, %v4089
    %v4114 = vpack.c.b16 %v4092, %v4091
    %v4115 = vpack.c.b16 %v4094, %v4093
    %v4116 = vpack.c.b16 %v4096, %v4095
    %v4117 = vpack.c.b16 %v4098, %v4097
    %v4118 = vpack.c.b16 %v4100, %v4099
    %v4119 = vpack.c.b16 %v4102, %v4101
    %v4120 = vpack.c.b16 %v4104, %v4103
    %4137 = vmatprep.subr.bf16.mxu0 0
    %4138 = vmatpush1.bf16.msra.mxu0 %v4105
    %4139 = vmatprep.subr.bf16.mxu0 0
    %4140 = vmatpush1.bf16.msra.mxu0 %v4106
    %4141 = vmatprep.subr.bf16.mxu0 0
    %4142 = vmatpush1.bf16.msra.mxu0 %v4107
    %4143 = vmatprep.subr.bf16.mxu0 0
    %4144 = vmatpush1.bf16.msra.mxu0 %v4108
    %4145 = vmatprep.subr.bf16.mxu0 0
    %4146 = vmatpush1.bf16.msra.mxu0 %v4109
    %4147 = vmatprep.subr.bf16.mxu0 0
    %4148 = vmatpush1.bf16.msra.mxu0 %v4110
    %4149 = vmatprep.subr.bf16.mxu0 0
    %4150 = vmatpush1.bf16.msra.mxu0 %v4111
    %4151 = vmatprep.subr.bf16.mxu0 0
    %4152 = vmatpush1.bf16.msra.mxu0 %v4112
    %4153 = vmatprep.subr.bf16.mxu0 0
    %4154 = vmatpush1.bf16.msra.mxu0 %v4113
    %4155 = vmatprep.subr.bf16.mxu0 0
    %4156 = vmatpush1.bf16.msra.mxu0 %v4114
    %4157 = vmatprep.subr.bf16.mxu0 0
    %4158 = vmatpush1.bf16.msra.mxu0 %v4115
    %4159 = vmatprep.subr.bf16.mxu0 0
    %4160 = vmatpush1.bf16.msra.mxu0 %v4116
    %4161 = vmatprep.subr.bf16.mxu0 0
    %4162 = vmatpush1.bf16.msra.mxu0 %v4117
    %4163 = vmatprep.subr.bf16.mxu0 0
    %4164 = vmatpush1.bf16.msra.mxu0 %v4118
    %4165 = vmatprep.subr.bf16.mxu0 0
    %4166 = vmatpush1.bf16.msra.mxu0 %v4119
    %4167 = vmatprep.subr.bf16.mxu0 0
    %4168 = vmatpush1.bf16.msra.mxu0 %v4120
    %4169 = vmatprep.mubr.bf16.mxu0 %v4001
    %4170 = vmatmul.mubr.bf16.gmra.mrb[0].mxu0 %v4000
    %v4171 = vpop.f32.mrb[0].mxu0
    %v4172 = vadd.f32 %v4039, %v4171
    %v4173 = vpop.f32.mrb[0].mxu0
    %v4174 = vpop.f32.mrb[0].mxu0
    %v4175 = vpop.f32.mrb[0].mxu0
    %4176 = vdwg.mxu0
    %4177 = vst [vmem:[#allocation2] sm:$0x3] %v4172
    // Predicated region
    $region22: #{dueling_dqn_forward.3} parent=1 // pred_check
      _
    $region23: #{dueling_dqn_forward.3} parent=1 // pred_check_branch
      %4179 = sbr.rel (0) target = $region25
    $region24: #{dueling_dqn_forward.3} parent=1 // pred_region
      %s4181 = ssub.s32 32, 32
      %4182 = vsyncadd [#allocation3], %s4181
      %s4184 = sshll.u32 [#allocation2], 4
      %s4185 = int_to_ptr.vmem [resolvable:$true] %s4184
      %4187 = dma.vmem_to_hbm [thread:$0]  %s4185, 32, %s5, [#allocation3]
    $region25: #{dueling_dqn_forward.3} parent=1 // pred_fallthru
      _
    // Predicated region
    $region26: #{dueling_dqn_forward.3} parent=1 // pred_check
      _
    $region27: #{dueling_dqn_forward.3} parent=1 // pred_check_branch
      %4189 = sbr.rel (0) target = $region29
    $region28: #{dueling_dqn_forward.3} parent=1 // pred_region
      %4190 = dma.done [#allocation3], 32
    $region29: #{dueling_dqn_forward.3} parent=1 // pred_fallthru
      _
    %4191 = vsyncpa [#allocation3], 1

</llo_original>
